<compile_context>
chip_gen: v7x
topology: tpu7x:2x2x1
jax: 0.10.0
libtpu: 0.0.40
codegen_flags: <defaults>
</compile_context>

<pallas_src>
import numpy as np
import jax
import jax.numpy as jnp
from jax.experimental import pallas as pl
from jax.experimental.pallas import tpu as pltpu

EPS = 1e-5
LANES = 128
PT = 8          # zero rows prepended to every flat activation buffer


def _rup(x, m):
    return (x + m - 1) // m * m


def _geom(B):
    # cbr1/cbr2 run at 4x4 spatial, cbr3/cbr4 at 2x2 spatial (pad=1 each side).
    Hp1 = Wp1 = 6
    Hp2 = Wp2 = 4
    R1 = B * Hp1 * Wp1                      # flat padded rows, 4x4 stage
    R2 = B * Hp2 * Wp2                      # flat padded rows, 2x2 stage
    ext1 = _rup(PT + R1 + Wp1 + 1, 8)       # extended buffer rows, 4x4 stage
    ext2 = _rup(PT + R2 + Wp2 + 1, 8)       # extended buffer rows, 2x2 stage
    Mout = max(8, _rup(B, 8))               # sublane-aligned FC batch rows
    return Hp1, Wp1, Hp2, Wp2, R1, R2, ext1, ext2, Mout


# -----------------------------------------------------------------------------
# Fused kernel
# -----------------------------------------------------------------------------
def _make_kernel(B):
    Hp1, Wp1, Hp2, Wp2, R1, R2, ext1, ext2, Mout = _geom(B)

    def conv3x3(src_ref, w_ref, shift_ref, Wp, R):
        # src_ref: [PT zero rows | R flat rows ((b*Hp+hp)*Wp+wp) | zero rows].
        # out[r] = relu( sum_taps src[r + (kh-1)*Wp + (kw-1)] @ W_tap + shift )
        acc = None
        for kh in range(3):
            for kw in range(3):
                start = PT + (kh - 1) * Wp + (kw - 1)
                tap = src_ref[start:start + R, :].astype(jnp.bfloat16)
                part = jnp.dot(tap, w_ref[kh * 3 + kw],
                               preferred_element_type=jnp.float32)
                acc = part if acc is None else acc + part
        return jnp.maximum(acc + shift_ref[...], 0.0)          # (R, Cout) f32

    def pool2x2(y, Wp, L):
        # m[r] = max(y[r], y[r+1], y[r+Wp], y[r+Wp+1]); valid for r < L.
        return jnp.maximum(jnp.maximum(y[0:L], y[1:L + 1]),
                           jnp.maximum(y[Wp:Wp + L], y[Wp + 1:Wp + 1 + L]))

    def kernel(x_ref, m1_ref, m3_ref,
               w1_ref, s1_ref, w2_ref, s2_ref, w3_ref, s3_ref, w4_ref, s4_ref,
               f1w_ref, f1b_ref, f2w_ref, f2b_ref, f3w_ref, f3b_ref,
               out_ref,
               a1_ref, a3_ref, a4_ref, feat_ref):
        # ---- cbr1 ---------------------------------------------------------
        y1 = conv3x3(x_ref, w1_ref, s1_ref, Wp1, R1)           # (R1, 128)
        a1_ref[...] = jnp.zeros_like(a1_ref)
        a1_ref[PT:PT + R1, :] = y1 * m1_ref[...]               # zero the pad rows

        # ---- cbr2 ---------------------------------------------------------
        y2 = conv3x3(a1_ref, w2_ref, s2_ref, Wp1, R1)          # (R1, 128)

        # ---- maxpool1: 4x4 -> 2x2 ------------------------------------------
        L1 = R1 - 2 * Wp1 - 2
        p1 = pool2x2(y2, Wp1, L1)
        a3_ref[...] = jnp.zeros_like(a3_ref)
        for b in range(B):
            for ho in range(2):
                for wo in range(2):
                    src = (b * Hp1 + 1 + 2 * ho) * Wp1 + 1 + 2 * wo
                    dst = PT + (b * Hp2 + 1 + ho) * Wp2 + 1 + wo
                    a3_ref[dst:dst + 1, :] = p1[src:src + 1, :]

        # ---- cbr3 ---------------------------------------------------------
        y3 = conv3x3(a3_ref, w3_ref, s3_ref, Wp2, R2)          # (R2, 128)
        a4_ref[...] = jnp.zeros_like(a4_ref)
        a4_ref[PT:PT + R2, :] = y3 * m3_ref[...]

        # ---- cbr4 ---------------------------------------------------------
        y4 = conv3x3(a4_ref, w4_ref, s4_ref, Wp2, R2)          # (R2, 256)

        # ---- maxpool2: 2x2 -> 1x1, flatten ---------------------------------
        L2 = R2 - 2 * Wp2 - 2
        p2 = pool2x2(y4, Wp2, L2)
        feat_ref[...] = jnp.zeros_like(feat_ref)
        for b in range(B):
            src = (b * Hp2 + 1) * Wp2 + 1
            feat_ref[b:b + 1, :] = p2[src:src + 1, :]

        # ---- fc1 -> fc2 -> fc3 (no activations, matching the spec) ---------
        f = feat_ref[...].astype(jnp.bfloat16)                 # (Mout, 256)
        h1 = jnp.dot(f, f1w_ref[...],
                     preferred_element_type=jnp.float32) + f1b_ref[...]
        h2 = jnp.dot(h1.astype(jnp.bfloat16), f2w_ref[...],
                     preferred_element_type=jnp.float32) + f2b_ref[...]
        h3 = jnp.dot(h2.astype(jnp.bfloat16), f3w_ref[...],
                     preferred_element_type=jnp.float32) + f3b_ref[...]
        out_ref[...] = h3                                      # (Mout, 128)

    return kernel


# -----------------------------------------------------------------------------
# Wrapper
# -----------------------------------------------------------------------------
def build_forward(B):
    Hp1, Wp1, Hp2, Wp2, R1, R2, ext1, ext2, Mout = _geom(B)
    kernel = _make_kernel(B)

    def full_spec(shape):
        nd = len(shape)
        return pl.BlockSpec(tuple(shape), lambda i, _nd=nd: (0,) * _nd)

    def fwd(pp, x_nchw):
        # NCHW -> NHWC, spatial zero-pad (3x3/pad1), channel pad 6->128,
        # flatten to the flat padded-row layout expected by the kernel.
        x = jnp.transpose(x_nchw, (0, 2, 3, 1)).astype(jnp.float32)      # (B,4,4,6)
        x = jnp.pad(x, ((0, 0), (1, 1), (1, 1), (0, LANES - x.shape[-1])))
        flat = x.reshape(B * Hp1 * Wp1, LANES)
        x_ext = jnp.pad(flat, ((PT, ext1 - PT - R1), (0, 0)))            # (ext1,128)

        args = (x_ext, pp["mask1"], pp["mask3"],
                pp["w1"], pp["s1"], pp["w2"], pp["s2"],
                pp["w3"], pp["s3"], pp["w4"], pp["s4"],
                pp["f1w"], pp["f1b"], pp["f2w"], pp["f2b"],
                pp["f3w"], pp["f3b"])

        out = pl.pallas_call(
            kernel,
            out_shape=jax.ShapeDtypeStruct((Mout, LANES), jnp.float32),
            grid=(1,),
            in_specs=[full_spec(a.shape) for a in args],
            out_specs=full_spec((Mout, LANES)),
            scratch_shapes=[
                pltpu.VMEM((ext1, LANES), jnp.float32),   # cbr1 out (padded flat)
                pltpu.VMEM((ext2, LANES), jnp.float32),   # pool1 out (padded flat)
                pltpu.VMEM((ext2, LANES), jnp.float32),   # cbr3 out (padded flat)
                pltpu.VMEM((Mout, 256), jnp.float32),     # flattened features
            ],
            compiler_params=pltpu.CompilerParams(
                dimension_semantics=("arbitrary",)),
        )(*args)
        return out[:B, :3]            # strip channel/batch padding

    return jax.jit(fwd)


# -----------------------------------------------------------------------------
# Parameter construction (deterministic, synthetic) and host-side packing
# -----------------------------------------------------------------------------
def make_params(key):
    def nxt():
        nonlocal key
        key, sub = jax.random.split(key)
        return sub

    def conv_block(cin, cout):
        return dict(
            w=jax.random.normal(nxt(), (cout, cin, 3, 3), jnp.float32) * 0.05,
            b=jax.random.normal(nxt(), (cout,), jnp.float32) * 0.05,
            gamma=1.0 + 0.1 * jax.random.normal(nxt(), (cout,), jnp.float32),
            beta=0.05 * jax.random.normal(nxt(), (cout,), jnp.float32),
            mean=0.05 * jax.random.normal(nxt(), (cout,), jnp.float32),
            var=jnp.abs(1.0 + 0.1 * jax.random.normal(nxt(), (cout,), jnp.float32)),
        )

    def fc(inf, outf):
        return dict(w=jax.random.normal(nxt(), (outf, inf), jnp.float32) * 0.02,
                    b=jax.random.normal(nxt(), (outf,), jnp.float32) * 0.02)

    return dict(cbr1=conv_block(6, 32), cbr2=conv_block(32, 64),
                cbr3=conv_block(64, 128), cbr4=conv_block(128, 256),
                fc1=fc(256, 1000), fc2=fc(1000, 256), fc3=fc(256, 3))


def _prep_conv(p, cin_pad, cout_pad):
    # Fold eval-mode BN + conv bias: y = (x (*) (W*scale)) + shift.
    cout, cin = p["w"].shape[0], p["w"].shape[1]
    scale = p["gamma"] / jnp.sqrt(p["var"] + EPS)
    shift = p["beta"] + scale * (p["b"] - p["mean"])
    w = jnp.transpose(p["w"], (2, 3, 1, 0)) * scale[None, None, None, :]  # (3,3,cin,cout)
    w = jnp.pad(w, ((0, 0), (0, 0), (0, cin_pad - cin), (0, cout_pad - cout)))
    w = w.reshape(9, cin_pad, cout_pad).astype(jnp.bfloat16)
    shift = jnp.pad(shift, (0, cout_pad - cout)).reshape(1, cout_pad).astype(jnp.float32)
    return w, shift


def _interior_mask(B, H, W):
    # 1.0 on real (non-padding) rows of the flat (B*(H+2)*(W+2), C) layout.
    Hp, Wp = H + 2, W + 2
    m = np.zeros((B * Hp * Wp, 1), np.float32)
    for b in range(B):
        for hp in range(1, Hp - 1):
            for wp in range(1, Wp - 1):
                m[(b * Hp + hp) * Wp + wp, 0] = 1.0
    return jnp.asarray(np.broadcast_to(m, (B * Hp * Wp, LANES)).copy())


def prepare_params(raw, B):
    pp = {}
    pp["w1"], pp["s1"] = _prep_conv(raw["cbr1"], LANES, LANES)
    pp["w2"], pp["s2"] = _prep_conv(raw["cbr2"], LANES, LANES)
    pp["w3"], pp["s3"] = _prep_conv(raw["cbr3"], LANES, LANES)
    pp["w4"], pp["s4"] = _prep_conv(raw["cbr4"], LANES, 256)

    def fc_prep(p, k_pad, n_pad):
        n, k = p["w"].shape
        w = jnp.pad(p["w"].T, ((0, k_pad - k), (0, n_pad - n))).astype(jnp.bfloat16)
        b = jnp.pad(p["b"], (0, n_pad - n)).reshape(1, n_pad).astype(jnp.float32)
        return w, b

    pp["f1w"], pp["f1b"] = fc_prep(raw["fc1"], 256, 1024)     # 1000 -> 1024 lanes
    pp["f2w"], pp["f2b"] = fc_prep(raw["fc2"], 1024, 256)
    pp["f3w"], pp["f3b"] = fc_prep(raw["fc3"], 256, LANES)    # 3 -> 128 lanes
    pp["mask1"] = _interior_mask(B, 4, 4)
    pp["mask3"] = _interior_mask(B, 2, 2)
    return pp


# -----------------------------------------------------------------------------
# Pure-JAX reference (f32) for a sanity check
# -----------------------------------------------------------------------------
def reference_forward(raw, x_nchw):
    x = jnp.transpose(x_nchw, (0, 2, 3, 1)).astype(jnp.float32)

    def cbr(x, p):
        w = jnp.transpose(p["w"], (2, 3, 1, 0))
        y = jax.lax.conv_general_dilated(
            x, w, window_strides=(1, 1), padding=((1, 1), (1, 1)),
            dimension_numbers=("NHWC", "HWIO", "NHWC"))
        y = y + p["b"]
        scale = p["gamma"] / jnp.sqrt(p["var"] + EPS)
        y = scale * (y - p["mean"]) + p["beta"]
        return jnp.maximum(y, 0.0)

    def pool(x):
        return jax.lax.reduce_window(x, -jnp.inf, jax.lax.max,
                                     (1, 2, 2, 1), (1, 2, 2, 1), "VALID")

    x = cbr(x, raw["cbr1"]); x = cbr(x, raw["cbr2"]); x = pool(x)
    x = cbr(x, raw["cbr3"]); x = cbr(x, raw["cbr4"]); x = pool(x)
    x = x.reshape(x.shape[0], -1)
    for k in ("fc1", "fc2", "fc3"):
        x = x @ raw[k]["w"].T + raw[k]["b"]
    return x


# TODO(synk): BatchNorm2d is implemented with eval-mode semantics (running
# stats folded into the conv); training-mode batch statistics are not computed.

if __name__ == "__main__":
    key = jax.random.PRNGKey(0)
    k_in, k_par = jax.random.split(key)
    B = 2
    # fc1 expects 256 flat features => input spatial must be 4x4 (4->2->1, 256 ch).
    x = jax.random.normal(k_in, (B, 6, 4, 4), jnp.float32)     # NCHW, like PyTorch
    raw = make_params(k_par)
    packed = prepare_params(raw, B)

    fwd = build_forward(B)
    out = jax.block_until_ready(fwd(packed, x))
    assert out.shape == (B, 3), out.shape
    assert bool(jnp.all(jnp.isfinite(out)))

    # Loose sanity check vs. XLA f32 reference (kernel uses bf16 MXU operands).
    ref = jax.block_until_ready(jax.jit(reference_forward)(raw, x))
    err = float(jnp.max(jnp.abs(out - ref)))
    tol = 5e-3 + 5e-2 * float(jnp.max(jnp.abs(ref)))
    assert err < tol, (err, tol)

    print("KERNEL_OK")
</pallas_src>

<mosaic_0001>
module attributes {stable_mosaic.version = 11 : i64} {
  func.func @kernel(%arg0: i32, %arg1: memref<88x128xf32, #tpu.memory_space<vmem>>, %arg2: memref<72x128xf32, #tpu.memory_space<vmem>>, %arg3: memref<32x128xf32, #tpu.memory_space<vmem>>, %arg4: memref<9x128x128xbf16, #tpu.memory_space<vmem>>, %arg5: memref<1x128xf32, #tpu.memory_space<vmem>>, %arg6: memref<9x128x128xbf16, #tpu.memory_space<vmem>>, %arg7: memref<1x128xf32, #tpu.memory_space<vmem>>, %arg8: memref<9x128x128xbf16, #tpu.memory_space<vmem>>, %arg9: memref<1x128xf32, #tpu.memory_space<vmem>>, %arg10: memref<9x128x256xbf16, #tpu.memory_space<vmem>>, %arg11: memref<1x256xf32, #tpu.memory_space<vmem>>, %arg12: memref<256x1024xbf16, #tpu.memory_space<vmem>>, %arg13: memref<1x1024xf32, #tpu.memory_space<vmem>>, %arg14: memref<1024x256xbf16, #tpu.memory_space<vmem>>, %arg15: memref<1x256xf32, #tpu.memory_space<vmem>>, %arg16: memref<256x128xbf16, #tpu.memory_space<vmem>>, %arg17: memref<1x128xf32, #tpu.memory_space<vmem>>, %arg18: memref<8x128xf32, #tpu.memory_space<vmem>>, %arg19: memref<88x128xf32, #tpu.memory_space<vmem>>, %arg20: memref<48x128xf32, #tpu.memory_space<vmem>>, %arg21: memref<48x128xf32, #tpu.memory_space<vmem>>, %arg22: memref<8x256xf32, #tpu.memory_space<vmem>>) attributes {dimension_semantics = [#tpu.dimension_semantics<arbitrary>], iteration_bounds = array<i64: 1>, scalar_prefetch = 0 : i64, scratch_operands = 4 : i64, tpu.core_type = #tpu.core_type<tc>, window_params = [{pipeline_mode = #tpu.pipeline_mode<synchronous>, transform_indices = @transform_0, window_bounds = array<i64: 88, 128>}, {pipeline_mode = #tpu.pipeline_mode<synchronous>, transform_indices = @transform_1, window_bounds = array<i64: 72, 128>}, {pipeline_mode = #tpu.pipeline_mode<synchronous>, transform_indices = @transform_2, window_bounds = array<i64: 32, 128>}, {pipeline_mode = #tpu.pipeline_mode<synchronous>, transform_indices = @transform_3, window_bounds = array<i64: 9, 128, 128>}, {pipeline_mode = #tpu.pipeline_mode<synchronous>, transform_indices = @transform_4, window_bounds = array<i64: 1, 128>}, {pipeline_mode = #tpu.pipeline_mode<synchronous>, transform_indices = @transform_5, window_bounds = array<i64: 9, 128, 128>}, {pipeline_mode = #tpu.pipeline_mode<synchronous>, transform_indices = @transform_6, window_bounds = array<i64: 1, 128>}, {pipeline_mode = #tpu.pipeline_mode<synchronous>, transform_indices = @transform_7, window_bounds = array<i64: 9, 128, 128>}, {pipeline_mode = #tpu.pipeline_mode<synchronous>, transform_indices = @transform_8, window_bounds = array<i64: 1, 128>}, {pipeline_mode = #tpu.pipeline_mode<synchronous>, transform_indices = @transform_9, window_bounds = array<i64: 9, 128, 256>}, {pipeline_mode = #tpu.pipeline_mode<synchronous>, transform_indices = @transform_10, window_bounds = array<i64: 1, 256>}, {pipeline_mode = #tpu.pipeline_mode<synchronous>, transform_indices = @transform_11, window_bounds = array<i64: 256, 1024>}, {pipeline_mode = #tpu.pipeline_mode<synchronous>, transform_indices = @transform_12, window_bounds = array<i64: 1, 1024>}, {pipeline_mode = #tpu.pipeline_mode<synchronous>, transform_indices = @transform_13, window_bounds = array<i64: 1024, 256>}, {pipeline_mode = #tpu.pipeline_mode<synchronous>, transform_indices = @transform_14, window_bounds = array<i64: 1, 256>}, {pipeline_mode = #tpu.pipeline_mode<synchronous>, transform_indices = @transform_15, window_bounds = array<i64: 256, 128>}, {pipeline_mode = #tpu.pipeline_mode<synchronous>, transform_indices = @transform_16, window_bounds = array<i64: 1, 128>}, {pipeline_mode = #tpu.pipeline_mode<synchronous>, transform_indices = @transform_17, window_bounds = array<i64: 8, 128>}]} {
    %c1 = arith.constant 1 : index
    %c0 = arith.constant 0 : index
    %0 = vector.load %arg1[%c1, %c0] : memref<88x128xf32, #tpu.memory_space<vmem>>, vector<72x128xf32>
    %1 = arith.truncf %0 : vector<72x128xf32> to vector<72x128xbf16>
    %c0_0 = arith.constant 0 : index
    %c0_1 = arith.constant 0 : index
    %c0_2 = arith.constant 0 : index
    %2 = vector.load %arg4[%c0_0, %c0_1, %c0_2] : memref<9x128x128xbf16, #tpu.memory_space<vmem>>, vector<1x128x128xbf16>
    %3 = vector.shape_cast %2 : vector<1x128x128xbf16> to vector<128x128xbf16>
    %cst = arith.constant dense<0.000000e+00> : vector<72x128xf32>
    %4 = tpu.matmul %1, %3, %cst {dimension_numbers = #tpu.dot_dimension_numbers<[1], [0], [0], [1], [0, 0, 1, 1], [], []>} : vector<72x128xbf16>, vector<128x128xbf16>, vector<72x128xf32> -> vector<72x128xf32>
    %c2 = arith.constant 2 : index
    %c0_3 = arith.constant 0 : index
    %5 = vector.load %arg1[%c2, %c0_3] : memref<88x128xf32, #tpu.memory_space<vmem>>, vector<72x128xf32>
    %6 = arith.truncf %5 : vector<72x128xf32> to vector<72x128xbf16>
    %c1_4 = arith.constant 1 : index
    %c0_5 = arith.constant 0 : index
    %c0_6 = arith.constant 0 : index
    %7 = vector.load %arg4[%c1_4, %c0_5, %c0_6] : memref<9x128x128xbf16, #tpu.memory_space<vmem>>, vector<1x128x128xbf16>
    %8 = vector.shape_cast %7 : vector<1x128x128xbf16> to vector<128x128xbf16>
    %cst_7 = arith.constant dense<0.000000e+00> : vector<72x128xf32>
    %9 = tpu.matmul %6, %8, %cst_7 {dimension_numbers = #tpu.dot_dimension_numbers<[1], [0], [0], [1], [0, 0, 1, 1], [], []>} : vector<72x128xbf16>, vector<128x128xbf16>, vector<72x128xf32> -> vector<72x128xf32>
    %10 = arith.addf %4, %9 : vector<72x128xf32>
    %c3 = arith.constant 3 : index
    %c0_8 = arith.constant 0 : index
    %11 = vector.load %arg1[%c3, %c0_8] : memref<88x128xf32, #tpu.memory_space<vmem>>, vector<72x128xf32>
    %12 = arith.truncf %11 : vector<72x128xf32> to vector<72x128xbf16>
    %c2_9 = arith.constant 2 : index
    %c0_10 = arith.constant 0 : index
    %c0_11 = arith.constant 0 : index
    %13 = vector.load %arg4[%c2_9, %c0_10, %c0_11] : memref<9x128x128xbf16, #tpu.memory_space<vmem>>, vector<1x128x128xbf16>
    %14 = vector.shape_cast %13 : vector<1x128x128xbf16> to vector<128x128xbf16>
    %cst_12 = arith.constant dense<0.000000e+00> : vector<72x128xf32>
    %15 = tpu.matmul %12, %14, %cst_12 {dimension_numbers = #tpu.dot_dimension_numbers<[1], [0], [0], [1], [0, 0, 1, 1], [], []>} : vector<72x128xbf16>, vector<128x128xbf16>, vector<72x128xf32> -> vector<72x128xf32>
    %16 = arith.addf %10, %15 : vector<72x128xf32>
    %c7 = arith.constant 7 : index
    %c0_13 = arith.constant 0 : index
    %17 = vector.load %arg1[%c7, %c0_13] : memref<88x128xf32, #tpu.memory_space<vmem>>, vector<72x128xf32>
    %18 = arith.truncf %17 : vector<72x128xf32> to vector<72x128xbf16>
    %c3_14 = arith.constant 3 : index
    %c0_15 = arith.constant 0 : index
    %c0_16 = arith.constant 0 : index
    %19 = vector.load %arg4[%c3_14, %c0_15, %c0_16] : memref<9x128x128xbf16, #tpu.memory_space<vmem>>, vector<1x128x128xbf16>
    %20 = vector.shape_cast %19 : vector<1x128x128xbf16> to vector<128x128xbf16>
    %cst_17 = arith.constant dense<0.000000e+00> : vector<72x128xf32>
    %21 = tpu.matmul %18, %20, %cst_17 {dimension_numbers = #tpu.dot_dimension_numbers<[1], [0], [0], [1], [0, 0, 1, 1], [], []>} : vector<72x128xbf16>, vector<128x128xbf16>, vector<72x128xf32> -> vector<72x128xf32>
    %22 = arith.addf %16, %21 : vector<72x128xf32>
    %c8 = arith.constant 8 : index
    %c0_18 = arith.constant 0 : index
    %23 = vector.load %arg1[%c8, %c0_18] : memref<88x128xf32, #tpu.memory_space<vmem>>, vector<72x128xf32>
    %24 = arith.truncf %23 : vector<72x128xf32> to vector<72x128xbf16>
    %c4 = arith.constant 4 : index
    %c0_19 = arith.constant 0 : index
    %c0_20 = arith.constant 0 : index
    %25 = vector.load %arg4[%c4, %c0_19, %c0_20] : memref<9x128x128xbf16, #tpu.memory_space<vmem>>, vector<1x128x128xbf16>
    %26 = vector.shape_cast %25 : vector<1x128x128xbf16> to vector<128x128xbf16>
    %cst_21 = arith.constant dense<0.000000e+00> : vector<72x128xf32>
    %27 = tpu.matmul %24, %26, %cst_21 {dimension_numbers = #tpu.dot_dimension_numbers<[1], [0], [0], [1], [0, 0, 1, 1], [], []>} : vector<72x128xbf16>, vector<128x128xbf16>, vector<72x128xf32> -> vector<72x128xf32>
    %28 = arith.addf %22, %27 : vector<72x128xf32>
    %c9 = arith.constant 9 : index
    %c0_22 = arith.constant 0 : index
    %29 = vector.load %arg1[%c9, %c0_22] : memref<88x128xf32, #tpu.memory_space<vmem>>, vector<72x128xf32>
    %30 = arith.truncf %29 : vector<72x128xf32> to vector<72x128xbf16>
    %c5 = arith.constant 5 : index
    %c0_23 = arith.constant 0 : index
    %c0_24 = arith.constant 0 : index
    %31 = vector.load %arg4[%c5, %c0_23, %c0_24] : memref<9x128x128xbf16, #tpu.memory_space<vmem>>, vector<1x128x128xbf16>
    %32 = vector.shape_cast %31 : vector<1x128x128xbf16> to vector<128x128xbf16>
    %cst_25 = arith.constant dense<0.000000e+00> : vector<72x128xf32>
    %33 = tpu.matmul %30, %32, %cst_25 {dimension_numbers = #tpu.dot_dimension_numbers<[1], [0], [0], [1], [0, 0, 1, 1], [], []>} : vector<72x128xbf16>, vector<128x128xbf16>, vector<72x128xf32> -> vector<72x128xf32>
    %34 = arith.addf %28, %33 : vector<72x128xf32>
    %c13 = arith.constant 13 : index
    %c0_26 = arith.constant 0 : index
    %35 = vector.load %arg1[%c13, %c0_26] : memref<88x128xf32, #tpu.memory_space<vmem>>, vector<72x128xf32>
    %36 = arith.truncf %35 : vector<72x128xf32> to vector<72x128xbf16>
    %c6 = arith.constant 6 : index
    %c0_27 = arith.constant 0 : index
    %c0_28 = arith.constant 0 : index
    %37 = vector.load %arg4[%c6, %c0_27, %c0_28] : memref<9x128x128xbf16, #tpu.memory_space<vmem>>, vector<1x128x128xbf16>
    %38 = vector.shape_cast %37 : vector<1x128x128xbf16> to vector<128x128xbf16>
    %cst_29 = arith.constant dense<0.000000e+00> : vector<72x128xf32>
    %39 = tpu.matmul %36, %38, %cst_29 {dimension_numbers = #tpu.dot_dimension_numbers<[1], [0], [0], [1], [0, 0, 1, 1], [], []>} : vector<72x128xbf16>, vector<128x128xbf16>, vector<72x128xf32> -> vector<72x128xf32>
    %40 = arith.addf %34, %39 : vector<72x128xf32>
    %c14 = arith.constant 14 : index
    %c0_30 = arith.constant 0 : index
    %41 = vector.load %arg1[%c14, %c0_30] : memref<88x128xf32, #tpu.memory_space<vmem>>, vector<72x128xf32>
    %42 = arith.truncf %41 : vector<72x128xf32> to vector<72x128xbf16>
    %c7_31 = arith.constant 7 : index
    %c0_32 = arith.constant 0 : index
    %c0_33 = arith.constant 0 : index
    %43 = vector.load %arg4[%c7_31, %c0_32, %c0_33] : memref<9x128x128xbf16, #tpu.memory_space<vmem>>, vector<1x128x128xbf16>
    %44 = vector.shape_cast %43 : vector<1x128x128xbf16> to vector<128x128xbf16>
    %cst_34 = arith.constant dense<0.000000e+00> : vector<72x128xf32>
    %45 = tpu.matmul %42, %44, %cst_34 {dimension_numbers = #tpu.dot_dimension_numbers<[1], [0], [0], [1], [0, 0, 1, 1], [], []>} : vector<72x128xbf16>, vector<128x128xbf16>, vector<72x128xf32> -> vector<72x128xf32>
    %46 = arith.addf %40, %45 : vector<72x128xf32>
    %c15 = arith.constant 15 : index
    %c0_35 = arith.constant 0 : index
    %47 = vector.load %arg1[%c15, %c0_35] : memref<88x128xf32, #tpu.memory_space<vmem>>, vector<72x128xf32>
    %48 = arith.truncf %47 : vector<72x128xf32> to vector<72x128xbf16>
    %c8_36 = arith.constant 8 : index
    %c0_37 = arith.constant 0 : index
    %c0_38 = arith.constant 0 : index
    %49 = vector.load %arg4[%c8_36, %c0_37, %c0_38] : memref<9x128x128xbf16, #tpu.memory_space<vmem>>, vector<1x128x128xbf16>
    %50 = vector.shape_cast %49 : vector<1x128x128xbf16> to vector<128x128xbf16>
    %cst_39 = arith.constant dense<0.000000e+00> : vector<72x128xf32>
    %51 = tpu.matmul %48, %50, %cst_39 {dimension_numbers = #tpu.dot_dimension_numbers<[1], [0], [0], [1], [0, 0, 1, 1], [], []>} : vector<72x128xbf16>, vector<128x128xbf16>, vector<72x128xf32> -> vector<72x128xf32>
    %52 = arith.addf %46, %51 : vector<72x128xf32>
    %c0_40 = arith.constant 0 : index
    %c0_41 = arith.constant 0 : index
    %53 = vector.load %arg5[%c0_40, %c0_41] : memref<1x128xf32, #tpu.memory_space<vmem>>, vector<1x128xf32>
    %54 = vector.broadcast %53 : vector<1x128xf32> to vector<72x128xf32>
    %55 = arith.addf %52, %54 : vector<72x128xf32>
    %cst_42 = arith.constant 0.000000e+00 : f32
    %56 = vector.broadcast %cst_42 : f32 to vector<72x128xf32>
    %57 = arith.maximumf %55, %56 : vector<72x128xf32>
    %cst_43 = arith.constant 0.000000e+00 : f32
    %58 = vector.broadcast %cst_43 : f32 to vector<88x128xf32>
    %c0_44 = arith.constant 0 : index
    %c0_45 = arith.constant 0 : index
    %59 = vector.load %arg19[%c0_44, %c0_45] : memref<88x128xf32, #tpu.memory_space<vmem>>, vector<88x128xf32>
    tpu.vector_store %arg19[%c0_44, %c0_45], %58 {strides = array<i32>} : memref<88x128xf32, #tpu.memory_space<vmem>>, vector<88x128xf32>,
    %c0_46 = arith.constant 0 : index
    %c0_47 = arith.constant 0 : index
    %60 = vector.load %arg2[%c0_46, %c0_47] : memref<72x128xf32, #tpu.memory_space<vmem>>, vector<72x128xf32>
    %61 = arith.mulf %57, %60 : vector<72x128xf32>
    %c8_48 = arith.constant 8 : index
    %c0_49 = arith.constant 0 : index
    %62 = vector.load %arg19[%c8_48, %c0_49] : memref<88x128xf32, #tpu.memory_space<vmem>>, vector<72x128xf32>
    tpu.vector_store %arg19[%c8_48, %c0_49], %61 {strides = array<i32>} : memref<88x128xf32, #tpu.memory_space<vmem>>, vector<72x128xf32>,
    %c1_50 = arith.constant 1 : index
    %c0_51 = arith.constant 0 : index
    %63 = vector.load %arg19[%c1_50, %c0_51] : memref<88x128xf32, #tpu.memory_space<vmem>>, vector<72x128xf32>
    %64 = arith.truncf %63 : vector<72x128xf32> to vector<72x128xbf16>
    %c0_52 = arith.constant 0 : index
    %c0_53 = arith.constant 0 : index
    %c0_54 = arith.constant 0 : index
    %65 = vector.load %arg6[%c0_52, %c0_53, %c0_54] : memref<9x128x128xbf16, #tpu.memory_space<vmem>>, vector<1x128x128xbf16>
    %66 = vector.shape_cast %65 : vector<1x128x128xbf16> to vector<128x128xbf16>
    %cst_55 = arith.constant dense<0.000000e+00> : vector<72x128xf32>
    %67 = tpu.matmul %64, %66, %cst_55 {dimension_numbers = #tpu.dot_dimension_numbers<[1], [0], [0], [1], [0, 0, 1, 1], [], []>} : vector<72x128xbf16>, vector<128x128xbf16>, vector<72x128xf32> -> vector<72x128xf32>
    %c2_56 = arith.constant 2 : index
    %c0_57 = arith.constant 0 : index
    %68 = vector.load %arg19[%c2_56, %c0_57] : memref<88x128xf32, #tpu.memory_space<vmem>>, vector<72x128xf32>
    %69 = arith.truncf %68 : vector<72x128xf32> to vector<72x128xbf16>
    %c1_58 = arith.constant 1 : index
    %c0_59 = arith.constant 0 : index
    %c0_60 = arith.constant 0 : index
    %70 = vector.load %arg6[%c1_58, %c0_59, %c0_60] : memref<9x128x128xbf16, #tpu.memory_space<vmem>>, vector<1x128x128xbf16>
    %71 = vector.shape_cast %70 : vector<1x128x128xbf16> to vector<128x128xbf16>
    %cst_61 = arith.constant dense<0.000000e+00> : vector<72x128xf32>
    %72 = tpu.matmul %69, %71, %cst_61 {dimension_numbers = #tpu.dot_dimension_numbers<[1], [0], [0], [1], [0, 0, 1, 1], [], []>} : vector<72x128xbf16>, vector<128x128xbf16>, vector<72x128xf32> -> vector<72x128xf32>
    %73 = arith.addf %67, %72 : vector<72x128xf32>
    %c3_62 = arith.constant 3 : index
    %c0_63 = arith.constant 0 : index
    %74 = vector.load %arg19[%c3_62, %c0_63] : memref<88x128xf32, #tpu.memory_space<vmem>>, vector<72x128xf32>
    %75 = arith.truncf %74 : vector<72x128xf32> to vector<72x128xbf16>
    %c2_64 = arith.constant 2 : index
    %c0_65 = arith.constant 0 : index
    %c0_66 = arith.constant 0 : index
    %76 = vector.load %arg6[%c2_64, %c0_65, %c0_66] : memref<9x128x128xbf16, #tpu.memory_space<vmem>>, vector<1x128x128xbf16>
    %77 = vector.shape_cast %76 : vector<1x128x128xbf16> to vector<128x128xbf16>
    %cst_67 = arith.constant dense<0.000000e+00> : vector<72x128xf32>
    %78 = tpu.matmul %75, %77, %cst_67 {dimension_numbers = #tpu.dot_dimension_numbers<[1], [0], [0], [1], [0, 0, 1, 1], [], []>} : vector<72x128xbf16>, vector<128x128xbf16>, vector<72x128xf32> -> vector<72x128xf32>
    %79 = arith.addf %73, %78 : vector<72x128xf32>
    %c7_68 = arith.constant 7 : index
    %c0_69 = arith.constant 0 : index
    %80 = vector.load %arg19[%c7_68, %c0_69] : memref<88x128xf32, #tpu.memory_space<vmem>>, vector<72x128xf32>
    %81 = arith.truncf %80 : vector<72x128xf32> to vector<72x128xbf16>
    %c3_70 = arith.constant 3 : index
    %c0_71 = arith.constant 0 : index
    %c0_72 = arith.constant 0 : index
    %82 = vector.load %arg6[%c3_70, %c0_71, %c0_72] : memref<9x128x128xbf16, #tpu.memory_space<vmem>>, vector<1x128x128xbf16>
    %83 = vector.shape_cast %82 : vector<1x128x128xbf16> to vector<128x128xbf16>
    %cst_73 = arith.constant dense<0.000000e+00> : vector<72x128xf32>
    %84 = tpu.matmul %81, %83, %cst_73 {dimension_numbers = #tpu.dot_dimension_numbers<[1], [0], [0], [1], [0, 0, 1, 1], [], []>} : vector<72x128xbf16>, vector<128x128xbf16>, vector<72x128xf32> -> vector<72x128xf32>
    %85 = arith.addf %79, %84 : vector<72x128xf32>
    %c8_74 = arith.constant 8 : index
    %c0_75 = arith.constant 0 : index
    %86 = vector.load %arg19[%c8_74, %c0_75] : memref<88x128xf32, #tpu.memory_space<vmem>>, vector<72x128xf32>
    %87 = arith.truncf %86 : vector<72x128xf32> to vector<72x128xbf16>
    %c4_76 = arith.constant 4 : index
    %c0_77 = arith.constant 0 : index
    %c0_78 = arith.constant 0 : index
    %88 = vector.load %arg6[%c4_76, %c0_77, %c0_78] : memref<9x128x128xbf16, #tpu.memory_space<vmem>>, vector<1x128x128xbf16>
    %89 = vector.shape_cast %88 : vector<1x128x128xbf16> to vector<128x128xbf16>
    %cst_79 = arith.constant dense<0.000000e+00> : vector<72x128xf32>
    %90 = tpu.matmul %87, %89, %cst_79 {dimension_numbers = #tpu.dot_dimension_numbers<[1], [0], [0], [1], [0, 0, 1, 1], [], []>} : vector<72x128xbf16>, vector<128x128xbf16>, vector<72x128xf32> -> vector<72x128xf32>
    %91 = arith.addf %85, %90 : vector<72x128xf32>
    %c9_80 = arith.constant 9 : index
    %c0_81 = arith.constant 0 : index
    %92 = vector.load %arg19[%c9_80, %c0_81] : memref<88x128xf32, #tpu.memory_space<vmem>>, vector<72x128xf32>
    %93 = arith.truncf %92 : vector<72x128xf32> to vector<72x128xbf16>
    %c5_82 = arith.constant 5 : index
    %c0_83 = arith.constant 0 : index
    %c0_84 = arith.constant 0 : index
    %94 = vector.load %arg6[%c5_82, %c0_83, %c0_84] : memref<9x128x128xbf16, #tpu.memory_space<vmem>>, vector<1x128x128xbf16>
    %95 = vector.shape_cast %94 : vector<1x128x128xbf16> to vector<128x128xbf16>
    %cst_85 = arith.constant dense<0.000000e+00> : vector<72x128xf32>
    %96 = tpu.matmul %93, %95, %cst_85 {dimension_numbers = #tpu.dot_dimension_numbers<[1], [0], [0], [1], [0, 0, 1, 1], [], []>} : vector<72x128xbf16>, vector<128x128xbf16>, vector<72x128xf32> -> vector<72x128xf32>
    %97 = arith.addf %91, %96 : vector<72x128xf32>
    %c13_86 = arith.constant 13 : index
    %c0_87 = arith.constant 0 : index
    %98 = vector.load %arg19[%c13_86, %c0_87] : memref<88x128xf32, #tpu.memory_space<vmem>>, vector<72x128xf32>
    %99 = arith.truncf %98 : vector<72x128xf32> to vector<72x128xbf16>
    %c6_88 = arith.constant 6 : index
    %c0_89 = arith.constant 0 : index
    %c0_90 = arith.constant 0 : index
    %100 = vector.load %arg6[%c6_88, %c0_89, %c0_90] : memref<9x128x128xbf16, #tpu.memory_space<vmem>>, vector<1x128x128xbf16>
    %101 = vector.shape_cast %100 : vector<1x128x128xbf16> to vector<128x128xbf16>
    %cst_91 = arith.constant dense<0.000000e+00> : vector<72x128xf32>
    %102 = tpu.matmul %99, %101, %cst_91 {dimension_numbers = #tpu.dot_dimension_numbers<[1], [0], [0], [1], [0, 0, 1, 1], [], []>} : vector<72x128xbf16>, vector<128x128xbf16>, vector<72x128xf32> -> vector<72x128xf32>
    %103 = arith.addf %97, %102 : vector<72x128xf32>
    %c14_92 = arith.constant 14 : index
    %c0_93 = arith.constant 0 : index
    %104 = vector.load %arg19[%c14_92, %c0_93] : memref<88x128xf32, #tpu.memory_space<vmem>>, vector<72x128xf32>
    %105 = arith.truncf %104 : vector<72x128xf32> to vector<72x128xbf16>
    %c7_94 = arith.constant 7 : index
    %c0_95 = arith.constant 0 : index
    %c0_96 = arith.constant 0 : index
    %106 = vector.load %arg6[%c7_94, %c0_95, %c0_96] : memref<9x128x128xbf16, #tpu.memory_space<vmem>>, vector<1x128x128xbf16>
    %107 = vector.shape_cast %106 : vector<1x128x128xbf16> to vector<128x128xbf16>
    %cst_97 = arith.constant dense<0.000000e+00> : vector<72x128xf32>
    %108 = tpu.matmul %105, %107, %cst_97 {dimension_numbers = #tpu.dot_dimension_numbers<[1], [0], [0], [1], [0, 0, 1, 1], [], []>} : vector<72x128xbf16>, vector<128x128xbf16>, vector<72x128xf32> -> vector<72x128xf32>
    %109 = arith.addf %103, %108 : vector<72x128xf32>
    %c15_98 = arith.constant 15 : index
    %c0_99 = arith.constant 0 : index
    %110 = vector.load %arg19[%c15_98, %c0_99] : memref<88x128xf32, #tpu.memory_space<vmem>>, vector<72x128xf32>
    %111 = arith.truncf %110 : vector<72x128xf32> to vector<72x128xbf16>
    %c8_100 = arith.constant 8 : index
    %c0_101 = arith.constant 0 : index
    %c0_102 = arith.constant 0 : index
    %112 = vector.load %arg6[%c8_100, %c0_101, %c0_102] : memref<9x128x128xbf16, #tpu.memory_space<vmem>>, vector<1x128x128xbf16>
    %113 = vector.shape_cast %112 : vector<1x128x128xbf16> to vector<128x128xbf16>
    %cst_103 = arith.constant dense<0.000000e+00> : vector<72x128xf32>
    %114 = tpu.matmul %111, %113, %cst_103 {dimension_numbers = #tpu.dot_dimension_numbers<[1], [0], [0], [1], [0, 0, 1, 1], [], []>} : vector<72x128xbf16>, vector<128x128xbf16>, vector<72x128xf32> -> vector<72x128xf32>
    %115 = arith.addf %109, %114 : vector<72x128xf32>
    %c0_104 = arith.constant 0 : index
    %c0_105 = arith.constant 0 : index
    %116 = vector.load %arg7[%c0_104, %c0_105] : memref<1x128xf32, #tpu.memory_space<vmem>>, vector<1x128xf32>
    %117 = vector.broadcast %116 : vector<1x128xf32> to vector<72x128xf32>
    %118 = arith.addf %115, %117 : vector<72x128xf32>
    %cst_106 = arith.constant 0.000000e+00 : f32
    %119 = vector.broadcast %cst_106 : f32 to vector<72x128xf32>
    %120 = arith.maximumf %118, %119 : vector<72x128xf32>
    %121 = vector.extract_strided_slice %120 {offsets = [0, 0], sizes = [58, 128], strides = [1, 1]} : vector<72x128xf32> to vector<58x128xf32>
    %122 = vector.extract_strided_slice %120 {offsets = [1, 0], sizes = [58, 128], strides = [1, 1]} : vector<72x128xf32> to vector<58x128xf32>
    %123 = arith.maximumf %121, %122 : vector<58x128xf32>
    %124 = vector.extract_strided_slice %120 {offsets = [6, 0], sizes = [58, 128], strides = [1, 1]} : vector<72x128xf32> to vector<58x128xf32>
    %125 = vector.extract_strided_slice %120 {offsets = [7, 0], sizes = [58, 128], strides = [1, 1]} : vector<72x128xf32> to vector<58x128xf32>
    %126 = arith.maximumf %124, %125 : vector<58x128xf32>
    %127 = arith.maximumf %123, %126 : vector<58x128xf32>
    %cst_107 = arith.constant 0.000000e+00 : f32
    %128 = vector.broadcast %cst_107 : f32 to vector<48x128xf32>
    %c0_108 = arith.constant 0 : index
    %c0_109 = arith.constant 0 : index
    %129 = vector.load %arg20[%c0_108, %c0_109] : memref<48x128xf32, #tpu.memory_space<vmem>>, vector<48x128xf32>
    tpu.vector_store %arg20[%c0_108, %c0_109], %128 {strides = array<i32>} : memref<48x128xf32, #tpu.memory_space<vmem>>, vector<48x128xf32>,
    %130 = vector.extract_strided_slice %127 {offsets = [7, 0], sizes = [1, 128], strides = [1, 1]} : vector<58x128xf32> to vector<1x128xf32>
    %c13_110 = arith.constant 13 : index
    %c0_111 = arith.constant 0 : index
    %131 = vector.load %arg20[%c13_110, %c0_111] : memref<48x128xf32, #tpu.memory_space<vmem>>, vector<1x128xf32>
    tpu.vector_store %arg20[%c13_110, %c0_111], %130 {strides = array<i32>} : memref<48x128xf32, #tpu.memory_space<vmem>>, vector<1x128xf32>,
    %132 = vector.extract_strided_slice %127 {offsets = [9, 0], sizes = [1, 128], strides = [1, 1]} : vector<58x128xf32> to vector<1x128xf32>
    %c14_112 = arith.constant 14 : index
    %c0_113 = arith.constant 0 : index
    %133 = vector.load %arg20[%c14_112, %c0_113] : memref<48x128xf32, #tpu.memory_space<vmem>>, vector<1x128xf32>
    tpu.vector_store %arg20[%c14_112, %c0_113], %132 {strides = array<i32>} : memref<48x128xf32, #tpu.memory_space<vmem>>, vector<1x128xf32>,
    %134 = vector.extract_strided_slice %127 {offsets = [19, 0], sizes = [1, 128], strides = [1, 1]} : vector<58x128xf32> to vector<1x128xf32>
    %c17 = arith.constant 17 : index
    %c0_114 = arith.constant 0 : index
    %135 = vector.load %arg20[%c17, %c0_114] : memref<48x128xf32, #tpu.memory_space<vmem>>, vector<1x128xf32>
    tpu.vector_store %arg20[%c17, %c0_114], %134 {strides = array<i32>} : memref<48x128xf32, #tpu.memory_space<vmem>>, vector<1x128xf32>,
    %136 = vector.extract_strided_slice %127 {offsets = [21, 0], sizes = [1, 128], strides = [1, 1]} : vector<58x128xf32> to vector<1x128xf32>
    %c18 = arith.constant 18 : index
    %c0_115 = arith.constant 0 : index
    %137 = vector.load %arg20[%c18, %c0_115] : memref<48x128xf32, #tpu.memory_space<vmem>>, vector<1x128xf32>
    tpu.vector_store %arg20[%c18, %c0_115], %136 {strides = array<i32>} : memref<48x128xf32, #tpu.memory_space<vmem>>, vector<1x128xf32>,
    %138 = vector.extract_strided_slice %127 {offsets = [43, 0], sizes = [1, 128], strides = [1, 1]} : vector<58x128xf32> to vector<1x128xf32>
    %c29 = arith.constant 29 : index
    %c0_116 = arith.constant 0 : index
    %139 = vector.load %arg20[%c29, %c0_116] : memref<48x128xf32, #tpu.memory_space<vmem>>, vector<1x128xf32>
    tpu.vector_store %arg20[%c29, %c0_116], %138 {strides = array<i32>} : memref<48x128xf32, #tpu.memory_space<vmem>>, vector<1x128xf32>,
    %140 = vector.extract_strided_slice %127 {offsets = [45, 0], sizes = [1, 128], strides = [1, 1]} : vector<58x128xf32> to vector<1x128xf32>
    %c30 = arith.constant 30 : index
    %c0_117 = arith.constant 0 : index
    %141 = vector.load %arg20[%c30, %c0_117] : memref<48x128xf32, #tpu.memory_space<vmem>>, vector<1x128xf32>
    tpu.vector_store %arg20[%c30, %c0_117], %140 {strides = array<i32>} : memref<48x128xf32, #tpu.memory_space<vmem>>, vector<1x128xf32>,
    %142 = vector.extract_strided_slice %127 {offsets = [55, 0], sizes = [1, 128], strides = [1, 1]} : vector<58x128xf32> to vector<1x128xf32>
    %c33 = arith.constant 33 : index
    %c0_118 = arith.constant 0 : index
    %143 = vector.load %arg20[%c33, %c0_118] : memref<48x128xf32, #tpu.memory_space<vmem>>, vector<1x128xf32>
    tpu.vector_store %arg20[%c33, %c0_118], %142 {strides = array<i32>} : memref<48x128xf32, #tpu.memory_space<vmem>>, vector<1x128xf32>,
    %144 = vector.extract_strided_slice %127 {offsets = [57, 0], sizes = [1, 128], strides = [1, 1]} : vector<58x128xf32> to vector<1x128xf32>
    %c34 = arith.constant 34 : index
    %c0_119 = arith.constant 0 : index
    %145 = vector.load %arg20[%c34, %c0_119] : memref<48x128xf32, #tpu.memory_space<vmem>>, vector<1x128xf32>
    tpu.vector_store %arg20[%c34, %c0_119], %144 {strides = array<i32>} : memref<48x128xf32, #tpu.memory_space<vmem>>, vector<1x128xf32>,
    %c3_120 = arith.constant 3 : index
    %c0_121 = arith.constant 0 : index
    %146 = vector.load %arg20[%c3_120, %c0_121] : memref<48x128xf32, #tpu.memory_space<vmem>>, vector<32x128xf32>
    %147 = arith.truncf %146 : vector<32x128xf32> to vector<32x128xbf16>
    %c0_122 = arith.constant 0 : index
    %c0_123 = arith.constant 0 : index
    %c0_124 = arith.constant 0 : index
    %148 = vector.load %arg8[%c0_122, %c0_123, %c0_124] : memref<9x128x128xbf16, #tpu.memory_space<vmem>>, vector<1x128x128xbf16>
    %149 = vector.shape_cast %148 : vector<1x128x128xbf16> to vector<128x128xbf16>
    %cst_125 = arith.constant dense<0.000000e+00> : vector<32x128xf32>
    %150 = tpu.matmul %147, %149, %cst_125 {dimension_numbers = #tpu.dot_dimension_numbers<[1], [0], [0], [1], [0, 0, 1, 1], [], []>} : vector<32x128xbf16>, vector<128x128xbf16>, vector<32x128xf32> -> vector<32x128xf32>
    %c4_126 = arith.constant 4 : index
    %c0_127 = arith.constant 0 : index
    %151 = vector.load %arg20[%c4_126, %c0_127] : memref<48x128xf32, #tpu.memory_space<vmem>>, vector<32x128xf32>
    %152 = arith.truncf %151 : vector<32x128xf32> to vector<32x128xbf16>
    %c1_128 = arith.constant 1 : index
    %c0_129 = arith.constant 0 : index
    %c0_130 = arith.constant 0 : index
    %153 = vector.load %arg8[%c1_128, %c0_129, %c0_130] : memref<9x128x128xbf16, #tpu.memory_space<vmem>>, vector<1x128x128xbf16>
    %154 = vector.shape_cast %153 : vector<1x128x128xbf16> to vector<128x128xbf16>
    %cst_131 = arith.constant dense<0.000000e+00> : vector<32x128xf32>
    %155 = tpu.matmul %152, %154, %cst_131 {dimension_numbers = #tpu.dot_dimension_numbers<[1], [0], [0], [1], [0, 0, 1, 1], [], []>} : vector<32x128xbf16>, vector<128x128xbf16>, vector<32x128xf32> -> vector<32x128xf32>
    %156 = arith.addf %150, %155 : vector<32x128xf32>
    %c5_132 = arith.constant 5 : index
    %c0_133 = arith.constant 0 : index
    %157 = vector.load %arg20[%c5_132, %c0_133] : memref<48x128xf32, #tpu.memory_space<vmem>>, vector<32x128xf32>
    %158 = arith.truncf %157 : vector<32x128xf32> to vector<32x128xbf16>
    %c2_134 = arith.constant 2 : index
    %c0_135 = arith.constant 0 : index
    %c0_136 = arith.constant 0 : index
    %159 = vector.load %arg8[%c2_134, %c0_135, %c0_136] : memref<9x128x128xbf16, #tpu.memory_space<vmem>>, vector<1x128x128xbf16>
    %160 = vector.shape_cast %159 : vector<1x128x128xbf16> to vector<128x128xbf16>
    %cst_137 = arith.constant dense<0.000000e+00> : vector<32x128xf32>
    %161 = tpu.matmul %158, %160, %cst_137 {dimension_numbers = #tpu.dot_dimension_numbers<[1], [0], [0], [1], [0, 0, 1, 1], [], []>} : vector<32x128xbf16>, vector<128x128xbf16>, vector<32x128xf32> -> vector<32x128xf32>
    %162 = arith.addf %156, %161 : vector<32x128xf32>
    %c7_138 = arith.constant 7 : index
    %c0_139 = arith.constant 0 : index
    %163 = vector.load %arg20[%c7_138, %c0_139] : memref<48x128xf32, #tpu.memory_space<vmem>>, vector<32x128xf32>
    %164 = arith.truncf %163 : vector<32x128xf32> to vector<32x128xbf16>
    %c3_140 = arith.constant 3 : index
    %c0_141 = arith.constant 0 : index
    %c0_142 = arith.constant 0 : index
    %165 = vector.load %arg8[%c3_140, %c0_141, %c0_142] : memref<9x128x128xbf16, #tpu.memory_space<vmem>>, vector<1x128x128xbf16>
    %166 = vector.shape_cast %165 : vector<1x128x128xbf16> to vector<128x128xbf16>
    %cst_143 = arith.constant dense<0.000000e+00> : vector<32x128xf32>
    %167 = tpu.matmul %164, %166, %cst_143 {dimension_numbers = #tpu.dot_dimension_numbers<[1], [0], [0], [1], [0, 0, 1, 1], [], []>} : vector<32x128xbf16>, vector<128x128xbf16>, vector<32x128xf32> -> vector<32x128xf32>
    %168 = arith.addf %162, %167 : vector<32x128xf32>
    %c8_144 = arith.constant 8 : index
    %c0_145 = arith.constant 0 : index
    %169 = vector.load %arg20[%c8_144, %c0_145] : memref<48x128xf32, #tpu.memory_space<vmem>>, vector<32x128xf32>
    %170 = arith.truncf %169 : vector<32x128xf32> to vector<32x128xbf16>
    %c4_146 = arith.constant 4 : index
    %c0_147 = arith.constant 0 : index
    %c0_148 = arith.constant 0 : index
    %171 = vector.load %arg8[%c4_146, %c0_147, %c0_148] : memref<9x128x128xbf16, #tpu.memory_space<vmem>>, vector<1x128x128xbf16>
    %172 = vector.shape_cast %171 : vector<1x128x128xbf16> to vector<128x128xbf16>
    %cst_149 = arith.constant dense<0.000000e+00> : vector<32x128xf32>
    %173 = tpu.matmul %170, %172, %cst_149 {dimension_numbers = #tpu.dot_dimension_numbers<[1], [0], [0], [1], [0, 0, 1, 1], [], []>} : vector<32x128xbf16>, vector<128x128xbf16>, vector<32x128xf32> -> vector<32x128xf32>
    %174 = arith.addf %168, %173 : vector<32x128xf32>
    %c9_150 = arith.constant 9 : index
    %c0_151 = arith.constant 0 : index
    %175 = vector.load %arg20[%c9_150, %c0_151] : memref<48x128xf32, #tpu.memory_space<vmem>>, vector<32x128xf32>
    %176 = arith.truncf %175 : vector<32x128xf32> to vector<32x128xbf16>
    %c5_152 = arith.constant 5 : index
    %c0_153 = arith.constant 0 : index
    %c0_154 = arith.constant 0 : index
    %177 = vector.load %arg8[%c5_152, %c0_153, %c0_154] : memref<9x128x128xbf16, #tpu.memory_space<vmem>>, vector<1x128x128xbf16>
    %178 = vector.shape_cast %177 : vector<1x128x128xbf16> to vector<128x128xbf16>
    %cst_155 = arith.constant dense<0.000000e+00> : vector<32x128xf32>
    %179 = tpu.matmul %176, %178, %cst_155 {dimension_numbers = #tpu.dot_dimension_numbers<[1], [0], [0], [1], [0, 0, 1, 1], [], []>} : vector<32x128xbf16>, vector<128x128xbf16>, vector<32x128xf32> -> vector<32x128xf32>
    %180 = arith.addf %174, %179 : vector<32x128xf32>
    %c11 = arith.constant 11 : index
    %c0_156 = arith.constant 0 : index
    %181 = vector.load %arg20[%c11, %c0_156] : memref<48x128xf32, #tpu.memory_space<vmem>>, vector<32x128xf32>
    %182 = arith.truncf %181 : vector<32x128xf32> to vector<32x128xbf16>
    %c6_157 = arith.constant 6 : index
    %c0_158 = arith.constant 0 : index
    %c0_159 = arith.constant 0 : index
    %183 = vector.load %arg8[%c6_157, %c0_158, %c0_159] : memref<9x128x128xbf16, #tpu.memory_space<vmem>>, vector<1x128x128xbf16>
    %184 = vector.shape_cast %183 : vector<1x128x128xbf16> to vector<128x128xbf16>
    %cst_160 = arith.constant dense<0.000000e+00> : vector<32x128xf32>
    %185 = tpu.matmul %182, %184, %cst_160 {dimension_numbers = #tpu.dot_dimension_numbers<[1], [0], [0], [1], [0, 0, 1, 1], [], []>} : vector<32x128xbf16>, vector<128x128xbf16>, vector<32x128xf32> -> vector<32x128xf32>
    %186 = arith.addf %180, %185 : vector<32x128xf32>
    %c12 = arith.constant 12 : index
    %c0_161 = arith.constant 0 : index
    %187 = vector.load %arg20[%c12, %c0_161] : memref<48x128xf32, #tpu.memory_space<vmem>>, vector<32x128xf32>
    %188 = arith.truncf %187 : vector<32x128xf32> to vector<32x128xbf16>
    %c7_162 = arith.constant 7 : index
    %c0_163 = arith.constant 0 : index
    %c0_164 = arith.constant 0 : index
    %189 = vector.load %arg8[%c7_162, %c0_163, %c0_164] : memref<9x128x128xbf16, #tpu.memory_space<vmem>>, vector<1x128x128xbf16>
    %190 = vector.shape_cast %189 : vector<1x128x128xbf16> to vector<128x128xbf16>
    %cst_165 = arith.constant dense<0.000000e+00> : vector<32x128xf32>
    %191 = tpu.matmul %188, %190, %cst_165 {dimension_numbers = #tpu.dot_dimension_numbers<[1], [0], [0], [1], [0, 0, 1, 1], [], []>} : vector<32x128xbf16>, vector<128x128xbf16>, vector<32x128xf32> -> vector<32x128xf32>
    %192 = arith.addf %186, %191 : vector<32x128xf32>
    %c13_166 = arith.constant 13 : index
    %c0_167 = arith.constant 0 : index
    %193 = vector.load %arg20[%c13_166, %c0_167] : memref<48x128xf32, #tpu.memory_space<vmem>>, vector<32x128xf32>
    %194 = arith.truncf %193 : vector<32x128xf32> to vector<32x128xbf16>
    %c8_168 = arith.constant 8 : index
    %c0_169 = arith.constant 0 : index
    %c0_170 = arith.constant 0 : index
    %195 = vector.load %arg8[%c8_168, %c0_169, %c0_170] : memref<9x128x128xbf16, #tpu.memory_space<vmem>>, vector<1x128x128xbf16>
    %196 = vector.shape_cast %195 : vector<1x128x128xbf16> to vector<128x128xbf16>
    %cst_171 = arith.constant dense<0.000000e+00> : vector<32x128xf32>
    %197 = tpu.matmul %194, %196, %cst_171 {dimension_numbers = #tpu.dot_dimension_numbers<[1], [0], [0], [1], [0, 0, 1, 1], [], []>} : vector<32x128xbf16>, vector<128x128xbf16>, vector<32x128xf32> -> vector<32x128xf32>
    %198 = arith.addf %192, %197 : vector<32x128xf32>
    %c0_172 = arith.constant 0 : index
    %c0_173 = arith.constant 0 : index
    %199 = vector.load %arg9[%c0_172, %c0_173] : memref<1x128xf32, #tpu.memory_space<vmem>>, vector<1x128xf32>
    %200 = vector.broadcast %199 : vector<1x128xf32> to vector<32x128xf32>
    %201 = arith.addf %198, %200 : vector<32x128xf32>
    %cst_174 = arith.constant 0.000000e+00 : f32
    %202 = vector.broadcast %cst_174 : f32 to vector<32x128xf32>
    %203 = arith.maximumf %201, %202 : vector<32x128xf32>
    %cst_175 = arith.constant 0.000000e+00 : f32
    %204 = vector.broadcast %cst_175 : f32 to vector<48x128xf32>
    %c0_176 = arith.constant 0 : index
    %c0_177 = arith.constant 0 : index
    %205 = vector.load %arg21[%c0_176, %c0_177] : memref<48x128xf32, #tpu.memory_space<vmem>>, vector<48x128xf32>
    tpu.vector_store %arg21[%c0_176, %c0_177], %204 {strides = array<i32>} : memref<48x128xf32, #tpu.memory_space<vmem>>, vector<48x128xf32>,
    %c0_178 = arith.constant 0 : index
    %c0_179 = arith.constant 0 : index
    %206 = vector.load %arg3[%c0_178, %c0_179] : memref<32x128xf32, #tpu.memory_space<vmem>>, vector<32x128xf32>
    %207 = arith.mulf %203, %206 : vector<32x128xf32>
    %c8_180 = arith.constant 8 : index
    %c0_181 = arith.constant 0 : index
    %208 = vector.load %arg21[%c8_180, %c0_181] : memref<48x128xf32, #tpu.memory_space<vmem>>, vector<32x128xf32>
    tpu.vector_store %arg21[%c8_180, %c0_181], %207 {strides = array<i32>} : memref<48x128xf32, #tpu.memory_space<vmem>>, vector<32x128xf32>,
    %c3_182 = arith.constant 3 : index
    %c0_183 = arith.constant 0 : index
    %209 = vector.load %arg21[%c3_182, %c0_183] : memref<48x128xf32, #tpu.memory_space<vmem>>, vector<32x128xf32>
    %210 = arith.truncf %209 : vector<32x128xf32> to vector<32x128xbf16>
    %c0_184 = arith.constant 0 : index
    %c0_185 = arith.constant 0 : index
    %c0_186 = arith.constant 0 : index
    %211 = vector.load %arg10[%c0_184, %c0_185, %c0_186] : memref<9x128x256xbf16, #tpu.memory_space<vmem>>, vector<1x128x256xbf16>
    %212 = vector.shape_cast %211 : vector<1x128x256xbf16> to vector<128x256xbf16>
    %cst_187 = arith.constant dense<0.000000e+00> : vector<32x256xf32>
    %213 = tpu.matmul %210, %212, %cst_187 {dimension_numbers = #tpu.dot_dimension_numbers<[1], [0], [0], [1], [0, 0, 1, 1], [], []>} : vector<32x128xbf16>, vector<128x256xbf16>, vector<32x256xf32> -> vector<32x256xf32>
    %c4_188 = arith.constant 4 : index
    %c0_189 = arith.constant 0 : index
    %214 = vector.load %arg21[%c4_188, %c0_189] : memref<48x128xf32, #tpu.memory_space<vmem>>, vector<32x128xf32>
    %215 = arith.truncf %214 : vector<32x128xf32> to vector<32x128xbf16>
    %c1_190 = arith.constant 1 : index
    %c0_191 = arith.constant 0 : index
    %c0_192 = arith.constant 0 : index
    %216 = vector.load %arg10[%c1_190, %c0_191, %c0_192] : memref<9x128x256xbf16, #tpu.memory_space<vmem>>, vector<1x128x256xbf16>
    %217 = vector.shape_cast %216 : vector<1x128x256xbf16> to vector<128x256xbf16>
    %cst_193 = arith.constant dense<0.000000e+00> : vector<32x256xf32>
    %218 = tpu.matmul %215, %217, %cst_193 {dimension_numbers = #tpu.dot_dimension_numbers<[1], [0], [0], [1], [0, 0, 1, 1], [], []>} : vector<32x128xbf16>, vector<128x256xbf16>, vector<32x256xf32> -> vector<32x256xf32>
    %219 = arith.addf %213, %218 : vector<32x256xf32>
    %c5_194 = arith.constant 5 : index
    %c0_195 = arith.constant 0 : index
    %220 = vector.load %arg21[%c5_194, %c0_195] : memref<48x128xf32, #tpu.memory_space<vmem>>, vector<32x128xf32>
    %221 = arith.truncf %220 : vector<32x128xf32> to vector<32x128xbf16>
    %c2_196 = arith.constant 2 : index
    %c0_197 = arith.constant 0 : index
    %c0_198 = arith.constant 0 : index
    %222 = vector.load %arg10[%c2_196, %c0_197, %c0_198] : memref<9x128x256xbf16, #tpu.memory_space<vmem>>, vector<1x128x256xbf16>
    %223 = vector.shape_cast %222 : vector<1x128x256xbf16> to vector<128x256xbf16>
    %cst_199 = arith.constant dense<0.000000e+00> : vector<32x256xf32>
    %224 = tpu.matmul %221, %223, %cst_199 {dimension_numbers = #tpu.dot_dimension_numbers<[1], [0], [0], [1], [0, 0, 1, 1], [], []>} : vector<32x128xbf16>, vector<128x256xbf16>, vector<32x256xf32> -> vector<32x256xf32>
    %225 = arith.addf %219, %224 : vector<32x256xf32>
    %c7_200 = arith.constant 7 : index
    %c0_201 = arith.constant 0 : index
    %226 = vector.load %arg21[%c7_200, %c0_201] : memref<48x128xf32, #tpu.memory_space<vmem>>, vector<32x128xf32>
    %227 = arith.truncf %226 : vector<32x128xf32> to vector<32x128xbf16>
    %c3_202 = arith.constant 3 : index
    %c0_203 = arith.constant 0 : index
    %c0_204 = arith.constant 0 : index
    %228 = vector.load %arg10[%c3_202, %c0_203, %c0_204] : memref<9x128x256xbf16, #tpu.memory_space<vmem>>, vector<1x128x256xbf16>
    %229 = vector.shape_cast %228 : vector<1x128x256xbf16> to vector<128x256xbf16>
    %cst_205 = arith.constant dense<0.000000e+00> : vector<32x256xf32>
    %230 = tpu.matmul %227, %229, %cst_205 {dimension_numbers = #tpu.dot_dimension_numbers<[1], [0], [0], [1], [0, 0, 1, 1], [], []>} : vector<32x128xbf16>, vector<128x256xbf16>, vector<32x256xf32> -> vector<32x256xf32>
    %231 = arith.addf %225, %230 : vector<32x256xf32>
    %c8_206 = arith.constant 8 : index
    %c0_207 = arith.constant 0 : index
    %232 = vector.load %arg21[%c8_206, %c0_207] : memref<48x128xf32, #tpu.memory_space<vmem>>, vector<32x128xf32>
    %233 = arith.truncf %232 : vector<32x128xf32> to vector<32x128xbf16>
    %c4_208 = arith.constant 4 : index
    %c0_209 = arith.constant 0 : index
    %c0_210 = arith.constant 0 : index
    %234 = vector.load %arg10[%c4_208, %c0_209, %c0_210] : memref<9x128x256xbf16, #tpu.memory_space<vmem>>, vector<1x128x256xbf16>
    %235 = vector.shape_cast %234 : vector<1x128x256xbf16> to vector<128x256xbf16>
    %cst_211 = arith.constant dense<0.000000e+00> : vector<32x256xf32>
    %236 = tpu.matmul %233, %235, %cst_211 {dimension_numbers = #tpu.dot_dimension_numbers<[1], [0], [0], [1], [0, 0, 1, 1], [], []>} : vector<32x128xbf16>, vector<128x256xbf16>, vector<32x256xf32> -> vector<32x256xf32>
    %237 = arith.addf %231, %236 : vector<32x256xf32>
    %c9_212 = arith.constant 9 : index
    %c0_213 = arith.constant 0 : index
    %238 = vector.load %arg21[%c9_212, %c0_213] : memref<48x128xf32, #tpu.memory_space<vmem>>, vector<32x128xf32>
    %239 = arith.truncf %238 : vector<32x128xf32> to vector<32x128xbf16>
    %c5_214 = arith.constant 5 : index
    %c0_215 = arith.constant 0 : index
    %c0_216 = arith.constant 0 : index
    %240 = vector.load %arg10[%c5_214, %c0_215, %c0_216] : memref<9x128x256xbf16, #tpu.memory_space<vmem>>, vector<1x128x256xbf16>
    %241 = vector.shape_cast %240 : vector<1x128x256xbf16> to vector<128x256xbf16>
    %cst_217 = arith.constant dense<0.000000e+00> : vector<32x256xf32>
    %242 = tpu.matmul %239, %241, %cst_217 {dimension_numbers = #tpu.dot_dimension_numbers<[1], [0], [0], [1], [0, 0, 1, 1], [], []>} : vector<32x128xbf16>, vector<128x256xbf16>, vector<32x256xf32> -> vector<32x256xf32>
    %243 = arith.addf %237, %242 : vector<32x256xf32>
    %c11_218 = arith.constant 11 : index
    %c0_219 = arith.constant 0 : index
    %244 = vector.load %arg21[%c11_218, %c0_219] : memref<48x128xf32, #tpu.memory_space<vmem>>, vector<32x128xf32>
    %245 = arith.truncf %244 : vector<32x128xf32> to vector<32x128xbf16>
    %c6_220 = arith.constant 6 : index
    %c0_221 = arith.constant 0 : index
    %c0_222 = arith.constant 0 : index
    %246 = vector.load %arg10[%c6_220, %c0_221, %c0_222] : memref<9x128x256xbf16, #tpu.memory_space<vmem>>, vector<1x128x256xbf16>
    %247 = vector.shape_cast %246 : vector<1x128x256xbf16> to vector<128x256xbf16>
    %cst_223 = arith.constant dense<0.000000e+00> : vector<32x256xf32>
    %248 = tpu.matmul %245, %247, %cst_223 {dimension_numbers = #tpu.dot_dimension_numbers<[1], [0], [0], [1], [0, 0, 1, 1], [], []>} : vector<32x128xbf16>, vector<128x256xbf16>, vector<32x256xf32> -> vector<32x256xf32>
    %249 = arith.addf %243, %248 : vector<32x256xf32>
    %c12_224 = arith.constant 12 : index
    %c0_225 = arith.constant 0 : index
    %250 = vector.load %arg21[%c12_224, %c0_225] : memref<48x128xf32, #tpu.memory_space<vmem>>, vector<32x128xf32>
    %251 = arith.truncf %250 : vector<32x128xf32> to vector<32x128xbf16>
    %c7_226 = arith.constant 7 : index
    %c0_227 = arith.constant 0 : index
    %c0_228 = arith.constant 0 : index
    %252 = vector.load %arg10[%c7_226, %c0_227, %c0_228] : memref<9x128x256xbf16, #tpu.memory_space<vmem>>, vector<1x128x256xbf16>
    %253 = vector.shape_cast %252 : vector<1x128x256xbf16> to vector<128x256xbf16>
    %cst_229 = arith.constant dense<0.000000e+00> : vector<32x256xf32>
    %254 = tpu.matmul %251, %253, %cst_229 {dimension_numbers = #tpu.dot_dimension_numbers<[1], [0], [0], [1], [0, 0, 1, 1], [], []>} : vector<32x128xbf16>, vector<128x256xbf16>, vector<32x256xf32> -> vector<32x256xf32>
    %255 = arith.addf %249, %254 : vector<32x256xf32>
    %c13_230 = arith.constant 13 : index
    %c0_231 = arith.constant 0 : index
    %256 = vector.load %arg21[%c13_230, %c0_231] : memref<48x128xf32, #tpu.memory_space<vmem>>, vector<32x128xf32>
    %257 = arith.truncf %256 : vector<32x128xf32> to vector<32x128xbf16>
    %c8_232 = arith.constant 8 : index
    %c0_233 = arith.constant 0 : index
    %c0_234 = arith.constant 0 : index
    %258 = vector.load %arg10[%c8_232, %c0_233, %c0_234] : memref<9x128x256xbf16, #tpu.memory_space<vmem>>, vector<1x128x256xbf16>
    %259 = vector.shape_cast %258 : vector<1x128x256xbf16> to vector<128x256xbf16>
    %cst_235 = arith.constant dense<0.000000e+00> : vector<32x256xf32>
    %260 = tpu.matmul %257, %259, %cst_235 {dimension_numbers = #tpu.dot_dimension_numbers<[1], [0], [0], [1], [0, 0, 1, 1], [], []>} : vector<32x128xbf16>, vector<128x256xbf16>, vector<32x256xf32> -> vector<32x256xf32>
    %261 = arith.addf %255, %260 : vector<32x256xf32>
    %c0_236 = arith.constant 0 : index
    %c0_237 = arith.constant 0 : index
    %262 = vector.load %arg11[%c0_236, %c0_237] : memref<1x256xf32, #tpu.memory_space<vmem>>, vector<1x256xf32>
    %263 = vector.broadcast %262 : vector<1x256xf32> to vector<32x256xf32>
    %264 = arith.addf %261, %263 : vector<32x256xf32>
    %cst_238 = arith.constant 0.000000e+00 : f32
    %265 = vector.broadcast %cst_238 : f32 to vector<32x256xf32>
    %266 = arith.maximumf %264, %265 : vector<32x256xf32>
    %267 = vector.extract_strided_slice %266 {offsets = [0, 0], sizes = [22, 256], strides = [1, 1]} : vector<32x256xf32> to vector<22x256xf32>
    %268 = vector.extract_strided_slice %266 {offsets = [1, 0], sizes = [22, 256], strides = [1, 1]} : vector<32x256xf32> to vector<22x256xf32>
    %269 = arith.maximumf %267, %268 : vector<22x256xf32>
    %270 = vector.extract_strided_slice %266 {offsets = [4, 0], sizes = [22, 256], strides = [1, 1]} : vector<32x256xf32> to vector<22x256xf32>
    %271 = vector.extract_strided_slice %266 {offsets = [5, 0], sizes = [22, 256], strides = [1, 1]} : vector<32x256xf32> to vector<22x256xf32>
    %272 = arith.maximumf %270, %271 : vector<22x256xf32>
    %273 = arith.maximumf %269, %272 : vector<22x256xf32>
    %cst_239 = arith.constant 0.000000e+00 : f32
    %274 = vector.broadcast %cst_239 : f32 to vector<8x256xf32>
    %c0_240 = arith.constant 0 : index
    %c0_241 = arith.constant 0 : index
    %275 = vector.load %arg22[%c0_240, %c0_241] : memref<8x256xf32, #tpu.memory_space<vmem>>, vector<8x256xf32>
    tpu.vector_store %arg22[%c0_240, %c0_241], %274 {strides = array<i32>} : memref<8x256xf32, #tpu.memory_space<vmem>>, vector<8x256xf32>,
    %276 = vector.extract_strided_slice %273 {offsets = [5, 0], sizes = [1, 256], strides = [1, 1]} : vector<22x256xf32> to vector<1x256xf32>
    %c0_242 = arith.constant 0 : index
    %c0_243 = arith.constant 0 : index
    %277 = vector.load %arg22[%c0_242, %c0_243] : memref<8x256xf32, #tpu.memory_space<vmem>>, vector<1x256xf32>
    tpu.vector_store %arg22[%c0_242, %c0_243], %276 {strides = array<i32>} : memref<8x256xf32, #tpu.memory_space<vmem>>, vector<1x256xf32>,
    %278 = vector.extract_strided_slice %273 {offsets = [21, 0], sizes = [1, 256], strides = [1, 1]} : vector<22x256xf32> to vector<1x256xf32>
    %c1_244 = arith.constant 1 : index
    %c0_245 = arith.constant 0 : index
    %279 = vector.load %arg22[%c1_244, %c0_245] : memref<8x256xf32, #tpu.memory_space<vmem>>, vector<1x256xf32>
    tpu.vector_store %arg22[%c1_244, %c0_245], %278 {strides = array<i32>} : memref<8x256xf32, #tpu.memory_space<vmem>>, vector<1x256xf32>,
    %c0_246 = arith.constant 0 : index
    %c0_247 = arith.constant 0 : index
    %280 = vector.load %arg22[%c0_246, %c0_247] : memref<8x256xf32, #tpu.memory_space<vmem>>, vector<8x256xf32>
    %281 = arith.truncf %280 : vector<8x256xf32> to vector<8x256xbf16>
    %c0_248 = arith.constant 0 : index
    %c0_249 = arith.constant 0 : index
    %282 = vector.load %arg12[%c0_248, %c0_249] : memref<256x1024xbf16, #tpu.memory_space<vmem>>, vector<256x1024xbf16>
    %cst_250 = arith.constant dense<0.000000e+00> : vector<8x1024xf32>
    %283 = tpu.matmul %281, %282, %cst_250 {dimension_numbers = #tpu.dot_dimension_numbers<[1], [0], [0], [1], [0, 0, 1, 1], [], []>} : vector<8x256xbf16>, vector<256x1024xbf16>, vector<8x1024xf32> -> vector<8x1024xf32>
    %c0_251 = arith.constant 0 : index
    %c0_252 = arith.constant 0 : index
    %284 = vector.load %arg13[%c0_251, %c0_252] : memref<1x1024xf32, #tpu.memory_space<vmem>>, vector<1x1024xf32>
    %285 = vector.broadcast %284 : vector<1x1024xf32> to vector<8x1024xf32>
    %286 = arith.addf %283, %285 : vector<8x1024xf32>
    %287 = arith.truncf %286 : vector<8x1024xf32> to vector<8x1024xbf16>
    %c0_253 = arith.constant 0 : index
    %c0_254 = arith.constant 0 : index
    %288 = vector.load %arg14[%c0_253, %c0_254] : memref<1024x256xbf16, #tpu.memory_space<vmem>>, vector<1024x256xbf16>
    %cst_255 = arith.constant dense<0.000000e+00> : vector<8x256xf32>
    %289 = tpu.matmul %287, %288, %cst_255 {dimension_numbers = #tpu.dot_dimension_numbers<[1], [0], [0], [1], [0, 0, 1, 1], [], []>} : vector<8x1024xbf16>, vector<1024x256xbf16>, vector<8x256xf32> -> vector<8x256xf32>
    %c0_256 = arith.constant 0 : index
    %c0_257 = arith.constant 0 : index
    %290 = vector.load %arg15[%c0_256, %c0_257] : memref<1x256xf32, #tpu.memory_space<vmem>>, vector<1x256xf32>
    %291 = vector.broadcast %290 : vector<1x256xf32> to vector<8x256xf32>
    %292 = arith.addf %289, %291 : vector<8x256xf32>
    %293 = arith.truncf %292 : vector<8x256xf32> to vector<8x256xbf16>
    %c0_258 = arith.constant 0 : index
    %c0_259 = arith.constant 0 : index
    %294 = vector.load %arg16[%c0_258, %c0_259] : memref<256x128xbf16, #tpu.memory_space<vmem>>, vector<256x128xbf16>
    %cst_260 = arith.constant dense<0.000000e+00> : vector<8x128xf32>
    %295 = tpu.matmul %293, %294, %cst_260 {dimension_numbers = #tpu.dot_dimension_numbers<[1], [0], [0], [1], [0, 0, 1, 1], [], []>} : vector<8x256xbf16>, vector<256x128xbf16>, vector<8x128xf32> -> vector<8x128xf32>
    %c0_261 = arith.constant 0 : index
    %c0_262 = arith.constant 0 : index
    %296 = vector.load %arg17[%c0_261, %c0_262] : memref<1x128xf32, #tpu.memory_space<vmem>>, vector<1x128xf32>
    %297 = vector.broadcast %296 : vector<1x128xf32> to vector<8x128xf32>
    %298 = arith.addf %295, %297 : vector<8x128xf32>
    %c0_263 = arith.constant 0 : index
    %c0_264 = arith.constant 0 : index
    %299 = vector.load %arg18[%c0_263, %c0_264] : memref<8x128xf32, #tpu.memory_space<vmem>>, vector<8x128xf32>
    tpu.vector_store %arg18[%c0_263, %c0_264], %298 {strides = array<i32>} : memref<8x128xf32, #tpu.memory_space<vmem>>, vector<8x128xf32>,
    return
  }
  func.func @transform_0(%arg0: i32) -> (i32, i32) {
    %c0_i32 = arith.constant 0 : i32
    %c0_i32_0 = arith.constant 0 : i32
    %c0_i32_1 = arith.constant 0 : i32
    return %c0_i32, %c0_i32_0 : i32, i32
  }
  func.func @transform_1(%arg0: i32) -> (i32, i32) {
    %c0_i32 = arith.constant 0 : i32
    %c0_i32_0 = arith.constant 0 : i32
    %c0_i32_1 = arith.constant 0 : i32
    return %c0_i32, %c0_i32_0 : i32, i32
  }
  func.func @transform_2(%arg0: i32) -> (i32, i32) {
    %c0_i32 = arith.constant 0 : i32
    %c0_i32_0 = arith.constant 0 : i32
    %c0_i32_1 = arith.constant 0 : i32
    return %c0_i32, %c0_i32_0 : i32, i32
  }
  func.func @transform_3(%arg0: i32) -> (i32, i32, i32) {
    %c0_i32 = arith.constant 0 : i32
    %c0_i32_0 = arith.constant 0 : i32
    %c0_i32_1 = arith.constant 0 : i32
    %c0_i32_2 = arith.constant 0 : i32
    return %c0_i32, %c0_i32_0, %c0_i32_1 : i32, i32, i32
  }
  func.func @transform_4(%arg0: i32) -> (i32, i32) {
    %c0_i32 = arith.constant 0 : i32
    %c0_i32_0 = arith.constant 0 : i32
    %c0_i32_1 = arith.constant 0 : i32
    return %c0_i32, %c0_i32_0 : i32, i32
  }
  func.func @transform_5(%arg0: i32) -> (i32, i32, i32) {
    %c0_i32 = arith.constant 0 : i32
    %c0_i32_0 = arith.constant 0 : i32
    %c0_i32_1 = arith.constant 0 : i32
    %c0_i32_2 = arith.constant 0 : i32
    return %c0_i32, %c0_i32_0, %c0_i32_1 : i32, i32, i32
  }
  func.func @transform_6(%arg0: i32) -> (i32, i32) {
    %c0_i32 = arith.constant 0 : i32
    %c0_i32_0 = arith.constant 0 : i32
    %c0_i32_1 = arith.constant 0 : i32
    return %c0_i32, %c0_i32_0 : i32, i32
  }
  func.func @transform_7(%arg0: i32) -> (i32, i32, i32) {
    %c0_i32 = arith.constant 0 : i32
    %c0_i32_0 = arith.constant 0 : i32
    %c0_i32_1 = arith.constant 0 : i32
    %c0_i32_2 = arith.constant 0 : i32
    return %c0_i32, %c0_i32_0, %c0_i32_1 : i32, i32, i32
  }
  func.func @transform_8(%arg0: i32) -> (i32, i32) {
    %c0_i32 = arith.constant 0 : i32
    %c0_i32_0 = arith.constant 0 : i32
    %c0_i32_1 = arith.constant 0 : i32
    return %c0_i32, %c0_i32_0 : i32, i32
  }
  func.func @transform_9(%arg0: i32) -> (i32, i32, i32) {
    %c0_i32 = arith.constant 0 : i32
    %c0_i32_0 = arith.constant 0 : i32
    %c0_i32_1 = arith.constant 0 : i32
    %c0_i32_2 = arith.constant 0 : i32
    return %c0_i32, %c0_i32_0, %c0_i32_1 : i32, i32, i32
  }
  func.func @transform_10(%arg0: i32) -> (i32, i32) {
    %c0_i32 = arith.constant 0 : i32
    %c0_i32_0 = arith.constant 0 : i32
    %c0_i32_1 = arith.constant 0 : i32
    return %c0_i32, %c0_i32_0 : i32, i32
  }
  func.func @transform_11(%arg0: i32) -> (i32, i32) {
    %c0_i32 = arith.constant 0 : i32
    %c0_i32_0 = arith.constant 0 : i32
    %c0_i32_1 = arith.constant 0 : i32
    return %c0_i32, %c0_i32_0 : i32, i32
  }
  func.func @transform_12(%arg0: i32) -> (i32, i32) {
    %c0_i32 = arith.constant 0 : i32
    %c0_i32_0 = arith.constant 0 : i32
    %c0_i32_1 = arith.constant 0 : i32
    return %c0_i32, %c0_i32_0 : i32, i32
  }
  func.func @transform_13(%arg0: i32) -> (i32, i32) {
    %c0_i32 = arith.constant 0 : i32
    %c0_i32_0 = arith.constant 0 : i32
    %c0_i32_1 = arith.constant 0 : i32
    return %c0_i32, %c0_i32_0 : i32, i32
  }
  func.func @transform_14(%arg0: i32) -> (i32, i32) {
    %c0_i32 = arith.constant 0 : i32
    %c0_i32_0 = arith.constant 0 : i32
    %c0_i32_1 = arith.constant 0 : i32
    return %c0_i32, %c0_i32_0 : i32, i32
  }
  func.func @transform_15(%arg0: i32) -> (i32, i32) {
    %c0_i32 = arith.constant 0 : i32
    %c0_i32_0 = arith.constant 0 : i32
    %c0_i32_1 = arith.constant 0 : i32
    return %c0_i32, %c0_i32_0 : i32, i32
  }
  func.func @transform_16(%arg0: i32) -> (i32, i32) {
    %c0_i32 = arith.constant 0 : i32
    %c0_i32_0 = arith.constant 0 : i32
    %c0_i32_1 = arith.constant 0 : i32
    return %c0_i32, %c0_i32_0 : i32, i32
  }
  func.func @transform_17(%arg0: i32) -> (i32, i32) {
    %c0_i32 = arith.constant 0 : i32
    %c0_i32_0 = arith.constant 0 : i32
    %c0_i32_1 = arith.constant 0 : i32
    return %c0_i32, %c0_i32_0 : i32, i32
  }
}

</mosaic_0001>

<llo_original>
// kernel: fwd.1
$region0: #{fwd.1}
  #allocation0 [shape = 'u32[]', space=smem, size = 0x4, offset = 0x4, fixed_abs, tag = 'smem constant byte address 0x4 - core index']
  #allocation1 [shape = 'u32[144,128]{1,0:T(1,128)}', space=vmem, size = 0x12000, scoped, tag = 'internal scratch']
  #allocation2 [shape = 'f32[88,128]{1,0:T(8,128)}', space=vmem, size = 0xb000, scoped, tag = 'scratch operand']
  #allocation3 [shape = 'f32[48,128]{1,0:T(8,128)}', space=vmem, size = 0x6000, scoped, tag = 'scratch operand']
  #allocation4 [shape = 'f32[48,128]{1,0:T(8,128)}', space=vmem, size = 0x6000, scoped, tag = 'scratch operand']
  #allocation5 [shape = 'f32[8,256]{1,0:T(8,128)}', space=vmem, size = 0x2000, scoped, tag = 'scratch operand']
  %s0 = inlined_call_operand.vmem [shape: f32[88,128], index: 0, kind: input, shape index: {}]
  %s1 = inlined_call_operand.vmem [shape: f32[72,128], index: 1, kind: input, shape index: {}]
  %s2 = inlined_call_operand.vmem [shape: f32[32,128], index: 2, kind: input, shape index: {}]
  %s3 = inlined_call_operand.hbm [shape: bf16[9,128,128], index: 3, kind: input, shape index: {}]
  %s4 = inlined_call_operand.vmem [shape: f32[1,128], index: 4, kind: input, shape index: {}]
  %s5 = inlined_call_operand.hbm [shape: bf16[9,128,128], index: 5, kind: input, shape index: {}]
  %s6 = inlined_call_operand.vmem [shape: f32[1,128], index: 6, kind: input, shape index: {}]
  %s7 = inlined_call_operand.hbm [shape: bf16[9,128,128], index: 7, kind: input, shape index: {}]
  %s8 = inlined_call_operand.vmem [shape: f32[1,128], index: 8, kind: input, shape index: {}]
  %s9 = inlined_call_operand.hbm [shape: bf16[9,128,256], index: 9, kind: input, shape index: {}]
  %s10 = inlined_call_operand.vmem [shape: f32[1,256], index: 10, kind: input, shape index: {}]
  %s11 = inlined_call_operand.hbm [shape: bf16[256,1024], index: 11, kind: input, shape index: {}]
  %s12 = inlined_call_operand.vmem [shape: f32[1,1024], index: 12, kind: input, shape index: {}]
  %s13 = inlined_call_operand.hbm [shape: bf16[1024,256], index: 13, kind: input, shape index: {}]
  %s14 = inlined_call_operand.vmem [shape: f32[1,256], index: 14, kind: input, shape index: {}]
  %s15 = inlined_call_operand.vmem [shape: bf16[256,128], index: 15, kind: input, shape index: {}]
  %s16 = inlined_call_operand.vmem [shape: f32[1,128], index: 16, kind: input, shape index: {}]
  %s17 = inlined_call_operand.vmem [shape: f32[8,128], index: 17, kind: output, shape index: {}]
  %s18 = sld [smem:[#allocation0]]
  $region102: #{fwd.1} parent=0
    _
  %s20 = ssub.s32 1, %s18
  %s21 = scalar_select 0, %s20, %s18
  $region1: #{fwd.1} parent=0
    #allocation6 [shape = 'u8[294912]{0}', space=vmem, size = 0x48000, scoped, tag = 'input window, operand 3, single buffered']
    #allocation7 [shape = 's32[1]{0}', space=sflag, size = 0x4, scoped, tag = 'scoped memory for fwd.1']
    #allocation8 [shape = 'u8[294912]{0}', space=vmem, size = 0x48000, scoped, tag = 'input window, operand 5, single buffered']
    #allocation9 [shape = 's32[1]{0}', space=sflag, size = 0x4, scoped, tag = 'scoped memory for fwd.1']
    #allocation10 [shape = 'u8[294912]{0}', space=vmem, size = 0x48000, scoped, tag = 'input window, operand 7, single buffered']
    #allocation11 [shape = 'u8[589824]{0}', space=vmem, size = 0x90000, scoped, tag = 'input window, operand 9, single buffered']
    #allocation12 [shape = 's32[1]{0}', space=sflag, size = 0x4, scoped, tag = 'scoped memory for fwd.1']
    #allocation13 [shape = 'u8[524288]{0}', space=vmem, size = 0x80000, scoped, tag = 'input window, operand 11, single buffered']
    #allocation14 [shape = 'u8[524288]{0}', space=vmem, size = 0x80000, scoped, tag = 'input window, operand 13, single buffered']
    #allocation15 [shape = 's32[1]{0}', space=sflag, size = 0x4, scoped, tag = 'scoped memory for fwd.1']
    %22 = vsyncpa [#allocation7], 0
    %23 = vsyncpa [#allocation9], 0
    %24 = vsyncpa [#allocation12], 0
    %25 = vsyncpa [#allocation15], 0
    // Predicated region
    $region2: #{fwd.1} parent=1 // pred_check
      _
    $region3: #{fwd.1} parent=1 // pred_check_branch
      %27 = sbr.rel (0) target = $region5
    $region4: #{fwd.1} parent=1 // pred_region
      _
    $region5: #{fwd.1} parent=1 // pred_fallthru
      _
    // Predicated region
    $region6: #{fwd.1} parent=1 // pred_check
      _
    $region7: #{fwd.1} parent=1 // pred_check_branch
      %29 = sbr.rel (0) target = $region9
    $region8: #{fwd.1} parent=1 // pred_region
      _
    $region9: #{fwd.1} parent=1 // pred_fallthru
      _
    // Predicated region
    $region10: #{fwd.1} parent=1 // pred_check
      _
    $region11: #{fwd.1} parent=1 // pred_check_branch
      %31 = sbr.rel (0) target = $region13
    $region12: #{fwd.1} parent=1 // pred_region
      _
    $region13: #{fwd.1} parent=1 // pred_fallthru
      _
    // Predicated region
    $region14: #{fwd.1} parent=1 // pred_check
      _
    $region15: #{fwd.1} parent=1 // pred_check_branch
      %33 = sbr.rel (0) target = $region17
    $region16: #{fwd.1} parent=1 // pred_region
      %s35 = ssub.s32 9216, 9216
      %36 = vsyncadd [#allocation7], %s35
      %s37 = sshll.u32 [#allocation6], 4
      %s38 = int_to_ptr.vmem [resolvable:$true] %s37
      %43 = dma.hbm_to_vmem [thread:$0]  %s3, 9216, %s38, [#allocation7], 64, 64, 4
    $region17: #{fwd.1} parent=1 // pred_fallthru
      _
    // Predicated region
    $region18: #{fwd.1} parent=1 // pred_check
      _
    $region19: #{fwd.1} parent=1 // pred_check_branch
      %45 = sbr.rel (0) target = $region21
    $region20: #{fwd.1} parent=1 // pred_region
      _
    $region21: #{fwd.1} parent=1 // pred_fallthru
      _
    // Predicated region
    $region22: #{fwd.1} parent=1 // pred_check
      _
    $region23: #{fwd.1} parent=1 // pred_check_branch
      %47 = sbr.rel (0) target = $region25
    $region24: #{fwd.1} parent=1 // pred_region
      %s49 = ssub.s32 9216, 9216
      %50 = vsyncadd [#allocation9], %s49
      %s51 = sshll.u32 [#allocation8], 4
      %s52 = int_to_ptr.vmem [resolvable:$true] %s51
      %57 = dma.hbm_to_vmem [thread:$0]  %s5, 9216, %s52, [#allocation9], 64, 64, 4
    $region25: #{fwd.1} parent=1 // pred_fallthru
      _
    // Predicated region
    $region26: #{fwd.1} parent=1 // pred_check
      _
    $region27: #{fwd.1} parent=1 // pred_check_branch
      %59 = sbr.rel (0) target = $region29
    $region28: #{fwd.1} parent=1 // pred_region
      _
    $region29: #{fwd.1} parent=1 // pred_fallthru
      _
    // Predicated region
    $region30: #{fwd.1} parent=1 // pred_check
      _
    $region31: #{fwd.1} parent=1 // pred_check_branch
      %61 = sbr.rel (0) target = $region33
    $region32: #{fwd.1} parent=1 // pred_region
      %s63 = ssub.s32 9216, 9216
      %64 = vsyncadd [#allocation9], %s63
      %s65 = sshll.u32 [#allocation10], 4
      %s66 = int_to_ptr.vmem [resolvable:$true] %s65
      %71 = dma.hbm_to_vmem [thread:$0]  %s7, 9216, %s66, [#allocation9], 64, 64, 4
    $region33: #{fwd.1} parent=1 // pred_fallthru
      _
    // Predicated region
    $region34: #{fwd.1} parent=1 // pred_check
      _
    $region35: #{fwd.1} parent=1 // pred_check_branch
      %73 = sbr.rel (0) target = $region37
    $region36: #{fwd.1} parent=1 // pred_region
      _
    $region37: #{fwd.1} parent=1 // pred_fallthru
      _
    // Predicated region
    $region38: #{fwd.1} parent=1 // pred_check
      _
    $region39: #{fwd.1} parent=1 // pred_check_branch
      %75 = sbr.rel (0) target = $region41
    $region40: #{fwd.1} parent=1 // pred_region
      %s77 = ssub.s32 18432, 18432
      %78 = vsyncadd [#allocation12], %s77
      %s79 = sshll.u32 [#allocation11], 4
      %s80 = int_to_ptr.vmem [resolvable:$true] %s79
      %85 = dma.hbm_to_vmem [thread:$0]  %s9, 18432, %s80, [#allocation12], 128, 128, 8
    $region41: #{fwd.1} parent=1 // pred_fallthru
      _
    // Predicated region
    $region42: #{fwd.1} parent=1 // pred_check
      _
    $region43: #{fwd.1} parent=1 // pred_check_branch
      %87 = sbr.rel (0) target = $region45
    $region44: #{fwd.1} parent=1 // pred_region
      _
    $region45: #{fwd.1} parent=1 // pred_fallthru
      _
    // Predicated region
    $region46: #{fwd.1} parent=1 // pred_check
      _
    $region47: #{fwd.1} parent=1 // pred_check_branch
      %89 = sbr.rel (0) target = $region49
    $region48: #{fwd.1} parent=1 // pred_region
      %s91 = ssub.s32 16384, 16384
      %92 = vsyncadd [#allocation12], %s91
      %s93 = sshll.u32 [#allocation13], 4
      %s94 = int_to_ptr.vmem [resolvable:$true] %s93
      %99 = dma.hbm_to_vmem [thread:$0]  %s11, 16384, %s94, [#allocation12], 512, 512, 32
    $region49: #{fwd.1} parent=1 // pred_fallthru
      _
    // Predicated region
    $region50: #{fwd.1} parent=1 // pred_check
      _
    $region51: #{fwd.1} parent=1 // pred_check_branch
      %101 = sbr.rel (0) target = $region53
    $region52: #{fwd.1} parent=1 // pred_region
      _
    $region53: #{fwd.1} parent=1 // pred_fallthru
      _
    // Predicated region
    $region54: #{fwd.1} parent=1 // pred_check
      _
    $region55: #{fwd.1} parent=1 // pred_check_branch
      %103 = sbr.rel (0) target = $region57
    $region56: #{fwd.1} parent=1 // pred_region
      %s105 = ssub.s32 16384, 16384
      %106 = vsyncadd [#allocation15], %s105
      %s107 = sshll.u32 [#allocation14], 4
      %s108 = int_to_ptr.vmem [resolvable:$true] %s107
      %113 = dma.hbm_to_vmem [thread:$0]  %s13, 16384, %s108, [#allocation15], 128, 128, 8
    $region57: #{fwd.1} parent=1 // pred_fallthru
      _
    // Predicated region
    $region58: #{fwd.1} parent=1 // pred_check
      _
    $region59: #{fwd.1} parent=1 // pred_check_branch
      %115 = sbr.rel (0) target = $region61
    $region60: #{fwd.1} parent=1 // pred_region
      _
    $region61: #{fwd.1} parent=1 // pred_fallthru
      _
    // Predicated region
    $region62: #{fwd.1} parent=1 // pred_check
      _
    $region63: #{fwd.1} parent=1 // pred_check_branch
      %117 = sbr.rel (0) target = $region65
    $region64: #{fwd.1} parent=1 // pred_region
      _
    $region65: #{fwd.1} parent=1 // pred_fallthru
      _
    // Predicated region
    $region66: #{fwd.1} parent=1 // pred_check
      _
    $region67: #{fwd.1} parent=1 // pred_check_branch
      %119 = sbr.rel (0) target = $region69
    $region68: #{fwd.1} parent=1 // pred_region
      _
    $region69: #{fwd.1} parent=1 // pred_fallthru
      _
    // Predicated region
    $region70: #{fwd.1} parent=1 // pred_check
      _
    $region71: #{fwd.1} parent=1 // pred_check_branch
      %121 = sbr.rel (0) target = $region73
    $region72: #{fwd.1} parent=1 // pred_region
      %122 = dma.done [#allocation7], 9216
    $region73: #{fwd.1} parent=1 // pred_fallthru
      _
    // Predicated region
    $region74: #{fwd.1} parent=1 // pred_check
      _
    $region75: #{fwd.1} parent=1 // pred_check_branch
      %124 = sbr.rel (0) target = $region77
    $region76: #{fwd.1} parent=1 // pred_region
      %125 = dma.done [#allocation9], 9216
    $region77: #{fwd.1} parent=1 // pred_fallthru
      _
    // Predicated region
    $region78: #{fwd.1} parent=1 // pred_check
      _
    $region79: #{fwd.1} parent=1 // pred_check_branch
      %127 = sbr.rel (0) target = $region81
    $region80: #{fwd.1} parent=1 // pred_region
      %128 = dma.done [#allocation9], 9216
    $region81: #{fwd.1} parent=1 // pred_fallthru
      _
    // Predicated region
    $region82: #{fwd.1} parent=1 // pred_check
      _
    $region83: #{fwd.1} parent=1 // pred_check_branch
      %130 = sbr.rel (0) target = $region85
    $region84: #{fwd.1} parent=1 // pred_region
      %131 = dma.done [#allocation12], 18432
    $region85: #{fwd.1} parent=1 // pred_fallthru
      _
    // Predicated region
    $region86: #{fwd.1} parent=1 // pred_check
      _
    $region87: #{fwd.1} parent=1 // pred_check_branch
      %133 = sbr.rel (0) target = $region89
    $region88: #{fwd.1} parent=1 // pred_region
      %134 = dma.done [#allocation12], 16384
    $region89: #{fwd.1} parent=1 // pred_fallthru
      _
    // Predicated region
    $region90: #{fwd.1} parent=1 // pred_check
      _
    $region91: #{fwd.1} parent=1 // pred_check_branch
      %136 = sbr.rel (0) target = $region93
    $region92: #{fwd.1} parent=1 // pred_region
      %137 = dma.done [#allocation15], 16384
    $region93: #{fwd.1} parent=1 // pred_fallthru
      _
    %v139 = vld [vmem:[%s0 + $0x1] sm:$0xff]
    %v140 = vld [vmem:[%s0 + $0x9] sm:$0xff]
    %v141 = vld [vmem:[%s0 + $0x11] sm:$0xff]
    %v142 = vld [vmem:[%s0 + $0x19] sm:$0xff]
    %v143 = vld [vmem:[%s0 + $0x21] sm:$0xff]
    %v144 = vld [vmem:[%s0 + $0x29] sm:$0xff]
    %v145 = vld [vmem:[%s0 + $0x31] sm:$0xff]
    %v146 = vld [vmem:[%s0 + $0x39] sm:$0xff]
    %v147 = vld [vmem:[%s0 + $0x41] sm:$0xff]
    %v148 = vpack.c.bf16 %v140, %v139
    %v149 = vpack.c.bf16 %v142, %v141
    %v150 = vpack.c.bf16 %v144, %v143
    %v151 = vpack.c.bf16 %v146, %v145
    %v152 = vpack.c.bf16 %v147, %v147
    %v153 = vld [vmem:[#allocation6] sm:$0xf]
    %v154 = vld [vmem:[#allocation6 + $0x4] sm:$0xf]
    %v155 = vld [vmem:[#allocation6 + $0x8] sm:$0xf]
    %v156 = vld [vmem:[#allocation6 + $0xc] sm:$0xf]
    %v157 = vld [vmem:[#allocation6 + $0x10] sm:$0xf]
    %v158 = vld [vmem:[#allocation6 + $0x14] sm:$0xf]
    %v159 = vld [vmem:[#allocation6 + $0x18] sm:$0xf]
    %v160 = vld [vmem:[#allocation6 + $0x1c] sm:$0xf]
    %v161 = vld [vmem:[#allocation6 + $0x20] sm:$0xf]
    %v162 = vld [vmem:[#allocation6 + $0x24] sm:$0xf]
    %v163 = vld [vmem:[#allocation6 + $0x28] sm:$0xf]
    %v164 = vld [vmem:[#allocation6 + $0x2c] sm:$0xf]
    %v165 = vld [vmem:[#allocation6 + $0x30] sm:$0xf]
    %v166 = vld [vmem:[#allocation6 + $0x34] sm:$0xf]
    %v167 = vld [vmem:[#allocation6 + $0x38] sm:$0xf]
    %v168 = vld [vmem:[#allocation6 + $0x3c] sm:$0xf]
    %v169 = vld [vmem:[%s0 + $0x2] sm:$0xff]
    %v170 = vld [vmem:[%s0 + $0xa] sm:$0xff]
    %v171 = vld [vmem:[%s0 + $0x12] sm:$0xff]
    %v172 = vld [vmem:[%s0 + $0x1a] sm:$0xff]
    %v173 = vld [vmem:[%s0 + $0x22] sm:$0xff]
    %v174 = vld [vmem:[%s0 + $0x2a] sm:$0xff]
    %v175 = vld [vmem:[%s0 + $0x32] sm:$0xff]
    %v176 = vld [vmem:[%s0 + $0x3a] sm:$0xff]
    %v177 = vld [vmem:[%s0 + $0x42] sm:$0xff]
    %v178 = vpack.c.bf16 %v170, %v169
    %v179 = vpack.c.bf16 %v172, %v171
    %v180 = vpack.c.bf16 %v174, %v173
    %v181 = vpack.c.bf16 %v176, %v175
    %v182 = vpack.c.bf16 %v177, %v177
    %s183 = scalar_lea.vmem [#allocation6], 64
    %v184 = vld [vmem:[%s183] sm:$0xf]
    %v185 = vld [vmem:[%s183 + $0x4] sm:$0xf]
    %v186 = vld [vmem:[%s183 + $0x8] sm:$0xf]
    %v187 = vld [vmem:[%s183 + $0xc] sm:$0xf]
    %v188 = vld [vmem:[%s183 + $0x10] sm:$0xf]
    %v189 = vld [vmem:[%s183 + $0x14] sm:$0xf]
    %v190 = vld [vmem:[%s183 + $0x18] sm:$0xf]
    %v191 = vld [vmem:[%s183 + $0x1c] sm:$0xf]
    %v192 = vld [vmem:[%s183 + $0x20] sm:$0xf]
    %v193 = vld [vmem:[%s183 + $0x24] sm:$0xf]
    %v194 = vld [vmem:[%s183 + $0x28] sm:$0xf]
    %v195 = vld [vmem:[%s183 + $0x2c] sm:$0xf]
    %v196 = vld [vmem:[%s183 + $0x30] sm:$0xf]
    %v197 = vld [vmem:[%s183 + $0x34] sm:$0xf]
    %v198 = vld [vmem:[%s183 + $0x38] sm:$0xf]
    %v199 = vld [vmem:[%s183 + $0x3c] sm:$0xf]
    %v216 = vunpack.c.l.b16 %v184
    %v217 = vunpack.c.l.b16 %v185
    %v218 = vunpack.c.l.b16 %v186
    %v219 = vunpack.c.l.b16 %v187
    %v220 = vunpack.c.l.b16 %v188
    %v221 = vunpack.c.l.b16 %v189
    %v222 = vunpack.c.l.b16 %v190
    %v223 = vunpack.c.l.b16 %v191
    %v224 = vunpack.c.l.b16 %v192
    %v225 = vunpack.c.l.b16 %v193
    %v226 = vunpack.c.l.b16 %v194
    %v227 = vunpack.c.l.b16 %v195
    %v228 = vunpack.c.l.b16 %v196
    %v229 = vunpack.c.l.b16 %v197
    %v230 = vunpack.c.l.b16 %v198
    %v231 = vunpack.c.l.b16 %v199
    %v232 = vpack.c.b16 %v217, %v216
    %v233 = vpack.c.b16 %v219, %v218
    %v234 = vpack.c.b16 %v221, %v220
    %v235 = vpack.c.b16 %v223, %v222
    %v236 = vpack.c.b16 %v225, %v224
    %v237 = vpack.c.b16 %v227, %v226
    %v238 = vpack.c.b16 %v229, %v228
    %v239 = vpack.c.b16 %v231, %v230
    %248 = vmatprep.subr.bf16.mxu0 0
    %249 = vmatpush1.bf16.msra.mxu0 %v232
    %250 = vmatprep.subr.bf16.mxu0 0
    %251 = vmatpush1.bf16.msra.mxu0 %v233
    %252 = vmatprep.subr.bf16.mxu0 0
    %253 = vmatpush1.bf16.msra.mxu0 %v234
    %254 = vmatprep.subr.bf16.mxu0 0
    %255 = vmatpush1.bf16.msra.mxu0 %v235
    %256 = vmatprep.subr.bf16.mxu0 0
    %257 = vmatpush1.bf16.msra.mxu0 %v236
    %258 = vmatprep.subr.bf16.mxu0 0
    %259 = vmatpush1.bf16.msra.mxu0 %v237
    %260 = vmatprep.subr.bf16.mxu0 0
    %261 = vmatpush1.bf16.msra.mxu0 %v238
    %262 = vmatprep.subr.bf16.mxu0 0
    %263 = vmatpush1.bf16.msra.mxu0 %v239
    %264 = vmatprep.subr.bf16.mxu0 0
    %265 = vmatpush1.bf16.msra.mxu0 0
    %266 = vmatprep.subr.bf16.mxu0 0
    %267 = vmatpush1.bf16.msra.mxu0 0
    %268 = vmatprep.subr.bf16.mxu0 0
    %269 = vmatpush1.bf16.msra.mxu0 0
    %270 = vmatprep.subr.bf16.mxu0 0
    %271 = vmatpush1.bf16.msra.mxu0 0
    %272 = vmatprep.subr.bf16.mxu0 0
    %273 = vmatpush1.bf16.msra.mxu0 0
    %274 = vmatprep.subr.bf16.mxu0 0
    %275 = vmatpush1.bf16.msra.mxu0 0
    %276 = vmatprep.subr.bf16.mxu0 0
    %277 = vmatpush1.bf16.msra.mxu0 0
    %278 = vmatprep.subr.bf16.mxu0 0
    %279 = vmatpush1.bf16.msra.mxu0 0
    %280 = vmatprep.mubr.bf16.mxu0 0
    %281 = vmatmul.mubr.bf16.gmra.mrb[0].mxu0 %v178
    %v282 = vpop.f32.mrb[0].mxu0
    %v283 = vadd.f32 0.0, %v282
    %v284 = vpop.f32.mrb[0].mxu0
    %v285 = vpop.f32.mrb[0].mxu0
    %v286 = vadd.f32 0.0, %v285
    %v287 = vpop.f32.mrb[0].mxu0
    %288 = vmatprep.mubr.bf16.mxu0 0
    %289 = vmatmul.mubr.bf16.gmra.mrb[0].mxu0 %v179
    %v290 = vpop.f32.mrb[0].mxu0
    %v291 = vadd.f32 0.0, %v290
    %v292 = vpop.f32.mrb[0].mxu0
    %v293 = vpop.f32.mrb[0].mxu0
    %v294 = vadd.f32 0.0, %v293
    %v295 = vpop.f32.mrb[0].mxu0
    %296 = vmatprep.mubr.bf16.mxu0 0
    %297 = vmatmul.mubr.bf16.gmra.mrb[0].mxu0 %v180
    %v298 = vpop.f32.mrb[0].mxu0
    %v299 = vadd.f32 0.0, %v298
    %v300 = vpop.f32.mrb[0].mxu0
    %v301 = vpop.f32.mrb[0].mxu0
    %v302 = vadd.f32 0.0, %v301
    %v303 = vpop.f32.mrb[0].mxu0
    %304 = vmatprep.mubr.bf16.mxu0 0
    %305 = vmatmul.mubr.bf16.gmra.mrb[0].mxu0 %v181
    %v306 = vpop.f32.mrb[0].mxu0
    %v307 = vadd.f32 0.0, %v306
    %v308 = vpop.f32.mrb[0].mxu0
    %v309 = vpop.f32.mrb[0].mxu0
    %v310 = vadd.f32 0.0, %v309
    %v311 = vpop.f32.mrb[0].mxu0
    %312 = vmatprep.mubr.bf16.mxu0 0
    %313 = vmatmul.mubr.bf16.gmra.mrb[0].mxu0 %v182
    %v314 = vpop.f32.mrb[0].mxu0
    %v315 = vadd.f32 0.0, %v314
    %v316 = vpop.f32.mrb[0].mxu0
    %v317 = vpop.f32.mrb[0].mxu0
    %v318 = vpop.f32.mrb[0].mxu0
    %319 = vdwg.mxu0
    %v336 = vunpack.c.l.b16 %v153
    %v337 = vunpack.c.l.b16 %v154
    %v338 = vunpack.c.l.b16 %v155
    %v339 = vunpack.c.l.b16 %v156
    %v340 = vunpack.c.l.b16 %v157
    %v341 = vunpack.c.l.b16 %v158
    %v342 = vunpack.c.l.b16 %v159
    %v343 = vunpack.c.l.b16 %v160
    %v344 = vunpack.c.l.b16 %v161
    %v345 = vunpack.c.l.b16 %v162
    %v346 = vunpack.c.l.b16 %v163
    %v347 = vunpack.c.l.b16 %v164
    %v348 = vunpack.c.l.b16 %v165
    %v349 = vunpack.c.l.b16 %v166
    %v350 = vunpack.c.l.b16 %v167
    %v351 = vunpack.c.l.b16 %v168
    %v352 = vpack.c.b16 %v337, %v336
    %v353 = vpack.c.b16 %v339, %v338
    %v354 = vpack.c.b16 %v341, %v340
    %v355 = vpack.c.b16 %v343, %v342
    %v356 = vpack.c.b16 %v345, %v344
    %v357 = vpack.c.b16 %v347, %v346
    %v358 = vpack.c.b16 %v349, %v348
    %v359 = vpack.c.b16 %v351, %v350
    %368 = vmatprep.subr.bf16.mxu0 0
    %369 = vmatpush1.bf16.msra.mxu0 %v352
    %370 = vmatprep.subr.bf16.mxu0 0
    %371 = vmatpush1.bf16.msra.mxu0 %v353
    %372 = vmatprep.subr.bf16.mxu0 0
    %373 = vmatpush1.bf16.msra.mxu0 %v354
    %374 = vmatprep.subr.bf16.mxu0 0
    %375 = vmatpush1.bf16.msra.mxu0 %v355
    %376 = vmatprep.subr.bf16.mxu0 0
    %377 = vmatpush1.bf16.msra.mxu0 %v356
    %378 = vmatprep.subr.bf16.mxu0 0
    %379 = vmatpush1.bf16.msra.mxu0 %v357
    %380 = vmatprep.subr.bf16.mxu0 0
    %381 = vmatpush1.bf16.msra.mxu0 %v358
    %382 = vmatprep.subr.bf16.mxu0 0
    %383 = vmatpush1.bf16.msra.mxu0 %v359
    %384 = vmatprep.subr.bf16.mxu0 0
    %385 = vmatpush1.bf16.msra.mxu0 0
    %386 = vmatprep.subr.bf16.mxu0 0
    %387 = vmatpush1.bf16.msra.mxu0 0
    %388 = vmatprep.subr.bf16.mxu0 0
    %389 = vmatpush1.bf16.msra.mxu0 0
    %390 = vmatprep.subr.bf16.mxu0 0
    %391 = vmatpush1.bf16.msra.mxu0 0
    %392 = vmatprep.subr.bf16.mxu0 0
    %393 = vmatpush1.bf16.msra.mxu0 0
    %394 = vmatprep.subr.bf16.mxu0 0
    %395 = vmatpush1.bf16.msra.mxu0 0
    %396 = vmatprep.subr.bf16.mxu0 0
    %397 = vmatpush1.bf16.msra.mxu0 0
    %398 = vmatprep.subr.bf16.mxu0 0
    %399 = vmatpush1.bf16.msra.mxu0 0
    %400 = vmatprep.mubr.bf16.mxu0 0
    %401 = vmatmul.mubr.bf16.gmra.mrb[0].mxu0 %v148
    %v402 = vpop.f32.mrb[0].mxu0
    %v403 = vadd.f32 %v283, %v402
    %v404 = vpop.f32.mrb[0].mxu0
    %v405 = vpop.f32.mrb[0].mxu0
    %v406 = vadd.f32 %v286, %v405
    %v407 = vpop.f32.mrb[0].mxu0
    %408 = vmatprep.mubr.bf16.mxu0 0
    %409 = vmatmul.mubr.bf16.gmra.mrb[0].mxu0 %v149
    %v410 = vpop.f32.mrb[0].mxu0
    %v411 = vadd.f32 %v291, %v410
    %v412 = vpop.f32.mrb[0].mxu0
    %v413 = vpop.f32.mrb[0].mxu0
    %v414 = vadd.f32 %v294, %v413
    %v415 = vpop.f32.mrb[0].mxu0
    %416 = vmatprep.mubr.bf16.mxu0 0
    %417 = vmatmul.mubr.bf16.gmra.mrb[0].mxu0 %v150
    %v418 = vpop.f32.mrb[0].mxu0
    %v419 = vadd.f32 %v299, %v418
    %v420 = vpop.f32.mrb[0].mxu0
    %v421 = vpop.f32.mrb[0].mxu0
    %v422 = vadd.f32 %v302, %v421
    %v423 = vpop.f32.mrb[0].mxu0
    %424 = vmatprep.mubr.bf16.mxu0 0
    %425 = vmatmul.mubr.bf16.gmra.mrb[0].mxu0 %v151
    %v426 = vpop.f32.mrb[0].mxu0
    %v427 = vadd.f32 %v307, %v426
    %v428 = vpop.f32.mrb[0].mxu0
    %v429 = vpop.f32.mrb[0].mxu0
    %v430 = vadd.f32 %v310, %v429
    %v431 = vpop.f32.mrb[0].mxu0
    %432 = vmatprep.mubr.bf16.mxu0 0
    %433 = vmatmul.mubr.bf16.gmra.mrb[0].mxu0 %v152
    %v434 = vpop.f32.mrb[0].mxu0
    %v435 = vadd.f32 %v315, %v434
    %v436 = vpop.f32.mrb[0].mxu0
    %v437 = vpop.f32.mrb[0].mxu0
    %v438 = vpop.f32.mrb[0].mxu0
    %439 = vdwg.mxu0
    %v440 = vld [vmem:[%s0 + $0x3] sm:$0xff]
    %v441 = vld [vmem:[%s0 + $0xb] sm:$0xff]
    %v442 = vld [vmem:[%s0 + $0x13] sm:$0xff]
    %v443 = vld [vmem:[%s0 + $0x1b] sm:$0xff]
    %v444 = vld [vmem:[%s0 + $0x23] sm:$0xff]
    %v445 = vld [vmem:[%s0 + $0x2b] sm:$0xff]
    %v446 = vld [vmem:[%s0 + $0x33] sm:$0xff]
    %v447 = vld [vmem:[%s0 + $0x3b] sm:$0xff]
    %v448 = vld [vmem:[%s0 + $0x43] sm:$0xff]
    %v449 = vpack.c.bf16 %v441, %v440
    %v450 = vpack.c.bf16 %v443, %v442
    %v451 = vpack.c.bf16 %v445, %v444
    %v452 = vpack.c.bf16 %v447, %v446
    %v453 = vpack.c.bf16 %v448, %v448
    %s454 = scalar_lea.vmem [#allocation6], 128
    %v455 = vld [vmem:[%s454] sm:$0xf]
    %v456 = vld [vmem:[%s454 + $0x4] sm:$0xf]
    %v457 = vld [vmem:[%s454 + $0x8] sm:$0xf]
    %v458 = vld [vmem:[%s454 + $0xc] sm:$0xf]
    %v459 = vld [vmem:[%s454 + $0x10] sm:$0xf]
    %v460 = vld [vmem:[%s454 + $0x14] sm:$0xf]
    %v461 = vld [vmem:[%s454 + $0x18] sm:$0xf]
    %v462 = vld [vmem:[%s454 + $0x1c] sm:$0xf]
    %v463 = vld [vmem:[%s454 + $0x20] sm:$0xf]
    %v464 = vld [vmem:[%s454 + $0x24] sm:$0xf]
    %v465 = vld [vmem:[%s454 + $0x28] sm:$0xf]
    %v466 = vld [vmem:[%s454 + $0x2c] sm:$0xf]
    %v467 = vld [vmem:[%s454 + $0x30] sm:$0xf]
    %v468 = vld [vmem:[%s454 + $0x34] sm:$0xf]
    %v469 = vld [vmem:[%s454 + $0x38] sm:$0xf]
    %v470 = vld [vmem:[%s454 + $0x3c] sm:$0xf]
    %v487 = vunpack.c.l.b16 %v455
    %v488 = vunpack.c.l.b16 %v456
    %v489 = vunpack.c.l.b16 %v457
    %v490 = vunpack.c.l.b16 %v458
    %v491 = vunpack.c.l.b16 %v459
    %v492 = vunpack.c.l.b16 %v460
    %v493 = vunpack.c.l.b16 %v461
    %v494 = vunpack.c.l.b16 %v462
    %v495 = vunpack.c.l.b16 %v463
    %v496 = vunpack.c.l.b16 %v464
    %v497 = vunpack.c.l.b16 %v465
    %v498 = vunpack.c.l.b16 %v466
    %v499 = vunpack.c.l.b16 %v467
    %v500 = vunpack.c.l.b16 %v468
    %v501 = vunpack.c.l.b16 %v469
    %v502 = vunpack.c.l.b16 %v470
    %v503 = vpack.c.b16 %v488, %v487
    %v504 = vpack.c.b16 %v490, %v489
    %v505 = vpack.c.b16 %v492, %v491
    %v506 = vpack.c.b16 %v494, %v493
    %v507 = vpack.c.b16 %v496, %v495
    %v508 = vpack.c.b16 %v498, %v497
    %v509 = vpack.c.b16 %v500, %v499
    %v510 = vpack.c.b16 %v502, %v501
    %519 = vmatprep.subr.bf16.mxu0 0
    %520 = vmatpush1.bf16.msra.mxu0 %v503
    %521 = vmatprep.subr.bf16.mxu0 0
    %522 = vmatpush1.bf16.msra.mxu0 %v504
    %523 = vmatprep.subr.bf16.mxu0 0
    %524 = vmatpush1.bf16.msra.mxu0 %v505
    %525 = vmatprep.subr.bf16.mxu0 0
    %526 = vmatpush1.bf16.msra.mxu0 %v506
    %527 = vmatprep.subr.bf16.mxu0 0
    %528 = vmatpush1.bf16.msra.mxu0 %v507
    %529 = vmatprep.subr.bf16.mxu0 0
    %530 = vmatpush1.bf16.msra.mxu0 %v508
    %531 = vmatprep.subr.bf16.mxu0 0
    %532 = vmatpush1.bf16.msra.mxu0 %v509
    %533 = vmatprep.subr.bf16.mxu0 0
    %534 = vmatpush1.bf16.msra.mxu0 %v510
    %535 = vmatprep.subr.bf16.mxu0 0
    %536 = vmatpush1.bf16.msra.mxu0 0
    %537 = vmatprep.subr.bf16.mxu0 0
    %538 = vmatpush1.bf16.msra.mxu0 0
    %539 = vmatprep.subr.bf16.mxu0 0
    %540 = vmatpush1.bf16.msra.mxu0 0
    %541 = vmatprep.subr.bf16.mxu0 0
    %542 = vmatpush1.bf16.msra.mxu0 0
    %543 = vmatprep.subr.bf16.mxu0 0
    %544 = vmatpush1.bf16.msra.mxu0 0
    %545 = vmatprep.subr.bf16.mxu0 0
    %546 = vmatpush1.bf16.msra.mxu0 0
    %547 = vmatprep.subr.bf16.mxu0 0
    %548 = vmatpush1.bf16.msra.mxu0 0
    %549 = vmatprep.subr.bf16.mxu0 0
    %550 = vmatpush1.bf16.msra.mxu0 0
    %551 = vmatprep.mubr.bf16.mxu0 0
    %552 = vmatmul.mubr.bf16.gmra.mrb[0].mxu0 %v449
    %v553 = vpop.f32.mrb[0].mxu0
    %v554 = vadd.f32 0.0, %v553
    %v555 = vpop.f32.mrb[0].mxu0
    %v556 = vpop.f32.mrb[0].mxu0
    %v557 = vadd.f32 0.0, %v556
    %v558 = vpop.f32.mrb[0].mxu0
    %559 = vmatprep.mubr.bf16.mxu0 0
    %560 = vmatmul.mubr.bf16.gmra.mrb[0].mxu0 %v450
    %v561 = vpop.f32.mrb[0].mxu0
    %v562 = vadd.f32 0.0, %v561
    %v563 = vpop.f32.mrb[0].mxu0
    %v564 = vpop.f32.mrb[0].mxu0
    %v565 = vadd.f32 0.0, %v564
    %v566 = vpop.f32.mrb[0].mxu0
    %567 = vmatprep.mubr.bf16.mxu0 0
    %568 = vmatmul.mubr.bf16.gmra.mrb[0].mxu0 %v451
    %v569 = vpop.f32.mrb[0].mxu0
    %v570 = vadd.f32 0.0, %v569
    %v571 = vpop.f32.mrb[0].mxu0
    %v572 = vpop.f32.mrb[0].mxu0
    %v573 = vadd.f32 0.0, %v572
    %v574 = vpop.f32.mrb[0].mxu0
    %575 = vmatprep.mubr.bf16.mxu0 0
    %576 = vmatmul.mubr.bf16.gmra.mrb[0].mxu0 %v452
    %v577 = vpop.f32.mrb[0].mxu0
    %v578 = vadd.f32 0.0, %v577
    %v579 = vpop.f32.mrb[0].mxu0
    %v580 = vpop.f32.mrb[0].mxu0
    %v581 = vadd.f32 0.0, %v580
    %v582 = vpop.f32.mrb[0].mxu0
    %583 = vmatprep.mubr.bf16.mxu0 0
    %584 = vmatmul.mubr.bf16.gmra.mrb[0].mxu0 %v453
    %v585 = vpop.f32.mrb[0].mxu0
    %v586 = vadd.f32 0.0, %v585
    %v587 = vpop.f32.mrb[0].mxu0
    %v588 = vpop.f32.mrb[0].mxu0
    %v589 = vpop.f32.mrb[0].mxu0
    %590 = vdwg.mxu0
    %v591 = vadd.f32 %v403, %v554
    %v592 = vadd.f32 %v406, %v557
    %v593 = vadd.f32 %v411, %v562
    %v594 = vadd.f32 %v414, %v565
    %v595 = vadd.f32 %v419, %v570
    %v596 = vadd.f32 %v422, %v573
    %v597 = vadd.f32 %v427, %v578
    %v598 = vadd.f32 %v430, %v581
    %v599 = vadd.f32 %v435, %v586
    %v600 = vld [vmem:[%s0 + $0x7] sm:$0xff]
    %v601 = vld [vmem:[%s0 + $0xf] sm:$0xff]
    %v602 = vld [vmem:[%s0 + $0x17] sm:$0xff]
    %v603 = vld [vmem:[%s0 + $0x1f] sm:$0xff]
    %v604 = vld [vmem:[%s0 + $0x27] sm:$0xff]
    %v605 = vld [vmem:[%s0 + $0x2f] sm:$0xff]
    %v606 = vld [vmem:[%s0 + $0x37] sm:$0xff]
    %v607 = vld [vmem:[%s0 + $0x3f] sm:$0xff]
    %v608 = vld [vmem:[%s0 + $0x47] sm:$0xff]
    %v609 = vpack.c.bf16 %v601, %v600
    %v610 = vpack.c.bf16 %v603, %v602
    %v611 = vpack.c.bf16 %v605, %v604
    %v612 = vpack.c.bf16 %v607, %v606
    %v613 = vpack.c.bf16 %v608, %v608
    %s614 = scalar_lea.vmem [#allocation6], 192
    %v615 = vld [vmem:[%s614] sm:$0xf]
    %v616 = vld [vmem:[%s614 + $0x4] sm:$0xf]
    %v617 = vld [vmem:[%s614 + $0x8] sm:$0xf]
    %v618 = vld [vmem:[%s614 + $0xc] sm:$0xf]
    %v619 = vld [vmem:[%s614 + $0x10] sm:$0xf]
    %v620 = vld [vmem:[%s614 + $0x14] sm:$0xf]
    %v621 = vld [vmem:[%s614 + $0x18] sm:$0xf]
    %v622 = vld [vmem:[%s614 + $0x1c] sm:$0xf]
    %v623 = vld [vmem:[%s614 + $0x20] sm:$0xf]
    %v624 = vld [vmem:[%s614 + $0x24] sm:$0xf]
    %v625 = vld [vmem:[%s614 + $0x28] sm:$0xf]
    %v626 = vld [vmem:[%s614 + $0x2c] sm:$0xf]
    %v627 = vld [vmem:[%s614 + $0x30] sm:$0xf]
    %v628 = vld [vmem:[%s614 + $0x34] sm:$0xf]
    %v629 = vld [vmem:[%s614 + $0x38] sm:$0xf]
    %v630 = vld [vmem:[%s614 + $0x3c] sm:$0xf]
    %v647 = vunpack.c.l.b16 %v615
    %v648 = vunpack.c.l.b16 %v616
    %v649 = vunpack.c.l.b16 %v617
    %v650 = vunpack.c.l.b16 %v618
    %v651 = vunpack.c.l.b16 %v619
    %v652 = vunpack.c.l.b16 %v620
    %v653 = vunpack.c.l.b16 %v621
    %v654 = vunpack.c.l.b16 %v622
    %v655 = vunpack.c.l.b16 %v623
    %v656 = vunpack.c.l.b16 %v624
    %v657 = vunpack.c.l.b16 %v625
    %v658 = vunpack.c.l.b16 %v626
    %v659 = vunpack.c.l.b16 %v627
    %v660 = vunpack.c.l.b16 %v628
    %v661 = vunpack.c.l.b16 %v629
    %v662 = vunpack.c.l.b16 %v630
    %v663 = vpack.c.b16 %v648, %v647
    %v664 = vpack.c.b16 %v650, %v649
    %v665 = vpack.c.b16 %v652, %v651
    %v666 = vpack.c.b16 %v654, %v653
    %v667 = vpack.c.b16 %v656, %v655
    %v668 = vpack.c.b16 %v658, %v657
    %v669 = vpack.c.b16 %v660, %v659
    %v670 = vpack.c.b16 %v662, %v661
    %679 = vmatprep.subr.bf16.mxu0 0
    %680 = vmatpush1.bf16.msra.mxu0 %v663
    %681 = vmatprep.subr.bf16.mxu0 0
    %682 = vmatpush1.bf16.msra.mxu0 %v664
    %683 = vmatprep.subr.bf16.mxu0 0
    %684 = vmatpush1.bf16.msra.mxu0 %v665
    %685 = vmatprep.subr.bf16.mxu0 0
    %686 = vmatpush1.bf16.msra.mxu0 %v666
    %687 = vmatprep.subr.bf16.mxu0 0
    %688 = vmatpush1.bf16.msra.mxu0 %v667
    %689 = vmatprep.subr.bf16.mxu0 0
    %690 = vmatpush1.bf16.msra.mxu0 %v668
    %691 = vmatprep.subr.bf16.mxu0 0
    %692 = vmatpush1.bf16.msra.mxu0 %v669
    %693 = vmatprep.subr.bf16.mxu0 0
    %694 = vmatpush1.bf16.msra.mxu0 %v670
    %695 = vmatprep.subr.bf16.mxu0 0
    %696 = vmatpush1.bf16.msra.mxu0 0
    %697 = vmatprep.subr.bf16.mxu0 0
    %698 = vmatpush1.bf16.msra.mxu0 0
    %699 = vmatprep.subr.bf16.mxu0 0
    %700 = vmatpush1.bf16.msra.mxu0 0
    %701 = vmatprep.subr.bf16.mxu0 0
    %702 = vmatpush1.bf16.msra.mxu0 0
    %703 = vmatprep.subr.bf16.mxu0 0
    %704 = vmatpush1.bf16.msra.mxu0 0
    %705 = vmatprep.subr.bf16.mxu0 0
    %706 = vmatpush1.bf16.msra.mxu0 0
    %707 = vmatprep.subr.bf16.mxu0 0
    %708 = vmatpush1.bf16.msra.mxu0 0
    %709 = vmatprep.subr.bf16.mxu0 0
    %710 = vmatpush1.bf16.msra.mxu0 0
    %711 = vmatprep.mubr.bf16.mxu0 0
    %712 = vmatmul.mubr.bf16.gmra.mrb[0].mxu0 %v609
    %v713 = vpop.f32.mrb[0].mxu0
    %v714 = vadd.f32 0.0, %v713
    %v715 = vpop.f32.mrb[0].mxu0
    %v716 = vpop.f32.mrb[0].mxu0
    %v717 = vadd.f32 0.0, %v716
    %v718 = vpop.f32.mrb[0].mxu0
    %719 = vmatprep.mubr.bf16.mxu0 0
    %720 = vmatmul.mubr.bf16.gmra.mrb[0].mxu0 %v610
    %v721 = vpop.f32.mrb[0].mxu0
    %v722 = vadd.f32 0.0, %v721
    %v723 = vpop.f32.mrb[0].mxu0
    %v724 = vpop.f32.mrb[0].mxu0
    %v725 = vadd.f32 0.0, %v724
    %v726 = vpop.f32.mrb[0].mxu0
    %727 = vmatprep.mubr.bf16.mxu0 0
    %728 = vmatmul.mubr.bf16.gmra.mrb[0].mxu0 %v611
    %v729 = vpop.f32.mrb[0].mxu0
    %v730 = vadd.f32 0.0, %v729
    %v731 = vpop.f32.mrb[0].mxu0
    %v732 = vpop.f32.mrb[0].mxu0
    %v733 = vadd.f32 0.0, %v732
    %v734 = vpop.f32.mrb[0].mxu0
    %735 = vmatprep.mubr.bf16.mxu0 0
    %736 = vmatmul.mubr.bf16.gmra.mrb[0].mxu0 %v612
    %v737 = vpop.f32.mrb[0].mxu0
    %v738 = vadd.f32 0.0, %v737
    %v739 = vpop.f32.mrb[0].mxu0
    %v740 = vpop.f32.mrb[0].mxu0
    %v741 = vadd.f32 0.0, %v740
    %v742 = vpop.f32.mrb[0].mxu0
    %743 = vmatprep.mubr.bf16.mxu0 0
    %744 = vmatmul.mubr.bf16.gmra.mrb[0].mxu0 %v613
    %v745 = vpop.f32.mrb[0].mxu0
    %v746 = vadd.f32 0.0, %v745
    %v747 = vpop.f32.mrb[0].mxu0
    %v748 = vpop.f32.mrb[0].mxu0
    %v749 = vpop.f32.mrb[0].mxu0
    %750 = vdwg.mxu0
    %v751 = vadd.f32 %v591, %v714
    %v752 = vadd.f32 %v592, %v717
    %v753 = vadd.f32 %v593, %v722
    %v754 = vadd.f32 %v594, %v725
    %v755 = vadd.f32 %v595, %v730
    %v756 = vadd.f32 %v596, %v733
    %v757 = vadd.f32 %v597, %v738
    %v758 = vadd.f32 %v598, %v741
    %v759 = vadd.f32 %v599, %v746
    %v760 = vld [vmem:[%s0 + $0x8] sm:$0xff]
    %v761 = vld [vmem:[%s0 + $0x10] sm:$0xff]
    %v762 = vld [vmem:[%s0 + $0x18] sm:$0xff]
    %v763 = vld [vmem:[%s0 + $0x20] sm:$0xff]
    %v764 = vld [vmem:[%s0 + $0x28] sm:$0xff]
    %v765 = vld [vmem:[%s0 + $0x30] sm:$0xff]
    %v766 = vld [vmem:[%s0 + $0x38] sm:$0xff]
    %v767 = vld [vmem:[%s0 + $0x40] sm:$0xff]
    %v768 = vld [vmem:[%s0 + $0x48] sm:$0xff]
    %v769 = vpack.c.bf16 %v761, %v760
    %v770 = vpack.c.bf16 %v763, %v762
    %v771 = vpack.c.bf16 %v765, %v764
    %v772 = vpack.c.bf16 %v767, %v766
    %v773 = vpack.c.bf16 %v768, %v768
    %s774 = scalar_lea.vmem [#allocation6], 256
    %v775 = vld [vmem:[%s774] sm:$0xf]
    %v776 = vld [vmem:[%s774 + $0x4] sm:$0xf]
    %v777 = vld [vmem:[%s774 + $0x8] sm:$0xf]
    %v778 = vld [vmem:[%s774 + $0xc] sm:$0xf]
    %v779 = vld [vmem:[%s774 + $0x10] sm:$0xf]
    %v780 = vld [vmem:[%s774 + $0x14] sm:$0xf]
    %v781 = vld [vmem:[%s774 + $0x18] sm:$0xf]
    %v782 = vld [vmem:[%s774 + $0x1c] sm:$0xf]
    %v783 = vld [vmem:[%s774 + $0x20] sm:$0xf]
    %v784 = vld [vmem:[%s774 + $0x24] sm:$0xf]
    %v785 = vld [vmem:[%s774 + $0x28] sm:$0xf]
    %v786 = vld [vmem:[%s774 + $0x2c] sm:$0xf]
    %v787 = vld [vmem:[%s774 + $0x30] sm:$0xf]
    %v788 = vld [vmem:[%s774 + $0x34] sm:$0xf]
    %v789 = vld [vmem:[%s774 + $0x38] sm:$0xf]
    %v790 = vld [vmem:[%s774 + $0x3c] sm:$0xf]
    %v807 = vunpack.c.l.b16 %v775
    %v808 = vunpack.c.l.b16 %v776
    %v809 = vunpack.c.l.b16 %v777
    %v810 = vunpack.c.l.b16 %v778
    %v811 = vunpack.c.l.b16 %v779
    %v812 = vunpack.c.l.b16 %v780
    %v813 = vunpack.c.l.b16 %v781
    %v814 = vunpack.c.l.b16 %v782
    %v815 = vunpack.c.l.b16 %v783
    %v816 = vunpack.c.l.b16 %v784
    %v817 = vunpack.c.l.b16 %v785
    %v818 = vunpack.c.l.b16 %v786
    %v819 = vunpack.c.l.b16 %v787
    %v820 = vunpack.c.l.b16 %v788
    %v821 = vunpack.c.l.b16 %v789
    %v822 = vunpack.c.l.b16 %v790
    %v823 = vpack.c.b16 %v808, %v807
    %v824 = vpack.c.b16 %v810, %v809
    %v825 = vpack.c.b16 %v812, %v811
    %v826 = vpack.c.b16 %v814, %v813
    %v827 = vpack.c.b16 %v816, %v815
    %v828 = vpack.c.b16 %v818, %v817
    %v829 = vpack.c.b16 %v820, %v819
    %v830 = vpack.c.b16 %v822, %v821
    %839 = vmatprep.subr.bf16.mxu0 0
    %840 = vmatpush1.bf16.msra.mxu0 %v823
    %841 = vmatprep.subr.bf16.mxu0 0
    %842 = vmatpush1.bf16.msra.mxu0 %v824
    %843 = vmatprep.subr.bf16.mxu0 0
    %844 = vmatpush1.bf16.msra.mxu0 %v825
    %845 = vmatprep.subr.bf16.mxu0 0
    %846 = vmatpush1.bf16.msra.mxu0 %v826
    %847 = vmatprep.subr.bf16.mxu0 0
    %848 = vmatpush1.bf16.msra.mxu0 %v827
    %849 = vmatprep.subr.bf16.mxu0 0
    %850 = vmatpush1.bf16.msra.mxu0 %v828
    %851 = vmatprep.subr.bf16.mxu0 0
    %852 = vmatpush1.bf16.msra.mxu0 %v829
    %853 = vmatprep.subr.bf16.mxu0 0
    %854 = vmatpush1.bf16.msra.mxu0 %v830
    %855 = vmatprep.subr.bf16.mxu0 0
    %856 = vmatpush1.bf16.msra.mxu0 0
    %857 = vmatprep.subr.bf16.mxu0 0
    %858 = vmatpush1.bf16.msra.mxu0 0
    %859 = vmatprep.subr.bf16.mxu0 0
    %860 = vmatpush1.bf16.msra.mxu0 0
    %861 = vmatprep.subr.bf16.mxu0 0
    %862 = vmatpush1.bf16.msra.mxu0 0
    %863 = vmatprep.subr.bf16.mxu0 0
    %864 = vmatpush1.bf16.msra.mxu0 0
    %865 = vmatprep.subr.bf16.mxu0 0
    %866 = vmatpush1.bf16.msra.mxu0 0
    %867 = vmatprep.subr.bf16.mxu0 0
    %868 = vmatpush1.bf16.msra.mxu0 0
    %869 = vmatprep.subr.bf16.mxu0 0
    %870 = vmatpush1.bf16.msra.mxu0 0
    %871 = vmatprep.mubr.bf16.mxu0 0
    %872 = vmatmul.mubr.bf16.gmra.mrb[0].mxu0 %v769
    %v873 = vpop.f32.mrb[0].mxu0
    %v874 = vadd.f32 0.0, %v873
    %v875 = vpop.f32.mrb[0].mxu0
    %v876 = vpop.f32.mrb[0].mxu0
    %v877 = vadd.f32 0.0, %v876
    %v878 = vpop.f32.mrb[0].mxu0
    %879 = vmatprep.mubr.bf16.mxu0 0
    %880 = vmatmul.mubr.bf16.gmra.mrb[0].mxu0 %v770
    %v881 = vpop.f32.mrb[0].mxu0
    %v882 = vadd.f32 0.0, %v881
    %v883 = vpop.f32.mrb[0].mxu0
    %v884 = vpop.f32.mrb[0].mxu0
    %v885 = vadd.f32 0.0, %v884
    %v886 = vpop.f32.mrb[0].mxu0
    %887 = vmatprep.mubr.bf16.mxu0 0
    %888 = vmatmul.mubr.bf16.gmra.mrb[0].mxu0 %v771
    %v889 = vpop.f32.mrb[0].mxu0
    %v890 = vadd.f32 0.0, %v889
    %v891 = vpop.f32.mrb[0].mxu0
    %v892 = vpop.f32.mrb[0].mxu0
    %v893 = vadd.f32 0.0, %v892
    %v894 = vpop.f32.mrb[0].mxu0
    %895 = vmatprep.mubr.bf16.mxu0 0
    %896 = vmatmul.mubr.bf16.gmra.mrb[0].mxu0 %v772
    %v897 = vpop.f32.mrb[0].mxu0
    %v898 = vadd.f32 0.0, %v897
    %v899 = vpop.f32.mrb[0].mxu0
    %v900 = vpop.f32.mrb[0].mxu0
    %v901 = vadd.f32 0.0, %v900
    %v902 = vpop.f32.mrb[0].mxu0
    %903 = vmatprep.mubr.bf16.mxu0 0
    %904 = vmatmul.mubr.bf16.gmra.mrb[0].mxu0 %v773
    %v905 = vpop.f32.mrb[0].mxu0
    %v906 = vadd.f32 0.0, %v905
    %v907 = vpop.f32.mrb[0].mxu0
    %v908 = vpop.f32.mrb[0].mxu0
    %v909 = vpop.f32.mrb[0].mxu0
    %910 = vdwg.mxu0
    %v911 = vadd.f32 %v751, %v874
    %v912 = vadd.f32 %v752, %v877
    %v913 = vadd.f32 %v753, %v882
    %v914 = vadd.f32 %v754, %v885
    %v915 = vadd.f32 %v755, %v890
    %v916 = vadd.f32 %v756, %v893
    %v917 = vadd.f32 %v757, %v898
    %v918 = vadd.f32 %v758, %v901
    %v919 = vadd.f32 %v759, %v906
    %v920 = vld [vmem:[%s0 + $0x9] sm:$0xff]
    %v921 = vld [vmem:[%s0 + $0x11] sm:$0xff]
    %v922 = vld [vmem:[%s0 + $0x19] sm:$0xff]
    %v923 = vld [vmem:[%s0 + $0x21] sm:$0xff]
    %v924 = vld [vmem:[%s0 + $0x29] sm:$0xff]
    %v925 = vld [vmem:[%s0 + $0x31] sm:$0xff]
    %v926 = vld [vmem:[%s0 + $0x39] sm:$0xff]
    %v927 = vld [vmem:[%s0 + $0x41] sm:$0xff]
    %v928 = vld [vmem:[%s0 + $0x49] sm:$0xff]
    %v929 = vpack.c.bf16 %v921, %v920
    %v930 = vpack.c.bf16 %v923, %v922
    %v931 = vpack.c.bf16 %v925, %v924
    %v932 = vpack.c.bf16 %v927, %v926
    %v933 = vpack.c.bf16 %v928, %v928
    %s934 = scalar_lea.vmem [#allocation6], 320
    %v935 = vld [vmem:[%s934] sm:$0xf]
    %v936 = vld [vmem:[%s934 + $0x4] sm:$0xf]
    %v937 = vld [vmem:[%s934 + $0x8] sm:$0xf]
    %v938 = vld [vmem:[%s934 + $0xc] sm:$0xf]
    %v939 = vld [vmem:[%s934 + $0x10] sm:$0xf]
    %v940 = vld [vmem:[%s934 + $0x14] sm:$0xf]
    %v941 = vld [vmem:[%s934 + $0x18] sm:$0xf]
    %v942 = vld [vmem:[%s934 + $0x1c] sm:$0xf]
    %v943 = vld [vmem:[%s934 + $0x20] sm:$0xf]
    %v944 = vld [vmem:[%s934 + $0x24] sm:$0xf]
    %v945 = vld [vmem:[%s934 + $0x28] sm:$0xf]
    %v946 = vld [vmem:[%s934 + $0x2c] sm:$0xf]
    %v947 = vld [vmem:[%s934 + $0x30] sm:$0xf]
    %v948 = vld [vmem:[%s934 + $0x34] sm:$0xf]
    %v949 = vld [vmem:[%s934 + $0x38] sm:$0xf]
    %v950 = vld [vmem:[%s934 + $0x3c] sm:$0xf]
    %v967 = vunpack.c.l.b16 %v935
    %v968 = vunpack.c.l.b16 %v936
    %v969 = vunpack.c.l.b16 %v937
    %v970 = vunpack.c.l.b16 %v938
    %v971 = vunpack.c.l.b16 %v939
    %v972 = vunpack.c.l.b16 %v940
    %v973 = vunpack.c.l.b16 %v941
    %v974 = vunpack.c.l.b16 %v942
    %v975 = vunpack.c.l.b16 %v943
    %v976 = vunpack.c.l.b16 %v944
    %v977 = vunpack.c.l.b16 %v945
    %v978 = vunpack.c.l.b16 %v946
    %v979 = vunpack.c.l.b16 %v947
    %v980 = vunpack.c.l.b16 %v948
    %v981 = vunpack.c.l.b16 %v949
    %v982 = vunpack.c.l.b16 %v950
    %v983 = vpack.c.b16 %v968, %v967
    %v984 = vpack.c.b16 %v970, %v969
    %v985 = vpack.c.b16 %v972, %v971
    %v986 = vpack.c.b16 %v974, %v973
    %v987 = vpack.c.b16 %v976, %v975
    %v988 = vpack.c.b16 %v978, %v977
    %v989 = vpack.c.b16 %v980, %v979
    %v990 = vpack.c.b16 %v982, %v981
    %999 = vmatprep.subr.bf16.mxu0 0
    %1000 = vmatpush1.bf16.msra.mxu0 %v983
    %1001 = vmatprep.subr.bf16.mxu0 0
    %1002 = vmatpush1.bf16.msra.mxu0 %v984
    %1003 = vmatprep.subr.bf16.mxu0 0
    %1004 = vmatpush1.bf16.msra.mxu0 %v985
    %1005 = vmatprep.subr.bf16.mxu0 0
    %1006 = vmatpush1.bf16.msra.mxu0 %v986
    %1007 = vmatprep.subr.bf16.mxu0 0
    %1008 = vmatpush1.bf16.msra.mxu0 %v987
    %1009 = vmatprep.subr.bf16.mxu0 0
    %1010 = vmatpush1.bf16.msra.mxu0 %v988
    %1011 = vmatprep.subr.bf16.mxu0 0
    %1012 = vmatpush1.bf16.msra.mxu0 %v989
    %1013 = vmatprep.subr.bf16.mxu0 0
    %1014 = vmatpush1.bf16.msra.mxu0 %v990
    %1015 = vmatprep.subr.bf16.mxu0 0
    %1016 = vmatpush1.bf16.msra.mxu0 0
    %1017 = vmatprep.subr.bf16.mxu0 0
    %1018 = vmatpush1.bf16.msra.mxu0 0
    %1019 = vmatprep.subr.bf16.mxu0 0
    %1020 = vmatpush1.bf16.msra.mxu0 0
    %1021 = vmatprep.subr.bf16.mxu0 0
    %1022 = vmatpush1.bf16.msra.mxu0 0
    %1023 = vmatprep.subr.bf16.mxu0 0
    %1024 = vmatpush1.bf16.msra.mxu0 0
    %1025 = vmatprep.subr.bf16.mxu0 0
    %1026 = vmatpush1.bf16.msra.mxu0 0
    %1027 = vmatprep.subr.bf16.mxu0 0
    %1028 = vmatpush1.bf16.msra.mxu0 0
    %1029 = vmatprep.subr.bf16.mxu0 0
    %1030 = vmatpush1.bf16.msra.mxu0 0
    %1031 = vmatprep.mubr.bf16.mxu0 0
    %1032 = vmatmul.mubr.bf16.gmra.mrb[0].mxu0 %v929
    %v1033 = vpop.f32.mrb[0].mxu0
    %v1034 = vadd.f32 0.0, %v1033
    %v1035 = vpop.f32.mrb[0].mxu0
    %v1036 = vpop.f32.mrb[0].mxu0
    %v1037 = vadd.f32 0.0, %v1036
    %v1038 = vpop.f32.mrb[0].mxu0
    %1039 = vmatprep.mubr.bf16.mxu0 0
    %1040 = vmatmul.mubr.bf16.gmra.mrb[0].mxu0 %v930
    %v1041 = vpop.f32.mrb[0].mxu0
    %v1042 = vadd.f32 0.0, %v1041
    %v1043 = vpop.f32.mrb[0].mxu0
    %v1044 = vpop.f32.mrb[0].mxu0
    %v1045 = vadd.f32 0.0, %v1044
    %v1046 = vpop.f32.mrb[0].mxu0
    %1047 = vmatprep.mubr.bf16.mxu0 0
    %1048 = vmatmul.mubr.bf16.gmra.mrb[0].mxu0 %v931
    %v1049 = vpop.f32.mrb[0].mxu0
    %v1050 = vadd.f32 0.0, %v1049
    %v1051 = vpop.f32.mrb[0].mxu0
    %v1052 = vpop.f32.mrb[0].mxu0
    %v1053 = vadd.f32 0.0, %v1052
    %v1054 = vpop.f32.mrb[0].mxu0
    %1055 = vmatprep.mubr.bf16.mxu0 0
    %1056 = vmatmul.mubr.bf16.gmra.mrb[0].mxu0 %v932
    %v1057 = vpop.f32.mrb[0].mxu0
    %v1058 = vadd.f32 0.0, %v1057
    %v1059 = vpop.f32.mrb[0].mxu0
    %v1060 = vpop.f32.mrb[0].mxu0
    %v1061 = vadd.f32 0.0, %v1060
    %v1062 = vpop.f32.mrb[0].mxu0
    %1063 = vmatprep.mubr.bf16.mxu0 0
    %1064 = vmatmul.mubr.bf16.gmra.mrb[0].mxu0 %v933
    %v1065 = vpop.f32.mrb[0].mxu0
    %v1066 = vadd.f32 0.0, %v1065
    %v1067 = vpop.f32.mrb[0].mxu0
    %v1068 = vpop.f32.mrb[0].mxu0
    %v1069 = vpop.f32.mrb[0].mxu0
    %1070 = vdwg.mxu0
    %v1071 = vadd.f32 %v911, %v1034
    %v1072 = vadd.f32 %v912, %v1037
    %v1073 = vadd.f32 %v913, %v1042
    %v1074 = vadd.f32 %v914, %v1045
    %v1075 = vadd.f32 %v915, %v1050
    %v1076 = vadd.f32 %v916, %v1053
    %v1077 = vadd.f32 %v917, %v1058
    %v1078 = vadd.f32 %v918, %v1061
    %v1079 = vadd.f32 %v919, %v1066
    %v1080 = vld [vmem:[%s0 + $0xd] sm:$0xff]
    %v1081 = vld [vmem:[%s0 + $0x15] sm:$0xff]
    %v1082 = vld [vmem:[%s0 + $0x1d] sm:$0xff]
    %v1083 = vld [vmem:[%s0 + $0x25] sm:$0xff]
    %v1084 = vld [vmem:[%s0 + $0x2d] sm:$0xff]
    %v1085 = vld [vmem:[%s0 + $0x35] sm:$0xff]
    %v1086 = vld [vmem:[%s0 + $0x3d] sm:$0xff]
    %v1087 = vld [vmem:[%s0 + $0x45] sm:$0xff]
    %v1088 = vld [vmem:[%s0 + $0x4d] sm:$0xff]
    %v1089 = vpack.c.bf16 %v1081, %v1080
    %v1090 = vpack.c.bf16 %v1083, %v1082
    %v1091 = vpack.c.bf16 %v1085, %v1084
    %v1092 = vpack.c.bf16 %v1087, %v1086
    %v1093 = vpack.c.bf16 %v1088, %v1088
    %s1094 = scalar_lea.vmem [#allocation6], 384
    %v1095 = vld [vmem:[%s1094] sm:$0xf]
    %v1096 = vld [vmem:[%s1094 + $0x4] sm:$0xf]
    %v1097 = vld [vmem:[%s1094 + $0x8] sm:$0xf]
    %v1098 = vld [vmem:[%s1094 + $0xc] sm:$0xf]
    %v1099 = vld [vmem:[%s1094 + $0x10] sm:$0xf]
    %v1100 = vld [vmem:[%s1094 + $0x14] sm:$0xf]
    %v1101 = vld [vmem:[%s1094 + $0x18] sm:$0xf]
    %v1102 = vld [vmem:[%s1094 + $0x1c] sm:$0xf]
    %v1103 = vld [vmem:[%s1094 + $0x20] sm:$0xf]
    %v1104 = vld [vmem:[%s1094 + $0x24] sm:$0xf]
    %v1105 = vld [vmem:[%s1094 + $0x28] sm:$0xf]
    %v1106 = vld [vmem:[%s1094 + $0x2c] sm:$0xf]
    %v1107 = vld [vmem:[%s1094 + $0x30] sm:$0xf]
    %v1108 = vld [vmem:[%s1094 + $0x34] sm:$0xf]
    %v1109 = vld [vmem:[%s1094 + $0x38] sm:$0xf]
    %v1110 = vld [vmem:[%s1094 + $0x3c] sm:$0xf]
    %v1127 = vunpack.c.l.b16 %v1095
    %v1128 = vunpack.c.l.b16 %v1096
    %v1129 = vunpack.c.l.b16 %v1097
    %v1130 = vunpack.c.l.b16 %v1098
    %v1131 = vunpack.c.l.b16 %v1099
    %v1132 = vunpack.c.l.b16 %v1100
    %v1133 = vunpack.c.l.b16 %v1101
    %v1134 = vunpack.c.l.b16 %v1102
    %v1135 = vunpack.c.l.b16 %v1103
    %v1136 = vunpack.c.l.b16 %v1104
    %v1137 = vunpack.c.l.b16 %v1105
    %v1138 = vunpack.c.l.b16 %v1106
    %v1139 = vunpack.c.l.b16 %v1107
    %v1140 = vunpack.c.l.b16 %v1108
    %v1141 = vunpack.c.l.b16 %v1109
    %v1142 = vunpack.c.l.b16 %v1110
    %v1143 = vpack.c.b16 %v1128, %v1127
    %v1144 = vpack.c.b16 %v1130, %v1129
    %v1145 = vpack.c.b16 %v1132, %v1131
    %v1146 = vpack.c.b16 %v1134, %v1133
    %v1147 = vpack.c.b16 %v1136, %v1135
    %v1148 = vpack.c.b16 %v1138, %v1137
    %v1149 = vpack.c.b16 %v1140, %v1139
    %v1150 = vpack.c.b16 %v1142, %v1141
    %1159 = vmatprep.subr.bf16.mxu0 0
    %1160 = vmatpush1.bf16.msra.mxu0 %v1143
    %1161 = vmatprep.subr.bf16.mxu0 0
    %1162 = vmatpush1.bf16.msra.mxu0 %v1144
    %1163 = vmatprep.subr.bf16.mxu0 0
    %1164 = vmatpush1.bf16.msra.mxu0 %v1145
    %1165 = vmatprep.subr.bf16.mxu0 0
    %1166 = vmatpush1.bf16.msra.mxu0 %v1146
    %1167 = vmatprep.subr.bf16.mxu0 0
    %1168 = vmatpush1.bf16.msra.mxu0 %v1147
    %1169 = vmatprep.subr.bf16.mxu0 0
    %1170 = vmatpush1.bf16.msra.mxu0 %v1148
    %1171 = vmatprep.subr.bf16.mxu0 0
    %1172 = vmatpush1.bf16.msra.mxu0 %v1149
    %1173 = vmatprep.subr.bf16.mxu0 0
    %1174 = vmatpush1.bf16.msra.mxu0 %v1150
    %1175 = vmatprep.subr.bf16.mxu0 0
    %1176 = vmatpush1.bf16.msra.mxu0 0
    %1177 = vmatprep.subr.bf16.mxu0 0
    %1178 = vmatpush1.bf16.msra.mxu0 0
    %1179 = vmatprep.subr.bf16.mxu0 0
    %1180 = vmatpush1.bf16.msra.mxu0 0
    %1181 = vmatprep.subr.bf16.mxu0 0
    %1182 = vmatpush1.bf16.msra.mxu0 0
    %1183 = vmatprep.subr.bf16.mxu0 0
    %1184 = vmatpush1.bf16.msra.mxu0 0
    %1185 = vmatprep.subr.bf16.mxu0 0
    %1186 = vmatpush1.bf16.msra.mxu0 0
    %1187 = vmatprep.subr.bf16.mxu0 0
    %1188 = vmatpush1.bf16.msra.mxu0 0
    %1189 = vmatprep.subr.bf16.mxu0 0
    %1190 = vmatpush1.bf16.msra.mxu0 0
    %1191 = vmatprep.mubr.bf16.mxu0 0
    %1192 = vmatmul.mubr.bf16.gmra.mrb[0].mxu0 %v1089
    %v1193 = vpop.f32.mrb[0].mxu0
    %v1194 = vadd.f32 0.0, %v1193
    %v1195 = vpop.f32.mrb[0].mxu0
    %v1196 = vpop.f32.mrb[0].mxu0
    %v1197 = vadd.f32 0.0, %v1196
    %v1198 = vpop.f32.mrb[0].mxu0
    %1199 = vmatprep.mubr.bf16.mxu0 0
    %1200 = vmatmul.mubr.bf16.gmra.mrb[0].mxu0 %v1090
    %v1201 = vpop.f32.mrb[0].mxu0
    %v1202 = vadd.f32 0.0, %v1201
    %v1203 = vpop.f32.mrb[0].mxu0
    %v1204 = vpop.f32.mrb[0].mxu0
    %v1205 = vadd.f32 0.0, %v1204
    %v1206 = vpop.f32.mrb[0].mxu0
    %1207 = vmatprep.mubr.bf16.mxu0 0
    %1208 = vmatmul.mubr.bf16.gmra.mrb[0].mxu0 %v1091
    %v1209 = vpop.f32.mrb[0].mxu0
    %v1210 = vadd.f32 0.0, %v1209
    %v1211 = vpop.f32.mrb[0].mxu0
    %v1212 = vpop.f32.mrb[0].mxu0
    %v1213 = vadd.f32 0.0, %v1212
    %v1214 = vpop.f32.mrb[0].mxu0
    %1215 = vmatprep.mubr.bf16.mxu0 0
    %1216 = vmatmul.mubr.bf16.gmra.mrb[0].mxu0 %v1092
    %v1217 = vpop.f32.mrb[0].mxu0
    %v1218 = vadd.f32 0.0, %v1217
    %v1219 = vpop.f32.mrb[0].mxu0
    %v1220 = vpop.f32.mrb[0].mxu0
    %v1221 = vadd.f32 0.0, %v1220
    %v1222 = vpop.f32.mrb[0].mxu0
    %1223 = vmatprep.mubr.bf16.mxu0 0
    %1224 = vmatmul.mubr.bf16.gmra.mrb[0].mxu0 %v1093
    %v1225 = vpop.f32.mrb[0].mxu0
    %v1226 = vadd.f32 0.0, %v1225
    %v1227 = vpop.f32.mrb[0].mxu0
    %v1228 = vpop.f32.mrb[0].mxu0
    %v1229 = vpop.f32.mrb[0].mxu0
    %1230 = vdwg.mxu0
    %v1231 = vadd.f32 %v1071, %v1194
    %v1232 = vadd.f32 %v1072, %v1197
    %v1233 = vadd.f32 %v1073, %v1202
    %v1234 = vadd.f32 %v1074, %v1205
    %v1235 = vadd.f32 %v1075, %v1210
    %v1236 = vadd.f32 %v1076, %v1213
    %v1237 = vadd.f32 %v1077, %v1218
    %v1238 = vadd.f32 %v1078, %v1221
    %v1239 = vadd.f32 %v1079, %v1226
    %v1240 = vld [vmem:[%s0 + $0xe] sm:$0xff]
    %v1241 = vld [vmem:[%s0 + $0x16] sm:$0xff]
    %v1242 = vld [vmem:[%s0 + $0x1e] sm:$0xff]
    %v1243 = vld [vmem:[%s0 + $0x26] sm:$0xff]
    %v1244 = vld [vmem:[%s0 + $0x2e] sm:$0xff]
    %v1245 = vld [vmem:[%s0 + $0x36] sm:$0xff]
    %v1246 = vld [vmem:[%s0 + $0x3e] sm:$0xff]
    %v1247 = vld [vmem:[%s0 + $0x46] sm:$0xff]
    %v1248 = vld [vmem:[%s0 + $0x4e] sm:$0xff]
    %v1249 = vpack.c.bf16 %v1241, %v1240
    %v1250 = vpack.c.bf16 %v1243, %v1242
    %v1251 = vpack.c.bf16 %v1245, %v1244
    %v1252 = vpack.c.bf16 %v1247, %v1246
    %v1253 = vpack.c.bf16 %v1248, %v1248
    %s1254 = scalar_lea.vmem [#allocation6], 448
    %v1255 = vld [vmem:[%s1254] sm:$0xf]
    %v1256 = vld [vmem:[%s1254 + $0x4] sm:$0xf]
    %v1257 = vld [vmem:[%s1254 + $0x8] sm:$0xf]
    %v1258 = vld [vmem:[%s1254 + $0xc] sm:$0xf]
    %v1259 = vld [vmem:[%s1254 + $0x10] sm:$0xf]
    %v1260 = vld [vmem:[%s1254 + $0x14] sm:$0xf]
    %v1261 = vld [vmem:[%s1254 + $0x18] sm:$0xf]
    %v1262 = vld [vmem:[%s1254 + $0x1c] sm:$0xf]
    %v1263 = vld [vmem:[%s1254 + $0x20] sm:$0xf]
    %v1264 = vld [vmem:[%s1254 + $0x24] sm:$0xf]
    %v1265 = vld [vmem:[%s1254 + $0x28] sm:$0xf]
    %v1266 = vld [vmem:[%s1254 + $0x2c] sm:$0xf]
    %v1267 = vld [vmem:[%s1254 + $0x30] sm:$0xf]
    %v1268 = vld [vmem:[%s1254 + $0x34] sm:$0xf]
    %v1269 = vld [vmem:[%s1254 + $0x38] sm:$0xf]
    %v1270 = vld [vmem:[%s1254 + $0x3c] sm:$0xf]
    %v1287 = vunpack.c.l.b16 %v1255
    %v1288 = vunpack.c.l.b16 %v1256
    %v1289 = vunpack.c.l.b16 %v1257
    %v1290 = vunpack.c.l.b16 %v1258
    %v1291 = vunpack.c.l.b16 %v1259
    %v1292 = vunpack.c.l.b16 %v1260
    %v1293 = vunpack.c.l.b16 %v1261
    %v1294 = vunpack.c.l.b16 %v1262
    %v1295 = vunpack.c.l.b16 %v1263
    %v1296 = vunpack.c.l.b16 %v1264
    %v1297 = vunpack.c.l.b16 %v1265
    %v1298 = vunpack.c.l.b16 %v1266
    %v1299 = vunpack.c.l.b16 %v1267
    %v1300 = vunpack.c.l.b16 %v1268
    %v1301 = vunpack.c.l.b16 %v1269
    %v1302 = vunpack.c.l.b16 %v1270
    %v1303 = vpack.c.b16 %v1288, %v1287
    %v1304 = vpack.c.b16 %v1290, %v1289
    %v1305 = vpack.c.b16 %v1292, %v1291
    %v1306 = vpack.c.b16 %v1294, %v1293
    %v1307 = vpack.c.b16 %v1296, %v1295
    %v1308 = vpack.c.b16 %v1298, %v1297
    %v1309 = vpack.c.b16 %v1300, %v1299
    %v1310 = vpack.c.b16 %v1302, %v1301
    %1319 = vmatprep.subr.bf16.mxu0 0
    %1320 = vmatpush1.bf16.msra.mxu0 %v1303
    %1321 = vmatprep.subr.bf16.mxu0 0
    %1322 = vmatpush1.bf16.msra.mxu0 %v1304
    %1323 = vmatprep.subr.bf16.mxu0 0
    %1324 = vmatpush1.bf16.msra.mxu0 %v1305
    %1325 = vmatprep.subr.bf16.mxu0 0
    %1326 = vmatpush1.bf16.msra.mxu0 %v1306
    %1327 = vmatprep.subr.bf16.mxu0 0
    %1328 = vmatpush1.bf16.msra.mxu0 %v1307
    %1329 = vmatprep.subr.bf16.mxu0 0
    %1330 = vmatpush1.bf16.msra.mxu0 %v1308
    %1331 = vmatprep.subr.bf16.mxu0 0
    %1332 = vmatpush1.bf16.msra.mxu0 %v1309
    %1333 = vmatprep.subr.bf16.mxu0 0
    %1334 = vmatpush1.bf16.msra.mxu0 %v1310
    %1335 = vmatprep.subr.bf16.mxu0 0
    %1336 = vmatpush1.bf16.msra.mxu0 0
    %1337 = vmatprep.subr.bf16.mxu0 0
    %1338 = vmatpush1.bf16.msra.mxu0 0
    %1339 = vmatprep.subr.bf16.mxu0 0
    %1340 = vmatpush1.bf16.msra.mxu0 0
    %1341 = vmatprep.subr.bf16.mxu0 0
    %1342 = vmatpush1.bf16.msra.mxu0 0
    %1343 = vmatprep.subr.bf16.mxu0 0
    %1344 = vmatpush1.bf16.msra.mxu0 0
    %1345 = vmatprep.subr.bf16.mxu0 0
    %1346 = vmatpush1.bf16.msra.mxu0 0
    %1347 = vmatprep.subr.bf16.mxu0 0
    %1348 = vmatpush1.bf16.msra.mxu0 0
    %1349 = vmatprep.subr.bf16.mxu0 0
    %1350 = vmatpush1.bf16.msra.mxu0 0
    %1351 = vmatprep.mubr.bf16.mxu0 0
    %1352 = vmatmul.mubr.bf16.gmra.mrb[0].mxu0 %v1249
    %v1353 = vpop.f32.mrb[0].mxu0
    %v1354 = vadd.f32 0.0, %v1353
    %v1355 = vpop.f32.mrb[0].mxu0
    %v1356 = vpop.f32.mrb[0].mxu0
    %v1357 = vadd.f32 0.0, %v1356
    %v1358 = vpop.f32.mrb[0].mxu0
    %1359 = vmatprep.mubr.bf16.mxu0 0
    %1360 = vmatmul.mubr.bf16.gmra.mrb[0].mxu0 %v1250
    %v1361 = vpop.f32.mrb[0].mxu0
    %v1362 = vadd.f32 0.0, %v1361
    %v1363 = vpop.f32.mrb[0].mxu0
    %v1364 = vpop.f32.mrb[0].mxu0
    %v1365 = vadd.f32 0.0, %v1364
    %v1366 = vpop.f32.mrb[0].mxu0
    %1367 = vmatprep.mubr.bf16.mxu0 0
    %1368 = vmatmul.mubr.bf16.gmra.mrb[0].mxu0 %v1251
    %v1369 = vpop.f32.mrb[0].mxu0
    %v1370 = vadd.f32 0.0, %v1369
    %v1371 = vpop.f32.mrb[0].mxu0
    %v1372 = vpop.f32.mrb[0].mxu0
    %v1373 = vadd.f32 0.0, %v1372
    %v1374 = vpop.f32.mrb[0].mxu0
    %1375 = vmatprep.mubr.bf16.mxu0 0
    %1376 = vmatmul.mubr.bf16.gmra.mrb[0].mxu0 %v1252
    %v1377 = vpop.f32.mrb[0].mxu0
    %v1378 = vadd.f32 0.0, %v1377
    %v1379 = vpop.f32.mrb[0].mxu0
    %v1380 = vpop.f32.mrb[0].mxu0
    %v1381 = vadd.f32 0.0, %v1380
    %v1382 = vpop.f32.mrb[0].mxu0
    %1383 = vmatprep.mubr.bf16.mxu0 0
    %1384 = vmatmul.mubr.bf16.gmra.mrb[0].mxu0 %v1253
    %v1385 = vpop.f32.mrb[0].mxu0
    %v1386 = vadd.f32 0.0, %v1385
    %v1387 = vpop.f32.mrb[0].mxu0
    %v1388 = vpop.f32.mrb[0].mxu0
    %v1389 = vpop.f32.mrb[0].mxu0
    %1390 = vdwg.mxu0
    %v1391 = vadd.f32 %v1231, %v1354
    %v1392 = vadd.f32 %v1232, %v1357
    %v1393 = vadd.f32 %v1233, %v1362
    %v1394 = vadd.f32 %v1234, %v1365
    %v1395 = vadd.f32 %v1235, %v1370
    %v1396 = vadd.f32 %v1236, %v1373
    %v1397 = vadd.f32 %v1237, %v1378
    %v1398 = vadd.f32 %v1238, %v1381
    %v1399 = vadd.f32 %v1239, %v1386
    %v1400 = vld [vmem:[%s0 + $0xf] sm:$0xff]
    %v1401 = vld [vmem:[%s0 + $0x17] sm:$0xff]
    %v1402 = vld [vmem:[%s0 + $0x1f] sm:$0xff]
    %v1403 = vld [vmem:[%s0 + $0x27] sm:$0xff]
    %v1404 = vld [vmem:[%s0 + $0x2f] sm:$0xff]
    %v1405 = vld [vmem:[%s0 + $0x37] sm:$0xff]
    %v1406 = vld [vmem:[%s0 + $0x3f] sm:$0xff]
    %v1407 = vld [vmem:[%s0 + $0x47] sm:$0xff]
    %v1408 = vld [vmem:[%s0 + $0x4f] sm:$0xff]
    %v1409 = vpack.c.bf16 %v1401, %v1400
    %v1410 = vpack.c.bf16 %v1403, %v1402
    %v1411 = vpack.c.bf16 %v1405, %v1404
    %v1412 = vpack.c.bf16 %v1407, %v1406
    %v1413 = vpack.c.bf16 %v1408, %v1408
    %s1414 = scalar_lea.vmem [#allocation6], 512
    %v1415 = vld [vmem:[%s1414] sm:$0xf]
    %v1416 = vld [vmem:[%s1414 + $0x4] sm:$0xf]
    %v1417 = vld [vmem:[%s1414 + $0x8] sm:$0xf]
    %v1418 = vld [vmem:[%s1414 + $0xc] sm:$0xf]
    %v1419 = vld [vmem:[%s1414 + $0x10] sm:$0xf]
    %v1420 = vld [vmem:[%s1414 + $0x14] sm:$0xf]
    %v1421 = vld [vmem:[%s1414 + $0x18] sm:$0xf]
    %v1422 = vld [vmem:[%s1414 + $0x1c] sm:$0xf]
    %v1423 = vld [vmem:[%s1414 + $0x20] sm:$0xf]
    %v1424 = vld [vmem:[%s1414 + $0x24] sm:$0xf]
    %v1425 = vld [vmem:[%s1414 + $0x28] sm:$0xf]
    %v1426 = vld [vmem:[%s1414 + $0x2c] sm:$0xf]
    %v1427 = vld [vmem:[%s1414 + $0x30] sm:$0xf]
    %v1428 = vld [vmem:[%s1414 + $0x34] sm:$0xf]
    %v1429 = vld [vmem:[%s1414 + $0x38] sm:$0xf]
    %v1430 = vld [vmem:[%s1414 + $0x3c] sm:$0xf]
    %v1447 = vunpack.c.l.b16 %v1415
    %v1448 = vunpack.c.l.b16 %v1416
    %v1449 = vunpack.c.l.b16 %v1417
    %v1450 = vunpack.c.l.b16 %v1418
    %v1451 = vunpack.c.l.b16 %v1419
    %v1452 = vunpack.c.l.b16 %v1420
    %v1453 = vunpack.c.l.b16 %v1421
    %v1454 = vunpack.c.l.b16 %v1422
    %v1455 = vunpack.c.l.b16 %v1423
    %v1456 = vunpack.c.l.b16 %v1424
    %v1457 = vunpack.c.l.b16 %v1425
    %v1458 = vunpack.c.l.b16 %v1426
    %v1459 = vunpack.c.l.b16 %v1427
    %v1460 = vunpack.c.l.b16 %v1428
    %v1461 = vunpack.c.l.b16 %v1429
    %v1462 = vunpack.c.l.b16 %v1430
    %v1463 = vpack.c.b16 %v1448, %v1447
    %v1464 = vpack.c.b16 %v1450, %v1449
    %v1465 = vpack.c.b16 %v1452, %v1451
    %v1466 = vpack.c.b16 %v1454, %v1453
    %v1467 = vpack.c.b16 %v1456, %v1455
    %v1468 = vpack.c.b16 %v1458, %v1457
    %v1469 = vpack.c.b16 %v1460, %v1459
    %v1470 = vpack.c.b16 %v1462, %v1461
    %1479 = vmatprep.subr.bf16.mxu0 0
    %1480 = vmatpush1.bf16.msra.mxu0 %v1463
    %1481 = vmatprep.subr.bf16.mxu0 0
    %1482 = vmatpush1.bf16.msra.mxu0 %v1464
    %1483 = vmatprep.subr.bf16.mxu0 0
    %1484 = vmatpush1.bf16.msra.mxu0 %v1465
    %1485 = vmatprep.subr.bf16.mxu0 0
    %1486 = vmatpush1.bf16.msra.mxu0 %v1466
    %1487 = vmatprep.subr.bf16.mxu0 0
    %1488 = vmatpush1.bf16.msra.mxu0 %v1467
    %1489 = vmatprep.subr.bf16.mxu0 0
    %1490 = vmatpush1.bf16.msra.mxu0 %v1468
    %1491 = vmatprep.subr.bf16.mxu0 0
    %1492 = vmatpush1.bf16.msra.mxu0 %v1469
    %1493 = vmatprep.subr.bf16.mxu0 0
    %1494 = vmatpush1.bf16.msra.mxu0 %v1470
    %1495 = vmatprep.subr.bf16.mxu0 0
    %1496 = vmatpush1.bf16.msra.mxu0 0
    %1497 = vmatprep.subr.bf16.mxu0 0
    %1498 = vmatpush1.bf16.msra.mxu0 0
    %1499 = vmatprep.subr.bf16.mxu0 0
    %1500 = vmatpush1.bf16.msra.mxu0 0
    %1501 = vmatprep.subr.bf16.mxu0 0
    %1502 = vmatpush1.bf16.msra.mxu0 0
    %1503 = vmatprep.subr.bf16.mxu0 0
    %1504 = vmatpush1.bf16.msra.mxu0 0
    %1505 = vmatprep.subr.bf16.mxu0 0
    %1506 = vmatpush1.bf16.msra.mxu0 0
    %1507 = vmatprep.subr.bf16.mxu0 0
    %1508 = vmatpush1.bf16.msra.mxu0 0
    %1509 = vmatprep.subr.bf16.mxu0 0
    %1510 = vmatpush1.bf16.msra.mxu0 0
    %1511 = vmatprep.mubr.bf16.mxu0 0
    %1512 = vmatmul.mubr.bf16.gmra.mrb[0].mxu0 %v1409
    %v1513 = vpop.f32.mrb[0].mxu0
    %v1514 = vadd.f32 0.0, %v1513
    %v1515 = vpop.f32.mrb[0].mxu0
    %v1516 = vpop.f32.mrb[0].mxu0
    %v1517 = vadd.f32 0.0, %v1516
    %v1518 = vpop.f32.mrb[0].mxu0
    %1519 = vmatprep.mubr.bf16.mxu0 0
    %1520 = vmatmul.mubr.bf16.gmra.mrb[0].mxu0 %v1410
    %v1521 = vpop.f32.mrb[0].mxu0
    %v1522 = vadd.f32 0.0, %v1521
    %v1523 = vpop.f32.mrb[0].mxu0
    %v1524 = vpop.f32.mrb[0].mxu0
    %v1525 = vadd.f32 0.0, %v1524
    %v1526 = vpop.f32.mrb[0].mxu0
    %1527 = vmatprep.mubr.bf16.mxu0 0
    %1528 = vmatmul.mubr.bf16.gmra.mrb[0].mxu0 %v1411
    %v1529 = vpop.f32.mrb[0].mxu0
    %v1530 = vadd.f32 0.0, %v1529
    %v1531 = vpop.f32.mrb[0].mxu0
    %v1532 = vpop.f32.mrb[0].mxu0
    %v1533 = vadd.f32 0.0, %v1532
    %v1534 = vpop.f32.mrb[0].mxu0
    %1535 = vmatprep.mubr.bf16.mxu0 0
    %1536 = vmatmul.mubr.bf16.gmra.mrb[0].mxu0 %v1412
    %v1537 = vpop.f32.mrb[0].mxu0
    %v1538 = vadd.f32 0.0, %v1537
    %v1539 = vpop.f32.mrb[0].mxu0
    %v1540 = vpop.f32.mrb[0].mxu0
    %v1541 = vadd.f32 0.0, %v1540
    %v1542 = vpop.f32.mrb[0].mxu0
    %1543 = vmatprep.mubr.bf16.mxu0 0
    %1544 = vmatmul.mubr.bf16.gmra.mrb[0].mxu0 %v1413
    %v1545 = vpop.f32.mrb[0].mxu0
    %v1546 = vadd.f32 0.0, %v1545
    %v1547 = vpop.f32.mrb[0].mxu0
    %v1548 = vpop.f32.mrb[0].mxu0
    %v1549 = vpop.f32.mrb[0].mxu0
    %1550 = vdwg.mxu0
    %v1551 = vadd.f32 %v1391, %v1514
    %v1552 = vadd.f32 %v1392, %v1517
    %v1553 = vadd.f32 %v1393, %v1522
    %v1554 = vadd.f32 %v1394, %v1525
    %v1555 = vadd.f32 %v1395, %v1530
    %v1556 = vadd.f32 %v1396, %v1533
    %v1557 = vadd.f32 %v1397, %v1538
    %v1558 = vadd.f32 %v1398, %v1541
    %v1559 = vadd.f32 %v1399, %v1546
    %v1560 = vld [vmem:[%s4] sm:$0x1]
    %v1562 = vlaneseq
    %v1563 = vshrl.u32 %v1562, 7
    %v1564 = vsub.s32 0, %v1563
    %v1565 = vrot.slane %v1560, %v1564
    %v1567 = vadd.f32 %v1551, %v1565
    %v1568 = vadd.f32 %v1552, %v1565
    %v1569 = vadd.f32 %v1553, %v1565
    %v1570 = vadd.f32 %v1554, %v1565
    %v1571 = vadd.f32 %v1555, %v1565
    %v1572 = vadd.f32 %v1556, %v1565
    %v1573 = vadd.f32 %v1557, %v1565
    %v1574 = vadd.f32 %v1558, %v1565
    %v1575 = vadd.f32 %v1559, %v1565
    %v1576 = vmax.f32 %v1567, 0.0
    %v1577 = vmax.f32 %v1568, 0.0
    %v1578 = vmax.f32 %v1569, 0.0
    %v1579 = vmax.f32 %v1570, 0.0
    %v1580 = vmax.f32 %v1571, 0.0
    %v1581 = vmax.f32 %v1572, 0.0
    %v1582 = vmax.f32 %v1573, 0.0
    %v1583 = vmax.f32 %v1574, 0.0
    %v1584 = vmax.f32 %v1575, 0.0
    %1585 = vst [vmem:[#allocation2] sm:$0xff] 0.0
    %1586 = vst [vmem:[#allocation2 + $0x8] sm:$0xff] 0.0
    %1587 = vst [vmem:[#allocation2 + $0x10] sm:$0xff] 0.0
    %1588 = vst [vmem:[#allocation2 + $0x18] sm:$0xff] 0.0
    %1589 = vst [vmem:[#allocation2 + $0x20] sm:$0xff] 0.0
    %1590 = vst [vmem:[#allocation2 + $0x28] sm:$0xff] 0.0
    %1591 = vst [vmem:[#allocation2 + $0x30] sm:$0xff] 0.0
    %1592 = vst [vmem:[#allocation2 + $0x38] sm:$0xff] 0.0
    %1593 = vst [vmem:[#allocation2 + $0x40] sm:$0xff] 0.0
    %1594 = vst [vmem:[#allocation2 + $0x48] sm:$0xff] 0.0
    %1595 = vst [vmem:[#allocation2 + $0x50] sm:$0xff] 0.0
    %v1596 = vld [vmem:[%s1] sm:$0xff]
    %v1597 = vld [vmem:[%s1 + $0x8] sm:$0xff]
    %v1598 = vld [vmem:[%s1 + $0x10] sm:$0xff]
    %v1599 = vld [vmem:[%s1 + $0x18] sm:$0xff]
    %v1600 = vld [vmem:[%s1 + $0x20] sm:$0xff]
    %v1601 = vld [vmem:[%s1 + $0x28] sm:$0xff]
    %v1602 = vld [vmem:[%s1 + $0x30] sm:$0xff]
    %v1603 = vld [vmem:[%s1 + $0x38] sm:$0xff]
    %v1604 = vld [vmem:[%s1 + $0x40] sm:$0xff]
    %v1605 = vmul.f32 %v1576, %v1596
    %v1606 = vmul.f32 %v1577, %v1597
    %v1607 = vmul.f32 %v1578, %v1598
    %v1608 = vmul.f32 %v1579, %v1599
    %v1609 = vmul.f32 %v1580, %v1600
    %v1610 = vmul.f32 %v1581, %v1601
    %v1611 = vmul.f32 %v1582, %v1602
    %v1612 = vmul.f32 %v1583, %v1603
    %v1613 = vmul.f32 %v1584, %v1604
    %1614 = vst [vmem:[#allocation2 + $0x8] sm:$0xff] %v1605
    %1615 = vst [vmem:[#allocation2 + $0x10] sm:$0xff] %v1606
    %1616 = vst [vmem:[#allocation2 + $0x18] sm:$0xff] %v1607
    %1617 = vst [vmem:[#allocation2 + $0x20] sm:$0xff] %v1608
    %1618 = vst [vmem:[#allocation2 + $0x28] sm:$0xff] %v1609
    %1619 = vst [vmem:[#allocation2 + $0x30] sm:$0xff] %v1610
    %1620 = vst [vmem:[#allocation2 + $0x38] sm:$0xff] %v1611
    %1621 = vst [vmem:[#allocation2 + $0x40] sm:$0xff] %v1612
    %1622 = vst [vmem:[#allocation2 + $0x48] sm:$0xff] %v1613
    %v1623 = vld [vmem:[#allocation2 + $0x1] sm:$0xff]
    %v1624 = vld [vmem:[#allocation2 + $0x9] sm:$0xff]
    %v1625 = vld [vmem:[#allocation2 + $0x11] sm:$0xff]
    %v1626 = vld [vmem:[#allocation2 + $0x19] sm:$0xff]
    %v1627 = vld [vmem:[#allocation2 + $0x21] sm:$0xff]
    %v1628 = vld [vmem:[#allocation2 + $0x29] sm:$0xff]
    %v1629 = vld [vmem:[#allocation2 + $0x31] sm:$0xff]
    %v1630 = vld [vmem:[#allocation2 + $0x39] sm:$0xff]
    %v1631 = vld [vmem:[#allocation2 + $0x41] sm:$0xff]
    %v1632 = vpack.c.bf16 %v1624, %v1623
    %v1633 = vpack.c.bf16 %v1626, %v1625
    %v1634 = vpack.c.bf16 %v1628, %v1627
    %v1635 = vpack.c.bf16 %v1630, %v1629
    %v1636 = vpack.c.bf16 %v1631, %v1631
    %v1637 = vld [vmem:[#allocation8] sm:$0xf]
    %v1638 = vld [vmem:[#allocation8 + $0x4] sm:$0xf]
    %v1639 = vld [vmem:[#allocation8 + $0x8] sm:$0xf]
    %v1640 = vld [vmem:[#allocation8 + $0xc] sm:$0xf]
    %v1641 = vld [vmem:[#allocation8 + $0x10] sm:$0xf]
    %v1642 = vld [vmem:[#allocation8 + $0x14] sm:$0xf]
    %v1643 = vld [vmem:[#allocation8 + $0x18] sm:$0xf]
    %v1644 = vld [vmem:[#allocation8 + $0x1c] sm:$0xf]
    %v1645 = vld [vmem:[#allocation8 + $0x20] sm:$0xf]
    %v1646 = vld [vmem:[#allocation8 + $0x24] sm:$0xf]
    %v1647 = vld [vmem:[#allocation8 + $0x28] sm:$0xf]
    %v1648 = vld [vmem:[#allocation8 + $0x2c] sm:$0xf]
    %v1649 = vld [vmem:[#allocation8 + $0x30] sm:$0xf]
    %v1650 = vld [vmem:[#allocation8 + $0x34] sm:$0xf]
    %v1651 = vld [vmem:[#allocation8 + $0x38] sm:$0xf]
    %v1652 = vld [vmem:[#allocation8 + $0x3c] sm:$0xf]
    %v1653 = vld [vmem:[#allocation2 + $0x2] sm:$0xff]
    %v1654 = vld [vmem:[#allocation2 + $0xa] sm:$0xff]
    %v1655 = vld [vmem:[#allocation2 + $0x12] sm:$0xff]
    %v1656 = vld [vmem:[#allocation2 + $0x1a] sm:$0xff]
    %v1657 = vld [vmem:[#allocation2 + $0x22] sm:$0xff]
    %v1658 = vld [vmem:[#allocation2 + $0x2a] sm:$0xff]
    %v1659 = vld [vmem:[#allocation2 + $0x32] sm:$0xff]
    %v1660 = vld [vmem:[#allocation2 + $0x3a] sm:$0xff]
    %v1661 = vld [vmem:[#allocation2 + $0x42] sm:$0xff]
    %v1662 = vpack.c.bf16 %v1654, %v1653
    %v1663 = vpack.c.bf16 %v1656, %v1655
    %v1664 = vpack.c.bf16 %v1658, %v1657
    %v1665 = vpack.c.bf16 %v1660, %v1659
    %v1666 = vpack.c.bf16 %v1661, %v1661
    %s1667 = scalar_lea.vmem [#allocation8], 64
    %v1668 = vld [vmem:[%s1667] sm:$0xf]
    %v1669 = vld [vmem:[%s1667 + $0x4] sm:$0xf]
    %v1670 = vld [vmem:[%s1667 + $0x8] sm:$0xf]
    %v1671 = vld [vmem:[%s1667 + $0xc] sm:$0xf]
    %v1672 = vld [vmem:[%s1667 + $0x10] sm:$0xf]
    %v1673 = vld [vmem:[%s1667 + $0x14] sm:$0xf]
    %v1674 = vld [vmem:[%s1667 + $0x18] sm:$0xf]
    %v1675 = vld [vmem:[%s1667 + $0x1c] sm:$0xf]
    %v1676 = vld [vmem:[%s1667 + $0x20] sm:$0xf]
    %v1677 = vld [vmem:[%s1667 + $0x24] sm:$0xf]
    %v1678 = vld [vmem:[%s1667 + $0x28] sm:$0xf]
    %v1679 = vld [vmem:[%s1667 + $0x2c] sm:$0xf]
    %v1680 = vld [vmem:[%s1667 + $0x30] sm:$0xf]
    %v1681 = vld [vmem:[%s1667 + $0x34] sm:$0xf]
    %v1682 = vld [vmem:[%s1667 + $0x38] sm:$0xf]
    %v1683 = vld [vmem:[%s1667 + $0x3c] sm:$0xf]
    %v1700 = vunpack.c.l.b16 %v1668
    %v1701 = vunpack.c.l.b16 %v1669
    %v1702 = vunpack.c.l.b16 %v1670
    %v1703 = vunpack.c.l.b16 %v1671
    %v1704 = vunpack.c.l.b16 %v1672
    %v1705 = vunpack.c.l.b16 %v1673
    %v1706 = vunpack.c.l.b16 %v1674
    %v1707 = vunpack.c.l.b16 %v1675
    %v1708 = vunpack.c.l.b16 %v1676
    %v1709 = vunpack.c.l.b16 %v1677
    %v1710 = vunpack.c.l.b16 %v1678
    %v1711 = vunpack.c.l.b16 %v1679
    %v1712 = vunpack.c.l.b16 %v1680
    %v1713 = vunpack.c.l.b16 %v1681
    %v1714 = vunpack.c.l.b16 %v1682
    %v1715 = vunpack.c.l.b16 %v1683
    %v1716 = vpack.c.b16 %v1701, %v1700
    %v1717 = vpack.c.b16 %v1703, %v1702
    %v1718 = vpack.c.b16 %v1705, %v1704
    %v1719 = vpack.c.b16 %v1707, %v1706
    %v1720 = vpack.c.b16 %v1709, %v1708
    %v1721 = vpack.c.b16 %v1711, %v1710
    %v1722 = vpack.c.b16 %v1713, %v1712
    %v1723 = vpack.c.b16 %v1715, %v1714
    %1732 = vmatprep.subr.bf16.mxu0 0
    %1733 = vmatpush1.bf16.msra.mxu0 %v1716
    %1734 = vmatprep.subr.bf16.mxu0 0
    %1735 = vmatpush1.bf16.msra.mxu0 %v1717
    %1736 = vmatprep.subr.bf16.mxu0 0
    %1737 = vmatpush1.bf16.msra.mxu0 %v1718
    %1738 = vmatprep.subr.bf16.mxu0 0
    %1739 = vmatpush1.bf16.msra.mxu0 %v1719
    %1740 = vmatprep.subr.bf16.mxu0 0
    %1741 = vmatpush1.bf16.msra.mxu0 %v1720
    %1742 = vmatprep.subr.bf16.mxu0 0
    %1743 = vmatpush1.bf16.msra.mxu0 %v1721
    %1744 = vmatprep.subr.bf16.mxu0 0
    %1745 = vmatpush1.bf16.msra.mxu0 %v1722
    %1746 = vmatprep.subr.bf16.mxu0 0
    %1747 = vmatpush1.bf16.msra.mxu0 %v1723
    %1748 = vmatprep.subr.bf16.mxu0 0
    %1749 = vmatpush1.bf16.msra.mxu0 0
    %1750 = vmatprep.subr.bf16.mxu0 0
    %1751 = vmatpush1.bf16.msra.mxu0 0
    %1752 = vmatprep.subr.bf16.mxu0 0
    %1753 = vmatpush1.bf16.msra.mxu0 0
    %1754 = vmatprep.subr.bf16.mxu0 0
    %1755 = vmatpush1.bf16.msra.mxu0 0
    %1756 = vmatprep.subr.bf16.mxu0 0
    %1757 = vmatpush1.bf16.msra.mxu0 0
    %1758 = vmatprep.subr.bf16.mxu0 0
    %1759 = vmatpush1.bf16.msra.mxu0 0
    %1760 = vmatprep.subr.bf16.mxu0 0
    %1761 = vmatpush1.bf16.msra.mxu0 0
    %1762 = vmatprep.subr.bf16.mxu0 0
    %1763 = vmatpush1.bf16.msra.mxu0 0
    %1764 = vmatprep.mubr.bf16.mxu0 0
    %1765 = vmatmul.mubr.bf16.gmra.mrb[0].mxu0 %v1662
    %v1766 = vpop.f32.mrb[0].mxu0
    %v1767 = vadd.f32 0.0, %v1766
    %v1768 = vpop.f32.mrb[0].mxu0
    %v1769 = vpop.f32.mrb[0].mxu0
    %v1770 = vadd.f32 0.0, %v1769
    %v1771 = vpop.f32.mrb[0].mxu0
    %1772 = vmatprep.mubr.bf16.mxu0 0
    %1773 = vmatmul.mubr.bf16.gmra.mrb[0].mxu0 %v1663
    %v1774 = vpop.f32.mrb[0].mxu0
    %v1775 = vadd.f32 0.0, %v1774
    %v1776 = vpop.f32.mrb[0].mxu0
    %v1777 = vpop.f32.mrb[0].mxu0
    %v1778 = vadd.f32 0.0, %v1777
    %v1779 = vpop.f32.mrb[0].mxu0
    %1780 = vmatprep.mubr.bf16.mxu0 0
    %1781 = vmatmul.mubr.bf16.gmra.mrb[0].mxu0 %v1664
    %v1782 = vpop.f32.mrb[0].mxu0
    %v1783 = vadd.f32 0.0, %v1782
    %v1784 = vpop.f32.mrb[0].mxu0
    %v1785 = vpop.f32.mrb[0].mxu0
    %v1786 = vadd.f32 0.0, %v1785
    %v1787 = vpop.f32.mrb[0].mxu0
    %1788 = vmatprep.mubr.bf16.mxu0 0
    %1789 = vmatmul.mubr.bf16.gmra.mrb[0].mxu0 %v1665
    %v1790 = vpop.f32.mrb[0].mxu0
    %v1791 = vadd.f32 0.0, %v1790
    %v1792 = vpop.f32.mrb[0].mxu0
    %v1793 = vpop.f32.mrb[0].mxu0
    %v1794 = vadd.f32 0.0, %v1793
    %v1795 = vpop.f32.mrb[0].mxu0
    %1796 = vmatprep.mubr.bf16.mxu0 0
    %1797 = vmatmul.mubr.bf16.gmra.mrb[0].mxu0 %v1666
    %v1798 = vpop.f32.mrb[0].mxu0
    %v1799 = vadd.f32 0.0, %v1798
    %v1800 = vpop.f32.mrb[0].mxu0
    %v1801 = vpop.f32.mrb[0].mxu0
    %v1802 = vpop.f32.mrb[0].mxu0
    %1803 = vdwg.mxu0
    %v1820 = vunpack.c.l.b16 %v1637
    %v1821 = vunpack.c.l.b16 %v1638
    %v1822 = vunpack.c.l.b16 %v1639
    %v1823 = vunpack.c.l.b16 %v1640
    %v1824 = vunpack.c.l.b16 %v1641
    %v1825 = vunpack.c.l.b16 %v1642
    %v1826 = vunpack.c.l.b16 %v1643
    %v1827 = vunpack.c.l.b16 %v1644
    %v1828 = vunpack.c.l.b16 %v1645
    %v1829 = vunpack.c.l.b16 %v1646
    %v1830 = vunpack.c.l.b16 %v1647
    %v1831 = vunpack.c.l.b16 %v1648
    %v1832 = vunpack.c.l.b16 %v1649
    %v1833 = vunpack.c.l.b16 %v1650
    %v1834 = vunpack.c.l.b16 %v1651
    %v1835 = vunpack.c.l.b16 %v1652
    %v1836 = vpack.c.b16 %v1821, %v1820
    %v1837 = vpack.c.b16 %v1823, %v1822
    %v1838 = vpack.c.b16 %v1825, %v1824
    %v1839 = vpack.c.b16 %v1827, %v1826
    %v1840 = vpack.c.b16 %v1829, %v1828
    %v1841 = vpack.c.b16 %v1831, %v1830
    %v1842 = vpack.c.b16 %v1833, %v1832
    %v1843 = vpack.c.b16 %v1835, %v1834
    %1852 = vmatprep.subr.bf16.mxu0 0
    %1853 = vmatpush1.bf16.msra.mxu0 %v1836
    %1854 = vmatprep.subr.bf16.mxu0 0
    %1855 = vmatpush1.bf16.msra.mxu0 %v1837
    %1856 = vmatprep.subr.bf16.mxu0 0
    %1857 = vmatpush1.bf16.msra.mxu0 %v1838
    %1858 = vmatprep.subr.bf16.mxu0 0
    %1859 = vmatpush1.bf16.msra.mxu0 %v1839
    %1860 = vmatprep.subr.bf16.mxu0 0
    %1861 = vmatpush1.bf16.msra.mxu0 %v1840
    %1862 = vmatprep.subr.bf16.mxu0 0
    %1863 = vmatpush1.bf16.msra.mxu0 %v1841
    %1864 = vmatprep.subr.bf16.mxu0 0
    %1865 = vmatpush1.bf16.msra.mxu0 %v1842
    %1866 = vmatprep.subr.bf16.mxu0 0
    %1867 = vmatpush1.bf16.msra.mxu0 %v1843
    %1868 = vmatprep.subr.bf16.mxu0 0
    %1869 = vmatpush1.bf16.msra.mxu0 0
    %1870 = vmatprep.subr.bf16.mxu0 0
    %1871 = vmatpush1.bf16.msra.mxu0 0
    %1872 = vmatprep.subr.bf16.mxu0 0
    %1873 = vmatpush1.bf16.msra.mxu0 0
    %1874 = vmatprep.subr.bf16.mxu0 0
    %1875 = vmatpush1.bf16.msra.mxu0 0
    %1876 = vmatprep.subr.bf16.mxu0 0
    %1877 = vmatpush1.bf16.msra.mxu0 0
    %1878 = vmatprep.subr.bf16.mxu0 0
    %1879 = vmatpush1.bf16.msra.mxu0 0
    %1880 = vmatprep.subr.bf16.mxu0 0
    %1881 = vmatpush1.bf16.msra.mxu0 0
    %1882 = vmatprep.subr.bf16.mxu0 0
    %1883 = vmatpush1.bf16.msra.mxu0 0
    %1884 = vmatprep.mubr.bf16.mxu0 0
    %1885 = vmatmul.mubr.bf16.gmra.mrb[0].mxu0 %v1632
    %v1886 = vpop.f32.mrb[0].mxu0
    %v1887 = vadd.f32 %v1767, %v1886
    %v1888 = vpop.f32.mrb[0].mxu0
    %v1889 = vpop.f32.mrb[0].mxu0
    %v1890 = vadd.f32 %v1770, %v1889
    %v1891 = vpop.f32.mrb[0].mxu0
    %1892 = vmatprep.mubr.bf16.mxu0 0
    %1893 = vmatmul.mubr.bf16.gmra.mrb[0].mxu0 %v1633
    %v1894 = vpop.f32.mrb[0].mxu0
    %v1895 = vadd.f32 %v1775, %v1894
    %v1896 = vpop.f32.mrb[0].mxu0
    %v1897 = vpop.f32.mrb[0].mxu0
    %v1898 = vadd.f32 %v1778, %v1897
    %v1899 = vpop.f32.mrb[0].mxu0
    %1900 = vmatprep.mubr.bf16.mxu0 0
    %1901 = vmatmul.mubr.bf16.gmra.mrb[0].mxu0 %v1634
    %v1902 = vpop.f32.mrb[0].mxu0
    %v1903 = vadd.f32 %v1783, %v1902
    %v1904 = vpop.f32.mrb[0].mxu0
    %v1905 = vpop.f32.mrb[0].mxu0
    %v1906 = vadd.f32 %v1786, %v1905
    %v1907 = vpop.f32.mrb[0].mxu0
    %1908 = vmatprep.mubr.bf16.mxu0 0
    %1909 = vmatmul.mubr.bf16.gmra.mrb[0].mxu0 %v1635
    %v1910 = vpop.f32.mrb[0].mxu0
    %v1911 = vadd.f32 %v1791, %v1910
    %v1912 = vpop.f32.mrb[0].mxu0
    %v1913 = vpop.f32.mrb[0].mxu0
    %v1914 = vadd.f32 %v1794, %v1913
    %v1915 = vpop.f32.mrb[0].mxu0
    %1916 = vmatprep.mubr.bf16.mxu0 0
    %1917 = vmatmul.mubr.bf16.gmra.mrb[0].mxu0 %v1636
    %v1918 = vpop.f32.mrb[0].mxu0
    %v1919 = vadd.f32 %v1799, %v1918
    %v1920 = vpop.f32.mrb[0].mxu0
    %v1921 = vpop.f32.mrb[0].mxu0
    %v1922 = vpop.f32.mrb[0].mxu0
    %1923 = vdwg.mxu0
    %v1924 = vld [vmem:[#allocation2 + $0x3] sm:$0xff]
    %v1925 = vld [vmem:[#allocation2 + $0xb] sm:$0xff]
    %v1926 = vld [vmem:[#allocation2 + $0x13] sm:$0xff]
    %v1927 = vld [vmem:[#allocation2 + $0x1b] sm:$0xff]
    %v1928 = vld [vmem:[#allocation2 + $0x23] sm:$0xff]
    %v1929 = vld [vmem:[#allocation2 + $0x2b] sm:$0xff]
    %v1930 = vld [vmem:[#allocation2 + $0x33] sm:$0xff]
    %v1931 = vld [vmem:[#allocation2 + $0x3b] sm:$0xff]
    %v1932 = vld [vmem:[#allocation2 + $0x43] sm:$0xff]
    %v1933 = vpack.c.bf16 %v1925, %v1924
    %v1934 = vpack.c.bf16 %v1927, %v1926
    %v1935 = vpack.c.bf16 %v1929, %v1928
    %v1936 = vpack.c.bf16 %v1931, %v1930
    %v1937 = vpack.c.bf16 %v1932, %v1932
    %s1938 = scalar_lea.vmem [#allocation8], 128
    %v1939 = vld [vmem:[%s1938] sm:$0xf]
    %v1940 = vld [vmem:[%s1938 + $0x4] sm:$0xf]
    %v1941 = vld [vmem:[%s1938 + $0x8] sm:$0xf]
    %v1942 = vld [vmem:[%s1938 + $0xc] sm:$0xf]
    %v1943 = vld [vmem:[%s1938 + $0x10] sm:$0xf]
    %v1944 = vld [vmem:[%s1938 + $0x14] sm:$0xf]
    %v1945 = vld [vmem:[%s1938 + $0x18] sm:$0xf]
    %v1946 = vld [vmem:[%s1938 + $0x1c] sm:$0xf]
    %v1947 = vld [vmem:[%s1938 + $0x20] sm:$0xf]
    %v1948 = vld [vmem:[%s1938 + $0x24] sm:$0xf]
    %v1949 = vld [vmem:[%s1938 + $0x28] sm:$0xf]
    %v1950 = vld [vmem:[%s1938 + $0x2c] sm:$0xf]
    %v1951 = vld [vmem:[%s1938 + $0x30] sm:$0xf]
    %v1952 = vld [vmem:[%s1938 + $0x34] sm:$0xf]
    %v1953 = vld [vmem:[%s1938 + $0x38] sm:$0xf]
    %v1954 = vld [vmem:[%s1938 + $0x3c] sm:$0xf]
    %v1971 = vunpack.c.l.b16 %v1939
    %v1972 = vunpack.c.l.b16 %v1940
    %v1973 = vunpack.c.l.b16 %v1941
    %v1974 = vunpack.c.l.b16 %v1942
    %v1975 = vunpack.c.l.b16 %v1943
    %v1976 = vunpack.c.l.b16 %v1944
    %v1977 = vunpack.c.l.b16 %v1945
    %v1978 = vunpack.c.l.b16 %v1946
    %v1979 = vunpack.c.l.b16 %v1947
    %v1980 = vunpack.c.l.b16 %v1948
    %v1981 = vunpack.c.l.b16 %v1949
    %v1982 = vunpack.c.l.b16 %v1950
    %v1983 = vunpack.c.l.b16 %v1951
    %v1984 = vunpack.c.l.b16 %v1952
    %v1985 = vunpack.c.l.b16 %v1953
    %v1986 = vunpack.c.l.b16 %v1954
    %v1987 = vpack.c.b16 %v1972, %v1971
    %v1988 = vpack.c.b16 %v1974, %v1973
    %v1989 = vpack.c.b16 %v1976, %v1975
    %v1990 = vpack.c.b16 %v1978, %v1977
    %v1991 = vpack.c.b16 %v1980, %v1979
    %v1992 = vpack.c.b16 %v1982, %v1981
    %v1993 = vpack.c.b16 %v1984, %v1983
    %v1994 = vpack.c.b16 %v1986, %v1985
    %2003 = vmatprep.subr.bf16.mxu0 0
    %2004 = vmatpush1.bf16.msra.mxu0 %v1987
    %2005 = vmatprep.subr.bf16.mxu0 0
    %2006 = vmatpush1.bf16.msra.mxu0 %v1988
    %2007 = vmatprep.subr.bf16.mxu0 0
    %2008 = vmatpush1.bf16.msra.mxu0 %v1989
    %2009 = vmatprep.subr.bf16.mxu0 0
    %2010 = vmatpush1.bf16.msra.mxu0 %v1990
    %2011 = vmatprep.subr.bf16.mxu0 0
    %2012 = vmatpush1.bf16.msra.mxu0 %v1991
    %2013 = vmatprep.subr.bf16.mxu0 0
    %2014 = vmatpush1.bf16.msra.mxu0 %v1992
    %2015 = vmatprep.subr.bf16.mxu0 0
    %2016 = vmatpush1.bf16.msra.mxu0 %v1993
    %2017 = vmatprep.subr.bf16.mxu0 0
    %2018 = vmatpush1.bf16.msra.mxu0 %v1994
    %2019 = vmatprep.subr.bf16.mxu0 0
    %2020 = vmatpush1.bf16.msra.mxu0 0
    %2021 = vmatprep.subr.bf16.mxu0 0
    %2022 = vmatpush1.bf16.msra.mxu0 0
    %2023 = vmatprep.subr.bf16.mxu0 0
    %2024 = vmatpush1.bf16.msra.mxu0 0
    %2025 = vmatprep.subr.bf16.mxu0 0
    %2026 = vmatpush1.bf16.msra.mxu0 0
    %2027 = vmatprep.subr.bf16.mxu0 0
    %2028 = vmatpush1.bf16.msra.mxu0 0
    %2029 = vmatprep.subr.bf16.mxu0 0
    %2030 = vmatpush1.bf16.msra.mxu0 0
    %2031 = vmatprep.subr.bf16.mxu0 0
    %2032 = vmatpush1.bf16.msra.mxu0 0
    %2033 = vmatprep.subr.bf16.mxu0 0
    %2034 = vmatpush1.bf16.msra.mxu0 0
    %2035 = vmatprep.mubr.bf16.mxu0 0
    %2036 = vmatmul.mubr.bf16.gmra.mrb[0].mxu0 %v1933
    %v2037 = vpop.f32.mrb[0].mxu0
    %v2038 = vadd.f32 0.0, %v2037
    %v2039 = vpop.f32.mrb[0].mxu0
    %v2040 = vpop.f32.mrb[0].mxu0
    %v2041 = vadd.f32 0.0, %v2040
    %v2042 = vpop.f32.mrb[0].mxu0
    %2043 = vmatprep.mubr.bf16.mxu0 0
    %2044 = vmatmul.mubr.bf16.gmra.mrb[0].mxu0 %v1934
    %v2045 = vpop.f32.mrb[0].mxu0
    %v2046 = vadd.f32 0.0, %v2045
    %v2047 = vpop.f32.mrb[0].mxu0
    %v2048 = vpop.f32.mrb[0].mxu0
    %v2049 = vadd.f32 0.0, %v2048
    %v2050 = vpop.f32.mrb[0].mxu0
    %2051 = vmatprep.mubr.bf16.mxu0 0
    %2052 = vmatmul.mubr.bf16.gmra.mrb[0].mxu0 %v1935
    %v2053 = vpop.f32.mrb[0].mxu0
    %v2054 = vadd.f32 0.0, %v2053
    %v2055 = vpop.f32.mrb[0].mxu0
    %v2056 = vpop.f32.mrb[0].mxu0
    %v2057 = vadd.f32 0.0, %v2056
    %v2058 = vpop.f32.mrb[0].mxu0
    %2059 = vmatprep.mubr.bf16.mxu0 0
    %2060 = vmatmul.mubr.bf16.gmra.mrb[0].mxu0 %v1936
    %v2061 = vpop.f32.mrb[0].mxu0
    %v2062 = vadd.f32 0.0, %v2061
    %v2063 = vpop.f32.mrb[0].mxu0
    %v2064 = vpop.f32.mrb[0].mxu0
    %v2065 = vadd.f32 0.0, %v2064
    %v2066 = vpop.f32.mrb[0].mxu0
    %2067 = vmatprep.mubr.bf16.mxu0 0
    %2068 = vmatmul.mubr.bf16.gmra.mrb[0].mxu0 %v1937
    %v2069 = vpop.f32.mrb[0].mxu0
    %v2070 = vadd.f32 0.0, %v2069
    %v2071 = vpop.f32.mrb[0].mxu0
    %v2072 = vpop.f32.mrb[0].mxu0
    %v2073 = vpop.f32.mrb[0].mxu0
    %2074 = vdwg.mxu0
    %v2075 = vadd.f32 %v1887, %v2038
    %v2076 = vadd.f32 %v1890, %v2041
    %v2077 = vadd.f32 %v1895, %v2046
    %v2078 = vadd.f32 %v1898, %v2049
    %v2079 = vadd.f32 %v1903, %v2054
    %v2080 = vadd.f32 %v1906, %v2057
    %v2081 = vadd.f32 %v1911, %v2062
    %v2082 = vadd.f32 %v1914, %v2065
    %v2083 = vadd.f32 %v1919, %v2070
    %v2084 = vld [vmem:[#allocation2 + $0x7] sm:$0xff]
    %v2085 = vld [vmem:[#allocation2 + $0xf] sm:$0xff]
    %v2086 = vld [vmem:[#allocation2 + $0x17] sm:$0xff]
    %v2087 = vld [vmem:[#allocation2 + $0x1f] sm:$0xff]
    %v2088 = vld [vmem:[#allocation2 + $0x27] sm:$0xff]
    %v2089 = vld [vmem:[#allocation2 + $0x2f] sm:$0xff]
    %v2090 = vld [vmem:[#allocation2 + $0x37] sm:$0xff]
    %v2091 = vld [vmem:[#allocation2 + $0x3f] sm:$0xff]
    %v2092 = vld [vmem:[#allocation2 + $0x47] sm:$0xff]
    %v2093 = vpack.c.bf16 %v2085, %v2084
    %v2094 = vpack.c.bf16 %v2087, %v2086
    %v2095 = vpack.c.bf16 %v2089, %v2088
    %v2096 = vpack.c.bf16 %v2091, %v2090
    %v2097 = vpack.c.bf16 %v2092, %v2092
    %s2098 = scalar_lea.vmem [#allocation8], 192
    %v2099 = vld [vmem:[%s2098] sm:$0xf]
    %v2100 = vld [vmem:[%s2098 + $0x4] sm:$0xf]
    %v2101 = vld [vmem:[%s2098 + $0x8] sm:$0xf]
    %v2102 = vld [vmem:[%s2098 + $0xc] sm:$0xf]
    %v2103 = vld [vmem:[%s2098 + $0x10] sm:$0xf]
    %v2104 = vld [vmem:[%s2098 + $0x14] sm:$0xf]
    %v2105 = vld [vmem:[%s2098 + $0x18] sm:$0xf]
    %v2106 = vld [vmem:[%s2098 + $0x1c] sm:$0xf]
    %v2107 = vld [vmem:[%s2098 + $0x20] sm:$0xf]
    %v2108 = vld [vmem:[%s2098 + $0x24] sm:$0xf]
    %v2109 = vld [vmem:[%s2098 + $0x28] sm:$0xf]
    %v2110 = vld [vmem:[%s2098 + $0x2c] sm:$0xf]
    %v2111 = vld [vmem:[%s2098 + $0x30] sm:$0xf]
    %v2112 = vld [vmem:[%s2098 + $0x34] sm:$0xf]
    %v2113 = vld [vmem:[%s2098 + $0x38] sm:$0xf]
    %v2114 = vld [vmem:[%s2098 + $0x3c] sm:$0xf]
    %v2131 = vunpack.c.l.b16 %v2099
    %v2132 = vunpack.c.l.b16 %v2100
    %v2133 = vunpack.c.l.b16 %v2101
    %v2134 = vunpack.c.l.b16 %v2102
    %v2135 = vunpack.c.l.b16 %v2103
    %v2136 = vunpack.c.l.b16 %v2104
    %v2137 = vunpack.c.l.b16 %v2105
    %v2138 = vunpack.c.l.b16 %v2106
    %v2139 = vunpack.c.l.b16 %v2107
    %v2140 = vunpack.c.l.b16 %v2108
    %v2141 = vunpack.c.l.b16 %v2109
    %v2142 = vunpack.c.l.b16 %v2110
    %v2143 = vunpack.c.l.b16 %v2111
    %v2144 = vunpack.c.l.b16 %v2112
    %v2145 = vunpack.c.l.b16 %v2113
    %v2146 = vunpack.c.l.b16 %v2114
    %v2147 = vpack.c.b16 %v2132, %v2131
    %v2148 = vpack.c.b16 %v2134, %v2133
    %v2149 = vpack.c.b16 %v2136, %v2135
    %v2150 = vpack.c.b16 %v2138, %v2137
    %v2151 = vpack.c.b16 %v2140, %v2139
    %v2152 = vpack.c.b16 %v2142, %v2141
    %v2153 = vpack.c.b16 %v2144, %v2143
    %v2154 = vpack.c.b16 %v2146, %v2145
    %2163 = vmatprep.subr.bf16.mxu0 0
    %2164 = vmatpush1.bf16.msra.mxu0 %v2147
    %2165 = vmatprep.subr.bf16.mxu0 0
    %2166 = vmatpush1.bf16.msra.mxu0 %v2148
    %2167 = vmatprep.subr.bf16.mxu0 0
    %2168 = vmatpush1.bf16.msra.mxu0 %v2149
    %2169 = vmatprep.subr.bf16.mxu0 0
    %2170 = vmatpush1.bf16.msra.mxu0 %v2150
    %2171 = vmatprep.subr.bf16.mxu0 0
    %2172 = vmatpush1.bf16.msra.mxu0 %v2151
    %2173 = vmatprep.subr.bf16.mxu0 0
    %2174 = vmatpush1.bf16.msra.mxu0 %v2152
    %2175 = vmatprep.subr.bf16.mxu0 0
    %2176 = vmatpush1.bf16.msra.mxu0 %v2153
    %2177 = vmatprep.subr.bf16.mxu0 0
    %2178 = vmatpush1.bf16.msra.mxu0 %v2154
    %2179 = vmatprep.subr.bf16.mxu0 0
    %2180 = vmatpush1.bf16.msra.mxu0 0
    %2181 = vmatprep.subr.bf16.mxu0 0
    %2182 = vmatpush1.bf16.msra.mxu0 0
    %2183 = vmatprep.subr.bf16.mxu0 0
    %2184 = vmatpush1.bf16.msra.mxu0 0
    %2185 = vmatprep.subr.bf16.mxu0 0
    %2186 = vmatpush1.bf16.msra.mxu0 0
    %2187 = vmatprep.subr.bf16.mxu0 0
    %2188 = vmatpush1.bf16.msra.mxu0 0
    %2189 = vmatprep.subr.bf16.mxu0 0
    %2190 = vmatpush1.bf16.msra.mxu0 0
    %2191 = vmatprep.subr.bf16.mxu0 0
    %2192 = vmatpush1.bf16.msra.mxu0 0
    %2193 = vmatprep.subr.bf16.mxu0 0
    %2194 = vmatpush1.bf16.msra.mxu0 0
    %2195 = vmatprep.mubr.bf16.mxu0 0
    %2196 = vmatmul.mubr.bf16.gmra.mrb[0].mxu0 %v2093
    %v2197 = vpop.f32.mrb[0].mxu0
    %v2198 = vadd.f32 0.0, %v2197
    %v2199 = vpop.f32.mrb[0].mxu0
    %v2200 = vpop.f32.mrb[0].mxu0
    %v2201 = vadd.f32 0.0, %v2200
    %v2202 = vpop.f32.mrb[0].mxu0
    %2203 = vmatprep.mubr.bf16.mxu0 0
    %2204 = vmatmul.mubr.bf16.gmra.mrb[0].mxu0 %v2094
    %v2205 = vpop.f32.mrb[0].mxu0
    %v2206 = vadd.f32 0.0, %v2205
    %v2207 = vpop.f32.mrb[0].mxu0
    %v2208 = vpop.f32.mrb[0].mxu0
    %v2209 = vadd.f32 0.0, %v2208
    %v2210 = vpop.f32.mrb[0].mxu0
    %2211 = vmatprep.mubr.bf16.mxu0 0
    %2212 = vmatmul.mubr.bf16.gmra.mrb[0].mxu0 %v2095
    %v2213 = vpop.f32.mrb[0].mxu0
    %v2214 = vadd.f32 0.0, %v2213
    %v2215 = vpop.f32.mrb[0].mxu0
    %v2216 = vpop.f32.mrb[0].mxu0
    %v2217 = vadd.f32 0.0, %v2216
    %v2218 = vpop.f32.mrb[0].mxu0
    %2219 = vmatprep.mubr.bf16.mxu0 0
    %2220 = vmatmul.mubr.bf16.gmra.mrb[0].mxu0 %v2096
    %v2221 = vpop.f32.mrb[0].mxu0
    %v2222 = vadd.f32 0.0, %v2221
    %v2223 = vpop.f32.mrb[0].mxu0
    %v2224 = vpop.f32.mrb[0].mxu0
    %v2225 = vadd.f32 0.0, %v2224
    %v2226 = vpop.f32.mrb[0].mxu0
    %2227 = vmatprep.mubr.bf16.mxu0 0
    %2228 = vmatmul.mubr.bf16.gmra.mrb[0].mxu0 %v2097
    %v2229 = vpop.f32.mrb[0].mxu0
    %v2230 = vadd.f32 0.0, %v2229
    %v2231 = vpop.f32.mrb[0].mxu0
    %v2232 = vpop.f32.mrb[0].mxu0
    %v2233 = vpop.f32.mrb[0].mxu0
    %2234 = vdwg.mxu0
    %v2235 = vadd.f32 %v2075, %v2198
    %v2236 = vadd.f32 %v2076, %v2201
    %v2237 = vadd.f32 %v2077, %v2206
    %v2238 = vadd.f32 %v2078, %v2209
    %v2239 = vadd.f32 %v2079, %v2214
    %v2240 = vadd.f32 %v2080, %v2217
    %v2241 = vadd.f32 %v2081, %v2222
    %v2242 = vadd.f32 %v2082, %v2225
    %v2243 = vadd.f32 %v2083, %v2230
    %v2244 = vld [vmem:[#allocation2 + $0x8] sm:$0xff]
    %v2245 = vld [vmem:[#allocation2 + $0x10] sm:$0xff]
    %v2246 = vld [vmem:[#allocation2 + $0x18] sm:$0xff]
    %v2247 = vld [vmem:[#allocation2 + $0x20] sm:$0xff]
    %v2248 = vld [vmem:[#allocation2 + $0x28] sm:$0xff]
    %v2249 = vld [vmem:[#allocation2 + $0x30] sm:$0xff]
    %v2250 = vld [vmem:[#allocation2 + $0x38] sm:$0xff]
    %v2251 = vld [vmem:[#allocation2 + $0x40] sm:$0xff]
    %v2252 = vld [vmem:[#allocation2 + $0x48] sm:$0xff]
    %v2253 = vpack.c.bf16 %v2245, %v2244
    %v2254 = vpack.c.bf16 %v2247, %v2246
    %v2255 = vpack.c.bf16 %v2249, %v2248
    %v2256 = vpack.c.bf16 %v2251, %v2250
    %v2257 = vpack.c.bf16 %v2252, %v2252
    %s2258 = scalar_lea.vmem [#allocation8], 256
    %v2259 = vld [vmem:[%s2258] sm:$0xf]
    %v2260 = vld [vmem:[%s2258 + $0x4] sm:$0xf]
    %v2261 = vld [vmem:[%s2258 + $0x8] sm:$0xf]
    %v2262 = vld [vmem:[%s2258 + $0xc] sm:$0xf]
    %v2263 = vld [vmem:[%s2258 + $0x10] sm:$0xf]
    %v2264 = vld [vmem:[%s2258 + $0x14] sm:$0xf]
    %v2265 = vld [vmem:[%s2258 + $0x18] sm:$0xf]
    %v2266 = vld [vmem:[%s2258 + $0x1c] sm:$0xf]
    %v2267 = vld [vmem:[%s2258 + $0x20] sm:$0xf]
    %v2268 = vld [vmem:[%s2258 + $0x24] sm:$0xf]
    %v2269 = vld [vmem:[%s2258 + $0x28] sm:$0xf]
    %v2270 = vld [vmem:[%s2258 + $0x2c] sm:$0xf]
    %v2271 = vld [vmem:[%s2258 + $0x30] sm:$0xf]
    %v2272 = vld [vmem:[%s2258 + $0x34] sm:$0xf]
    %v2273 = vld [vmem:[%s2258 + $0x38] sm:$0xf]
    %v2274 = vld [vmem:[%s2258 + $0x3c] sm:$0xf]
    %v2291 = vunpack.c.l.b16 %v2259
    %v2292 = vunpack.c.l.b16 %v2260
    %v2293 = vunpack.c.l.b16 %v2261
    %v2294 = vunpack.c.l.b16 %v2262
    %v2295 = vunpack.c.l.b16 %v2263
    %v2296 = vunpack.c.l.b16 %v2264
    %v2297 = vunpack.c.l.b16 %v2265
    %v2298 = vunpack.c.l.b16 %v2266
    %v2299 = vunpack.c.l.b16 %v2267
    %v2300 = vunpack.c.l.b16 %v2268
    %v2301 = vunpack.c.l.b16 %v2269
    %v2302 = vunpack.c.l.b16 %v2270
    %v2303 = vunpack.c.l.b16 %v2271
    %v2304 = vunpack.c.l.b16 %v2272
    %v2305 = vunpack.c.l.b16 %v2273
    %v2306 = vunpack.c.l.b16 %v2274
    %v2307 = vpack.c.b16 %v2292, %v2291
    %v2308 = vpack.c.b16 %v2294, %v2293
    %v2309 = vpack.c.b16 %v2296, %v2295
    %v2310 = vpack.c.b16 %v2298, %v2297
    %v2311 = vpack.c.b16 %v2300, %v2299
    %v2312 = vpack.c.b16 %v2302, %v2301
    %v2313 = vpack.c.b16 %v2304, %v2303
    %v2314 = vpack.c.b16 %v2306, %v2305
    %2323 = vmatprep.subr.bf16.mxu0 0
    %2324 = vmatpush1.bf16.msra.mxu0 %v2307
    %2325 = vmatprep.subr.bf16.mxu0 0
    %2326 = vmatpush1.bf16.msra.mxu0 %v2308
    %2327 = vmatprep.subr.bf16.mxu0 0
    %2328 = vmatpush1.bf16.msra.mxu0 %v2309
    %2329 = vmatprep.subr.bf16.mxu0 0
    %2330 = vmatpush1.bf16.msra.mxu0 %v2310
    %2331 = vmatprep.subr.bf16.mxu0 0
    %2332 = vmatpush1.bf16.msra.mxu0 %v2311
    %2333 = vmatprep.subr.bf16.mxu0 0
    %2334 = vmatpush1.bf16.msra.mxu0 %v2312
    %2335 = vmatprep.subr.bf16.mxu0 0
    %2336 = vmatpush1.bf16.msra.mxu0 %v2313
    %2337 = vmatprep.subr.bf16.mxu0 0
    %2338 = vmatpush1.bf16.msra.mxu0 %v2314
    %2339 = vmatprep.subr.bf16.mxu0 0
    %2340 = vmatpush1.bf16.msra.mxu0 0
    %2341 = vmatprep.subr.bf16.mxu0 0
    %2342 = vmatpush1.bf16.msra.mxu0 0
    %2343 = vmatprep.subr.bf16.mxu0 0
    %2344 = vmatpush1.bf16.msra.mxu0 0
    %2345 = vmatprep.subr.bf16.mxu0 0
    %2346 = vmatpush1.bf16.msra.mxu0 0
    %2347 = vmatprep.subr.bf16.mxu0 0
    %2348 = vmatpush1.bf16.msra.mxu0 0
    %2349 = vmatprep.subr.bf16.mxu0 0
    %2350 = vmatpush1.bf16.msra.mxu0 0
    %2351 = vmatprep.subr.bf16.mxu0 0
    %2352 = vmatpush1.bf16.msra.mxu0 0
    %2353 = vmatprep.subr.bf16.mxu0 0
    %2354 = vmatpush1.bf16.msra.mxu0 0
    %2355 = vmatprep.mubr.bf16.mxu0 0
    %2356 = vmatmul.mubr.bf16.gmra.mrb[0].mxu0 %v2253
    %v2357 = vpop.f32.mrb[0].mxu0
    %v2358 = vadd.f32 0.0, %v2357
    %v2359 = vpop.f32.mrb[0].mxu0
    %v2360 = vpop.f32.mrb[0].mxu0
    %v2361 = vadd.f32 0.0, %v2360
    %v2362 = vpop.f32.mrb[0].mxu0
    %2363 = vmatprep.mubr.bf16.mxu0 0
    %2364 = vmatmul.mubr.bf16.gmra.mrb[0].mxu0 %v2254
    %v2365 = vpop.f32.mrb[0].mxu0
    %v2366 = vadd.f32 0.0, %v2365
    %v2367 = vpop.f32.mrb[0].mxu0
    %v2368 = vpop.f32.mrb[0].mxu0
    %v2369 = vadd.f32 0.0, %v2368
    %v2370 = vpop.f32.mrb[0].mxu0
    %2371 = vmatprep.mubr.bf16.mxu0 0
    %2372 = vmatmul.mubr.bf16.gmra.mrb[0].mxu0 %v2255
    %v2373 = vpop.f32.mrb[0].mxu0
    %v2374 = vadd.f32 0.0, %v2373
    %v2375 = vpop.f32.mrb[0].mxu0
    %v2376 = vpop.f32.mrb[0].mxu0
    %v2377 = vadd.f32 0.0, %v2376
    %v2378 = vpop.f32.mrb[0].mxu0
    %2379 = vmatprep.mubr.bf16.mxu0 0
    %2380 = vmatmul.mubr.bf16.gmra.mrb[0].mxu0 %v2256
    %v2381 = vpop.f32.mrb[0].mxu0
    %v2382 = vadd.f32 0.0, %v2381
    %v2383 = vpop.f32.mrb[0].mxu0
    %v2384 = vpop.f32.mrb[0].mxu0
    %v2385 = vadd.f32 0.0, %v2384
    %v2386 = vpop.f32.mrb[0].mxu0
    %2387 = vmatprep.mubr.bf16.mxu0 0
    %2388 = vmatmul.mubr.bf16.gmra.mrb[0].mxu0 %v2257
    %v2389 = vpop.f32.mrb[0].mxu0
    %v2390 = vadd.f32 0.0, %v2389
    %v2391 = vpop.f32.mrb[0].mxu0
    %v2392 = vpop.f32.mrb[0].mxu0
    %v2393 = vpop.f32.mrb[0].mxu0
    %2394 = vdwg.mxu0
    %v2395 = vadd.f32 %v2235, %v2358
    %v2396 = vadd.f32 %v2236, %v2361
    %v2397 = vadd.f32 %v2237, %v2366
    %v2398 = vadd.f32 %v2238, %v2369
    %v2399 = vadd.f32 %v2239, %v2374
    %v2400 = vadd.f32 %v2240, %v2377
    %v2401 = vadd.f32 %v2241, %v2382
    %v2402 = vadd.f32 %v2242, %v2385
    %v2403 = vadd.f32 %v2243, %v2390
    %v2404 = vld [vmem:[#allocation2 + $0x9] sm:$0xff]
    %v2405 = vld [vmem:[#allocation2 + $0x11] sm:$0xff]
    %v2406 = vld [vmem:[#allocation2 + $0x19] sm:$0xff]
    %v2407 = vld [vmem:[#allocation2 + $0x21] sm:$0xff]
    %v2408 = vld [vmem:[#allocation2 + $0x29] sm:$0xff]
    %v2409 = vld [vmem:[#allocation2 + $0x31] sm:$0xff]
    %v2410 = vld [vmem:[#allocation2 + $0x39] sm:$0xff]
    %v2411 = vld [vmem:[#allocation2 + $0x41] sm:$0xff]
    %v2412 = vld [vmem:[#allocation2 + $0x49] sm:$0xff]
    %v2413 = vpack.c.bf16 %v2405, %v2404
    %v2414 = vpack.c.bf16 %v2407, %v2406
    %v2415 = vpack.c.bf16 %v2409, %v2408
    %v2416 = vpack.c.bf16 %v2411, %v2410
    %v2417 = vpack.c.bf16 %v2412, %v2412
    %s2418 = scalar_lea.vmem [#allocation8], 320
    %v2419 = vld [vmem:[%s2418] sm:$0xf]
    %v2420 = vld [vmem:[%s2418 + $0x4] sm:$0xf]
    %v2421 = vld [vmem:[%s2418 + $0x8] sm:$0xf]
    %v2422 = vld [vmem:[%s2418 + $0xc] sm:$0xf]
    %v2423 = vld [vmem:[%s2418 + $0x10] sm:$0xf]
    %v2424 = vld [vmem:[%s2418 + $0x14] sm:$0xf]
    %v2425 = vld [vmem:[%s2418 + $0x18] sm:$0xf]
    %v2426 = vld [vmem:[%s2418 + $0x1c] sm:$0xf]
    %v2427 = vld [vmem:[%s2418 + $0x20] sm:$0xf]
    %v2428 = vld [vmem:[%s2418 + $0x24] sm:$0xf]
    %v2429 = vld [vmem:[%s2418 + $0x28] sm:$0xf]
    %v2430 = vld [vmem:[%s2418 + $0x2c] sm:$0xf]
    %v2431 = vld [vmem:[%s2418 + $0x30] sm:$0xf]
    %v2432 = vld [vmem:[%s2418 + $0x34] sm:$0xf]
    %v2433 = vld [vmem:[%s2418 + $0x38] sm:$0xf]
    %v2434 = vld [vmem:[%s2418 + $0x3c] sm:$0xf]
    %v2451 = vunpack.c.l.b16 %v2419
    %v2452 = vunpack.c.l.b16 %v2420
    %v2453 = vunpack.c.l.b16 %v2421
    %v2454 = vunpack.c.l.b16 %v2422
    %v2455 = vunpack.c.l.b16 %v2423
    %v2456 = vunpack.c.l.b16 %v2424
    %v2457 = vunpack.c.l.b16 %v2425
    %v2458 = vunpack.c.l.b16 %v2426
    %v2459 = vunpack.c.l.b16 %v2427
    %v2460 = vunpack.c.l.b16 %v2428
    %v2461 = vunpack.c.l.b16 %v2429
    %v2462 = vunpack.c.l.b16 %v2430
    %v2463 = vunpack.c.l.b16 %v2431
    %v2464 = vunpack.c.l.b16 %v2432
    %v2465 = vunpack.c.l.b16 %v2433
    %v2466 = vunpack.c.l.b16 %v2434
    %v2467 = vpack.c.b16 %v2452, %v2451
    %v2468 = vpack.c.b16 %v2454, %v2453
    %v2469 = vpack.c.b16 %v2456, %v2455
    %v2470 = vpack.c.b16 %v2458, %v2457
    %v2471 = vpack.c.b16 %v2460, %v2459
    %v2472 = vpack.c.b16 %v2462, %v2461
    %v2473 = vpack.c.b16 %v2464, %v2463
    %v2474 = vpack.c.b16 %v2466, %v2465
    %2483 = vmatprep.subr.bf16.mxu0 0
    %2484 = vmatpush1.bf16.msra.mxu0 %v2467
    %2485 = vmatprep.subr.bf16.mxu0 0
    %2486 = vmatpush1.bf16.msra.mxu0 %v2468
    %2487 = vmatprep.subr.bf16.mxu0 0
    %2488 = vmatpush1.bf16.msra.mxu0 %v2469
    %2489 = vmatprep.subr.bf16.mxu0 0
    %2490 = vmatpush1.bf16.msra.mxu0 %v2470
    %2491 = vmatprep.subr.bf16.mxu0 0
    %2492 = vmatpush1.bf16.msra.mxu0 %v2471
    %2493 = vmatprep.subr.bf16.mxu0 0
    %2494 = vmatpush1.bf16.msra.mxu0 %v2472
    %2495 = vmatprep.subr.bf16.mxu0 0
    %2496 = vmatpush1.bf16.msra.mxu0 %v2473
    %2497 = vmatprep.subr.bf16.mxu0 0
    %2498 = vmatpush1.bf16.msra.mxu0 %v2474
    %2499 = vmatprep.subr.bf16.mxu0 0
    %2500 = vmatpush1.bf16.msra.mxu0 0
    %2501 = vmatprep.subr.bf16.mxu0 0
    %2502 = vmatpush1.bf16.msra.mxu0 0
    %2503 = vmatprep.subr.bf16.mxu0 0
    %2504 = vmatpush1.bf16.msra.mxu0 0
    %2505 = vmatprep.subr.bf16.mxu0 0
    %2506 = vmatpush1.bf16.msra.mxu0 0
    %2507 = vmatprep.subr.bf16.mxu0 0
    %2508 = vmatpush1.bf16.msra.mxu0 0
    %2509 = vmatprep.subr.bf16.mxu0 0
    %2510 = vmatpush1.bf16.msra.mxu0 0
    %2511 = vmatprep.subr.bf16.mxu0 0
    %2512 = vmatpush1.bf16.msra.mxu0 0
    %2513 = vmatprep.subr.bf16.mxu0 0
    %2514 = vmatpush1.bf16.msra.mxu0 0
    %2515 = vmatprep.mubr.bf16.mxu0 0
    %2516 = vmatmul.mubr.bf16.gmra.mrb[0].mxu0 %v2413
    %v2517 = vpop.f32.mrb[0].mxu0
    %v2518 = vadd.f32 0.0, %v2517
    %v2519 = vpop.f32.mrb[0].mxu0
    %v2520 = vpop.f32.mrb[0].mxu0
    %v2521 = vadd.f32 0.0, %v2520
    %v2522 = vpop.f32.mrb[0].mxu0
    %2523 = vmatprep.mubr.bf16.mxu0 0
    %2524 = vmatmul.mubr.bf16.gmra.mrb[0].mxu0 %v2414
    %v2525 = vpop.f32.mrb[0].mxu0
    %v2526 = vadd.f32 0.0, %v2525
    %v2527 = vpop.f32.mrb[0].mxu0
    %v2528 = vpop.f32.mrb[0].mxu0
    %v2529 = vadd.f32 0.0, %v2528
    %v2530 = vpop.f32.mrb[0].mxu0
    %2531 = vmatprep.mubr.bf16.mxu0 0
    %2532 = vmatmul.mubr.bf16.gmra.mrb[0].mxu0 %v2415
    %v2533 = vpop.f32.mrb[0].mxu0
    %v2534 = vadd.f32 0.0, %v2533
    %v2535 = vpop.f32.mrb[0].mxu0
    %v2536 = vpop.f32.mrb[0].mxu0
    %v2537 = vadd.f32 0.0, %v2536
    %v2538 = vpop.f32.mrb[0].mxu0
    %2539 = vmatprep.mubr.bf16.mxu0 0
    %2540 = vmatmul.mubr.bf16.gmra.mrb[0].mxu0 %v2416
    %v2541 = vpop.f32.mrb[0].mxu0
    %v2542 = vadd.f32 0.0, %v2541
    %v2543 = vpop.f32.mrb[0].mxu0
    %v2544 = vpop.f32.mrb[0].mxu0
    %v2545 = vadd.f32 0.0, %v2544
    %v2546 = vpop.f32.mrb[0].mxu0
    %2547 = vmatprep.mubr.bf16.mxu0 0
    %2548 = vmatmul.mubr.bf16.gmra.mrb[0].mxu0 %v2417
    %v2549 = vpop.f32.mrb[0].mxu0
    %v2550 = vadd.f32 0.0, %v2549
    %v2551 = vpop.f32.mrb[0].mxu0
    %v2552 = vpop.f32.mrb[0].mxu0
    %v2553 = vpop.f32.mrb[0].mxu0
    %2554 = vdwg.mxu0
    %v2555 = vadd.f32 %v2395, %v2518
    %v2556 = vadd.f32 %v2396, %v2521
    %v2557 = vadd.f32 %v2397, %v2526
    %v2558 = vadd.f32 %v2398, %v2529
    %v2559 = vadd.f32 %v2399, %v2534
    %v2560 = vadd.f32 %v2400, %v2537
    %v2561 = vadd.f32 %v2401, %v2542
    %v2562 = vadd.f32 %v2402, %v2545
    %v2563 = vadd.f32 %v2403, %v2550
    %v2564 = vld [vmem:[#allocation2 + $0xd] sm:$0xff]
    %v2565 = vld [vmem:[#allocation2 + $0x15] sm:$0xff]
    %v2566 = vld [vmem:[#allocation2 + $0x1d] sm:$0xff]
    %v2567 = vld [vmem:[#allocation2 + $0x25] sm:$0xff]
    %v2568 = vld [vmem:[#allocation2 + $0x2d] sm:$0xff]
    %v2569 = vld [vmem:[#allocation2 + $0x35] sm:$0xff]
    %v2570 = vld [vmem:[#allocation2 + $0x3d] sm:$0xff]
    %v2571 = vld [vmem:[#allocation2 + $0x45] sm:$0xff]
    %v2572 = vld [vmem:[#allocation2 + $0x4d] sm:$0xff]
    %v2573 = vpack.c.bf16 %v2565, %v2564
    %v2574 = vpack.c.bf16 %v2567, %v2566
    %v2575 = vpack.c.bf16 %v2569, %v2568
    %v2576 = vpack.c.bf16 %v2571, %v2570
    %v2577 = vpack.c.bf16 %v2572, %v2572
    %s2578 = scalar_lea.vmem [#allocation8], 384
    %v2579 = vld [vmem:[%s2578] sm:$0xf]
    %v2580 = vld [vmem:[%s2578 + $0x4] sm:$0xf]
    %v2581 = vld [vmem:[%s2578 + $0x8] sm:$0xf]
    %v2582 = vld [vmem:[%s2578 + $0xc] sm:$0xf]
    %v2583 = vld [vmem:[%s2578 + $0x10] sm:$0xf]
    %v2584 = vld [vmem:[%s2578 + $0x14] sm:$0xf]
    %v2585 = vld [vmem:[%s2578 + $0x18] sm:$0xf]
    %v2586 = vld [vmem:[%s2578 + $0x1c] sm:$0xf]
    %v2587 = vld [vmem:[%s2578 + $0x20] sm:$0xf]
    %v2588 = vld [vmem:[%s2578 + $0x24] sm:$0xf]
    %v2589 = vld [vmem:[%s2578 + $0x28] sm:$0xf]
    %v2590 = vld [vmem:[%s2578 + $0x2c] sm:$0xf]
    %v2591 = vld [vmem:[%s2578 + $0x30] sm:$0xf]
    %v2592 = vld [vmem:[%s2578 + $0x34] sm:$0xf]
    %v2593 = vld [vmem:[%s2578 + $0x38] sm:$0xf]
    %v2594 = vld [vmem:[%s2578 + $0x3c] sm:$0xf]
    %v2611 = vunpack.c.l.b16 %v2579
    %v2612 = vunpack.c.l.b16 %v2580
    %v2613 = vunpack.c.l.b16 %v2581
    %v2614 = vunpack.c.l.b16 %v2582
    %v2615 = vunpack.c.l.b16 %v2583
    %v2616 = vunpack.c.l.b16 %v2584
    %v2617 = vunpack.c.l.b16 %v2585
    %v2618 = vunpack.c.l.b16 %v2586
    %v2619 = vunpack.c.l.b16 %v2587
    %v2620 = vunpack.c.l.b16 %v2588
    %v2621 = vunpack.c.l.b16 %v2589
    %v2622 = vunpack.c.l.b16 %v2590
    %v2623 = vunpack.c.l.b16 %v2591
    %v2624 = vunpack.c.l.b16 %v2592
    %v2625 = vunpack.c.l.b16 %v2593
    %v2626 = vunpack.c.l.b16 %v2594
    %v2627 = vpack.c.b16 %v2612, %v2611
    %v2628 = vpack.c.b16 %v2614, %v2613
    %v2629 = vpack.c.b16 %v2616, %v2615
    %v2630 = vpack.c.b16 %v2618, %v2617
    %v2631 = vpack.c.b16 %v2620, %v2619
    %v2632 = vpack.c.b16 %v2622, %v2621
    %v2633 = vpack.c.b16 %v2624, %v2623
    %v2634 = vpack.c.b16 %v2626, %v2625
    %2643 = vmatprep.subr.bf16.mxu0 0
    %2644 = vmatpush1.bf16.msra.mxu0 %v2627
    %2645 = vmatprep.subr.bf16.mxu0 0
    %2646 = vmatpush1.bf16.msra.mxu0 %v2628
    %2647 = vmatprep.subr.bf16.mxu0 0
    %2648 = vmatpush1.bf16.msra.mxu0 %v2629
    %2649 = vmatprep.subr.bf16.mxu0 0
    %2650 = vmatpush1.bf16.msra.mxu0 %v2630
    %2651 = vmatprep.subr.bf16.mxu0 0
    %2652 = vmatpush1.bf16.msra.mxu0 %v2631
    %2653 = vmatprep.subr.bf16.mxu0 0
    %2654 = vmatpush1.bf16.msra.mxu0 %v2632
    %2655 = vmatprep.subr.bf16.mxu0 0
    %2656 = vmatpush1.bf16.msra.mxu0 %v2633
    %2657 = vmatprep.subr.bf16.mxu0 0
    %2658 = vmatpush1.bf16.msra.mxu0 %v2634
    %2659 = vmatprep.subr.bf16.mxu0 0
    %2660 = vmatpush1.bf16.msra.mxu0 0
    %2661 = vmatprep.subr.bf16.mxu0 0
    %2662 = vmatpush1.bf16.msra.mxu0 0
    %2663 = vmatprep.subr.bf16.mxu0 0
    %2664 = vmatpush1.bf16.msra.mxu0 0
    %2665 = vmatprep.subr.bf16.mxu0 0
    %2666 = vmatpush1.bf16.msra.mxu0 0
    %2667 = vmatprep.subr.bf16.mxu0 0
    %2668 = vmatpush1.bf16.msra.mxu0 0
    %2669 = vmatprep.subr.bf16.mxu0 0
    %2670 = vmatpush1.bf16.msra.mxu0 0
    %2671 = vmatprep.subr.bf16.mxu0 0
    %2672 = vmatpush1.bf16.msra.mxu0 0
    %2673 = vmatprep.subr.bf16.mxu0 0
    %2674 = vmatpush1.bf16.msra.mxu0 0
    %2675 = vmatprep.mubr.bf16.mxu0 0
    %2676 = vmatmul.mubr.bf16.gmra.mrb[0].mxu0 %v2573
    %v2677 = vpop.f32.mrb[0].mxu0
    %v2678 = vadd.f32 0.0, %v2677
    %v2679 = vpop.f32.mrb[0].mxu0
    %v2680 = vpop.f32.mrb[0].mxu0
    %v2681 = vadd.f32 0.0, %v2680
    %v2682 = vpop.f32.mrb[0].mxu0
    %2683 = vmatprep.mubr.bf16.mxu0 0
    %2684 = vmatmul.mubr.bf16.gmra.mrb[0].mxu0 %v2574
    %v2685 = vpop.f32.mrb[0].mxu0
    %v2686 = vadd.f32 0.0, %v2685
    %v2687 = vpop.f32.mrb[0].mxu0
    %v2688 = vpop.f32.mrb[0].mxu0
    %v2689 = vadd.f32 0.0, %v2688
    %v2690 = vpop.f32.mrb[0].mxu0
    %2691 = vmatprep.mubr.bf16.mxu0 0
    %2692 = vmatmul.mubr.bf16.gmra.mrb[0].mxu0 %v2575
    %v2693 = vpop.f32.mrb[0].mxu0
    %v2694 = vadd.f32 0.0, %v2693
    %v2695 = vpop.f32.mrb[0].mxu0
    %v2696 = vpop.f32.mrb[0].mxu0
    %v2697 = vadd.f32 0.0, %v2696
    %v2698 = vpop.f32.mrb[0].mxu0
    %2699 = vmatprep.mubr.bf16.mxu0 0
    %2700 = vmatmul.mubr.bf16.gmra.mrb[0].mxu0 %v2576
    %v2701 = vpop.f32.mrb[0].mxu0
    %v2702 = vadd.f32 0.0, %v2701
    %v2703 = vpop.f32.mrb[0].mxu0
    %v2704 = vpop.f32.mrb[0].mxu0
    %v2705 = vadd.f32 0.0, %v2704
    %v2706 = vpop.f32.mrb[0].mxu0
    %2707 = vmatprep.mubr.bf16.mxu0 0
    %2708 = vmatmul.mubr.bf16.gmra.mrb[0].mxu0 %v2577
    %v2709 = vpop.f32.mrb[0].mxu0
    %v2710 = vadd.f32 0.0, %v2709
    %v2711 = vpop.f32.mrb[0].mxu0
    %v2712 = vpop.f32.mrb[0].mxu0
    %v2713 = vpop.f32.mrb[0].mxu0
    %2714 = vdwg.mxu0
    %v2715 = vadd.f32 %v2555, %v2678
    %v2716 = vadd.f32 %v2556, %v2681
    %v2717 = vadd.f32 %v2557, %v2686
    %v2718 = vadd.f32 %v2558, %v2689
    %v2719 = vadd.f32 %v2559, %v2694
    %v2720 = vadd.f32 %v2560, %v2697
    %v2721 = vadd.f32 %v2561, %v2702
    %v2722 = vadd.f32 %v2562, %v2705
    %v2723 = vadd.f32 %v2563, %v2710
    %v2724 = vld [vmem:[#allocation2 + $0xe] sm:$0xff]
    %v2725 = vld [vmem:[#allocation2 + $0x16] sm:$0xff]
    %v2726 = vld [vmem:[#allocation2 + $0x1e] sm:$0xff]
    %v2727 = vld [vmem:[#allocation2 + $0x26] sm:$0xff]
    %v2728 = vld [vmem:[#allocation2 + $0x2e] sm:$0xff]
    %v2729 = vld [vmem:[#allocation2 + $0x36] sm:$0xff]
    %v2730 = vld [vmem:[#allocation2 + $0x3e] sm:$0xff]
    %v2731 = vld [vmem:[#allocation2 + $0x46] sm:$0xff]
    %v2732 = vld [vmem:[#allocation2 + $0x4e] sm:$0xff]
    %v2733 = vpack.c.bf16 %v2725, %v2724
    %v2734 = vpack.c.bf16 %v2727, %v2726
    %v2735 = vpack.c.bf16 %v2729, %v2728
    %v2736 = vpack.c.bf16 %v2731, %v2730
    %v2737 = vpack.c.bf16 %v2732, %v2732
    %s2738 = scalar_lea.vmem [#allocation8], 448
    %v2739 = vld [vmem:[%s2738] sm:$0xf]
    %v2740 = vld [vmem:[%s2738 + $0x4] sm:$0xf]
    %v2741 = vld [vmem:[%s2738 + $0x8] sm:$0xf]
    %v2742 = vld [vmem:[%s2738 + $0xc] sm:$0xf]
    %v2743 = vld [vmem:[%s2738 + $0x10] sm:$0xf]
    %v2744 = vld [vmem:[%s2738 + $0x14] sm:$0xf]
    %v2745 = vld [vmem:[%s2738 + $0x18] sm:$0xf]
    %v2746 = vld [vmem:[%s2738 + $0x1c] sm:$0xf]
    %v2747 = vld [vmem:[%s2738 + $0x20] sm:$0xf]
    %v2748 = vld [vmem:[%s2738 + $0x24] sm:$0xf]
    %v2749 = vld [vmem:[%s2738 + $0x28] sm:$0xf]
    %v2750 = vld [vmem:[%s2738 + $0x2c] sm:$0xf]
    %v2751 = vld [vmem:[%s2738 + $0x30] sm:$0xf]
    %v2752 = vld [vmem:[%s2738 + $0x34] sm:$0xf]
    %v2753 = vld [vmem:[%s2738 + $0x38] sm:$0xf]
    %v2754 = vld [vmem:[%s2738 + $0x3c] sm:$0xf]
    %v2771 = vunpack.c.l.b16 %v2739
    %v2772 = vunpack.c.l.b16 %v2740
    %v2773 = vunpack.c.l.b16 %v2741
    %v2774 = vunpack.c.l.b16 %v2742
    %v2775 = vunpack.c.l.b16 %v2743
    %v2776 = vunpack.c.l.b16 %v2744
    %v2777 = vunpack.c.l.b16 %v2745
    %v2778 = vunpack.c.l.b16 %v2746
    %v2779 = vunpack.c.l.b16 %v2747
    %v2780 = vunpack.c.l.b16 %v2748
    %v2781 = vunpack.c.l.b16 %v2749
    %v2782 = vunpack.c.l.b16 %v2750
    %v2783 = vunpack.c.l.b16 %v2751
    %v2784 = vunpack.c.l.b16 %v2752
    %v2785 = vunpack.c.l.b16 %v2753
    %v2786 = vunpack.c.l.b16 %v2754
    %v2787 = vpack.c.b16 %v2772, %v2771
    %v2788 = vpack.c.b16 %v2774, %v2773
    %v2789 = vpack.c.b16 %v2776, %v2775
    %v2790 = vpack.c.b16 %v2778, %v2777
    %v2791 = vpack.c.b16 %v2780, %v2779
    %v2792 = vpack.c.b16 %v2782, %v2781
    %v2793 = vpack.c.b16 %v2784, %v2783
    %v2794 = vpack.c.b16 %v2786, %v2785
    %2803 = vmatprep.subr.bf16.mxu0 0
    %2804 = vmatpush1.bf16.msra.mxu0 %v2787
    %2805 = vmatprep.subr.bf16.mxu0 0
    %2806 = vmatpush1.bf16.msra.mxu0 %v2788
    %2807 = vmatprep.subr.bf16.mxu0 0
    %2808 = vmatpush1.bf16.msra.mxu0 %v2789
    %2809 = vmatprep.subr.bf16.mxu0 0
    %2810 = vmatpush1.bf16.msra.mxu0 %v2790
    %2811 = vmatprep.subr.bf16.mxu0 0
    %2812 = vmatpush1.bf16.msra.mxu0 %v2791
    %2813 = vmatprep.subr.bf16.mxu0 0
    %2814 = vmatpush1.bf16.msra.mxu0 %v2792
    %2815 = vmatprep.subr.bf16.mxu0 0
    %2816 = vmatpush1.bf16.msra.mxu0 %v2793
    %2817 = vmatprep.subr.bf16.mxu0 0
    %2818 = vmatpush1.bf16.msra.mxu0 %v2794
    %2819 = vmatprep.subr.bf16.mxu0 0
    %2820 = vmatpush1.bf16.msra.mxu0 0
    %2821 = vmatprep.subr.bf16.mxu0 0
    %2822 = vmatpush1.bf16.msra.mxu0 0
    %2823 = vmatprep.subr.bf16.mxu0 0
    %2824 = vmatpush1.bf16.msra.mxu0 0
    %2825 = vmatprep.subr.bf16.mxu0 0
    %2826 = vmatpush1.bf16.msra.mxu0 0
    %2827 = vmatprep.subr.bf16.mxu0 0
    %2828 = vmatpush1.bf16.msra.mxu0 0
    %2829 = vmatprep.subr.bf16.mxu0 0
    %2830 = vmatpush1.bf16.msra.mxu0 0
    %2831 = vmatprep.subr.bf16.mxu0 0
    %2832 = vmatpush1.bf16.msra.mxu0 0
    %2833 = vmatprep.subr.bf16.mxu0 0
    %2834 = vmatpush1.bf16.msra.mxu0 0
    %2835 = vmatprep.mubr.bf16.mxu0 0
    %2836 = vmatmul.mubr.bf16.gmra.mrb[0].mxu0 %v2733
    %v2837 = vpop.f32.mrb[0].mxu0
    %v2838 = vadd.f32 0.0, %v2837
    %v2839 = vpop.f32.mrb[0].mxu0
    %v2840 = vpop.f32.mrb[0].mxu0
    %v2841 = vadd.f32 0.0, %v2840
    %v2842 = vpop.f32.mrb[0].mxu0
    %2843 = vmatprep.mubr.bf16.mxu0 0
    %2844 = vmatmul.mubr.bf16.gmra.mrb[0].mxu0 %v2734
    %v2845 = vpop.f32.mrb[0].mxu0
    %v2846 = vadd.f32 0.0, %v2845
    %v2847 = vpop.f32.mrb[0].mxu0
    %v2848 = vpop.f32.mrb[0].mxu0
    %v2849 = vadd.f32 0.0, %v2848
    %v2850 = vpop.f32.mrb[0].mxu0
    %2851 = vmatprep.mubr.bf16.mxu0 0
    %2852 = vmatmul.mubr.bf16.gmra.mrb[0].mxu0 %v2735
    %v2853 = vpop.f32.mrb[0].mxu0
    %v2854 = vadd.f32 0.0, %v2853
    %v2855 = vpop.f32.mrb[0].mxu0
    %v2856 = vpop.f32.mrb[0].mxu0
    %v2857 = vadd.f32 0.0, %v2856
    %v2858 = vpop.f32.mrb[0].mxu0
    %2859 = vmatprep.mubr.bf16.mxu0 0
    %2860 = vmatmul.mubr.bf16.gmra.mrb[0].mxu0 %v2736
    %v2861 = vpop.f32.mrb[0].mxu0
    %v2862 = vadd.f32 0.0, %v2861
    %v2863 = vpop.f32.mrb[0].mxu0
    %v2864 = vpop.f32.mrb[0].mxu0
    %v2865 = vadd.f32 0.0, %v2864
    %v2866 = vpop.f32.mrb[0].mxu0
    %2867 = vmatprep.mubr.bf16.mxu0 0
    %2868 = vmatmul.mubr.bf16.gmra.mrb[0].mxu0 %v2737
    %v2869 = vpop.f32.mrb[0].mxu0
    %v2870 = vadd.f32 0.0, %v2869
    %v2871 = vpop.f32.mrb[0].mxu0
    %v2872 = vpop.f32.mrb[0].mxu0
    %v2873 = vpop.f32.mrb[0].mxu0
    %2874 = vdwg.mxu0
    %v2875 = vadd.f32 %v2715, %v2838
    %v2876 = vadd.f32 %v2716, %v2841
    %v2877 = vadd.f32 %v2717, %v2846
    %v2878 = vadd.f32 %v2718, %v2849
    %v2879 = vadd.f32 %v2719, %v2854
    %v2880 = vadd.f32 %v2720, %v2857
    %v2881 = vadd.f32 %v2721, %v2862
    %v2882 = vadd.f32 %v2722, %v2865
    %v2883 = vadd.f32 %v2723, %v2870
    %v2884 = vld [vmem:[#allocation2 + $0xf] sm:$0xff]
    %v2885 = vld [vmem:[#allocation2 + $0x17] sm:$0xff]
    %v2886 = vld [vmem:[#allocation2 + $0x1f] sm:$0xff]
    %v2887 = vld [vmem:[#allocation2 + $0x27] sm:$0xff]
    %v2888 = vld [vmem:[#allocation2 + $0x2f] sm:$0xff]
    %v2889 = vld [vmem:[#allocation2 + $0x37] sm:$0xff]
    %v2890 = vld [vmem:[#allocation2 + $0x3f] sm:$0xff]
    %v2891 = vld [vmem:[#allocation2 + $0x47] sm:$0xff]
    %v2892 = vld [vmem:[#allocation2 + $0x4f] sm:$0xff]
    %v2893 = vpack.c.bf16 %v2885, %v2884
    %v2894 = vpack.c.bf16 %v2887, %v2886
    %v2895 = vpack.c.bf16 %v2889, %v2888
    %v2896 = vpack.c.bf16 %v2891, %v2890
    %v2897 = vpack.c.bf16 %v2892, %v2892
    %s2898 = scalar_lea.vmem [#allocation8], 512
    %v2899 = vld [vmem:[%s2898] sm:$0xf]
    %v2900 = vld [vmem:[%s2898 + $0x4] sm:$0xf]
    %v2901 = vld [vmem:[%s2898 + $0x8] sm:$0xf]
    %v2902 = vld [vmem:[%s2898 + $0xc] sm:$0xf]
    %v2903 = vld [vmem:[%s2898 + $0x10] sm:$0xf]
    %v2904 = vld [vmem:[%s2898 + $0x14] sm:$0xf]
    %v2905 = vld [vmem:[%s2898 + $0x18] sm:$0xf]
    %v2906 = vld [vmem:[%s2898 + $0x1c] sm:$0xf]
    %v2907 = vld [vmem:[%s2898 + $0x20] sm:$0xf]
    %v2908 = vld [vmem:[%s2898 + $0x24] sm:$0xf]
    %v2909 = vld [vmem:[%s2898 + $0x28] sm:$0xf]
    %v2910 = vld [vmem:[%s2898 + $0x2c] sm:$0xf]
    %v2911 = vld [vmem:[%s2898 + $0x30] sm:$0xf]
    %v2912 = vld [vmem:[%s2898 + $0x34] sm:$0xf]
    %v2913 = vld [vmem:[%s2898 + $0x38] sm:$0xf]
    %v2914 = vld [vmem:[%s2898 + $0x3c] sm:$0xf]
    %v2931 = vunpack.c.l.b16 %v2899
    %v2932 = vunpack.c.l.b16 %v2900
    %v2933 = vunpack.c.l.b16 %v2901
    %v2934 = vunpack.c.l.b16 %v2902
    %v2935 = vunpack.c.l.b16 %v2903
    %v2936 = vunpack.c.l.b16 %v2904
    %v2937 = vunpack.c.l.b16 %v2905
    %v2938 = vunpack.c.l.b16 %v2906
    %v2939 = vunpack.c.l.b16 %v2907
    %v2940 = vunpack.c.l.b16 %v2908
    %v2941 = vunpack.c.l.b16 %v2909
    %v2942 = vunpack.c.l.b16 %v2910
    %v2943 = vunpack.c.l.b16 %v2911
    %v2944 = vunpack.c.l.b16 %v2912
    %v2945 = vunpack.c.l.b16 %v2913
    %v2946 = vunpack.c.l.b16 %v2914
    %v2947 = vpack.c.b16 %v2932, %v2931
    %v2948 = vpack.c.b16 %v2934, %v2933
    %v2949 = vpack.c.b16 %v2936, %v2935
    %v2950 = vpack.c.b16 %v2938, %v2937
    %v2951 = vpack.c.b16 %v2940, %v2939
    %v2952 = vpack.c.b16 %v2942, %v2941
    %v2953 = vpack.c.b16 %v2944, %v2943
    %v2954 = vpack.c.b16 %v2946, %v2945
    %2963 = vmatprep.subr.bf16.mxu0 0
    %2964 = vmatpush1.bf16.msra.mxu0 %v2947
    %2965 = vmatprep.subr.bf16.mxu0 0
    %2966 = vmatpush1.bf16.msra.mxu0 %v2948
    %2967 = vmatprep.subr.bf16.mxu0 0
    %2968 = vmatpush1.bf16.msra.mxu0 %v2949
    %2969 = vmatprep.subr.bf16.mxu0 0
    %2970 = vmatpush1.bf16.msra.mxu0 %v2950
    %2971 = vmatprep.subr.bf16.mxu0 0
    %2972 = vmatpush1.bf16.msra.mxu0 %v2951
    %2973 = vmatprep.subr.bf16.mxu0 0
    %2974 = vmatpush1.bf16.msra.mxu0 %v2952
    %2975 = vmatprep.subr.bf16.mxu0 0
    %2976 = vmatpush1.bf16.msra.mxu0 %v2953
    %2977 = vmatprep.subr.bf16.mxu0 0
    %2978 = vmatpush1.bf16.msra.mxu0 %v2954
    %2979 = vmatprep.subr.bf16.mxu0 0
    %2980 = vmatpush1.bf16.msra.mxu0 0
    %2981 = vmatprep.subr.bf16.mxu0 0
    %2982 = vmatpush1.bf16.msra.mxu0 0
    %2983 = vmatprep.subr.bf16.mxu0 0
    %2984 = vmatpush1.bf16.msra.mxu0 0
    %2985 = vmatprep.subr.bf16.mxu0 0
    %2986 = vmatpush1.bf16.msra.mxu0 0
    %2987 = vmatprep.subr.bf16.mxu0 0
    %2988 = vmatpush1.bf16.msra.mxu0 0
    %2989 = vmatprep.subr.bf16.mxu0 0
    %2990 = vmatpush1.bf16.msra.mxu0 0
    %2991 = vmatprep.subr.bf16.mxu0 0
    %2992 = vmatpush1.bf16.msra.mxu0 0
    %2993 = vmatprep.subr.bf16.mxu0 0
    %2994 = vmatpush1.bf16.msra.mxu0 0
    %2995 = vmatprep.mubr.bf16.mxu0 0
    %2996 = vmatmul.mubr.bf16.gmra.mrb[0].mxu0 %v2893
    %v2997 = vpop.f32.mrb[0].mxu0
    %v2998 = vadd.f32 0.0, %v2997
    %v2999 = vpop.f32.mrb[0].mxu0
    %v3000 = vpop.f32.mrb[0].mxu0
    %v3001 = vadd.f32 0.0, %v3000
    %v3002 = vpop.f32.mrb[0].mxu0
    %3003 = vmatprep.mubr.bf16.mxu0 0
    %3004 = vmatmul.mubr.bf16.gmra.mrb[0].mxu0 %v2894
    %v3005 = vpop.f32.mrb[0].mxu0
    %v3006 = vadd.f32 0.0, %v3005
    %v3007 = vpop.f32.mrb[0].mxu0
    %v3008 = vpop.f32.mrb[0].mxu0
    %v3009 = vadd.f32 0.0, %v3008
    %v3010 = vpop.f32.mrb[0].mxu0
    %3011 = vmatprep.mubr.bf16.mxu0 0
    %3012 = vmatmul.mubr.bf16.gmra.mrb[0].mxu0 %v2895
    %v3013 = vpop.f32.mrb[0].mxu0
    %v3014 = vadd.f32 0.0, %v3013
    %v3015 = vpop.f32.mrb[0].mxu0
    %v3016 = vpop.f32.mrb[0].mxu0
    %v3017 = vadd.f32 0.0, %v3016
    %v3018 = vpop.f32.mrb[0].mxu0
    %3019 = vmatprep.mubr.bf16.mxu0 0
    %3020 = vmatmul.mubr.bf16.gmra.mrb[0].mxu0 %v2896
    %v3021 = vpop.f32.mrb[0].mxu0
    %v3022 = vadd.f32 0.0, %v3021
    %v3023 = vpop.f32.mrb[0].mxu0
    %v3024 = vpop.f32.mrb[0].mxu0
    %v3025 = vadd.f32 0.0, %v3024
    %v3026 = vpop.f32.mrb[0].mxu0
    %3027 = vmatprep.mubr.bf16.mxu0 0
    %3028 = vmatmul.mubr.bf16.gmra.mrb[0].mxu0 %v2897
    %v3029 = vpop.f32.mrb[0].mxu0
    %v3030 = vadd.f32 0.0, %v3029
    %v3031 = vpop.f32.mrb[0].mxu0
    %v3032 = vpop.f32.mrb[0].mxu0
    %v3033 = vpop.f32.mrb[0].mxu0
    %3034 = vdwg.mxu0
    %v3035 = vadd.f32 %v2875, %v2998
    %v3036 = vadd.f32 %v2876, %v3001
    %v3037 = vadd.f32 %v2877, %v3006
    %v3038 = vadd.f32 %v2878, %v3009
    %v3039 = vadd.f32 %v2879, %v3014
    %v3040 = vadd.f32 %v2880, %v3017
    %v3041 = vadd.f32 %v2881, %v3022
    %v3042 = vadd.f32 %v2882, %v3025
    %v3043 = vadd.f32 %v2883, %v3030
    %v3044 = vld [vmem:[%s6] sm:$0x1]
    %v3046 = vlaneseq
    %v3047 = vshrl.u32 %v3046, 7
    %v3048 = vsub.s32 0, %v3047
    %v3049 = vrot.slane %v3044, %v3048
    %v3051 = vadd.f32 %v3035, %v3049
    %v3052 = vadd.f32 %v3036, %v3049
    %v3053 = vadd.f32 %v3037, %v3049
    %v3054 = vadd.f32 %v3038, %v3049
    %v3055 = vadd.f32 %v3039, %v3049
    %v3056 = vadd.f32 %v3040, %v3049
    %v3057 = vadd.f32 %v3041, %v3049
    %v3058 = vadd.f32 %v3042, %v3049
    %v3059 = vadd.f32 %v3043, %v3049
    %v3060 = vmax.f32 %v3051, 0.0
    %v3061 = vmax.f32 %v3052, 0.0
    %v3062 = vmax.f32 %v3053, 0.0
    %v3063 = vmax.f32 %v3054, 0.0
    %v3064 = vmax.f32 %v3055, 0.0
    %v3065 = vmax.f32 %v3056, 0.0
    %v3066 = vmax.f32 %v3057, 0.0
    %v3067 = vmax.f32 %v3058, 0.0
    %v3068 = vmax.f32 %v3059, 0.0
    %vm3076 = vcmask 1046528
    %v3077 = vrot.slane %v3060, 1
    %v3078 = vrot.slane %v3061, 1
    %v3079 = vsel %vm3076, %v3077, %v3078
    %v3080 = vrot.slane %v3062, 1
    %v3081 = vsel %vm3076, %v3078, %v3080
    %v3082 = vrot.slane %v3063, 1
    %v3083 = vsel %vm3076, %v3080, %v3082
    %v3084 = vrot.slane %v3065, 1
    %v3085 = vrot.slane %v3066, 1
    %v3086 = vsel %vm3076, %v3084, %v3085
    %v3087 = vrot.slane %v3067, 1
    %v3088 = vsel %vm3076, %v3085, %v3087
    %v3095 = vmax.f32 %v3060, %v3079
    %v3096 = vmax.f32 %v3061, %v3081
    %v3097 = vmax.f32 %v3062, %v3083
    %v3098 = vmax.f32 %v3065, %v3086
    %v3099 = vmax.f32 %v3066, %v3088
    %v3100 = vmax.f32 %v3067, %v3087
    %v3103 = vrot.slane %v3064, 1
    %v3104 = vsel %vm3076, %v3082, %v3103
    %v3105 = vrot.slane %v3068, 1
    %v3106 = vsel %vm3076, %v3087, %v3105
    %v3109 = vmax.f32 %v3063, %v3104
    %v3110 = vmax.f32 %v3067, %v3106
    %vm3118 = vcmask 1041408
    %v3119 = vrot.slane %v3095, 6
    %v3120 = vrot.slane %v3096, 6
    %v3121 = vsel %vm3118, %v3119, %v3120
    %v3122 = vrot.slane %v3097, 6
    %v3123 = vsel %vm3118, %v3120, %v3122
    %v3124 = vrot.slane %v3109, 6
    %v3125 = vsel %vm3118, %v3122, %v3124
    %v3126 = vrot.slane %v3098, 6
    %v3127 = vrot.slane %v3099, 6
    %v3128 = vsel %vm3118, %v3126, %v3127
    %v3129 = vrot.slane %v3110, 6
    %v3130 = vsel %vm3118, %v3127, %v3129
    %v3137 = vmax.f32 %v3095, %v3121
    %v3138 = vmax.f32 %v3096, %v3123
    %v3139 = vmax.f32 %v3097, %v3125
    %v3140 = vmax.f32 %v3098, %v3128
    %v3141 = vmax.f32 %v3099, %v3130
    %v3142 = vmax.f32 %v3100, %v3129
    %3143 = vst [vmem:[#allocation3] sm:$0xff] 0.0
    %3144 = vst [vmem:[#allocation3 + $0x8] sm:$0xff] 0.0
    %3145 = vst [vmem:[#allocation3 + $0x10] sm:$0xff] 0.0
    %3146 = vst [vmem:[#allocation3 + $0x18] sm:$0xff] 0.0
    %3147 = vst [vmem:[#allocation3 + $0x20] sm:$0xff] 0.0
    %3148 = vst [vmem:[#allocation3 + $0x28] sm:$0xff] 0.0
    %3149 = vst [vmem:[#allocation3 + $0x6] sm:$0x80] %v3137
    %3150 = vst [vmem:[#allocation3 + $0xd] sm:$0x2] %v3138
    %3151 = vst [vmem:[#allocation3 + $0xe] sm:$0x8] %v3139
    %3152 = vst [vmem:[#allocation3 + $0xd] sm:$0x20] %v3139
    %3153 = vst [vmem:[#allocation3 + $0x1a] sm:$0x8] %v3140
    %3154 = vst [vmem:[#allocation3 + $0x19] sm:$0x20] %v3140
    %3155 = vst [vmem:[#allocation3 + $0x1a] sm:$0x80] %v3141
    %3156 = vst [vmem:[#allocation3 + $0x21] sm:$0x2] %v3142
    %v3157 = vld [vmem:[#allocation3 + $0x3] sm:$0xff]
    %v3158 = vld [vmem:[#allocation3 + $0xb] sm:$0xff]
    %v3159 = vld [vmem:[#allocation3 + $0x13] sm:$0xff]
    %v3160 = vld [vmem:[#allocation3 + $0x1b] sm:$0xff]
    %v3161 = vpack.c.bf16 %v3158, %v3157
    %v3162 = vpack.c.bf16 %v3160, %v3159
    %v3163 = vld [vmem:[#allocation10] sm:$0xf]
    %v3164 = vld [vmem:[#allocation10 + $0x4] sm:$0xf]
    %v3165 = vld [vmem:[#allocation10 + $0x8] sm:$0xf]
    %v3166 = vld [vmem:[#allocation10 + $0xc] sm:$0xf]
    %v3167 = vld [vmem:[#allocation10 + $0x10] sm:$0xf]
    %v3168 = vld [vmem:[#allocation10 + $0x14] sm:$0xf]
    %v3169 = vld [vmem:[#allocation10 + $0x18] sm:$0xf]
    %v3170 = vld [vmem:[#allocation10 + $0x1c] sm:$0xf]
    %v3171 = vld [vmem:[#allocation10 + $0x20] sm:$0xf]
    %v3172 = vld [vmem:[#allocation10 + $0x24] sm:$0xf]
    %v3173 = vld [vmem:[#allocation10 + $0x28] sm:$0xf]
    %v3174 = vld [vmem:[#allocation10 + $0x2c] sm:$0xf]
    %v3175 = vld [vmem:[#allocation10 + $0x30] sm:$0xf]
    %v3176 = vld [vmem:[#allocation10 + $0x34] sm:$0xf]
    %v3177 = vld [vmem:[#allocation10 + $0x38] sm:$0xf]
    %v3178 = vld [vmem:[#allocation10 + $0x3c] sm:$0xf]
    %v3179 = vld [vmem:[#allocation3 + $0x4] sm:$0xff]
    %v3180 = vld [vmem:[#allocation3 + $0xc] sm:$0xff]
    %v3181 = vld [vmem:[#allocation3 + $0x14] sm:$0xff]
    %v3182 = vld [vmem:[#allocation3 + $0x1c] sm:$0xff]
    %v3183 = vpack.c.bf16 %v3180, %v3179
    %v3184 = vpack.c.bf16 %v3182, %v3181
    %s3185 = scalar_lea.vmem [#allocation10], 64
    %v3186 = vld [vmem:[%s3185] sm:$0xf]
    %v3187 = vld [vmem:[%s3185 + $0x4] sm:$0xf]
    %v3188 = vld [vmem:[%s3185 + $0x8] sm:$0xf]
    %v3189 = vld [vmem:[%s3185 + $0xc] sm:$0xf]
    %v3190 = vld [vmem:[%s3185 + $0x10] sm:$0xf]
    %v3191 = vld [vmem:[%s3185 + $0x14] sm:$0xf]
    %v3192 = vld [vmem:[%s3185 + $0x18] sm:$0xf]
    %v3193 = vld [vmem:[%s3185 + $0x1c] sm:$0xf]
    %v3194 = vld [vmem:[%s3185 + $0x20] sm:$0xf]
    %v3195 = vld [vmem:[%s3185 + $0x24] sm:$0xf]
    %v3196 = vld [vmem:[%s3185 + $0x28] sm:$0xf]
    %v3197 = vld [vmem:[%s3185 + $0x2c] sm:$0xf]
    %v3198 = vld [vmem:[%s3185 + $0x30] sm:$0xf]
    %v3199 = vld [vmem:[%s3185 + $0x34] sm:$0xf]
    %v3200 = vld [vmem:[%s3185 + $0x38] sm:$0xf]
    %v3201 = vld [vmem:[%s3185 + $0x3c] sm:$0xf]
    %v3218 = vunpack.c.l.b16 %v3186
    %v3219 = vunpack.c.l.b16 %v3187
    %v3220 = vunpack.c.l.b16 %v3188
    %v3221 = vunpack.c.l.b16 %v3189
    %v3222 = vunpack.c.l.b16 %v3190
    %v3223 = vunpack.c.l.b16 %v3191
    %v3224 = vunpack.c.l.b16 %v3192
    %v3225 = vunpack.c.l.b16 %v3193
    %v3226 = vunpack.c.l.b16 %v3194
    %v3227 = vunpack.c.l.b16 %v3195
    %v3228 = vunpack.c.l.b16 %v3196
    %v3229 = vunpack.c.l.b16 %v3197
    %v3230 = vunpack.c.l.b16 %v3198
    %v3231 = vunpack.c.l.b16 %v3199
    %v3232 = vunpack.c.l.b16 %v3200
    %v3233 = vunpack.c.l.b16 %v3201
    %v3234 = vpack.c.b16 %v3219, %v3218
    %v3235 = vpack.c.b16 %v3221, %v3220
    %v3236 = vpack.c.b16 %v3223, %v3222
    %v3237 = vpack.c.b16 %v3225, %v3224
    %v3238 = vpack.c.b16 %v3227, %v3226
    %v3239 = vpack.c.b16 %v3229, %v3228
    %v3240 = vpack.c.b16 %v3231, %v3230
    %v3241 = vpack.c.b16 %v3233, %v3232
    %3250 = vmatprep.subr.bf16.mxu0 0
    %3251 = vmatpush1.bf16.msra.mxu0 %v3234
    %3252 = vmatprep.subr.bf16.mxu0 0
    %3253 = vmatpush1.bf16.msra.mxu0 %v3235
    %3254 = vmatprep.subr.bf16.mxu0 0
    %3255 = vmatpush1.bf16.msra.mxu0 %v3236
    %3256 = vmatprep.subr.bf16.mxu0 0
    %3257 = vmatpush1.bf16.msra.mxu0 %v3237
    %3258 = vmatprep.subr.bf16.mxu0 0
    %3259 = vmatpush1.bf16.msra.mxu0 %v3238
    %3260 = vmatprep.subr.bf16.mxu0 0
    %3261 = vmatpush1.bf16.msra.mxu0 %v3239
    %3262 = vmatprep.subr.bf16.mxu0 0
    %3263 = vmatpush1.bf16.msra.mxu0 %v3240
    %3264 = vmatprep.subr.bf16.mxu0 0
    %3265 = vmatpush1.bf16.msra.mxu0 %v3241
    %3266 = vmatprep.subr.bf16.mxu0 0
    %3267 = vmatpush1.bf16.msra.mxu0 0
    %3268 = vmatprep.subr.bf16.mxu0 0
    %3269 = vmatpush1.bf16.msra.mxu0 0
    %3270 = vmatprep.subr.bf16.mxu0 0
    %3271 = vmatpush1.bf16.msra.mxu0 0
    %3272 = vmatprep.subr.bf16.mxu0 0
    %3273 = vmatpush1.bf16.msra.mxu0 0
    %3274 = vmatprep.subr.bf16.mxu0 0
    %3275 = vmatpush1.bf16.msra.mxu0 0
    %3276 = vmatprep.subr.bf16.mxu0 0
    %3277 = vmatpush1.bf16.msra.mxu0 0
    %3278 = vmatprep.subr.bf16.mxu0 0
    %3279 = vmatpush1.bf16.msra.mxu0 0
    %3280 = vmatprep.subr.bf16.mxu0 0
    %3281 = vmatpush1.bf16.msra.mxu0 0
    %3282 = vmatprep.mubr.bf16.mxu0 0
    %3283 = vmatmul.mubr.bf16.gmra.mrb[0].mxu0 %v3183
    %v3284 = vpop.f32.mrb[0].mxu0
    %v3285 = vadd.f32 0.0, %v3284
    %v3286 = vpop.f32.mrb[0].mxu0
    %v3287 = vpop.f32.mrb[0].mxu0
    %v3288 = vadd.f32 0.0, %v3287
    %v3289 = vpop.f32.mrb[0].mxu0
    %3290 = vmatprep.mubr.bf16.mxu0 0
    %3291 = vmatmul.mubr.bf16.gmra.mrb[0].mxu0 %v3184
    %v3292 = vpop.f32.mrb[0].mxu0
    %v3293 = vadd.f32 0.0, %v3292
    %v3294 = vpop.f32.mrb[0].mxu0
    %v3295 = vpop.f32.mrb[0].mxu0
    %v3296 = vadd.f32 0.0, %v3295
    %v3297 = vpop.f32.mrb[0].mxu0
    %3298 = vdwg.mxu0
    %v3315 = vunpack.c.l.b16 %v3163
    %v3316 = vunpack.c.l.b16 %v3164
    %v3317 = vunpack.c.l.b16 %v3165
    %v3318 = vunpack.c.l.b16 %v3166
    %v3319 = vunpack.c.l.b16 %v3167
    %v3320 = vunpack.c.l.b16 %v3168
    %v3321 = vunpack.c.l.b16 %v3169
    %v3322 = vunpack.c.l.b16 %v3170
    %v3323 = vunpack.c.l.b16 %v3171
    %v3324 = vunpack.c.l.b16 %v3172
    %v3325 = vunpack.c.l.b16 %v3173
    %v3326 = vunpack.c.l.b16 %v3174
    %v3327 = vunpack.c.l.b16 %v3175
    %v3328 = vunpack.c.l.b16 %v3176
    %v3329 = vunpack.c.l.b16 %v3177
    %v3330 = vunpack.c.l.b16 %v3178
    %v3331 = vpack.c.b16 %v3316, %v3315
    %v3332 = vpack.c.b16 %v3318, %v3317
    %v3333 = vpack.c.b16 %v3320, %v3319
    %v3334 = vpack.c.b16 %v3322, %v3321
    %v3335 = vpack.c.b16 %v3324, %v3323
    %v3336 = vpack.c.b16 %v3326, %v3325
    %v3337 = vpack.c.b16 %v3328, %v3327
    %v3338 = vpack.c.b16 %v3330, %v3329
    %3347 = vmatprep.subr.bf16.mxu0 0
    %3348 = vmatpush1.bf16.msra.mxu0 %v3331
    %3349 = vmatprep.subr.bf16.mxu0 0
    %3350 = vmatpush1.bf16.msra.mxu0 %v3332
    %3351 = vmatprep.subr.bf16.mxu0 0
    %3352 = vmatpush1.bf16.msra.mxu0 %v3333
    %3353 = vmatprep.subr.bf16.mxu0 0
    %3354 = vmatpush1.bf16.msra.mxu0 %v3334
    %3355 = vmatprep.subr.bf16.mxu0 0
    %3356 = vmatpush1.bf16.msra.mxu0 %v3335
    %3357 = vmatprep.subr.bf16.mxu0 0
    %3358 = vmatpush1.bf16.msra.mxu0 %v3336
    %3359 = vmatprep.subr.bf16.mxu0 0
    %3360 = vmatpush1.bf16.msra.mxu0 %v3337
    %3361 = vmatprep.subr.bf16.mxu0 0
    %3362 = vmatpush1.bf16.msra.mxu0 %v3338
    %3363 = vmatprep.subr.bf16.mxu0 0
    %3364 = vmatpush1.bf16.msra.mxu0 0
    %3365 = vmatprep.subr.bf16.mxu0 0
    %3366 = vmatpush1.bf16.msra.mxu0 0
    %3367 = vmatprep.subr.bf16.mxu0 0
    %3368 = vmatpush1.bf16.msra.mxu0 0
    %3369 = vmatprep.subr.bf16.mxu0 0
    %3370 = vmatpush1.bf16.msra.mxu0 0
    %3371 = vmatprep.subr.bf16.mxu0 0
    %3372 = vmatpush1.bf16.msra.mxu0 0
    %3373 = vmatprep.subr.bf16.mxu0 0
    %3374 = vmatpush1.bf16.msra.mxu0 0
    %3375 = vmatprep.subr.bf16.mxu0 0
    %3376 = vmatpush1.bf16.msra.mxu0 0
    %3377 = vmatprep.subr.bf16.mxu0 0
    %3378 = vmatpush1.bf16.msra.mxu0 0
    %3379 = vmatprep.mubr.bf16.mxu0 0
    %3380 = vmatmul.mubr.bf16.gmra.mrb[0].mxu0 %v3161
    %v3381 = vpop.f32.mrb[0].mxu0
    %v3382 = vadd.f32 %v3285, %v3381
    %v3383 = vpop.f32.mrb[0].mxu0
    %v3384 = vpop.f32.mrb[0].mxu0
    %v3385 = vadd.f32 %v3288, %v3384
    %v3386 = vpop.f32.mrb[0].mxu0
    %3387 = vmatprep.mubr.bf16.mxu0 0
    %3388 = vmatmul.mubr.bf16.gmra.mrb[0].mxu0 %v3162
    %v3389 = vpop.f32.mrb[0].mxu0
    %v3390 = vadd.f32 %v3293, %v3389
    %v3391 = vpop.f32.mrb[0].mxu0
    %v3392 = vpop.f32.mrb[0].mxu0
    %v3393 = vadd.f32 %v3296, %v3392
    %v3394 = vpop.f32.mrb[0].mxu0
    %3395 = vdwg.mxu0
    %v3396 = vld [vmem:[#allocation3 + $0x5] sm:$0xff]
    %v3397 = vld [vmem:[#allocation3 + $0xd] sm:$0xff]
    %v3398 = vld [vmem:[#allocation3 + $0x15] sm:$0xff]
    %v3399 = vld [vmem:[#allocation3 + $0x1d] sm:$0xff]
    %v3400 = vpack.c.bf16 %v3397, %v3396
    %v3401 = vpack.c.bf16 %v3399, %v3398
    %s3402 = scalar_lea.vmem [#allocation10], 128
    %v3403 = vld [vmem:[%s3402] sm:$0xf]
    %v3404 = vld [vmem:[%s3402 + $0x4] sm:$0xf]
    %v3405 = vld [vmem:[%s3402 + $0x8] sm:$0xf]
    %v3406 = vld [vmem:[%s3402 + $0xc] sm:$0xf]
    %v3407 = vld [vmem:[%s3402 + $0x10] sm:$0xf]
    %v3408 = vld [vmem:[%s3402 + $0x14] sm:$0xf]
    %v3409 = vld [vmem:[%s3402 + $0x18] sm:$0xf]
    %v3410 = vld [vmem:[%s3402 + $0x1c] sm:$0xf]
    %v3411 = vld [vmem:[%s3402 + $0x20] sm:$0xf]
    %v3412 = vld [vmem:[%s3402 + $0x24] sm:$0xf]
    %v3413 = vld [vmem:[%s3402 + $0x28] sm:$0xf]
    %v3414 = vld [vmem:[%s3402 + $0x2c] sm:$0xf]
    %v3415 = vld [vmem:[%s3402 + $0x30] sm:$0xf]
    %v3416 = vld [vmem:[%s3402 + $0x34] sm:$0xf]
    %v3417 = vld [vmem:[%s3402 + $0x38] sm:$0xf]
    %v3418 = vld [vmem:[%s3402 + $0x3c] sm:$0xf]
    %v3435 = vunpack.c.l.b16 %v3403
    %v3436 = vunpack.c.l.b16 %v3404
    %v3437 = vunpack.c.l.b16 %v3405
    %v3438 = vunpack.c.l.b16 %v3406
    %v3439 = vunpack.c.l.b16 %v3407
    %v3440 = vunpack.c.l.b16 %v3408
    %v3441 = vunpack.c.l.b16 %v3409
    %v3442 = vunpack.c.l.b16 %v3410
    %v3443 = vunpack.c.l.b16 %v3411
    %v3444 = vunpack.c.l.b16 %v3412
    %v3445 = vunpack.c.l.b16 %v3413
    %v3446 = vunpack.c.l.b16 %v3414
    %v3447 = vunpack.c.l.b16 %v3415
    %v3448 = vunpack.c.l.b16 %v3416
    %v3449 = vunpack.c.l.b16 %v3417
    %v3450 = vunpack.c.l.b16 %v3418
    %v3451 = vpack.c.b16 %v3436, %v3435
    %v3452 = vpack.c.b16 %v3438, %v3437
    %v3453 = vpack.c.b16 %v3440, %v3439
    %v3454 = vpack.c.b16 %v3442, %v3441
    %v3455 = vpack.c.b16 %v3444, %v3443
    %v3456 = vpack.c.b16 %v3446, %v3445
    %v3457 = vpack.c.b16 %v3448, %v3447
    %v3458 = vpack.c.b16 %v3450, %v3449
    %3467 = vmatprep.subr.bf16.mxu0 0
    %3468 = vmatpush1.bf16.msra.mxu0 %v3451
    %3469 = vmatprep.subr.bf16.mxu0 0
    %3470 = vmatpush1.bf16.msra.mxu0 %v3452
    %3471 = vmatprep.subr.bf16.mxu0 0
    %3472 = vmatpush1.bf16.msra.mxu0 %v3453
    %3473 = vmatprep.subr.bf16.mxu0 0
    %3474 = vmatpush1.bf16.msra.mxu0 %v3454
    %3475 = vmatprep.subr.bf16.mxu0 0
    %3476 = vmatpush1.bf16.msra.mxu0 %v3455
    %3477 = vmatprep.subr.bf16.mxu0 0
    %3478 = vmatpush1.bf16.msra.mxu0 %v3456
    %3479 = vmatprep.subr.bf16.mxu0 0
    %3480 = vmatpush1.bf16.msra.mxu0 %v3457
    %3481 = vmatprep.subr.bf16.mxu0 0
    %3482 = vmatpush1.bf16.msra.mxu0 %v3458
    %3483 = vmatprep.subr.bf16.mxu0 0
    %3484 = vmatpush1.bf16.msra.mxu0 0
    %3485 = vmatprep.subr.bf16.mxu0 0
    %3486 = vmatpush1.bf16.msra.mxu0 0
    %3487 = vmatprep.subr.bf16.mxu0 0
    %3488 = vmatpush1.bf16.msra.mxu0 0
    %3489 = vmatprep.subr.bf16.mxu0 0
    %3490 = vmatpush1.bf16.msra.mxu0 0
    %3491 = vmatprep.subr.bf16.mxu0 0
    %3492 = vmatpush1.bf16.msra.mxu0 0
    %3493 = vmatprep.subr.bf16.mxu0 0
    %3494 = vmatpush1.bf16.msra.mxu0 0
    %3495 = vmatprep.subr.bf16.mxu0 0
    %3496 = vmatpush1.bf16.msra.mxu0 0
    %3497 = vmatprep.subr.bf16.mxu0 0
    %3498 = vmatpush1.bf16.msra.mxu0 0
    %3499 = vmatprep.mubr.bf16.mxu0 0
    %3500 = vmatmul.mubr.bf16.gmra.mrb[0].mxu0 %v3400
    %v3501 = vpop.f32.mrb[0].mxu0
    %v3502 = vadd.f32 0.0, %v3501
    %v3503 = vpop.f32.mrb[0].mxu0
    %v3504 = vpop.f32.mrb[0].mxu0
    %v3505 = vadd.f32 0.0, %v3504
    %v3506 = vpop.f32.mrb[0].mxu0
    %3507 = vmatprep.mubr.bf16.mxu0 0
    %3508 = vmatmul.mubr.bf16.gmra.mrb[0].mxu0 %v3401
    %v3509 = vpop.f32.mrb[0].mxu0
    %v3510 = vadd.f32 0.0, %v3509
    %v3511 = vpop.f32.mrb[0].mxu0
    %v3512 = vpop.f32.mrb[0].mxu0
    %v3513 = vadd.f32 0.0, %v3512
    %v3514 = vpop.f32.mrb[0].mxu0
    %3515 = vdwg.mxu0
    %v3516 = vadd.f32 %v3382, %v3502
    %v3517 = vadd.f32 %v3385, %v3505
    %v3518 = vadd.f32 %v3390, %v3510
    %v3519 = vadd.f32 %v3393, %v3513
    %v3520 = vld [vmem:[#allocation3 + $0x7] sm:$0xff]
    %v3521 = vld [vmem:[#allocation3 + $0xf] sm:$0xff]
    %v3522 = vld [vmem:[#allocation3 + $0x17] sm:$0xff]
    %v3523 = vld [vmem:[#allocation3 + $0x1f] sm:$0xff]
    %v3524 = vpack.c.bf16 %v3521, %v3520
    %v3525 = vpack.c.bf16 %v3523, %v3522
    %s3526 = scalar_lea.vmem [#allocation10], 192
    %v3527 = vld [vmem:[%s3526] sm:$0xf]
    %v3528 = vld [vmem:[%s3526 + $0x4] sm:$0xf]
    %v3529 = vld [vmem:[%s3526 + $0x8] sm:$0xf]
    %v3530 = vld [vmem:[%s3526 + $0xc] sm:$0xf]
    %v3531 = vld [vmem:[%s3526 + $0x10] sm:$0xf]
    %v3532 = vld [vmem:[%s3526 + $0x14] sm:$0xf]
    %v3533 = vld [vmem:[%s3526 + $0x18] sm:$0xf]
    %v3534 = vld [vmem:[%s3526 + $0x1c] sm:$0xf]
    %v3535 = vld [vmem:[%s3526 + $0x20] sm:$0xf]
    %v3536 = vld [vmem:[%s3526 + $0x24] sm:$0xf]
    %v3537 = vld [vmem:[%s3526 + $0x28] sm:$0xf]
    %v3538 = vld [vmem:[%s3526 + $0x2c] sm:$0xf]
    %v3539 = vld [vmem:[%s3526 + $0x30] sm:$0xf]
    %v3540 = vld [vmem:[%s3526 + $0x34] sm:$0xf]
    %v3541 = vld [vmem:[%s3526 + $0x38] sm:$0xf]
    %v3542 = vld [vmem:[%s3526 + $0x3c] sm:$0xf]
    %v3559 = vunpack.c.l.b16 %v3527
    %v3560 = vunpack.c.l.b16 %v3528
    %v3561 = vunpack.c.l.b16 %v3529
    %v3562 = vunpack.c.l.b16 %v3530
    %v3563 = vunpack.c.l.b16 %v3531
    %v3564 = vunpack.c.l.b16 %v3532
    %v3565 = vunpack.c.l.b16 %v3533
    %v3566 = vunpack.c.l.b16 %v3534
    %v3567 = vunpack.c.l.b16 %v3535
    %v3568 = vunpack.c.l.b16 %v3536
    %v3569 = vunpack.c.l.b16 %v3537
    %v3570 = vunpack.c.l.b16 %v3538
    %v3571 = vunpack.c.l.b16 %v3539
    %v3572 = vunpack.c.l.b16 %v3540
    %v3573 = vunpack.c.l.b16 %v3541
    %v3574 = vunpack.c.l.b16 %v3542
    %v3575 = vpack.c.b16 %v3560, %v3559
    %v3576 = vpack.c.b16 %v3562, %v3561
    %v3577 = vpack.c.b16 %v3564, %v3563
    %v3578 = vpack.c.b16 %v3566, %v3565
    %v3579 = vpack.c.b16 %v3568, %v3567
    %v3580 = vpack.c.b16 %v3570, %v3569
    %v3581 = vpack.c.b16 %v3572, %v3571
    %v3582 = vpack.c.b16 %v3574, %v3573
    %3591 = vmatprep.subr.bf16.mxu0 0
    %3592 = vmatpush1.bf16.msra.mxu0 %v3575
    %3593 = vmatprep.subr.bf16.mxu0 0
    %3594 = vmatpush1.bf16.msra.mxu0 %v3576
    %3595 = vmatprep.subr.bf16.mxu0 0
    %3596 = vmatpush1.bf16.msra.mxu0 %v3577
    %3597 = vmatprep.subr.bf16.mxu0 0
    %3598 = vmatpush1.bf16.msra.mxu0 %v3578
    %3599 = vmatprep.subr.bf16.mxu0 0
    %3600 = vmatpush1.bf16.msra.mxu0 %v3579
    %3601 = vmatprep.subr.bf16.mxu0 0
    %3602 = vmatpush1.bf16.msra.mxu0 %v3580
    %3603 = vmatprep.subr.bf16.mxu0 0
    %3604 = vmatpush1.bf16.msra.mxu0 %v3581
    %3605 = vmatprep.subr.bf16.mxu0 0
    %3606 = vmatpush1.bf16.msra.mxu0 %v3582
    %3607 = vmatprep.subr.bf16.mxu0 0
    %3608 = vmatpush1.bf16.msra.mxu0 0
    %3609 = vmatprep.subr.bf16.mxu0 0
    %3610 = vmatpush1.bf16.msra.mxu0 0
    %3611 = vmatprep.subr.bf16.mxu0 0
    %3612 = vmatpush1.bf16.msra.mxu0 0
    %3613 = vmatprep.subr.bf16.mxu0 0
    %3614 = vmatpush1.bf16.msra.mxu0 0
    %3615 = vmatprep.subr.bf16.mxu0 0
    %3616 = vmatpush1.bf16.msra.mxu0 0
    %3617 = vmatprep.subr.bf16.mxu0 0
    %3618 = vmatpush1.bf16.msra.mxu0 0
    %3619 = vmatprep.subr.bf16.mxu0 0
    %3620 = vmatpush1.bf16.msra.mxu0 0
    %3621 = vmatprep.subr.bf16.mxu0 0
    %3622 = vmatpush1.bf16.msra.mxu0 0
    %3623 = vmatprep.mubr.bf16.mxu0 0
    %3624 = vmatmul.mubr.bf16.gmra.mrb[0].mxu0 %v3524
    %v3625 = vpop.f32.mrb[0].mxu0
    %v3626 = vadd.f32 0.0, %v3625
    %v3627 = vpop.f32.mrb[0].mxu0
    %v3628 = vpop.f32.mrb[0].mxu0
    %v3629 = vadd.f32 0.0, %v3628
    %v3630 = vpop.f32.mrb[0].mxu0
    %3631 = vmatprep.mubr.bf16.mxu0 0
    %3632 = vmatmul.mubr.bf16.gmra.mrb[0].mxu0 %v3525
    %v3633 = vpop.f32.mrb[0].mxu0
    %v3634 = vadd.f32 0.0, %v3633
    %v3635 = vpop.f32.mrb[0].mxu0
    %v3636 = vpop.f32.mrb[0].mxu0
    %v3637 = vadd.f32 0.0, %v3636
    %v3638 = vpop.f32.mrb[0].mxu0
    %3639 = vdwg.mxu0
    %v3640 = vadd.f32 %v3516, %v3626
    %v3641 = vadd.f32 %v3517, %v3629
    %v3642 = vadd.f32 %v3518, %v3634
    %v3643 = vadd.f32 %v3519, %v3637
    %v3644 = vld [vmem:[#allocation3 + $0x8] sm:$0xff]
    %v3645 = vld [vmem:[#allocation3 + $0x10] sm:$0xff]
    %v3646 = vld [vmem:[#allocation3 + $0x18] sm:$0xff]
    %v3647 = vld [vmem:[#allocation3 + $0x20] sm:$0xff]
    %v3648 = vpack.c.bf16 %v3645, %v3644
    %v3649 = vpack.c.bf16 %v3647, %v3646
    %s3650 = scalar_lea.vmem [#allocation10], 256
    %v3651 = vld [vmem:[%s3650] sm:$0xf]
    %v3652 = vld [vmem:[%s3650 + $0x4] sm:$0xf]
    %v3653 = vld [vmem:[%s3650 + $0x8] sm:$0xf]
    %v3654 = vld [vmem:[%s3650 + $0xc] sm:$0xf]
    %v3655 = vld [vmem:[%s3650 + $0x10] sm:$0xf]
    %v3656 = vld [vmem:[%s3650 + $0x14] sm:$0xf]
    %v3657 = vld [vmem:[%s3650 + $0x18] sm:$0xf]
    %v3658 = vld [vmem:[%s3650 + $0x1c] sm:$0xf]
    %v3659 = vld [vmem:[%s3650 + $0x20] sm:$0xf]
    %v3660 = vld [vmem:[%s3650 + $0x24] sm:$0xf]
    %v3661 = vld [vmem:[%s3650 + $0x28] sm:$0xf]
    %v3662 = vld [vmem:[%s3650 + $0x2c] sm:$0xf]
    %v3663 = vld [vmem:[%s3650 + $0x30] sm:$0xf]
    %v3664 = vld [vmem:[%s3650 + $0x34] sm:$0xf]
    %v3665 = vld [vmem:[%s3650 + $0x38] sm:$0xf]
    %v3666 = vld [vmem:[%s3650 + $0x3c] sm:$0xf]
    %v3683 = vunpack.c.l.b16 %v3651
    %v3684 = vunpack.c.l.b16 %v3652
    %v3685 = vunpack.c.l.b16 %v3653
    %v3686 = vunpack.c.l.b16 %v3654
    %v3687 = vunpack.c.l.b16 %v3655
    %v3688 = vunpack.c.l.b16 %v3656
    %v3689 = vunpack.c.l.b16 %v3657
    %v3690 = vunpack.c.l.b16 %v3658
    %v3691 = vunpack.c.l.b16 %v3659
    %v3692 = vunpack.c.l.b16 %v3660
    %v3693 = vunpack.c.l.b16 %v3661
    %v3694 = vunpack.c.l.b16 %v3662
    %v3695 = vunpack.c.l.b16 %v3663
    %v3696 = vunpack.c.l.b16 %v3664
    %v3697 = vunpack.c.l.b16 %v3665
    %v3698 = vunpack.c.l.b16 %v3666
    %v3699 = vpack.c.b16 %v3684, %v3683
    %v3700 = vpack.c.b16 %v3686, %v3685
    %v3701 = vpack.c.b16 %v3688, %v3687
    %v3702 = vpack.c.b16 %v3690, %v3689
    %v3703 = vpack.c.b16 %v3692, %v3691
    %v3704 = vpack.c.b16 %v3694, %v3693
    %v3705 = vpack.c.b16 %v3696, %v3695
    %v3706 = vpack.c.b16 %v3698, %v3697
    %3715 = vmatprep.subr.bf16.mxu0 0
    %3716 = vmatpush1.bf16.msra.mxu0 %v3699
    %3717 = vmatprep.subr.bf16.mxu0 0
    %3718 = vmatpush1.bf16.msra.mxu0 %v3700
    %3719 = vmatprep.subr.bf16.mxu0 0
    %3720 = vmatpush1.bf16.msra.mxu0 %v3701
    %3721 = vmatprep.subr.bf16.mxu0 0
    %3722 = vmatpush1.bf16.msra.mxu0 %v3702
    %3723 = vmatprep.subr.bf16.mxu0 0
    %3724 = vmatpush1.bf16.msra.mxu0 %v3703
    %3725 = vmatprep.subr.bf16.mxu0 0
    %3726 = vmatpush1.bf16.msra.mxu0 %v3704
    %3727 = vmatprep.subr.bf16.mxu0 0
    %3728 = vmatpush1.bf16.msra.mxu0 %v3705
    %3729 = vmatprep.subr.bf16.mxu0 0
    %3730 = vmatpush1.bf16.msra.mxu0 %v3706
    %3731 = vmatprep.subr.bf16.mxu0 0
    %3732 = vmatpush1.bf16.msra.mxu0 0
    %3733 = vmatprep.subr.bf16.mxu0 0
    %3734 = vmatpush1.bf16.msra.mxu0 0
    %3735 = vmatprep.subr.bf16.mxu0 0
    %3736 = vmatpush1.bf16.msra.mxu0 0
    %3737 = vmatprep.subr.bf16.mxu0 0
    %3738 = vmatpush1.bf16.msra.mxu0 0
    %3739 = vmatprep.subr.bf16.mxu0 0
    %3740 = vmatpush1.bf16.msra.mxu0 0
    %3741 = vmatprep.subr.bf16.mxu0 0
    %3742 = vmatpush1.bf16.msra.mxu0 0
    %3743 = vmatprep.subr.bf16.mxu0 0
    %3744 = vmatpush1.bf16.msra.mxu0 0
    %3745 = vmatprep.subr.bf16.mxu0 0
    %3746 = vmatpush1.bf16.msra.mxu0 0
    %3747 = vmatprep.mubr.bf16.mxu0 0
    %3748 = vmatmul.mubr.bf16.gmra.mrb[0].mxu0 %v3648
    %v3749 = vpop.f32.mrb[0].mxu0
    %v3750 = vadd.f32 0.0, %v3749
    %v3751 = vpop.f32.mrb[0].mxu0
    %v3752 = vpop.f32.mrb[0].mxu0
    %v3753 = vadd.f32 0.0, %v3752
    %v3754 = vpop.f32.mrb[0].mxu0
    %3755 = vmatprep.mubr.bf16.mxu0 0
    %3756 = vmatmul.mubr.bf16.gmra.mrb[0].mxu0 %v3649
    %v3757 = vpop.f32.mrb[0].mxu0
    %v3758 = vadd.f32 0.0, %v3757
    %v3759 = vpop.f32.mrb[0].mxu0
    %v3760 = vpop.f32.mrb[0].mxu0
    %v3761 = vadd.f32 0.0, %v3760
    %v3762 = vpop.f32.mrb[0].mxu0
    %3763 = vdwg.mxu0
    %v3764 = vadd.f32 %v3640, %v3750
    %v3765 = vadd.f32 %v3641, %v3753
    %v3766 = vadd.f32 %v3642, %v3758
    %v3767 = vadd.f32 %v3643, %v3761
    %v3768 = vld [vmem:[#allocation3 + $0x9] sm:$0xff]
    %v3769 = vld [vmem:[#allocation3 + $0x11] sm:$0xff]
    %v3770 = vld [vmem:[#allocation3 + $0x19] sm:$0xff]
    %v3771 = vld [vmem:[#allocation3 + $0x21] sm:$0xff]
    %v3772 = vpack.c.bf16 %v3769, %v3768
    %v3773 = vpack.c.bf16 %v3771, %v3770
    %s3774 = scalar_lea.vmem [#allocation10], 320
    %v3775 = vld [vmem:[%s3774] sm:$0xf]
    %v3776 = vld [vmem:[%s3774 + $0x4] sm:$0xf]
    %v3777 = vld [vmem:[%s3774 + $0x8] sm:$0xf]
    %v3778 = vld [vmem:[%s3774 + $0xc] sm:$0xf]
    %v3779 = vld [vmem:[%s3774 + $0x10] sm:$0xf]
    %v3780 = vld [vmem:[%s3774 + $0x14] sm:$0xf]
    %v3781 = vld [vmem:[%s3774 + $0x18] sm:$0xf]
    %v3782 = vld [vmem:[%s3774 + $0x1c] sm:$0xf]
    %v3783 = vld [vmem:[%s3774 + $0x20] sm:$0xf]
    %v3784 = vld [vmem:[%s3774 + $0x24] sm:$0xf]
    %v3785 = vld [vmem:[%s3774 + $0x28] sm:$0xf]
    %v3786 = vld [vmem:[%s3774 + $0x2c] sm:$0xf]
    %v3787 = vld [vmem:[%s3774 + $0x30] sm:$0xf]
    %v3788 = vld [vmem:[%s3774 + $0x34] sm:$0xf]
    %v3789 = vld [vmem:[%s3774 + $0x38] sm:$0xf]
    %v3790 = vld [vmem:[%s3774 + $0x3c] sm:$0xf]
    %v3807 = vunpack.c.l.b16 %v3775
    %v3808 = vunpack.c.l.b16 %v3776
    %v3809 = vunpack.c.l.b16 %v3777
    %v3810 = vunpack.c.l.b16 %v3778
    %v3811 = vunpack.c.l.b16 %v3779
    %v3812 = vunpack.c.l.b16 %v3780
    %v3813 = vunpack.c.l.b16 %v3781
    %v3814 = vunpack.c.l.b16 %v3782
    %v3815 = vunpack.c.l.b16 %v3783
    %v3816 = vunpack.c.l.b16 %v3784
    %v3817 = vunpack.c.l.b16 %v3785
    %v3818 = vunpack.c.l.b16 %v3786
    %v3819 = vunpack.c.l.b16 %v3787
    %v3820 = vunpack.c.l.b16 %v3788
    %v3821 = vunpack.c.l.b16 %v3789
    %v3822 = vunpack.c.l.b16 %v3790
    %v3823 = vpack.c.b16 %v3808, %v3807
    %v3824 = vpack.c.b16 %v3810, %v3809
    %v3825 = vpack.c.b16 %v3812, %v3811
    %v3826 = vpack.c.b16 %v3814, %v3813
    %v3827 = vpack.c.b16 %v3816, %v3815
    %v3828 = vpack.c.b16 %v3818, %v3817
    %v3829 = vpack.c.b16 %v3820, %v3819
    %v3830 = vpack.c.b16 %v3822, %v3821
    %3839 = vmatprep.subr.bf16.mxu0 0
    %3840 = vmatpush1.bf16.msra.mxu0 %v3823
    %3841 = vmatprep.subr.bf16.mxu0 0
    %3842 = vmatpush1.bf16.msra.mxu0 %v3824
    %3843 = vmatprep.subr.bf16.mxu0 0
    %3844 = vmatpush1.bf16.msra.mxu0 %v3825
    %3845 = vmatprep.subr.bf16.mxu0 0
    %3846 = vmatpush1.bf16.msra.mxu0 %v3826
    %3847 = vmatprep.subr.bf16.mxu0 0
    %3848 = vmatpush1.bf16.msra.mxu0 %v3827
    %3849 = vmatprep.subr.bf16.mxu0 0
    %3850 = vmatpush1.bf16.msra.mxu0 %v3828
    %3851 = vmatprep.subr.bf16.mxu0 0
    %3852 = vmatpush1.bf16.msra.mxu0 %v3829
    %3853 = vmatprep.subr.bf16.mxu0 0
    %3854 = vmatpush1.bf16.msra.mxu0 %v3830
    %3855 = vmatprep.subr.bf16.mxu0 0
    %3856 = vmatpush1.bf16.msra.mxu0 0
    %3857 = vmatprep.subr.bf16.mxu0 0
    %3858 = vmatpush1.bf16.msra.mxu0 0
    %3859 = vmatprep.subr.bf16.mxu0 0
    %3860 = vmatpush1.bf16.msra.mxu0 0
    %3861 = vmatprep.subr.bf16.mxu0 0
    %3862 = vmatpush1.bf16.msra.mxu0 0
    %3863 = vmatprep.subr.bf16.mxu0 0
    %3864 = vmatpush1.bf16.msra.mxu0 0
    %3865 = vmatprep.subr.bf16.mxu0 0
    %3866 = vmatpush1.bf16.msra.mxu0 0
    %3867 = vmatprep.subr.bf16.mxu0 0
    %3868 = vmatpush1.bf16.msra.mxu0 0
    %3869 = vmatprep.subr.bf16.mxu0 0
    %3870 = vmatpush1.bf16.msra.mxu0 0
    %3871 = vmatprep.mubr.bf16.mxu0 0
    %3872 = vmatmul.mubr.bf16.gmra.mrb[0].mxu0 %v3772
    %v3873 = vpop.f32.mrb[0].mxu0
    %v3874 = vadd.f32 0.0, %v3873
    %v3875 = vpop.f32.mrb[0].mxu0
    %v3876 = vpop.f32.mrb[0].mxu0
    %v3877 = vadd.f32 0.0, %v3876
    %v3878 = vpop.f32.mrb[0].mxu0
    %3879 = vmatprep.mubr.bf16.mxu0 0
    %3880 = vmatmul.mubr.bf16.gmra.mrb[0].mxu0 %v3773
    %v3881 = vpop.f32.mrb[0].mxu0
    %v3882 = vadd.f32 0.0, %v3881
    %v3883 = vpop.f32.mrb[0].mxu0
    %v3884 = vpop.f32.mrb[0].mxu0
    %v3885 = vadd.f32 0.0, %v3884
    %v3886 = vpop.f32.mrb[0].mxu0
    %3887 = vdwg.mxu0
    %v3888 = vadd.f32 %v3764, %v3874
    %v3889 = vadd.f32 %v3765, %v3877
    %v3890 = vadd.f32 %v3766, %v3882
    %v3891 = vadd.f32 %v3767, %v3885
    %v3892 = vld [vmem:[#allocation3 + $0xb] sm:$0xff]
    %v3893 = vld [vmem:[#allocation3 + $0x13] sm:$0xff]
    %v3894 = vld [vmem:[#allocation3 + $0x1b] sm:$0xff]
    %v3895 = vld [vmem:[#allocation3 + $0x23] sm:$0xff]
    %v3896 = vpack.c.bf16 %v3893, %v3892
    %v3897 = vpack.c.bf16 %v3895, %v3894
    %s3898 = scalar_lea.vmem [#allocation10], 384
    %v3899 = vld [vmem:[%s3898] sm:$0xf]
    %v3900 = vld [vmem:[%s3898 + $0x4] sm:$0xf]
    %v3901 = vld [vmem:[%s3898 + $0x8] sm:$0xf]
    %v3902 = vld [vmem:[%s3898 + $0xc] sm:$0xf]
    %v3903 = vld [vmem:[%s3898 + $0x10] sm:$0xf]
    %v3904 = vld [vmem:[%s3898 + $0x14] sm:$0xf]
    %v3905 = vld [vmem:[%s3898 + $0x18] sm:$0xf]
    %v3906 = vld [vmem:[%s3898 + $0x1c] sm:$0xf]
    %v3907 = vld [vmem:[%s3898 + $0x20] sm:$0xf]
    %v3908 = vld [vmem:[%s3898 + $0x24] sm:$0xf]
    %v3909 = vld [vmem:[%s3898 + $0x28] sm:$0xf]
    %v3910 = vld [vmem:[%s3898 + $0x2c] sm:$0xf]
    %v3911 = vld [vmem:[%s3898 + $0x30] sm:$0xf]
    %v3912 = vld [vmem:[%s3898 + $0x34] sm:$0xf]
    %v3913 = vld [vmem:[%s3898 + $0x38] sm:$0xf]
    %v3914 = vld [vmem:[%s3898 + $0x3c] sm:$0xf]
    %v3931 = vunpack.c.l.b16 %v3899
    %v3932 = vunpack.c.l.b16 %v3900
    %v3933 = vunpack.c.l.b16 %v3901
    %v3934 = vunpack.c.l.b16 %v3902
    %v3935 = vunpack.c.l.b16 %v3903
    %v3936 = vunpack.c.l.b16 %v3904
    %v3937 = vunpack.c.l.b16 %v3905
    %v3938 = vunpack.c.l.b16 %v3906
    %v3939 = vunpack.c.l.b16 %v3907
    %v3940 = vunpack.c.l.b16 %v3908
    %v3941 = vunpack.c.l.b16 %v3909
    %v3942 = vunpack.c.l.b16 %v3910
    %v3943 = vunpack.c.l.b16 %v3911
    %v3944 = vunpack.c.l.b16 %v3912
    %v3945 = vunpack.c.l.b16 %v3913
    %v3946 = vunpack.c.l.b16 %v3914
    %v3947 = vpack.c.b16 %v3932, %v3931
    %v3948 = vpack.c.b16 %v3934, %v3933
    %v3949 = vpack.c.b16 %v3936, %v3935
    %v3950 = vpack.c.b16 %v3938, %v3937
    %v3951 = vpack.c.b16 %v3940, %v3939
    %v3952 = vpack.c.b16 %v3942, %v3941
    %v3953 = vpack.c.b16 %v3944, %v3943
    %v3954 = vpack.c.b16 %v3946, %v3945
    %3963 = vmatprep.subr.bf16.mxu0 0
    %3964 = vmatpush1.bf16.msra.mxu0 %v3947
    %3965 = vmatprep.subr.bf16.mxu0 0
    %3966 = vmatpush1.bf16.msra.mxu0 %v3948
    %3967 = vmatprep.subr.bf16.mxu0 0
    %3968 = vmatpush1.bf16.msra.mxu0 %v3949
    %3969 = vmatprep.subr.bf16.mxu0 0
    %3970 = vmatpush1.bf16.msra.mxu0 %v3950
    %3971 = vmatprep.subr.bf16.mxu0 0
    %3972 = vmatpush1.bf16.msra.mxu0 %v3951
    %3973 = vmatprep.subr.bf16.mxu0 0
    %3974 = vmatpush1.bf16.msra.mxu0 %v3952
    %3975 = vmatprep.subr.bf16.mxu0 0
    %3976 = vmatpush1.bf16.msra.mxu0 %v3953
    %3977 = vmatprep.subr.bf16.mxu0 0
    %3978 = vmatpush1.bf16.msra.mxu0 %v3954
    %3979 = vmatprep.subr.bf16.mxu0 0
    %3980 = vmatpush1.bf16.msra.mxu0 0
    %3981 = vmatprep.subr.bf16.mxu0 0
    %3982 = vmatpush1.bf16.msra.mxu0 0
    %3983 = vmatprep.subr.bf16.mxu0 0
    %3984 = vmatpush1.bf16.msra.mxu0 0
    %3985 = vmatprep.subr.bf16.mxu0 0
    %3986 = vmatpush1.bf16.msra.mxu0 0
    %3987 = vmatprep.subr.bf16.mxu0 0
    %3988 = vmatpush1.bf16.msra.mxu0 0
    %3989 = vmatprep.subr.bf16.mxu0 0
    %3990 = vmatpush1.bf16.msra.mxu0 0
    %3991 = vmatprep.subr.bf16.mxu0 0
    %3992 = vmatpush1.bf16.msra.mxu0 0
    %3993 = vmatprep.subr.bf16.mxu0 0
    %3994 = vmatpush1.bf16.msra.mxu0 0
    %3995 = vmatprep.mubr.bf16.mxu0 0
    %3996 = vmatmul.mubr.bf16.gmra.mrb[0].mxu0 %v3896
    %v3997 = vpop.f32.mrb[0].mxu0
    %v3998 = vadd.f32 0.0, %v3997
    %v3999 = vpop.f32.mrb[0].mxu0
    %v4000 = vpop.f32.mrb[0].mxu0
    %v4001 = vadd.f32 0.0, %v4000
    %v4002 = vpop.f32.mrb[0].mxu0
    %4003 = vmatprep.mubr.bf16.mxu0 0
    %4004 = vmatmul.mubr.bf16.gmra.mrb[0].mxu0 %v3897
    %v4005 = vpop.f32.mrb[0].mxu0
    %v4006 = vadd.f32 0.0, %v4005
    %v4007 = vpop.f32.mrb[0].mxu0
    %v4008 = vpop.f32.mrb[0].mxu0
    %v4009 = vadd.f32 0.0, %v4008
    %v4010 = vpop.f32.mrb[0].mxu0
    %4011 = vdwg.mxu0
    %v4012 = vadd.f32 %v3888, %v3998
    %v4013 = vadd.f32 %v3889, %v4001
    %v4014 = vadd.f32 %v3890, %v4006
    %v4015 = vadd.f32 %v3891, %v4009
    %v4016 = vld [vmem:[#allocation3 + $0xc] sm:$0xff]
    %v4017 = vld [vmem:[#allocation3 + $0x14] sm:$0xff]
    %v4018 = vld [vmem:[#allocation3 + $0x1c] sm:$0xff]
    %v4019 = vld [vmem:[#allocation3 + $0x24] sm:$0xff]
    %v4020 = vpack.c.bf16 %v4017, %v4016
    %v4021 = vpack.c.bf16 %v4019, %v4018
    %s4022 = scalar_lea.vmem [#allocation10], 448
    %v4023 = vld [vmem:[%s4022] sm:$0xf]
    %v4024 = vld [vmem:[%s4022 + $0x4] sm:$0xf]
    %v4025 = vld [vmem:[%s4022 + $0x8] sm:$0xf]
    %v4026 = vld [vmem:[%s4022 + $0xc] sm:$0xf]
    %v4027 = vld [vmem:[%s4022 + $0x10] sm:$0xf]
    %v4028 = vld [vmem:[%s4022 + $0x14] sm:$0xf]
    %v4029 = vld [vmem:[%s4022 + $0x18] sm:$0xf]
    %v4030 = vld [vmem:[%s4022 + $0x1c] sm:$0xf]
    %v4031 = vld [vmem:[%s4022 + $0x20] sm:$0xf]
    %v4032 = vld [vmem:[%s4022 + $0x24] sm:$0xf]
    %v4033 = vld [vmem:[%s4022 + $0x28] sm:$0xf]
    %v4034 = vld [vmem:[%s4022 + $0x2c] sm:$0xf]
    %v4035 = vld [vmem:[%s4022 + $0x30] sm:$0xf]
    %v4036 = vld [vmem:[%s4022 + $0x34] sm:$0xf]
    %v4037 = vld [vmem:[%s4022 + $0x38] sm:$0xf]
    %v4038 = vld [vmem:[%s4022 + $0x3c] sm:$0xf]
    %v4055 = vunpack.c.l.b16 %v4023
    %v4056 = vunpack.c.l.b16 %v4024
    %v4057 = vunpack.c.l.b16 %v4025
    %v4058 = vunpack.c.l.b16 %v4026
    %v4059 = vunpack.c.l.b16 %v4027
    %v4060 = vunpack.c.l.b16 %v4028
    %v4061 = vunpack.c.l.b16 %v4029
    %v4062 = vunpack.c.l.b16 %v4030
    %v4063 = vunpack.c.l.b16 %v4031
    %v4064 = vunpack.c.l.b16 %v4032
    %v4065 = vunpack.c.l.b16 %v4033
    %v4066 = vunpack.c.l.b16 %v4034
    %v4067 = vunpack.c.l.b16 %v4035
    %v4068 = vunpack.c.l.b16 %v4036
    %v4069 = vunpack.c.l.b16 %v4037
    %v4070 = vunpack.c.l.b16 %v4038
    %v4071 = vpack.c.b16 %v4056, %v4055
    %v4072 = vpack.c.b16 %v4058, %v4057
    %v4073 = vpack.c.b16 %v4060, %v4059
    %v4074 = vpack.c.b16 %v4062, %v4061
    %v4075 = vpack.c.b16 %v4064, %v4063
    %v4076 = vpack.c.b16 %v4066, %v4065
    %v4077 = vpack.c.b16 %v4068, %v4067
    %v4078 = vpack.c.b16 %v4070, %v4069
    %4087 = vmatprep.subr.bf16.mxu0 0
    %4088 = vmatpush1.bf16.msra.mxu0 %v4071
    %4089 = vmatprep.subr.bf16.mxu0 0
    %4090 = vmatpush1.bf16.msra.mxu0 %v4072
    %4091 = vmatprep.subr.bf16.mxu0 0
    %4092 = vmatpush1.bf16.msra.mxu0 %v4073
    %4093 = vmatprep.subr.bf16.mxu0 0
    %4094 = vmatpush1.bf16.msra.mxu0 %v4074
    %4095 = vmatprep.subr.bf16.mxu0 0
    %4096 = vmatpush1.bf16.msra.mxu0 %v4075
    %4097 = vmatprep.subr.bf16.mxu0 0
    %4098 = vmatpush1.bf16.msra.mxu0 %v4076
    %4099 = vmatprep.subr.bf16.mxu0 0
    %4100 = vmatpush1.bf16.msra.mxu0 %v4077
    %4101 = vmatprep.subr.bf16.mxu0 0
    %4102 = vmatpush1.bf16.msra.mxu0 %v4078
    %4103 = vmatprep.subr.bf16.mxu0 0
    %4104 = vmatpush1.bf16.msra.mxu0 0
    %4105 = vmatprep.subr.bf16.mxu0 0
    %4106 = vmatpush1.bf16.msra.mxu0 0
    %4107 = vmatprep.subr.bf16.mxu0 0
    %4108 = vmatpush1.bf16.msra.mxu0 0
    %4109 = vmatprep.subr.bf16.mxu0 0
    %4110 = vmatpush1.bf16.msra.mxu0 0
    %4111 = vmatprep.subr.bf16.mxu0 0
    %4112 = vmatpush1.bf16.msra.mxu0 0
    %4113 = vmatprep.subr.bf16.mxu0 0
    %4114 = vmatpush1.bf16.msra.mxu0 0
    %4115 = vmatprep.subr.bf16.mxu0 0
    %4116 = vmatpush1.bf16.msra.mxu0 0
    %4117 = vmatprep.subr.bf16.mxu0 0
    %4118 = vmatpush1.bf16.msra.mxu0 0
    %4119 = vmatprep.mubr.bf16.mxu0 0
    %4120 = vmatmul.mubr.bf16.gmra.mrb[0].mxu0 %v4020
    %v4121 = vpop.f32.mrb[0].mxu0
    %v4122 = vadd.f32 0.0, %v4121
    %v4123 = vpop.f32.mrb[0].mxu0
    %v4124 = vpop.f32.mrb[0].mxu0
    %v4125 = vadd.f32 0.0, %v4124
    %v4126 = vpop.f32.mrb[0].mxu0
    %4127 = vmatprep.mubr.bf16.mxu0 0
    %4128 = vmatmul.mubr.bf16.gmra.mrb[0].mxu0 %v4021
    %v4129 = vpop.f32.mrb[0].mxu0
    %v4130 = vadd.f32 0.0, %v4129
    %v4131 = vpop.f32.mrb[0].mxu0
    %v4132 = vpop.f32.mrb[0].mxu0
    %v4133 = vadd.f32 0.0, %v4132
    %v4134 = vpop.f32.mrb[0].mxu0
    %4135 = vdwg.mxu0
    %v4136 = vadd.f32 %v4012, %v4122
    %v4137 = vadd.f32 %v4013, %v4125
    %v4138 = vadd.f32 %v4014, %v4130
    %v4139 = vadd.f32 %v4015, %v4133
    %v4140 = vld [vmem:[#allocation3 + $0xd] sm:$0xff]
    %v4141 = vld [vmem:[#allocation3 + $0x15] sm:$0xff]
    %v4142 = vld [vmem:[#allocation3 + $0x1d] sm:$0xff]
    %v4143 = vld [vmem:[#allocation3 + $0x25] sm:$0xff]
    %v4144 = vpack.c.bf16 %v4141, %v4140
    %v4145 = vpack.c.bf16 %v4143, %v4142
    %s4146 = scalar_lea.vmem [#allocation10], 512
    %v4147 = vld [vmem:[%s4146] sm:$0xf]
    %v4148 = vld [vmem:[%s4146 + $0x4] sm:$0xf]
    %v4149 = vld [vmem:[%s4146 + $0x8] sm:$0xf]
    %v4150 = vld [vmem:[%s4146 + $0xc] sm:$0xf]
    %v4151 = vld [vmem:[%s4146 + $0x10] sm:$0xf]
    %v4152 = vld [vmem:[%s4146 + $0x14] sm:$0xf]
    %v4153 = vld [vmem:[%s4146 + $0x18] sm:$0xf]
    %v4154 = vld [vmem:[%s4146 + $0x1c] sm:$0xf]
    %v4155 = vld [vmem:[%s4146 + $0x20] sm:$0xf]
    %v4156 = vld [vmem:[%s4146 + $0x24] sm:$0xf]
    %v4157 = vld [vmem:[%s4146 + $0x28] sm:$0xf]
    %v4158 = vld [vmem:[%s4146 + $0x2c] sm:$0xf]
    %v4159 = vld [vmem:[%s4146 + $0x30] sm:$0xf]
    %v4160 = vld [vmem:[%s4146 + $0x34] sm:$0xf]
    %v4161 = vld [vmem:[%s4146 + $0x38] sm:$0xf]
    %v4162 = vld [vmem:[%s4146 + $0x3c] sm:$0xf]
    %v4179 = vunpack.c.l.b16 %v4147
    %v4180 = vunpack.c.l.b16 %v4148
    %v4181 = vunpack.c.l.b16 %v4149
    %v4182 = vunpack.c.l.b16 %v4150
    %v4183 = vunpack.c.l.b16 %v4151
    %v4184 = vunpack.c.l.b16 %v4152
    %v4185 = vunpack.c.l.b16 %v4153
    %v4186 = vunpack.c.l.b16 %v4154
    %v4187 = vunpack.c.l.b16 %v4155
    %v4188 = vunpack.c.l.b16 %v4156
    %v4189 = vunpack.c.l.b16 %v4157
    %v4190 = vunpack.c.l.b16 %v4158
    %v4191 = vunpack.c.l.b16 %v4159
    %v4192 = vunpack.c.l.b16 %v4160
    %v4193 = vunpack.c.l.b16 %v4161
    %v4194 = vunpack.c.l.b16 %v4162
    %v4195 = vpack.c.b16 %v4180, %v4179
    %v4196 = vpack.c.b16 %v4182, %v4181
    %v4197 = vpack.c.b16 %v4184, %v4183
    %v4198 = vpack.c.b16 %v4186, %v4185
    %v4199 = vpack.c.b16 %v4188, %v4187
    %v4200 = vpack.c.b16 %v4190, %v4189
    %v4201 = vpack.c.b16 %v4192, %v4191
    %v4202 = vpack.c.b16 %v4194, %v4193
    %4211 = vmatprep.subr.bf16.mxu0 0
    %4212 = vmatpush1.bf16.msra.mxu0 %v4195
    %4213 = vmatprep.subr.bf16.mxu0 0
    %4214 = vmatpush1.bf16.msra.mxu0 %v4196
    %4215 = vmatprep.subr.bf16.mxu0 0
    %4216 = vmatpush1.bf16.msra.mxu0 %v4197
    %4217 = vmatprep.subr.bf16.mxu0 0
    %4218 = vmatpush1.bf16.msra.mxu0 %v4198
    %4219 = vmatprep.subr.bf16.mxu0 0
    %4220 = vmatpush1.bf16.msra.mxu0 %v4199
    %4221 = vmatprep.subr.bf16.mxu0 0
    %4222 = vmatpush1.bf16.msra.mxu0 %v4200
    %4223 = vmatprep.subr.bf16.mxu0 0
    %4224 = vmatpush1.bf16.msra.mxu0 %v4201
    %4225 = vmatprep.subr.bf16.mxu0 0
    %4226 = vmatpush1.bf16.msra.mxu0 %v4202
    %4227 = vmatprep.subr.bf16.mxu0 0
    %4228 = vmatpush1.bf16.msra.mxu0 0
    %4229 = vmatprep.subr.bf16.mxu0 0
    %4230 = vmatpush1.bf16.msra.mxu0 0
    %4231 = vmatprep.subr.bf16.mxu0 0
    %4232 = vmatpush1.bf16.msra.mxu0 0
    %4233 = vmatprep.subr.bf16.mxu0 0
    %4234 = vmatpush1.bf16.msra.mxu0 0
    %4235 = vmatprep.subr.bf16.mxu0 0
    %4236 = vmatpush1.bf16.msra.mxu0 0
    %4237 = vmatprep.subr.bf16.mxu0 0
    %4238 = vmatpush1.bf16.msra.mxu0 0
    %4239 = vmatprep.subr.bf16.mxu0 0
    %4240 = vmatpush1.bf16.msra.mxu0 0
    %4241 = vmatprep.subr.bf16.mxu0 0
    %4242 = vmatpush1.bf16.msra.mxu0 0
    %4243 = vmatprep.mubr.bf16.mxu0 0
    %4244 = vmatmul.mubr.bf16.gmra.mrb[0].mxu0 %v4144
    %v4245 = vpop.f32.mrb[0].mxu0
    %v4246 = vadd.f32 0.0, %v4245
    %v4247 = vpop.f32.mrb[0].mxu0
    %v4248 = vpop.f32.mrb[0].mxu0
    %v4249 = vadd.f32 0.0, %v4248
    %v4250 = vpop.f32.mrb[0].mxu0
    %4251 = vmatprep.mubr.bf16.mxu0 0
    %4252 = vmatmul.mubr.bf16.gmra.mrb[0].mxu0 %v4145
    %v4253 = vpop.f32.mrb[0].mxu0
    %v4254 = vadd.f32 0.0, %v4253
    %v4255 = vpop.f32.mrb[0].mxu0
    %v4256 = vpop.f32.mrb[0].mxu0
    %v4257 = vadd.f32 0.0, %v4256
    %v4258 = vpop.f32.mrb[0].mxu0
    %4259 = vdwg.mxu0
    %v4260 = vadd.f32 %v4136, %v4246
    %v4261 = vadd.f32 %v4137, %v4249
    %v4262 = vadd.f32 %v4138, %v4254
    %v4263 = vadd.f32 %v4139, %v4257
    %v4264 = vld [vmem:[%s8] sm:$0x1]
    %v4266 = vlaneseq
    %v4267 = vshrl.u32 %v4266, 7
    %v4268 = vsub.s32 0, %v4267
    %v4269 = vrot.slane %v4264, %v4268
    %v4271 = vadd.f32 %v4260, %v4269
    %v4272 = vadd.f32 %v4261, %v4269
    %v4273 = vadd.f32 %v4262, %v4269
    %v4274 = vadd.f32 %v4263, %v4269
    %v4275 = vmax.f32 %v4271, 0.0
    %v4276 = vmax.f32 %v4272, 0.0
    %v4277 = vmax.f32 %v4273, 0.0
    %v4278 = vmax.f32 %v4274, 0.0
    %4279 = vst [vmem:[#allocation4] sm:$0xff] 0.0
    %4280 = vst [vmem:[#allocation4 + $0x8] sm:$0xff] 0.0
    %4281 = vst [vmem:[#allocation4 + $0x10] sm:$0xff] 0.0
    %4282 = vst [vmem:[#allocation4 + $0x18] sm:$0xff] 0.0
    %4283 = vst [vmem:[#allocation4 + $0x20] sm:$0xff] 0.0
    %4284 = vst [vmem:[#allocation4 + $0x28] sm:$0xff] 0.0
    %v4285 = vld [vmem:[%s2] sm:$0xff]
    %v4286 = vld [vmem:[%s2 + $0x8] sm:$0xff]
    %v4287 = vld [vmem:[%s2 + $0x10] sm:$0xff]
    %v4288 = vld [vmem:[%s2 + $0x18] sm:$0xff]
    %v4289 = vmul.f32 %v4275, %v4285
    %v4290 = vmul.f32 %v4276, %v4286
    %v4291 = vmul.f32 %v4277, %v4287
    %v4292 = vmul.f32 %v4278, %v4288
    %4293 = vst [vmem:[#allocation4 + $0x8] sm:$0xff] %v4289
    %4294 = vst [vmem:[#allocation4 + $0x10] sm:$0xff] %v4290
    %4295 = vst [vmem:[#allocation4 + $0x18] sm:$0xff] %v4291
    %4296 = vst [vmem:[#allocation4 + $0x20] sm:$0xff] %v4292
    %v4297 = vld [vmem:[#allocation4 + $0x3] sm:$0xff]
    %v4298 = vld [vmem:[#allocation4 + $0xb] sm:$0xff]
    %v4299 = vld [vmem:[#allocation4 + $0x13] sm:$0xff]
    %v4300 = vld [vmem:[#allocation4 + $0x1b] sm:$0xff]
    %v4301 = vpack.c.bf16 %v4298, %v4297
    %v4302 = vpack.c.bf16 %v4300, %v4299
    %v4303 = vld [vmem:[#allocation11] sm:$0xff]
    %v4304 = vld [vmem:[#allocation11 + $0x8] sm:$0xff]
    %v4305 = vld [vmem:[#allocation11 + $0x10] sm:$0xff]
    %v4306 = vld [vmem:[#allocation11 + $0x18] sm:$0xff]
    %v4307 = vld [vmem:[#allocation11 + $0x20] sm:$0xff]
    %v4308 = vld [vmem:[#allocation11 + $0x28] sm:$0xff]
    %v4309 = vld [vmem:[#allocation11 + $0x30] sm:$0xff]
    %v4310 = vld [vmem:[#allocation11 + $0x38] sm:$0xff]
    %v4311 = vld [vmem:[#allocation11 + $0x40] sm:$0xff]
    %v4312 = vld [vmem:[#allocation11 + $0x48] sm:$0xff]
    %v4313 = vld [vmem:[#allocation11 + $0x50] sm:$0xff]
    %v4314 = vld [vmem:[#allocation11 + $0x58] sm:$0xff]
    %v4315 = vld [vmem:[#allocation11 + $0x60] sm:$0xff]
    %v4316 = vld [vmem:[#allocation11 + $0x68] sm:$0xff]
    %v4317 = vld [vmem:[#allocation11 + $0x70] sm:$0xff]
    %v4318 = vld [vmem:[#allocation11 + $0x78] sm:$0xff]
    %v4319 = vld [vmem:[#allocation4 + $0x4] sm:$0xff]
    %v4320 = vld [vmem:[#allocation4 + $0xc] sm:$0xff]
    %v4321 = vld [vmem:[#allocation4 + $0x14] sm:$0xff]
    %v4322 = vld [vmem:[#allocation4 + $0x1c] sm:$0xff]
    %v4323 = vpack.c.bf16 %v4320, %v4319
    %v4324 = vpack.c.bf16 %v4322, %v4321
    %s4325 = scalar_lea.vmem [#allocation11], 128
    %v4326 = vld [vmem:[%s4325] sm:$0xff]
    %v4327 = vld [vmem:[%s4325 + $0x8] sm:$0xff]
    %v4328 = vld [vmem:[%s4325 + $0x10] sm:$0xff]
    %v4329 = vld [vmem:[%s4325 + $0x18] sm:$0xff]
    %v4330 = vld [vmem:[%s4325 + $0x20] sm:$0xff]
    %v4331 = vld [vmem:[%s4325 + $0x28] sm:$0xff]
    %v4332 = vld [vmem:[%s4325 + $0x30] sm:$0xff]
    %v4333 = vld [vmem:[%s4325 + $0x38] sm:$0xff]
    %v4334 = vld [vmem:[%s4325 + $0x40] sm:$0xff]
    %v4335 = vld [vmem:[%s4325 + $0x48] sm:$0xff]
    %v4336 = vld [vmem:[%s4325 + $0x50] sm:$0xff]
    %v4337 = vld [vmem:[%s4325 + $0x58] sm:$0xff]
    %v4338 = vld [vmem:[%s4325 + $0x60] sm:$0xff]
    %v4339 = vld [vmem:[%s4325 + $0x68] sm:$0xff]
    %v4340 = vld [vmem:[%s4325 + $0x70] sm:$0xff]
    %v4341 = vld [vmem:[%s4325 + $0x78] sm:$0xff]
    %v4358 = vunpack.c.l.b16 %v4326
    %v4359 = vunpack.c.h.b16 %v4326
    %v4360 = vunpack.c.l.b16 %v4327
    %v4361 = vunpack.c.h.b16 %v4327
    %v4362 = vunpack.c.l.b16 %v4328
    %v4363 = vunpack.c.h.b16 %v4328
    %v4364 = vunpack.c.l.b16 %v4329
    %v4365 = vunpack.c.h.b16 %v4329
    %v4366 = vunpack.c.l.b16 %v4330
    %v4367 = vunpack.c.h.b16 %v4330
    %v4368 = vunpack.c.l.b16 %v4331
    %v4369 = vunpack.c.h.b16 %v4331
    %v4370 = vunpack.c.l.b16 %v4332
    %v4371 = vunpack.c.h.b16 %v4332
    %v4372 = vunpack.c.l.b16 %v4333
    %v4373 = vunpack.c.h.b16 %v4333
    %v4374 = vunpack.c.l.b16 %v4334
    %v4375 = vunpack.c.h.b16 %v4334
    %v4376 = vunpack.c.l.b16 %v4335
    %v4377 = vunpack.c.h.b16 %v4335
    %v4378 = vunpack.c.l.b16 %v4336
    %v4379 = vunpack.c.h.b16 %v4336
    %v4380 = vunpack.c.l.b16 %v4337
    %v4381 = vunpack.c.h.b16 %v4337
    %v4382 = vunpack.c.l.b16 %v4338
    %v4383 = vunpack.c.h.b16 %v4338
    %v4384 = vunpack.c.l.b16 %v4339
    %v4385 = vunpack.c.h.b16 %v4339
    %v4386 = vunpack.c.l.b16 %v4340
    %v4387 = vunpack.c.h.b16 %v4340
    %v4388 = vunpack.c.l.b16 %v4341
    %v4389 = vunpack.c.h.b16 %v4341
    %v4390 = vpack.c.b16 %v4360, %v4358
    %v4391 = vpack.c.b16 %v4361, %v4359
    %v4392 = vpack.c.b16 %v4364, %v4362
    %v4393 = vpack.c.b16 %v4365, %v4363
    %v4394 = vpack.c.b16 %v4368, %v4366
    %v4395 = vpack.c.b16 %v4369, %v4367
    %v4396 = vpack.c.b16 %v4372, %v4370
    %v4397 = vpack.c.b16 %v4373, %v4371
    %v4398 = vpack.c.b16 %v4376, %v4374
    %v4399 = vpack.c.b16 %v4377, %v4375
    %v4400 = vpack.c.b16 %v4380, %v4378
    %v4401 = vpack.c.b16 %v4381, %v4379
    %v4402 = vpack.c.b16 %v4384, %v4382
    %v4403 = vpack.c.b16 %v4385, %v4383
    %v4404 = vpack.c.b16 %v4388, %v4386
    %v4405 = vpack.c.b16 %v4389, %v4387
    %4422 = vmatprep.subr.bf16.mxu0 %v4391
    %4423 = vmatpush1.bf16.msra.mxu0 %v4390
    %4424 = vmatprep.subr.bf16.mxu0 %v4393
    %4425 = vmatpush1.bf16.msra.mxu0 %v4392
    %4426 = vmatprep.subr.bf16.mxu0 %v4395
    %4427 = vmatpush1.bf16.msra.mxu0 %v4394
    %4428 = vmatprep.subr.bf16.mxu0 %v4397
    %4429 = vmatpush1.bf16.msra.mxu0 %v4396
    %4430 = vmatprep.subr.bf16.mxu0 %v4399
    %4431 = vmatpush1.bf16.msra.mxu0 %v4398
    %4432 = vmatprep.subr.bf16.mxu0 %v4401
    %4433 = vmatpush1.bf16.msra.mxu0 %v4400
    %4434 = vmatprep.subr.bf16.mxu0 %v4403
    %4435 = vmatpush1.bf16.msra.mxu0 %v4402
    %4436 = vmatprep.subr.bf16.mxu0 %v4405
    %4437 = vmatpush1.bf16.msra.mxu0 %v4404
    %4438 = vmatprep.subr.bf16.mxu0 0
    %4439 = vmatpush1.bf16.msra.mxu0 0
    %4440 = vmatprep.subr.bf16.mxu0 0
    %4441 = vmatpush1.bf16.msra.mxu0 0
    %4442 = vmatprep.subr.bf16.mxu0 0
    %4443 = vmatpush1.bf16.msra.mxu0 0
    %4444 = vmatprep.subr.bf16.mxu0 0
    %4445 = vmatpush1.bf16.msra.mxu0 0
    %4446 = vmatprep.subr.bf16.mxu0 0
    %4447 = vmatpush1.bf16.msra.mxu0 0
    %4448 = vmatprep.subr.bf16.mxu0 0
    %4449 = vmatpush1.bf16.msra.mxu0 0
    %4450 = vmatprep.subr.bf16.mxu0 0
    %4451 = vmatpush1.bf16.msra.mxu0 0
    %4452 = vmatprep.subr.bf16.mxu0 0
    %4453 = vmatpush1.bf16.msra.mxu0 0
    %4454 = vmatprep.mubr.bf16.mxu0 0
    %4455 = vmatmul.mubr.bf16.gmra.mrb[0].mxu0 %v4323
    %v4456 = vpop.f32.mrb[0].mxu0
    %v4457 = vadd.f32 0.0, %v4456
    %v4458 = vpop.f32.mrb[0].mxu0
    %v4459 = vadd.f32 0.0, %v4458
    %v4460 = vpop.f32.mrb[0].mxu0
    %v4461 = vadd.f32 0.0, %v4460
    %v4462 = vpop.f32.mrb[0].mxu0
    %v4463 = vadd.f32 0.0, %v4462
    %4464 = vmatprep.mubr.bf16.mxu0 0
    %4465 = vmatmul.mubr.bf16.gmra.mrb[0].mxu0 %v4324
    %v4466 = vpop.f32.mrb[0].mxu0
    %v4467 = vadd.f32 0.0, %v4466
    %v4468 = vpop.f32.mrb[0].mxu0
    %v4469 = vadd.f32 0.0, %v4468
    %v4470 = vpop.f32.mrb[0].mxu0
    %v4471 = vadd.f32 0.0, %v4470
    %v4472 = vpop.f32.mrb[0].mxu0
    %v4473 = vadd.f32 0.0, %v4472
    %4474 = vdwg.mxu0
    %v4491 = vunpack.c.l.b16 %v4303
    %v4492 = vunpack.c.h.b16 %v4303
    %v4493 = vunpack.c.l.b16 %v4304
    %v4494 = vunpack.c.h.b16 %v4304
    %v4495 = vunpack.c.l.b16 %v4305
    %v4496 = vunpack.c.h.b16 %v4305
    %v4497 = vunpack.c.l.b16 %v4306
    %v4498 = vunpack.c.h.b16 %v4306
    %v4499 = vunpack.c.l.b16 %v4307
    %v4500 = vunpack.c.h.b16 %v4307
    %v4501 = vunpack.c.l.b16 %v4308
    %v4502 = vunpack.c.h.b16 %v4308
    %v4503 = vunpack.c.l.b16 %v4309
    %v4504 = vunpack.c.h.b16 %v4309
    %v4505 = vunpack.c.l.b16 %v4310
    %v4506 = vunpack.c.h.b16 %v4310
    %v4507 = vunpack.c.l.b16 %v4311
    %v4508 = vunpack.c.h.b16 %v4311
    %v4509 = vunpack.c.l.b16 %v4312
    %v4510 = vunpack.c.h.b16 %v4312
    %v4511 = vunpack.c.l.b16 %v4313
    %v4512 = vunpack.c.h.b16 %v4313
    %v4513 = vunpack.c.l.b16 %v4314
    %v4514 = vunpack.c.h.b16 %v4314
    %v4515 = vunpack.c.l.b16 %v4315
    %v4516 = vunpack.c.h.b16 %v4315
    %v4517 = vunpack.c.l.b16 %v4316
    %v4518 = vunpack.c.h.b16 %v4316
    %v4519 = vunpack.c.l.b16 %v4317
    %v4520 = vunpack.c.h.b16 %v4317
    %v4521 = vunpack.c.l.b16 %v4318
    %v4522 = vunpack.c.h.b16 %v4318
    %v4523 = vpack.c.b16 %v4493, %v4491
    %v4524 = vpack.c.b16 %v4494, %v4492
    %v4525 = vpack.c.b16 %v4497, %v4495
    %v4526 = vpack.c.b16 %v4498, %v4496
    %v4527 = vpack.c.b16 %v4501, %v4499
    %v4528 = vpack.c.b16 %v4502, %v4500
    %v4529 = vpack.c.b16 %v4505, %v4503
    %v4530 = vpack.c.b16 %v4506, %v4504
    %v4531 = vpack.c.b16 %v4509, %v4507
    %v4532 = vpack.c.b16 %v4510, %v4508
    %v4533 = vpack.c.b16 %v4513, %v4511
    %v4534 = vpack.c.b16 %v4514, %v4512
    %v4535 = vpack.c.b16 %v4517, %v4515
    %v4536 = vpack.c.b16 %v4518, %v4516
    %v4537 = vpack.c.b16 %v4521, %v4519
    %v4538 = vpack.c.b16 %v4522, %v4520
    %4555 = vmatprep.subr.bf16.mxu0 %v4524
    %4556 = vmatpush1.bf16.msra.mxu0 %v4523
    %4557 = vmatprep.subr.bf16.mxu0 %v4526
    %4558 = vmatpush1.bf16.msra.mxu0 %v4525
    %4559 = vmatprep.subr.bf16.mxu0 %v4528
    %4560 = vmatpush1.bf16.msra.mxu0 %v4527
    %4561 = vmatprep.subr.bf16.mxu0 %v4530
    %4562 = vmatpush1.bf16.msra.mxu0 %v4529
    %4563 = vmatprep.subr.bf16.mxu0 %v4532
    %4564 = vmatpush1.bf16.msra.mxu0 %v4531
    %4565 = vmatprep.subr.bf16.mxu0 %v4534
    %4566 = vmatpush1.bf16.msra.mxu0 %v4533
    %4567 = vmatprep.subr.bf16.mxu0 %v4536
    %4568 = vmatpush1.bf16.msra.mxu0 %v4535
    %4569 = vmatprep.subr.bf16.mxu0 %v4538
    %4570 = vmatpush1.bf16.msra.mxu0 %v4537
    %4571 = vmatprep.subr.bf16.mxu0 0
    %4572 = vmatpush1.bf16.msra.mxu0 0
    %4573 = vmatprep.subr.bf16.mxu0 0
    %4574 = vmatpush1.bf16.msra.mxu0 0
    %4575 = vmatprep.subr.bf16.mxu0 0
    %4576 = vmatpush1.bf16.msra.mxu0 0
    %4577 = vmatprep.subr.bf16.mxu0 0
    %4578 = vmatpush1.bf16.msra.mxu0 0
    %4579 = vmatprep.subr.bf16.mxu0 0
    %4580 = vmatpush1.bf16.msra.mxu0 0
    %4581 = vmatprep.subr.bf16.mxu0 0
    %4582 = vmatpush1.bf16.msra.mxu0 0
    %4583 = vmatprep.subr.bf16.mxu0 0
    %4584 = vmatpush1.bf16.msra.mxu0 0
    %4585 = vmatprep.subr.bf16.mxu0 0
    %4586 = vmatpush1.bf16.msra.mxu0 0
    %4587 = vmatprep.mubr.bf16.mxu0 0
    %4588 = vmatmul.mubr.bf16.gmra.mrb[0].mxu0 %v4301
    %v4589 = vpop.f32.mrb[0].mxu0
    %v4590 = vadd.f32 %v4457, %v4589
    %v4591 = vpop.f32.mrb[0].mxu0
    %v4592 = vadd.f32 %v4459, %v4591
    %v4593 = vpop.f32.mrb[0].mxu0
    %v4594 = vadd.f32 %v4461, %v4593
    %v4595 = vpop.f32.mrb[0].mxu0
    %v4596 = vadd.f32 %v4463, %v4595
    %4597 = vmatprep.mubr.bf16.mxu0 0
    %4598 = vmatmul.mubr.bf16.gmra.mrb[0].mxu0 %v4302
    %v4599 = vpop.f32.mrb[0].mxu0
    %v4600 = vadd.f32 %v4467, %v4599
    %v4601 = vpop.f32.mrb[0].mxu0
    %v4602 = vadd.f32 %v4469, %v4601
    %v4603 = vpop.f32.mrb[0].mxu0
    %v4604 = vadd.f32 %v4471, %v4603
    %v4605 = vpop.f32.mrb[0].mxu0
    %v4606 = vadd.f32 %v4473, %v4605
    %4607 = vdwg.mxu0
    %v4608 = vld [vmem:[#allocation4 + $0x5] sm:$0xff]
    %v4609 = vld [vmem:[#allocation4 + $0xd] sm:$0xff]
    %v4610 = vld [vmem:[#allocation4 + $0x15] sm:$0xff]
    %v4611 = vld [vmem:[#allocation4 + $0x1d] sm:$0xff]
    %v4612 = vpack.c.bf16 %v4609, %v4608
    %v4613 = vpack.c.bf16 %v4611, %v4610
    %s4614 = scalar_lea.vmem [#allocation11], 256
    %v4615 = vld [vmem:[%s4614] sm:$0xff]
    %v4616 = vld [vmem:[%s4614 + $0x8] sm:$0xff]
    %v4617 = vld [vmem:[%s4614 + $0x10] sm:$0xff]
    %v4618 = vld [vmem:[%s4614 + $0x18] sm:$0xff]
    %v4619 = vld [vmem:[%s4614 + $0x20] sm:$0xff]
    %v4620 = vld [vmem:[%s4614 + $0x28] sm:$0xff]
    %v4621 = vld [vmem:[%s4614 + $0x30] sm:$0xff]
    %v4622 = vld [vmem:[%s4614 + $0x38] sm:$0xff]
    %v4623 = vld [vmem:[%s4614 + $0x40] sm:$0xff]
    %v4624 = vld [vmem:[%s4614 + $0x48] sm:$0xff]
    %v4625 = vld [vmem:[%s4614 + $0x50] sm:$0xff]
    %v4626 = vld [vmem:[%s4614 + $0x58] sm:$0xff]
    %v4627 = vld [vmem:[%s4614 + $0x60] sm:$0xff]
    %v4628 = vld [vmem:[%s4614 + $0x68] sm:$0xff]
    %v4629 = vld [vmem:[%s4614 + $0x70] sm:$0xff]
    %v4630 = vld [vmem:[%s4614 + $0x78] sm:$0xff]
    %v4647 = vunpack.c.l.b16 %v4615
    %v4648 = vunpack.c.h.b16 %v4615
    %v4649 = vunpack.c.l.b16 %v4616
    %v4650 = vunpack.c.h.b16 %v4616
    %v4651 = vunpack.c.l.b16 %v4617
    %v4652 = vunpack.c.h.b16 %v4617
    %v4653 = vunpack.c.l.b16 %v4618
    %v4654 = vunpack.c.h.b16 %v4618
    %v4655 = vunpack.c.l.b16 %v4619
    %v4656 = vunpack.c.h.b16 %v4619
    %v4657 = vunpack.c.l.b16 %v4620
    %v4658 = vunpack.c.h.b16 %v4620
    %v4659 = vunpack.c.l.b16 %v4621
    %v4660 = vunpack.c.h.b16 %v4621
    %v4661 = vunpack.c.l.b16 %v4622
    %v4662 = vunpack.c.h.b16 %v4622
    %v4663 = vunpack.c.l.b16 %v4623
    %v4664 = vunpack.c.h.b16 %v4623
    %v4665 = vunpack.c.l.b16 %v4624
    %v4666 = vunpack.c.h.b16 %v4624
    %v4667 = vunpack.c.l.b16 %v4625
    %v4668 = vunpack.c.h.b16 %v4625
    %v4669 = vunpack.c.l.b16 %v4626
    %v4670 = vunpack.c.h.b16 %v4626
    %v4671 = vunpack.c.l.b16 %v4627
    %v4672 = vunpack.c.h.b16 %v4627
    %v4673 = vunpack.c.l.b16 %v4628
    %v4674 = vunpack.c.h.b16 %v4628
    %v4675 = vunpack.c.l.b16 %v4629
    %v4676 = vunpack.c.h.b16 %v4629
    %v4677 = vunpack.c.l.b16 %v4630
    %v4678 = vunpack.c.h.b16 %v4630
    %v4679 = vpack.c.b16 %v4649, %v4647
    %v4680 = vpack.c.b16 %v4650, %v4648
    %v4681 = vpack.c.b16 %v4653, %v4651
    %v4682 = vpack.c.b16 %v4654, %v4652
    %v4683 = vpack.c.b16 %v4657, %v4655
    %v4684 = vpack.c.b16 %v4658, %v4656
    %v4685 = vpack.c.b16 %v4661, %v4659
    %v4686 = vpack.c.b16 %v4662, %v4660
    %v4687 = vpack.c.b16 %v4665, %v4663
    %v4688 = vpack.c.b16 %v4666, %v4664
    %v4689 = vpack.c.b16 %v4669, %v4667
    %v4690 = vpack.c.b16 %v4670, %v4668
    %v4691 = vpack.c.b16 %v4673, %v4671
    %v4692 = vpack.c.b16 %v4674, %v4672
    %v4693 = vpack.c.b16 %v4677, %v4675
    %v4694 = vpack.c.b16 %v4678, %v4676
    %4711 = vmatprep.subr.bf16.mxu0 %v4680
    %4712 = vmatpush1.bf16.msra.mxu0 %v4679
    %4713 = vmatprep.subr.bf16.mxu0 %v4682
    %4714 = vmatpush1.bf16.msra.mxu0 %v4681
    %4715 = vmatprep.subr.bf16.mxu0 %v4684
    %4716 = vmatpush1.bf16.msra.mxu0 %v4683
    %4717 = vmatprep.subr.bf16.mxu0 %v4686
    %4718 = vmatpush1.bf16.msra.mxu0 %v4685
    %4719 = vmatprep.subr.bf16.mxu0 %v4688
    %4720 = vmatpush1.bf16.msra.mxu0 %v4687
    %4721 = vmatprep.subr.bf16.mxu0 %v4690
    %4722 = vmatpush1.bf16.msra.mxu0 %v4689
    %4723 = vmatprep.subr.bf16.mxu0 %v4692
    %4724 = vmatpush1.bf16.msra.mxu0 %v4691
    %4725 = vmatprep.subr.bf16.mxu0 %v4694
    %4726 = vmatpush1.bf16.msra.mxu0 %v4693
    %4727 = vmatprep.subr.bf16.mxu0 0
    %4728 = vmatpush1.bf16.msra.mxu0 0
    %4729 = vmatprep.subr.bf16.mxu0 0
    %4730 = vmatpush1.bf16.msra.mxu0 0
    %4731 = vmatprep.subr.bf16.mxu0 0
    %4732 = vmatpush1.bf16.msra.mxu0 0
    %4733 = vmatprep.subr.bf16.mxu0 0
    %4734 = vmatpush1.bf16.msra.mxu0 0
    %4735 = vmatprep.subr.bf16.mxu0 0
    %4736 = vmatpush1.bf16.msra.mxu0 0
    %4737 = vmatprep.subr.bf16.mxu0 0
    %4738 = vmatpush1.bf16.msra.mxu0 0
    %4739 = vmatprep.subr.bf16.mxu0 0
    %4740 = vmatpush1.bf16.msra.mxu0 0
    %4741 = vmatprep.subr.bf16.mxu0 0
    %4742 = vmatpush1.bf16.msra.mxu0 0
    %4743 = vmatprep.mubr.bf16.mxu0 0
    %4744 = vmatmul.mubr.bf16.gmra.mrb[0].mxu0 %v4612
    %v4745 = vpop.f32.mrb[0].mxu0
    %v4746 = vadd.f32 0.0, %v4745
    %v4747 = vpop.f32.mrb[0].mxu0
    %v4748 = vadd.f32 0.0, %v4747
    %v4749 = vpop.f32.mrb[0].mxu0
    %v4750 = vadd.f32 0.0, %v4749
    %v4751 = vpop.f32.mrb[0].mxu0
    %v4752 = vadd.f32 0.0, %v4751
    %4753 = vmatprep.mubr.bf16.mxu0 0
    %4754 = vmatmul.mubr.bf16.gmra.mrb[0].mxu0 %v4613
    %v4755 = vpop.f32.mrb[0].mxu0
    %v4756 = vadd.f32 0.0, %v4755
    %v4757 = vpop.f32.mrb[0].mxu0
    %v4758 = vadd.f32 0.0, %v4757
    %v4759 = vpop.f32.mrb[0].mxu0
    %v4760 = vadd.f32 0.0, %v4759
    %v4761 = vpop.f32.mrb[0].mxu0
    %v4762 = vadd.f32 0.0, %v4761
    %4763 = vdwg.mxu0
    %v4764 = vadd.f32 %v4590, %v4746
    %v4765 = vadd.f32 %v4592, %v4748
    %v4766 = vadd.f32 %v4594, %v4750
    %v4767 = vadd.f32 %v4596, %v4752
    %v4768 = vadd.f32 %v4600, %v4756
    %v4769 = vadd.f32 %v4602, %v4758
    %v4770 = vadd.f32 %v4604, %v4760
    %v4771 = vadd.f32 %v4606, %v4762
    %v4772 = vld [vmem:[#allocation4 + $0x7] sm:$0xff]
    %v4773 = vld [vmem:[#allocation4 + $0xf] sm:$0xff]
    %v4774 = vld [vmem:[#allocation4 + $0x17] sm:$0xff]
    %v4775 = vld [vmem:[#allocation4 + $0x1f] sm:$0xff]
    %v4776 = vpack.c.bf16 %v4773, %v4772
    %v4777 = vpack.c.bf16 %v4775, %v4774
    %s4778 = scalar_lea.vmem [#allocation11], 384
    %v4779 = vld [vmem:[%s4778] sm:$0xff]
    %v4780 = vld [vmem:[%s4778 + $0x8] sm:$0xff]
    %v4781 = vld [vmem:[%s4778 + $0x10] sm:$0xff]
    %v4782 = vld [vmem:[%s4778 + $0x18] sm:$0xff]
    %v4783 = vld [vmem:[%s4778 + $0x20] sm:$0xff]
    %v4784 = vld [vmem:[%s4778 + $0x28] sm:$0xff]
    %v4785 = vld [vmem:[%s4778 + $0x30] sm:$0xff]
    %v4786 = vld [vmem:[%s4778 + $0x38] sm:$0xff]
    %v4787 = vld [vmem:[%s4778 + $0x40] sm:$0xff]
    %v4788 = vld [vmem:[%s4778 + $0x48] sm:$0xff]
    %v4789 = vld [vmem:[%s4778 + $0x50] sm:$0xff]
    %v4790 = vld [vmem:[%s4778 + $0x58] sm:$0xff]
    %v4791 = vld [vmem:[%s4778 + $0x60] sm:$0xff]
    %v4792 = vld [vmem:[%s4778 + $0x68] sm:$0xff]
    %v4793 = vld [vmem:[%s4778 + $0x70] sm:$0xff]
    %v4794 = vld [vmem:[%s4778 + $0x78] sm:$0xff]
    %v4811 = vunpack.c.l.b16 %v4779
    %v4812 = vunpack.c.h.b16 %v4779
    %v4813 = vunpack.c.l.b16 %v4780
    %v4814 = vunpack.c.h.b16 %v4780
    %v4815 = vunpack.c.l.b16 %v4781
    %v4816 = vunpack.c.h.b16 %v4781
    %v4817 = vunpack.c.l.b16 %v4782
    %v4818 = vunpack.c.h.b16 %v4782
    %v4819 = vunpack.c.l.b16 %v4783
    %v4820 = vunpack.c.h.b16 %v4783
    %v4821 = vunpack.c.l.b16 %v4784
    %v4822 = vunpack.c.h.b16 %v4784
    %v4823 = vunpack.c.l.b16 %v4785
    %v4824 = vunpack.c.h.b16 %v4785
    %v4825 = vunpack.c.l.b16 %v4786
    %v4826 = vunpack.c.h.b16 %v4786
    %v4827 = vunpack.c.l.b16 %v4787
    %v4828 = vunpack.c.h.b16 %v4787
    %v4829 = vunpack.c.l.b16 %v4788
    %v4830 = vunpack.c.h.b16 %v4788
    %v4831 = vunpack.c.l.b16 %v4789
    %v4832 = vunpack.c.h.b16 %v4789
    %v4833 = vunpack.c.l.b16 %v4790
    %v4834 = vunpack.c.h.b16 %v4790
    %v4835 = vunpack.c.l.b16 %v4791
    %v4836 = vunpack.c.h.b16 %v4791
    %v4837 = vunpack.c.l.b16 %v4792
    %v4838 = vunpack.c.h.b16 %v4792
    %v4839 = vunpack.c.l.b16 %v4793
    %v4840 = vunpack.c.h.b16 %v4793
    %v4841 = vunpack.c.l.b16 %v4794
    %v4842 = vunpack.c.h.b16 %v4794
    %v4843 = vpack.c.b16 %v4813, %v4811
    %v4844 = vpack.c.b16 %v4814, %v4812
    %v4845 = vpack.c.b16 %v4817, %v4815
    %v4846 = vpack.c.b16 %v4818, %v4816
    %v4847 = vpack.c.b16 %v4821, %v4819
    %v4848 = vpack.c.b16 %v4822, %v4820
    %v4849 = vpack.c.b16 %v4825, %v4823
    %v4850 = vpack.c.b16 %v4826, %v4824
    %v4851 = vpack.c.b16 %v4829, %v4827
    %v4852 = vpack.c.b16 %v4830, %v4828
    %v4853 = vpack.c.b16 %v4833, %v4831
    %v4854 = vpack.c.b16 %v4834, %v4832
    %v4855 = vpack.c.b16 %v4837, %v4835
    %v4856 = vpack.c.b16 %v4838, %v4836
    %v4857 = vpack.c.b16 %v4841, %v4839
    %v4858 = vpack.c.b16 %v4842, %v4840
    %4875 = vmatprep.subr.bf16.mxu0 %v4844
    %4876 = vmatpush1.bf16.msra.mxu0 %v4843
    %4877 = vmatprep.subr.bf16.mxu0 %v4846
    %4878 = vmatpush1.bf16.msra.mxu0 %v4845
    %4879 = vmatprep.subr.bf16.mxu0 %v4848
    %4880 = vmatpush1.bf16.msra.mxu0 %v4847
    %4881 = vmatprep.subr.bf16.mxu0 %v4850
    %4882 = vmatpush1.bf16.msra.mxu0 %v4849
    %4883 = vmatprep.subr.bf16.mxu0 %v4852
    %4884 = vmatpush1.bf16.msra.mxu0 %v4851
    %4885 = vmatprep.subr.bf16.mxu0 %v4854
    %4886 = vmatpush1.bf16.msra.mxu0 %v4853
    %4887 = vmatprep.subr.bf16.mxu0 %v4856
    %4888 = vmatpush1.bf16.msra.mxu0 %v4855
    %4889 = vmatprep.subr.bf16.mxu0 %v4858
    %4890 = vmatpush1.bf16.msra.mxu0 %v4857
    %4891 = vmatprep.subr.bf16.mxu0 0
    %4892 = vmatpush1.bf16.msra.mxu0 0
    %4893 = vmatprep.subr.bf16.mxu0 0
    %4894 = vmatpush1.bf16.msra.mxu0 0
    %4895 = vmatprep.subr.bf16.mxu0 0
    %4896 = vmatpush1.bf16.msra.mxu0 0
    %4897 = vmatprep.subr.bf16.mxu0 0
    %4898 = vmatpush1.bf16.msra.mxu0 0
    %4899 = vmatprep.subr.bf16.mxu0 0
    %4900 = vmatpush1.bf16.msra.mxu0 0
    %4901 = vmatprep.subr.bf16.mxu0 0
    %4902 = vmatpush1.bf16.msra.mxu0 0
    %4903 = vmatprep.subr.bf16.mxu0 0
    %4904 = vmatpush1.bf16.msra.mxu0 0
    %4905 = vmatprep.subr.bf16.mxu0 0
    %4906 = vmatpush1.bf16.msra.mxu0 0
    %4907 = vmatprep.mubr.bf16.mxu0 0
    %4908 = vmatmul.mubr.bf16.gmra.mrb[0].mxu0 %v4776
    %v4909 = vpop.f32.mrb[0].mxu0
    %v4910 = vadd.f32 0.0, %v4909
    %v4911 = vpop.f32.mrb[0].mxu0
    %v4912 = vadd.f32 0.0, %v4911
    %v4913 = vpop.f32.mrb[0].mxu0
    %v4914 = vadd.f32 0.0, %v4913
    %v4915 = vpop.f32.mrb[0].mxu0
    %v4916 = vadd.f32 0.0, %v4915
    %4917 = vmatprep.mubr.bf16.mxu0 0
    %4918 = vmatmul.mubr.bf16.gmra.mrb[0].mxu0 %v4777
    %v4919 = vpop.f32.mrb[0].mxu0
    %v4920 = vadd.f32 0.0, %v4919
    %v4921 = vpop.f32.mrb[0].mxu0
    %v4922 = vadd.f32 0.0, %v4921
    %v4923 = vpop.f32.mrb[0].mxu0
    %v4924 = vadd.f32 0.0, %v4923
    %v4925 = vpop.f32.mrb[0].mxu0
    %v4926 = vadd.f32 0.0, %v4925
    %4927 = vdwg.mxu0
    %v4928 = vadd.f32 %v4764, %v4910
    %v4929 = vadd.f32 %v4765, %v4912
    %v4930 = vadd.f32 %v4766, %v4914
    %v4931 = vadd.f32 %v4767, %v4916
    %v4932 = vadd.f32 %v4768, %v4920
    %v4933 = vadd.f32 %v4769, %v4922
    %v4934 = vadd.f32 %v4770, %v4924
    %v4935 = vadd.f32 %v4771, %v4926
    %v4936 = vld [vmem:[#allocation4 + $0x8] sm:$0xff]
    %v4937 = vld [vmem:[#allocation4 + $0x10] sm:$0xff]
    %v4938 = vld [vmem:[#allocation4 + $0x18] sm:$0xff]
    %v4939 = vld [vmem:[#allocation4 + $0x20] sm:$0xff]
    %v4940 = vpack.c.bf16 %v4937, %v4936
    %v4941 = vpack.c.bf16 %v4939, %v4938
    %s4942 = scalar_lea.vmem [#allocation11], 512
    %v4943 = vld [vmem:[%s4942] sm:$0xff]
    %v4944 = vld [vmem:[%s4942 + $0x8] sm:$0xff]
    %v4945 = vld [vmem:[%s4942 + $0x10] sm:$0xff]
    %v4946 = vld [vmem:[%s4942 + $0x18] sm:$0xff]
    %v4947 = vld [vmem:[%s4942 + $0x20] sm:$0xff]
    %v4948 = vld [vmem:[%s4942 + $0x28] sm:$0xff]
    %v4949 = vld [vmem:[%s4942 + $0x30] sm:$0xff]
    %v4950 = vld [vmem:[%s4942 + $0x38] sm:$0xff]
    %v4951 = vld [vmem:[%s4942 + $0x40] sm:$0xff]
    %v4952 = vld [vmem:[%s4942 + $0x48] sm:$0xff]
    %v4953 = vld [vmem:[%s4942 + $0x50] sm:$0xff]
    %v4954 = vld [vmem:[%s4942 + $0x58] sm:$0xff]
    %v4955 = vld [vmem:[%s4942 + $0x60] sm:$0xff]
    %v4956 = vld [vmem:[%s4942 + $0x68] sm:$0xff]
    %v4957 = vld [vmem:[%s4942 + $0x70] sm:$0xff]
    %v4958 = vld [vmem:[%s4942 + $0x78] sm:$0xff]
    %v4975 = vunpack.c.l.b16 %v4943
    %v4976 = vunpack.c.h.b16 %v4943
    %v4977 = vunpack.c.l.b16 %v4944
    %v4978 = vunpack.c.h.b16 %v4944
    %v4979 = vunpack.c.l.b16 %v4945
    %v4980 = vunpack.c.h.b16 %v4945
    %v4981 = vunpack.c.l.b16 %v4946
    %v4982 = vunpack.c.h.b16 %v4946
    %v4983 = vunpack.c.l.b16 %v4947
    %v4984 = vunpack.c.h.b16 %v4947
    %v4985 = vunpack.c.l.b16 %v4948
    %v4986 = vunpack.c.h.b16 %v4948
    %v4987 = vunpack.c.l.b16 %v4949
    %v4988 = vunpack.c.h.b16 %v4949
    %v4989 = vunpack.c.l.b16 %v4950
    %v4990 = vunpack.c.h.b16 %v4950
    %v4991 = vunpack.c.l.b16 %v4951
    %v4992 = vunpack.c.h.b16 %v4951
    %v4993 = vunpack.c.l.b16 %v4952
    %v4994 = vunpack.c.h.b16 %v4952
    %v4995 = vunpack.c.l.b16 %v4953
    %v4996 = vunpack.c.h.b16 %v4953
    %v4997 = vunpack.c.l.b16 %v4954
    %v4998 = vunpack.c.h.b16 %v4954
    %v4999 = vunpack.c.l.b16 %v4955
    %v5000 = vunpack.c.h.b16 %v4955
    %v5001 = vunpack.c.l.b16 %v4956
    %v5002 = vunpack.c.h.b16 %v4956
    %v5003 = vunpack.c.l.b16 %v4957
    %v5004 = vunpack.c.h.b16 %v4957
    %v5005 = vunpack.c.l.b16 %v4958
    %v5006 = vunpack.c.h.b16 %v4958
    %v5007 = vpack.c.b16 %v4977, %v4975
    %v5008 = vpack.c.b16 %v4978, %v4976
    %v5009 = vpack.c.b16 %v4981, %v4979
    %v5010 = vpack.c.b16 %v4982, %v4980
    %v5011 = vpack.c.b16 %v4985, %v4983
    %v5012 = vpack.c.b16 %v4986, %v4984
    %v5013 = vpack.c.b16 %v4989, %v4987
    %v5014 = vpack.c.b16 %v4990, %v4988
    %v5015 = vpack.c.b16 %v4993, %v4991
    %v5016 = vpack.c.b16 %v4994, %v4992
    %v5017 = vpack.c.b16 %v4997, %v4995
    %v5018 = vpack.c.b16 %v4998, %v4996
    %v5019 = vpack.c.b16 %v5001, %v4999
    %v5020 = vpack.c.b16 %v5002, %v5000
    %v5021 = vpack.c.b16 %v5005, %v5003
    %v5022 = vpack.c.b16 %v5006, %v5004
    %5039 = vmatprep.subr.bf16.mxu0 %v5008
    %5040 = vmatpush1.bf16.msra.mxu0 %v5007
    %5041 = vmatprep.subr.bf16.mxu0 %v5010
    %5042 = vmatpush1.bf16.msra.mxu0 %v5009
    %5043 = vmatprep.subr.bf16.mxu0 %v5012
    %5044 = vmatpush1.bf16.msra.mxu0 %v5011
    %5045 = vmatprep.subr.bf16.mxu0 %v5014
    %5046 = vmatpush1.bf16.msra.mxu0 %v5013
    %5047 = vmatprep.subr.bf16.mxu0 %v5016
    %5048 = vmatpush1.bf16.msra.mxu0 %v5015
    %5049 = vmatprep.subr.bf16.mxu0 %v5018
    %5050 = vmatpush1.bf16.msra.mxu0 %v5017
    %5051 = vmatprep.subr.bf16.mxu0 %v5020
    %5052 = vmatpush1.bf16.msra.mxu0 %v5019
    %5053 = vmatprep.subr.bf16.mxu0 %v5022
    %5054 = vmatpush1.bf16.msra.mxu0 %v5021
    %5055 = vmatprep.subr.bf16.mxu0 0
    %5056 = vmatpush1.bf16.msra.mxu0 0
    %5057 = vmatprep.subr.bf16.mxu0 0
    %5058 = vmatpush1.bf16.msra.mxu0 0
    %5059 = vmatprep.subr.bf16.mxu0 0
    %5060 = vmatpush1.bf16.msra.mxu0 0
    %5061 = vmatprep.subr.bf16.mxu0 0
    %5062 = vmatpush1.bf16.msra.mxu0 0
    %5063 = vmatprep.subr.bf16.mxu0 0
    %5064 = vmatpush1.bf16.msra.mxu0 0
    %5065 = vmatprep.subr.bf16.mxu0 0
    %5066 = vmatpush1.bf16.msra.mxu0 0
    %5067 = vmatprep.subr.bf16.mxu0 0
    %5068 = vmatpush1.bf16.msra.mxu0 0
    %5069 = vmatprep.subr.bf16.mxu0 0
    %5070 = vmatpush1.bf16.msra.mxu0 0
    %5071 = vmatprep.mubr.bf16.mxu0 0
    %5072 = vmatmul.mubr.bf16.gmra.mrb[0].mxu0 %v4940
    %v5073 = vpop.f32.mrb[0].mxu0
    %v5074 = vadd.f32 0.0, %v5073
    %v5075 = vpop.f32.mrb[0].mxu0
    %v5076 = vadd.f32 0.0, %v5075
    %v5077 = vpop.f32.mrb[0].mxu0
    %v5078 = vadd.f32 0.0, %v5077
    %v5079 = vpop.f32.mrb[0].mxu0
    %v5080 = vadd.f32 0.0, %v5079
    %5081 = vmatprep.mubr.bf16.mxu0 0
    %5082 = vmatmul.mubr.bf16.gmra.mrb[0].mxu0 %v4941
    %v5083 = vpop.f32.mrb[0].mxu0
    %v5084 = vadd.f32 0.0, %v5083
    %v5085 = vpop.f32.mrb[0].mxu0
    %v5086 = vadd.f32 0.0, %v5085
    %v5087 = vpop.f32.mrb[0].mxu0
    %v5088 = vadd.f32 0.0, %v5087
    %v5089 = vpop.f32.mrb[0].mxu0
    %v5090 = vadd.f32 0.0, %v5089
    %5091 = vdwg.mxu0
    %v5092 = vadd.f32 %v4928, %v5074
    %v5093 = vadd.f32 %v4929, %v5076
    %v5094 = vadd.f32 %v4930, %v5078
    %v5095 = vadd.f32 %v4931, %v5080
    %v5096 = vadd.f32 %v4932, %v5084
    %v5097 = vadd.f32 %v4933, %v5086
    %v5098 = vadd.f32 %v4934, %v5088
    %v5099 = vadd.f32 %v4935, %v5090
    %v5100 = vld [vmem:[#allocation4 + $0x9] sm:$0xff]
    %v5101 = vld [vmem:[#allocation4 + $0x11] sm:$0xff]
    %v5102 = vld [vmem:[#allocation4 + $0x19] sm:$0xff]
    %v5103 = vld [vmem:[#allocation4 + $0x21] sm:$0xff]
    %v5104 = vpack.c.bf16 %v5101, %v5100
    %v5105 = vpack.c.bf16 %v5103, %v5102
    %s5106 = scalar_lea.vmem [#allocation11], 640
    %v5107 = vld [vmem:[%s5106] sm:$0xff]
    %v5108 = vld [vmem:[%s5106 + $0x8] sm:$0xff]
    %v5109 = vld [vmem:[%s5106 + $0x10] sm:$0xff]
    %v5110 = vld [vmem:[%s5106 + $0x18] sm:$0xff]
    %v5111 = vld [vmem:[%s5106 + $0x20] sm:$0xff]
    %v5112 = vld [vmem:[%s5106 + $0x28] sm:$0xff]
    %v5113 = vld [vmem:[%s5106 + $0x30] sm:$0xff]
    %v5114 = vld [vmem:[%s5106 + $0x38] sm:$0xff]
    %v5115 = vld [vmem:[%s5106 + $0x40] sm:$0xff]
    %v5116 = vld [vmem:[%s5106 + $0x48] sm:$0xff]
    %v5117 = vld [vmem:[%s5106 + $0x50] sm:$0xff]
    %v5118 = vld [vmem:[%s5106 + $0x58] sm:$0xff]
    %v5119 = vld [vmem:[%s5106 + $0x60] sm:$0xff]
    %v5120 = vld [vmem:[%s5106 + $0x68] sm:$0xff]
    %v5121 = vld [vmem:[%s5106 + $0x70] sm:$0xff]
    %v5122 = vld [vmem:[%s5106 + $0x78] sm:$0xff]
    %v5139 = vunpack.c.l.b16 %v5107
    %v5140 = vunpack.c.h.b16 %v5107
    %v5141 = vunpack.c.l.b16 %v5108
    %v5142 = vunpack.c.h.b16 %v5108
    %v5143 = vunpack.c.l.b16 %v5109
    %v5144 = vunpack.c.h.b16 %v5109
    %v5145 = vunpack.c.l.b16 %v5110
    %v5146 = vunpack.c.h.b16 %v5110
    %v5147 = vunpack.c.l.b16 %v5111
    %v5148 = vunpack.c.h.b16 %v5111
    %v5149 = vunpack.c.l.b16 %v5112
    %v5150 = vunpack.c.h.b16 %v5112
    %v5151 = vunpack.c.l.b16 %v5113
    %v5152 = vunpack.c.h.b16 %v5113
    %v5153 = vunpack.c.l.b16 %v5114
    %v5154 = vunpack.c.h.b16 %v5114
    %v5155 = vunpack.c.l.b16 %v5115
    %v5156 = vunpack.c.h.b16 %v5115
    %v5157 = vunpack.c.l.b16 %v5116
    %v5158 = vunpack.c.h.b16 %v5116
    %v5159 = vunpack.c.l.b16 %v5117
    %v5160 = vunpack.c.h.b16 %v5117
    %v5161 = vunpack.c.l.b16 %v5118
    %v5162 = vunpack.c.h.b16 %v5118
    %v5163 = vunpack.c.l.b16 %v5119
    %v5164 = vunpack.c.h.b16 %v5119
    %v5165 = vunpack.c.l.b16 %v5120
    %v5166 = vunpack.c.h.b16 %v5120
    %v5167 = vunpack.c.l.b16 %v5121
    %v5168 = vunpack.c.h.b16 %v5121
    %v5169 = vunpack.c.l.b16 %v5122
    %v5170 = vunpack.c.h.b16 %v5122
    %v5171 = vpack.c.b16 %v5141, %v5139
    %v5172 = vpack.c.b16 %v5142, %v5140
    %v5173 = vpack.c.b16 %v5145, %v5143
    %v5174 = vpack.c.b16 %v5146, %v5144
    %v5175 = vpack.c.b16 %v5149, %v5147
    %v5176 = vpack.c.b16 %v5150, %v5148
    %v5177 = vpack.c.b16 %v5153, %v5151
    %v5178 = vpack.c.b16 %v5154, %v5152
    %v5179 = vpack.c.b16 %v5157, %v5155
    %v5180 = vpack.c.b16 %v5158, %v5156
    %v5181 = vpack.c.b16 %v5161, %v5159
    %v5182 = vpack.c.b16 %v5162, %v5160
    %v5183 = vpack.c.b16 %v5165, %v5163
    %v5184 = vpack.c.b16 %v5166, %v5164
    %v5185 = vpack.c.b16 %v5169, %v5167
    %v5186 = vpack.c.b16 %v5170, %v5168
    %5203 = vmatprep.subr.bf16.mxu0 %v5172
    %5204 = vmatpush1.bf16.msra.mxu0 %v5171
    %5205 = vmatprep.subr.bf16.mxu0 %v5174
    %5206 = vmatpush1.bf16.msra.mxu0 %v5173
    %5207 = vmatprep.subr.bf16.mxu0 %v5176
    %5208 = vmatpush1.bf16.msra.mxu0 %v5175
    %5209 = vmatprep.subr.bf16.mxu0 %v5178
    %5210 = vmatpush1.bf16.msra.mxu0 %v5177
    %5211 = vmatprep.subr.bf16.mxu0 %v5180
    %5212 = vmatpush1.bf16.msra.mxu0 %v5179
    %5213 = vmatprep.subr.bf16.mxu0 %v5182
    %5214 = vmatpush1.bf16.msra.mxu0 %v5181
    %5215 = vmatprep.subr.bf16.mxu0 %v5184
    %5216 = vmatpush1.bf16.msra.mxu0 %v5183
    %5217 = vmatprep.subr.bf16.mxu0 %v5186
    %5218 = vmatpush1.bf16.msra.mxu0 %v5185
    %5219 = vmatprep.subr.bf16.mxu0 0
    %5220 = vmatpush1.bf16.msra.mxu0 0
    %5221 = vmatprep.subr.bf16.mxu0 0
    %5222 = vmatpush1.bf16.msra.mxu0 0
    %5223 = vmatprep.subr.bf16.mxu0 0
    %5224 = vmatpush1.bf16.msra.mxu0 0
    %5225 = vmatprep.subr.bf16.mxu0 0
    %5226 = vmatpush1.bf16.msra.mxu0 0
    %5227 = vmatprep.subr.bf16.mxu0 0
    %5228 = vmatpush1.bf16.msra.mxu0 0
    %5229 = vmatprep.subr.bf16.mxu0 0
    %5230 = vmatpush1.bf16.msra.mxu0 0
    %5231 = vmatprep.subr.bf16.mxu0 0
    %5232 = vmatpush1.bf16.msra.mxu0 0
    %5233 = vmatprep.subr.bf16.mxu0 0
    %5234 = vmatpush1.bf16.msra.mxu0 0
    %5235 = vmatprep.mubr.bf16.mxu0 0
    %5236 = vmatmul.mubr.bf16.gmra.mrb[0].mxu0 %v5104
    %v5237 = vpop.f32.mrb[0].mxu0
    %v5238 = vadd.f32 0.0, %v5237
    %v5239 = vpop.f32.mrb[0].mxu0
    %v5240 = vadd.f32 0.0, %v5239
    %v5241 = vpop.f32.mrb[0].mxu0
    %v5242 = vadd.f32 0.0, %v5241
    %v5243 = vpop.f32.mrb[0].mxu0
    %v5244 = vadd.f32 0.0, %v5243
    %5245 = vmatprep.mubr.bf16.mxu0 0
    %5246 = vmatmul.mubr.bf16.gmra.mrb[0].mxu0 %v5105
    %v5247 = vpop.f32.mrb[0].mxu0
    %v5248 = vadd.f32 0.0, %v5247
    %v5249 = vpop.f32.mrb[0].mxu0
    %v5250 = vadd.f32 0.0, %v5249
    %v5251 = vpop.f32.mrb[0].mxu0
    %v5252 = vadd.f32 0.0, %v5251
    %v5253 = vpop.f32.mrb[0].mxu0
    %v5254 = vadd.f32 0.0, %v5253
    %5255 = vdwg.mxu0
    %v5256 = vadd.f32 %v5092, %v5238
    %v5257 = vadd.f32 %v5093, %v5240
    %v5258 = vadd.f32 %v5094, %v5242
    %v5259 = vadd.f32 %v5095, %v5244
    %v5260 = vadd.f32 %v5096, %v5248
    %v5261 = vadd.f32 %v5097, %v5250
    %v5262 = vadd.f32 %v5098, %v5252
    %v5263 = vadd.f32 %v5099, %v5254
    %v5264 = vld [vmem:[#allocation4 + $0xb] sm:$0xff]
    %v5265 = vld [vmem:[#allocation4 + $0x13] sm:$0xff]
    %v5266 = vld [vmem:[#allocation4 + $0x1b] sm:$0xff]
    %v5267 = vld [vmem:[#allocation4 + $0x23] sm:$0xff]
    %v5268 = vpack.c.bf16 %v5265, %v5264
    %v5269 = vpack.c.bf16 %v5267, %v5266
    %s5270 = scalar_lea.vmem [#allocation11], 768
    %v5271 = vld [vmem:[%s5270] sm:$0xff]
    %v5272 = vld [vmem:[%s5270 + $0x8] sm:$0xff]
    %v5273 = vld [vmem:[%s5270 + $0x10] sm:$0xff]
    %v5274 = vld [vmem:[%s5270 + $0x18] sm:$0xff]
    %v5275 = vld [vmem:[%s5270 + $0x20] sm:$0xff]
    %v5276 = vld [vmem:[%s5270 + $0x28] sm:$0xff]
    %v5277 = vld [vmem:[%s5270 + $0x30] sm:$0xff]
    %v5278 = vld [vmem:[%s5270 + $0x38] sm:$0xff]
    %v5279 = vld [vmem:[%s5270 + $0x40] sm:$0xff]
    %v5280 = vld [vmem:[%s5270 + $0x48] sm:$0xff]
    %v5281 = vld [vmem:[%s5270 + $0x50] sm:$0xff]
    %v5282 = vld [vmem:[%s5270 + $0x58] sm:$0xff]
    %v5283 = vld [vmem:[%s5270 + $0x60] sm:$0xff]
    %v5284 = vld [vmem:[%s5270 + $0x68] sm:$0xff]
    %v5285 = vld [vmem:[%s5270 + $0x70] sm:$0xff]
    %v5286 = vld [vmem:[%s5270 + $0x78] sm:$0xff]
    %v5303 = vunpack.c.l.b16 %v5271
    %v5304 = vunpack.c.h.b16 %v5271
    %v5305 = vunpack.c.l.b16 %v5272
    %v5306 = vunpack.c.h.b16 %v5272
    %v5307 = vunpack.c.l.b16 %v5273
    %v5308 = vunpack.c.h.b16 %v5273
    %v5309 = vunpack.c.l.b16 %v5274
    %v5310 = vunpack.c.h.b16 %v5274
    %v5311 = vunpack.c.l.b16 %v5275
    %v5312 = vunpack.c.h.b16 %v5275
    %v5313 = vunpack.c.l.b16 %v5276
    %v5314 = vunpack.c.h.b16 %v5276
    %v5315 = vunpack.c.l.b16 %v5277
    %v5316 = vunpack.c.h.b16 %v5277
    %v5317 = vunpack.c.l.b16 %v5278
    %v5318 = vunpack.c.h.b16 %v5278
    %v5319 = vunpack.c.l.b16 %v5279
    %v5320 = vunpack.c.h.b16 %v5279
    %v5321 = vunpack.c.l.b16 %v5280
    %v5322 = vunpack.c.h.b16 %v5280
    %v5323 = vunpack.c.l.b16 %v5281
    %v5324 = vunpack.c.h.b16 %v5281
    %v5325 = vunpack.c.l.b16 %v5282
    %v5326 = vunpack.c.h.b16 %v5282
    %v5327 = vunpack.c.l.b16 %v5283
    %v5328 = vunpack.c.h.b16 %v5283
    %v5329 = vunpack.c.l.b16 %v5284
    %v5330 = vunpack.c.h.b16 %v5284
    %v5331 = vunpack.c.l.b16 %v5285
    %v5332 = vunpack.c.h.b16 %v5285
    %v5333 = vunpack.c.l.b16 %v5286
    %v5334 = vunpack.c.h.b16 %v5286
    %v5335 = vpack.c.b16 %v5305, %v5303
    %v5336 = vpack.c.b16 %v5306, %v5304
    %v5337 = vpack.c.b16 %v5309, %v5307
    %v5338 = vpack.c.b16 %v5310, %v5308
    %v5339 = vpack.c.b16 %v5313, %v5311
    %v5340 = vpack.c.b16 %v5314, %v5312
    %v5341 = vpack.c.b16 %v5317, %v5315
    %v5342 = vpack.c.b16 %v5318, %v5316
    %v5343 = vpack.c.b16 %v5321, %v5319
    %v5344 = vpack.c.b16 %v5322, %v5320
    %v5345 = vpack.c.b16 %v5325, %v5323
    %v5346 = vpack.c.b16 %v5326, %v5324
    %v5347 = vpack.c.b16 %v5329, %v5327
    %v5348 = vpack.c.b16 %v5330, %v5328
    %v5349 = vpack.c.b16 %v5333, %v5331
    %v5350 = vpack.c.b16 %v5334, %v5332
    %5367 = vmatprep.subr.bf16.mxu0 %v5336
    %5368 = vmatpush1.bf16.msra.mxu0 %v5335
    %5369 = vmatprep.subr.bf16.mxu0 %v5338
    %5370 = vmatpush1.bf16.msra.mxu0 %v5337
    %5371 = vmatprep.subr.bf16.mxu0 %v5340
    %5372 = vmatpush1.bf16.msra.mxu0 %v5339
    %5373 = vmatprep.subr.bf16.mxu0 %v5342
    %5374 = vmatpush1.bf16.msra.mxu0 %v5341
    %5375 = vmatprep.subr.bf16.mxu0 %v5344
    %5376 = vmatpush1.bf16.msra.mxu0 %v5343
    %5377 = vmatprep.subr.bf16.mxu0 %v5346
    %5378 = vmatpush1.bf16.msra.mxu0 %v5345
    %5379 = vmatprep.subr.bf16.mxu0 %v5348
    %5380 = vmatpush1.bf16.msra.mxu0 %v5347
    %5381 = vmatprep.subr.bf16.mxu0 %v5350
    %5382 = vmatpush1.bf16.msra.mxu0 %v5349
    %5383 = vmatprep.subr.bf16.mxu0 0
    %5384 = vmatpush1.bf16.msra.mxu0 0
    %5385 = vmatprep.subr.bf16.mxu0 0
    %5386 = vmatpush1.bf16.msra.mxu0 0
    %5387 = vmatprep.subr.bf16.mxu0 0
    %5388 = vmatpush1.bf16.msra.mxu0 0
    %5389 = vmatprep.subr.bf16.mxu0 0
    %5390 = vmatpush1.bf16.msra.mxu0 0
    %5391 = vmatprep.subr.bf16.mxu0 0
    %5392 = vmatpush1.bf16.msra.mxu0 0
    %5393 = vmatprep.subr.bf16.mxu0 0
    %5394 = vmatpush1.bf16.msra.mxu0 0
    %5395 = vmatprep.subr.bf16.mxu0 0
    %5396 = vmatpush1.bf16.msra.mxu0 0
    %5397 = vmatprep.subr.bf16.mxu0 0
    %5398 = vmatpush1.bf16.msra.mxu0 0
    %5399 = vmatprep.mubr.bf16.mxu0 0
    %5400 = vmatmul.mubr.bf16.gmra.mrb[0].mxu0 %v5268
    %v5401 = vpop.f32.mrb[0].mxu0
    %v5402 = vadd.f32 0.0, %v5401
    %v5403 = vpop.f32.mrb[0].mxu0
    %v5404 = vadd.f32 0.0, %v5403
    %v5405 = vpop.f32.mrb[0].mxu0
    %v5406 = vadd.f32 0.0, %v5405
    %v5407 = vpop.f32.mrb[0].mxu0
    %v5408 = vadd.f32 0.0, %v5407
    %5409 = vmatprep.mubr.bf16.mxu0 0
    %5410 = vmatmul.mubr.bf16.gmra.mrb[0].mxu0 %v5269
    %v5411 = vpop.f32.mrb[0].mxu0
    %v5412 = vadd.f32 0.0, %v5411
    %v5413 = vpop.f32.mrb[0].mxu0
    %v5414 = vadd.f32 0.0, %v5413
    %v5415 = vpop.f32.mrb[0].mxu0
    %v5416 = vadd.f32 0.0, %v5415
    %v5417 = vpop.f32.mrb[0].mxu0
    %v5418 = vadd.f32 0.0, %v5417
    %5419 = vdwg.mxu0
    %v5420 = vadd.f32 %v5256, %v5402
    %v5421 = vadd.f32 %v5257, %v5404
    %v5422 = vadd.f32 %v5258, %v5406
    %v5423 = vadd.f32 %v5259, %v5408
    %v5424 = vadd.f32 %v5260, %v5412
    %v5425 = vadd.f32 %v5261, %v5414
    %v5426 = vadd.f32 %v5262, %v5416
    %v5427 = vadd.f32 %v5263, %v5418
    %v5428 = vld [vmem:[#allocation4 + $0xc] sm:$0xff]
    %v5429 = vld [vmem:[#allocation4 + $0x14] sm:$0xff]
    %v5430 = vld [vmem:[#allocation4 + $0x1c] sm:$0xff]
    %v5431 = vld [vmem:[#allocation4 + $0x24] sm:$0xff]
    %v5432 = vpack.c.bf16 %v5429, %v5428
    %v5433 = vpack.c.bf16 %v5431, %v5430
    %s5434 = scalar_lea.vmem [#allocation11], 896
    %v5435 = vld [vmem:[%s5434] sm:$0xff]
    %v5436 = vld [vmem:[%s5434 + $0x8] sm:$0xff]
    %v5437 = vld [vmem:[%s5434 + $0x10] sm:$0xff]
    %v5438 = vld [vmem:[%s5434 + $0x18] sm:$0xff]
    %v5439 = vld [vmem:[%s5434 + $0x20] sm:$0xff]
    %v5440 = vld [vmem:[%s5434 + $0x28] sm:$0xff]
    %v5441 = vld [vmem:[%s5434 + $0x30] sm:$0xff]
    %v5442 = vld [vmem:[%s5434 + $0x38] sm:$0xff]
    %v5443 = vld [vmem:[%s5434 + $0x40] sm:$0xff]
    %v5444 = vld [vmem:[%s5434 + $0x48] sm:$0xff]
    %v5445 = vld [vmem:[%s5434 + $0x50] sm:$0xff]
    %v5446 = vld [vmem:[%s5434 + $0x58] sm:$0xff]
    %v5447 = vld [vmem:[%s5434 + $0x60] sm:$0xff]
    %v5448 = vld [vmem:[%s5434 + $0x68] sm:$0xff]
    %v5449 = vld [vmem:[%s5434 + $0x70] sm:$0xff]
    %v5450 = vld [vmem:[%s5434 + $0x78] sm:$0xff]
    %v5467 = vunpack.c.l.b16 %v5435
    %v5468 = vunpack.c.h.b16 %v5435
    %v5469 = vunpack.c.l.b16 %v5436
    %v5470 = vunpack.c.h.b16 %v5436
    %v5471 = vunpack.c.l.b16 %v5437
    %v5472 = vunpack.c.h.b16 %v5437
    %v5473 = vunpack.c.l.b16 %v5438
    %v5474 = vunpack.c.h.b16 %v5438
    %v5475 = vunpack.c.l.b16 %v5439
    %v5476 = vunpack.c.h.b16 %v5439
    %v5477 = vunpack.c.l.b16 %v5440
    %v5478 = vunpack.c.h.b16 %v5440
    %v5479 = vunpack.c.l.b16 %v5441
    %v5480 = vunpack.c.h.b16 %v5441
    %v5481 = vunpack.c.l.b16 %v5442
    %v5482 = vunpack.c.h.b16 %v5442
    %v5483 = vunpack.c.l.b16 %v5443
    %v5484 = vunpack.c.h.b16 %v5443
    %v5485 = vunpack.c.l.b16 %v5444
    %v5486 = vunpack.c.h.b16 %v5444
    %v5487 = vunpack.c.l.b16 %v5445
    %v5488 = vunpack.c.h.b16 %v5445
    %v5489 = vunpack.c.l.b16 %v5446
    %v5490 = vunpack.c.h.b16 %v5446
    %v5491 = vunpack.c.l.b16 %v5447
    %v5492 = vunpack.c.h.b16 %v5447
    %v5493 = vunpack.c.l.b16 %v5448
    %v5494 = vunpack.c.h.b16 %v5448
    %v5495 = vunpack.c.l.b16 %v5449
    %v5496 = vunpack.c.h.b16 %v5449
    %v5497 = vunpack.c.l.b16 %v5450
    %v5498 = vunpack.c.h.b16 %v5450
    %v5499 = vpack.c.b16 %v5469, %v5467
    %v5500 = vpack.c.b16 %v5470, %v5468
    %v5501 = vpack.c.b16 %v5473, %v5471
    %v5502 = vpack.c.b16 %v5474, %v5472
    %v5503 = vpack.c.b16 %v5477, %v5475
    %v5504 = vpack.c.b16 %v5478, %v5476
    %v5505 = vpack.c.b16 %v5481, %v5479
    %v5506 = vpack.c.b16 %v5482, %v5480
    %v5507 = vpack.c.b16 %v5485, %v5483
    %v5508 = vpack.c.b16 %v5486, %v5484
    %v5509 = vpack.c.b16 %v5489, %v5487
    %v5510 = vpack.c.b16 %v5490, %v5488
    %v5511 = vpack.c.b16 %v5493, %v5491
    %v5512 = vpack.c.b16 %v5494, %v5492
    %v5513 = vpack.c.b16 %v5497, %v5495
    %v5514 = vpack.c.b16 %v5498, %v5496
    %5531 = vmatprep.subr.bf16.mxu0 %v5500
    %5532 = vmatpush1.bf16.msra.mxu0 %v5499
    %5533 = vmatprep.subr.bf16.mxu0 %v5502
    %5534 = vmatpush1.bf16.msra.mxu0 %v5501
    %5535 = vmatprep.subr.bf16.mxu0 %v5504
    %5536 = vmatpush1.bf16.msra.mxu0 %v5503
    %5537 = vmatprep.subr.bf16.mxu0 %v5506
    %5538 = vmatpush1.bf16.msra.mxu0 %v5505
    %5539 = vmatprep.subr.bf16.mxu0 %v5508
    %5540 = vmatpush1.bf16.msra.mxu0 %v5507
    %5541 = vmatprep.subr.bf16.mxu0 %v5510
    %5542 = vmatpush1.bf16.msra.mxu0 %v5509
    %5543 = vmatprep.subr.bf16.mxu0 %v5512
    %5544 = vmatpush1.bf16.msra.mxu0 %v5511
    %5545 = vmatprep.subr.bf16.mxu0 %v5514
    %5546 = vmatpush1.bf16.msra.mxu0 %v5513
    %5547 = vmatprep.subr.bf16.mxu0 0
    %5548 = vmatpush1.bf16.msra.mxu0 0
    %5549 = vmatprep.subr.bf16.mxu0 0
    %5550 = vmatpush1.bf16.msra.mxu0 0
    %5551 = vmatprep.subr.bf16.mxu0 0
    %5552 = vmatpush1.bf16.msra.mxu0 0
    %5553 = vmatprep.subr.bf16.mxu0 0
    %5554 = vmatpush1.bf16.msra.mxu0 0
    %5555 = vmatprep.subr.bf16.mxu0 0
    %5556 = vmatpush1.bf16.msra.mxu0 0
    %5557 = vmatprep.subr.bf16.mxu0 0
    %5558 = vmatpush1.bf16.msra.mxu0 0
    %5559 = vmatprep.subr.bf16.mxu0 0
    %5560 = vmatpush1.bf16.msra.mxu0 0
    %5561 = vmatprep.subr.bf16.mxu0 0
    %5562 = vmatpush1.bf16.msra.mxu0 0
    %5563 = vmatprep.mubr.bf16.mxu0 0
    %5564 = vmatmul.mubr.bf16.gmra.mrb[0].mxu0 %v5432
    %v5565 = vpop.f32.mrb[0].mxu0
    %v5566 = vadd.f32 0.0, %v5565
    %v5567 = vpop.f32.mrb[0].mxu0
    %v5568 = vadd.f32 0.0, %v5567
    %v5569 = vpop.f32.mrb[0].mxu0
    %v5570 = vadd.f32 0.0, %v5569
    %v5571 = vpop.f32.mrb[0].mxu0
    %v5572 = vadd.f32 0.0, %v5571
    %5573 = vmatprep.mubr.bf16.mxu0 0
    %5574 = vmatmul.mubr.bf16.gmra.mrb[0].mxu0 %v5433
    %v5575 = vpop.f32.mrb[0].mxu0
    %v5576 = vadd.f32 0.0, %v5575
    %v5577 = vpop.f32.mrb[0].mxu0
    %v5578 = vadd.f32 0.0, %v5577
    %v5579 = vpop.f32.mrb[0].mxu0
    %v5580 = vadd.f32 0.0, %v5579
    %v5581 = vpop.f32.mrb[0].mxu0
    %v5582 = vadd.f32 0.0, %v5581
    %5583 = vdwg.mxu0
    %v5584 = vadd.f32 %v5420, %v5566
    %v5585 = vadd.f32 %v5421, %v5568
    %v5586 = vadd.f32 %v5422, %v5570
    %v5587 = vadd.f32 %v5423, %v5572
    %v5588 = vadd.f32 %v5424, %v5576
    %v5589 = vadd.f32 %v5425, %v5578
    %v5590 = vadd.f32 %v5426, %v5580
    %v5591 = vadd.f32 %v5427, %v5582
    %v5592 = vld [vmem:[#allocation4 + $0xd] sm:$0xff]
    %v5593 = vld [vmem:[#allocation4 + $0x15] sm:$0xff]
    %v5594 = vld [vmem:[#allocation4 + $0x1d] sm:$0xff]
    %v5595 = vld [vmem:[#allocation4 + $0x25] sm:$0xff]
    %v5596 = vpack.c.bf16 %v5593, %v5592
    %v5597 = vpack.c.bf16 %v5595, %v5594
    %s5598 = scalar_lea.vmem [#allocation11], 1024
    %v5599 = vld [vmem:[%s5598] sm:$0xff]
    %v5600 = vld [vmem:[%s5598 + $0x8] sm:$0xff]
    %v5601 = vld [vmem:[%s5598 + $0x10] sm:$0xff]
    %v5602 = vld [vmem:[%s5598 + $0x18] sm:$0xff]
    %v5603 = vld [vmem:[%s5598 + $0x20] sm:$0xff]
    %v5604 = vld [vmem:[%s5598 + $0x28] sm:$0xff]
    %v5605 = vld [vmem:[%s5598 + $0x30] sm:$0xff]
    %v5606 = vld [vmem:[%s5598 + $0x38] sm:$0xff]
    %v5607 = vld [vmem:[%s5598 + $0x40] sm:$0xff]
    %v5608 = vld [vmem:[%s5598 + $0x48] sm:$0xff]
    %v5609 = vld [vmem:[%s5598 + $0x50] sm:$0xff]
    %v5610 = vld [vmem:[%s5598 + $0x58] sm:$0xff]
    %v5611 = vld [vmem:[%s5598 + $0x60] sm:$0xff]
    %v5612 = vld [vmem:[%s5598 + $0x68] sm:$0xff]
    %v5613 = vld [vmem:[%s5598 + $0x70] sm:$0xff]
    %v5614 = vld [vmem:[%s5598 + $0x78] sm:$0xff]
    %v5631 = vunpack.c.l.b16 %v5599
    %v5632 = vunpack.c.h.b16 %v5599
    %v5633 = vunpack.c.l.b16 %v5600
    %v5634 = vunpack.c.h.b16 %v5600
    %v5635 = vunpack.c.l.b16 %v5601
    %v5636 = vunpack.c.h.b16 %v5601
    %v5637 = vunpack.c.l.b16 %v5602
    %v5638 = vunpack.c.h.b16 %v5602
    %v5639 = vunpack.c.l.b16 %v5603
    %v5640 = vunpack.c.h.b16 %v5603
    %v5641 = vunpack.c.l.b16 %v5604
    %v5642 = vunpack.c.h.b16 %v5604
    %v5643 = vunpack.c.l.b16 %v5605
    %v5644 = vunpack.c.h.b16 %v5605
    %v5645 = vunpack.c.l.b16 %v5606
    %v5646 = vunpack.c.h.b16 %v5606
    %v5647 = vunpack.c.l.b16 %v5607
    %v5648 = vunpack.c.h.b16 %v5607
    %v5649 = vunpack.c.l.b16 %v5608
    %v5650 = vunpack.c.h.b16 %v5608
    %v5651 = vunpack.c.l.b16 %v5609
    %v5652 = vunpack.c.h.b16 %v5609
    %v5653 = vunpack.c.l.b16 %v5610
    %v5654 = vunpack.c.h.b16 %v5610
    %v5655 = vunpack.c.l.b16 %v5611
    %v5656 = vunpack.c.h.b16 %v5611
    %v5657 = vunpack.c.l.b16 %v5612
    %v5658 = vunpack.c.h.b16 %v5612
    %v5659 = vunpack.c.l.b16 %v5613
    %v5660 = vunpack.c.h.b16 %v5613
    %v5661 = vunpack.c.l.b16 %v5614
    %v5662 = vunpack.c.h.b16 %v5614
    %v5663 = vpack.c.b16 %v5633, %v5631
    %v5664 = vpack.c.b16 %v5634, %v5632
    %v5665 = vpack.c.b16 %v5637, %v5635
    %v5666 = vpack.c.b16 %v5638, %v5636
    %v5667 = vpack.c.b16 %v5641, %v5639
    %v5668 = vpack.c.b16 %v5642, %v5640
    %v5669 = vpack.c.b16 %v5645, %v5643
    %v5670 = vpack.c.b16 %v5646, %v5644
    %v5671 = vpack.c.b16 %v5649, %v5647
    %v5672 = vpack.c.b16 %v5650, %v5648
    %v5673 = vpack.c.b16 %v5653, %v5651
    %v5674 = vpack.c.b16 %v5654, %v5652
    %v5675 = vpack.c.b16 %v5657, %v5655
    %v5676 = vpack.c.b16 %v5658, %v5656
    %v5677 = vpack.c.b16 %v5661, %v5659
    %v5678 = vpack.c.b16 %v5662, %v5660
    %5695 = vmatprep.subr.bf16.mxu0 %v5664
    %5696 = vmatpush1.bf16.msra.mxu0 %v5663
    %5697 = vmatprep.subr.bf16.mxu0 %v5666
    %5698 = vmatpush1.bf16.msra.mxu0 %v5665
    %5699 = vmatprep.subr.bf16.mxu0 %v5668
    %5700 = vmatpush1.bf16.msra.mxu0 %v5667
    %5701 = vmatprep.subr.bf16.mxu0 %v5670
    %5702 = vmatpush1.bf16.msra.mxu0 %v5669
    %5703 = vmatprep.subr.bf16.mxu0 %v5672
    %5704 = vmatpush1.bf16.msra.mxu0 %v5671
    %5705 = vmatprep.subr.bf16.mxu0 %v5674
    %5706 = vmatpush1.bf16.msra.mxu0 %v5673
    %5707 = vmatprep.subr.bf16.mxu0 %v5676
    %5708 = vmatpush1.bf16.msra.mxu0 %v5675
    %5709 = vmatprep.subr.bf16.mxu0 %v5678
    %5710 = vmatpush1.bf16.msra.mxu0 %v5677
    %5711 = vmatprep.subr.bf16.mxu0 0
    %5712 = vmatpush1.bf16.msra.mxu0 0
    %5713 = vmatprep.subr.bf16.mxu0 0
    %5714 = vmatpush1.bf16.msra.mxu0 0
    %5715 = vmatprep.subr.bf16.mxu0 0
    %5716 = vmatpush1.bf16.msra.mxu0 0
    %5717 = vmatprep.subr.bf16.mxu0 0
    %5718 = vmatpush1.bf16.msra.mxu0 0
    %5719 = vmatprep.subr.bf16.mxu0 0
    %5720 = vmatpush1.bf16.msra.mxu0 0
    %5721 = vmatprep.subr.bf16.mxu0 0
    %5722 = vmatpush1.bf16.msra.mxu0 0
    %5723 = vmatprep.subr.bf16.mxu0 0
    %5724 = vmatpush1.bf16.msra.mxu0 0
    %5725 = vmatprep.subr.bf16.mxu0 0
    %5726 = vmatpush1.bf16.msra.mxu0 0
    %5727 = vmatprep.mubr.bf16.mxu0 0
    %5728 = vmatmul.mubr.bf16.gmra.mrb[0].mxu0 %v5596
    %v5729 = vpop.f32.mrb[0].mxu0
    %v5730 = vadd.f32 0.0, %v5729
    %v5731 = vpop.f32.mrb[0].mxu0
    %v5732 = vadd.f32 0.0, %v5731
    %v5733 = vpop.f32.mrb[0].mxu0
    %v5734 = vadd.f32 0.0, %v5733
    %v5735 = vpop.f32.mrb[0].mxu0
    %v5736 = vadd.f32 0.0, %v5735
    %5737 = vmatprep.mubr.bf16.mxu0 0
    %5738 = vmatmul.mubr.bf16.gmra.mrb[0].mxu0 %v5597
    %v5739 = vpop.f32.mrb[0].mxu0
    %v5740 = vadd.f32 0.0, %v5739
    %v5741 = vpop.f32.mrb[0].mxu0
    %v5742 = vadd.f32 0.0, %v5741
    %v5743 = vpop.f32.mrb[0].mxu0
    %v5744 = vadd.f32 0.0, %v5743
    %v5745 = vpop.f32.mrb[0].mxu0
    %v5746 = vadd.f32 0.0, %v5745
    %5747 = vdwg.mxu0
    %v5748 = vadd.f32 %v5584, %v5730
    %v5749 = vadd.f32 %v5585, %v5732
    %v5750 = vadd.f32 %v5586, %v5734
    %v5751 = vadd.f32 %v5587, %v5736
    %v5752 = vadd.f32 %v5588, %v5740
    %v5753 = vadd.f32 %v5589, %v5742
    %v5754 = vadd.f32 %v5590, %v5744
    %v5755 = vadd.f32 %v5591, %v5746
    %v5756 = vld [vmem:[%s10] sm:$0x3]
    %v5758 = vlaneseq
    %v5759 = vshrl.u32 %v5758, 7
    %v5760 = vsub.s32 0, %v5759
    %v5761 = vrot.slane %v5756, %v5760
    %v5762 = vlaneseq
    %v5763 = vshrl.u32 %v5762, 7
    %v5764 = vsub.s32 1, %v5763
    %v5765 = vrot.slane %v5756, %v5764
    %v5768 = vadd.f32 %v5748, %v5761
    %v5769 = vadd.f32 %v5749, %v5765
    %v5770 = vadd.f32 %v5750, %v5761
    %v5771 = vadd.f32 %v5751, %v5765
    %v5772 = vadd.f32 %v5752, %v5761
    %v5773 = vadd.f32 %v5753, %v5765
    %v5774 = vadd.f32 %v5754, %v5761
    %v5775 = vadd.f32 %v5755, %v5765
    %v5776 = vmax.f32 %v5768, 0.0
    %v5777 = vmax.f32 %v5769, 0.0
    %v5778 = vmax.f32 %v5770, 0.0
    %v5779 = vmax.f32 %v5771, 0.0
    %v5780 = vmax.f32 %v5772, 0.0
    %v5781 = vmax.f32 %v5773, 0.0
    %v5782 = vmax.f32 %v5774, 0.0
    %v5783 = vmax.f32 %v5775, 0.0
    %v5790 = vrot.slane %v5776, 1
    %v5791 = vrot.slane %v5778, 1
    %v5792 = vsel %vm3076, %v5790, %v5791
    %v5793 = vrot.slane %v5777, 1
    %v5794 = vrot.slane %v5779, 1
    %v5795 = vsel %vm3076, %v5793, %v5794
    %v5796 = vrot.slane %v5780, 1
    %v5797 = vrot.slane %v5781, 1
    %v5802 = vmax.f32 %v5776, %v5792
    %v5803 = vmax.f32 %v5777, %v5795
    %v5804 = vmax.f32 %v5780, %v5796
    %v5805 = vmax.f32 %v5781, %v5797
    %v5808 = vsel %vm3076, %v5791, %v5796
    %v5809 = vsel %vm3076, %v5794, %v5797
    %v5810 = vrot.slane %v5782, 1
    %v5811 = vsel %vm3076, %v5796, %v5810
    %v5812 = vrot.slane %v5783, 1
    %v5813 = vsel %vm3076, %v5797, %v5812
    %v5820 = vmax.f32 %v5778, %v5808
    %v5821 = vmax.f32 %v5779, %v5809
    %v5822 = vmax.f32 %v5780, %v5811
    %v5823 = vmax.f32 %v5781, %v5813
    %v5824 = vmax.f32 %v5782, %v5810
    %v5825 = vmax.f32 %v5783, %v5812
    %vm5834 = vcmask 1043456
    %v5835 = vrot.slane %v5802, 4
    %v5836 = vrot.slane %v5820, 4
    %v5837 = vsel %vm5834, %v5835, %v5836
    %v5838 = vrot.slane %v5803, 4
    %v5839 = vrot.slane %v5821, 4
    %v5840 = vsel %vm5834, %v5838, %v5839
    %v5841 = vrot.slane %v5822, 4
    %v5842 = vrot.slane %v5824, 4
    %v5843 = vsel %vm5834, %v5841, %v5842
    %v5844 = vrot.slane %v5823, 4
    %v5845 = vrot.slane %v5825, 4
    %v5846 = vsel %vm5834, %v5844, %v5845
    %v5851 = vmax.f32 %v5802, %v5837
    %v5852 = vmax.f32 %v5803, %v5840
    %v5853 = vmax.f32 %v5804, %v5843
    %v5854 = vmax.f32 %v5805, %v5846
    %5855 = vst [vmem:[#allocation5] sm:$0xff] 0.0
    %5856 = vst [vmem:[#allocation5 + $0x8] sm:$0xff] 0.0
    %v5859 = vcombine.high %v5851, %v5852
    %v5861 = vunpack.c.l.s4 1966171168
    %v5862 = vunpack.c.0.s8 %v5861
    %v5863 = vlaneseq
    %v5864 = vshrl.u32 %v5863, 7
    %v5865 = vsub.s32 %v5862, %v5864
    %v5866 = vrot.slane %v5859, %v5865
    %v5867 = vcombine.high %v5866, %v5866
    %v5869 = vunpack.c.l.s4 1966171168
    %v5870 = vunpack.c.0.s8 %v5869
    %v5871 = vlaneseq
    %v5872 = vshrl.u32 %v5871, 7
    %v5873 = vsub.s32 %v5870, %v5872
    %v5874 = vrot.slane %v5867, %v5873
    %v5876 = vlaneseq
    %vm5877 = vcmp.ge.s32.totalorder %v5876, 0
    %vm5878 = vcmp.lt.s32.totalorder %v5876, 256
    %vm5879 = vmand %vm5877, %vm5878
    %5880 = vst.msk [vmem:[#allocation5] ss:$8 sm:$0x3] %vm5879, %v5874
    %5881 = vst.msk [vmem:[#allocation5] ss:$8 sm:$0x0] %vm5879, %v5874
    %v5884 = vcombine.high %v5853, %v5854
    %v5886 = vunpack.c.l.s4 1966171168
    %v5887 = vunpack.c.0.s8 %v5886
    %v5888 = vlaneseq
    %v5889 = vshrl.u32 %v5888, 7
    %v5890 = vsub.s32 %v5887, %v5889
    %v5891 = vrot.slane %v5884, %v5890
    %v5892 = vcombine.high %v5891, %v5891
    %v5894 = vunpack.c.l.s4 1966171168
    %v5895 = vunpack.c.0.s8 %v5894
    %v5896 = vlaneseq
    %v5897 = vshrl.u32 %v5896, 7
    %v5898 = vsub.s32 %v5895, %v5897
    %v5899 = vrot.slane %v5892, %v5898
    %s5901 = scalar_lea.vmem [#allocation5], 1
    %5902 = vst.msk [vmem:[%s5901] ss:$8 sm:$0x3] %vm5879, %v5899
    %5903 = vst.msk [vmem:[%s5901] ss:$8 sm:$0x0] %vm5879, %v5899
    %v5904 = vld [vmem:[#allocation5] sm:$0xff]
    %v5905 = vld [vmem:[#allocation5 + $0x8] sm:$0xff]
    %v5906 = vpack.c.bf16 %v5904, %v5904
    %v5907 = vpack.c.bf16 %v5905, %v5905
    %v5908 = vld [vmem:[#allocation13] sm:$0xff]
    %v5909 = vld [vmem:[#allocation13 + $0x8] sm:$0xff]
    %v5910 = vld [vmem:[#allocation13 + $0x10] sm:$0xff]
    %v5911 = vld [vmem:[#allocation13 + $0x18] sm:$0xff]
    %v5912 = vld [vmem:[#allocation13 + $0x20] sm:$0xff]
    %v5913 = vld [vmem:[#allocation13 + $0x28] sm:$0xff]
    %v5914 = vld [vmem:[#allocation13 + $0x30] sm:$0xff]
    %v5915 = vld [vmem:[#allocation13 + $0x38] sm:$0xff]
    %v5916 = vld [vmem:[#allocation13 + $0x40] sm:$0xff]
    %v5917 = vld [vmem:[#allocation13 + $0x48] sm:$0xff]
    %v5918 = vld [vmem:[#allocation13 + $0x50] sm:$0xff]
    %v5919 = vld [vmem:[#allocation13 + $0x58] sm:$0xff]
    %v5920 = vld [vmem:[#allocation13 + $0x60] sm:$0xff]
    %v5921 = vld [vmem:[#allocation13 + $0x68] sm:$0xff]
    %v5922 = vld [vmem:[#allocation13 + $0x70] sm:$0xff]
    %v5923 = vld [vmem:[#allocation13 + $0x78] sm:$0xff]
    %v5924 = vld [vmem:[#allocation13 + $0x80] sm:$0xff]
    %v5925 = vld [vmem:[#allocation13 + $0x88] sm:$0xff]
    %v5926 = vld [vmem:[#allocation13 + $0x90] sm:$0xff]
    %v5927 = vld [vmem:[#allocation13 + $0x98] sm:$0xff]
    %v5928 = vld [vmem:[#allocation13 + $0xa0] sm:$0xff]
    %v5929 = vld [vmem:[#allocation13 + $0xa8] sm:$0xff]
    %v5930 = vld [vmem:[#allocation13 + $0xb0] sm:$0xff]
    %v5931 = vld [vmem:[#allocation13 + $0xb8] sm:$0xff]
    %v5932 = vld [vmem:[#allocation13 + $0xc0] sm:$0xff]
    %v5933 = vld [vmem:[#allocation13 + $0xc8] sm:$0xff]
    %v5934 = vld [vmem:[#allocation13 + $0xd0] sm:$0xff]
    %v5935 = vld [vmem:[#allocation13 + $0xd8] sm:$0xff]
    %v5936 = vld [vmem:[#allocation13 + $0xe0] sm:$0xff]
    %v5937 = vld [vmem:[#allocation13 + $0xe8] sm:$0xff]
    %v5938 = vld [vmem:[#allocation13 + $0xf0] sm:$0xff]
    %v5939 = vld [vmem:[#allocation13 + $0xf8] sm:$0xff]
    %v5940 = vld [vmem:[#allocation13 + $0x100] sm:$0xff]
    %v5941 = vld [vmem:[#allocation13 + $0x108] sm:$0xff]
    %v5942 = vld [vmem:[#allocation13 + $0x110] sm:$0xff]
    %v5943 = vld [vmem:[#allocation13 + $0x118] sm:$0xff]
    %v5944 = vld [vmem:[#allocation13 + $0x120] sm:$0xff]
    %v5945 = vld [vmem:[#allocation13 + $0x128] sm:$0xff]
    %v5946 = vld [vmem:[#allocation13 + $0x130] sm:$0xff]
    %v5947 = vld [vmem:[#allocation13 + $0x138] sm:$0xff]
    %v5948 = vld [vmem:[#allocation13 + $0x140] sm:$0xff]
    %v5949 = vld [vmem:[#allocation13 + $0x148] sm:$0xff]
    %v5950 = vld [vmem:[#allocation13 + $0x150] sm:$0xff]
    %v5951 = vld [vmem:[#allocation13 + $0x158] sm:$0xff]
    %v5952 = vld [vmem:[#allocation13 + $0x160] sm:$0xff]
    %v5953 = vld [vmem:[#allocation13 + $0x168] sm:$0xff]
    %v5954 = vld [vmem:[#allocation13 + $0x170] sm:$0xff]
    %v5955 = vld [vmem:[#allocation13 + $0x178] sm:$0xff]
    %v5956 = vld [vmem:[#allocation13 + $0x180] sm:$0xff]
    %v5957 = vld [vmem:[#allocation13 + $0x188] sm:$0xff]
    %v5958 = vld [vmem:[#allocation13 + $0x190] sm:$0xff]
    %v5959 = vld [vmem:[#allocation13 + $0x198] sm:$0xff]
    %v5960 = vld [vmem:[#allocation13 + $0x1a0] sm:$0xff]
    %v5961 = vld [vmem:[#allocation13 + $0x1a8] sm:$0xff]
    %v5962 = vld [vmem:[#allocation13 + $0x1b0] sm:$0xff]
    %v5963 = vld [vmem:[#allocation13 + $0x1b8] sm:$0xff]
    %v5964 = vld [vmem:[#allocation13 + $0x1c0] sm:$0xff]
    %v5965 = vld [vmem:[#allocation13 + $0x1c8] sm:$0xff]
    %v5966 = vld [vmem:[#allocation13 + $0x1d0] sm:$0xff]
    %v5967 = vld [vmem:[#allocation13 + $0x1d8] sm:$0xff]
    %v5968 = vld [vmem:[#allocation13 + $0x1e0] sm:$0xff]
    %v5969 = vld [vmem:[#allocation13 + $0x1e8] sm:$0xff]
    %v5970 = vld [vmem:[#allocation13 + $0x1f0] sm:$0xff]
    %v5971 = vld [vmem:[#allocation13 + $0x1f8] sm:$0xff]
    %v5972 = vld [vmem:[#allocation13 + $0x200] sm:$0xff]
    %v5973 = vld [vmem:[#allocation13 + $0x208] sm:$0xff]
    %v5974 = vld [vmem:[#allocation13 + $0x210] sm:$0xff]
    %v5975 = vld [vmem:[#allocation13 + $0x218] sm:$0xff]
    %v5976 = vld [vmem:[#allocation13 + $0x220] sm:$0xff]
    %v5977 = vld [vmem:[#allocation13 + $0x228] sm:$0xff]
    %v5978 = vld [vmem:[#allocation13 + $0x230] sm:$0xff]
    %v5979 = vld [vmem:[#allocation13 + $0x238] sm:$0xff]
    %v5980 = vld [vmem:[#allocation13 + $0x240] sm:$0xff]
    %v5981 = vld [vmem:[#allocation13 + $0x248] sm:$0xff]
    %v5982 = vld [vmem:[#allocation13 + $0x250] sm:$0xff]
    %v5983 = vld [vmem:[#allocation13 + $0x258] sm:$0xff]
    %v5984 = vld [vmem:[#allocation13 + $0x260] sm:$0xff]
    %v5985 = vld [vmem:[#allocation13 + $0x268] sm:$0xff]
    %v5986 = vld [vmem:[#allocation13 + $0x270] sm:$0xff]
    %v5987 = vld [vmem:[#allocation13 + $0x278] sm:$0xff]
    %v5988 = vld [vmem:[#allocation13 + $0x280] sm:$0xff]
    %v5989 = vld [vmem:[#allocation13 + $0x288] sm:$0xff]
    %v5990 = vld [vmem:[#allocation13 + $0x290] sm:$0xff]
    %v5991 = vld [vmem:[#allocation13 + $0x298] sm:$0xff]
    %v5992 = vld [vmem:[#allocation13 + $0x2a0] sm:$0xff]
    %v5993 = vld [vmem:[#allocation13 + $0x2a8] sm:$0xff]
    %v5994 = vld [vmem:[#allocation13 + $0x2b0] sm:$0xff]
    %v5995 = vld [vmem:[#allocation13 + $0x2b8] sm:$0xff]
    %v5996 = vld [vmem:[#allocation13 + $0x2c0] sm:$0xff]
    %v5997 = vld [vmem:[#allocation13 + $0x2c8] sm:$0xff]
    %v5998 = vld [vmem:[#allocation13 + $0x2d0] sm:$0xff]
    %v5999 = vld [vmem:[#allocation13 + $0x2d8] sm:$0xff]
    %v6000 = vld [vmem:[#allocation13 + $0x2e0] sm:$0xff]
    %v6001 = vld [vmem:[#allocation13 + $0x2e8] sm:$0xff]
    %v6002 = vld [vmem:[#allocation13 + $0x2f0] sm:$0xff]
    %v6003 = vld [vmem:[#allocation13 + $0x2f8] sm:$0xff]
    %v6004 = vld [vmem:[#allocation13 + $0x300] sm:$0xff]
    %v6005 = vld [vmem:[#allocation13 + $0x308] sm:$0xff]
    %v6006 = vld [vmem:[#allocation13 + $0x310] sm:$0xff]
    %v6007 = vld [vmem:[#allocation13 + $0x318] sm:$0xff]
    %v6008 = vld [vmem:[#allocation13 + $0x320] sm:$0xff]
    %v6009 = vld [vmem:[#allocation13 + $0x328] sm:$0xff]
    %v6010 = vld [vmem:[#allocation13 + $0x330] sm:$0xff]
    %v6011 = vld [vmem:[#allocation13 + $0x338] sm:$0xff]
    %v6012 = vld [vmem:[#allocation13 + $0x340] sm:$0xff]
    %v6013 = vld [vmem:[#allocation13 + $0x348] sm:$0xff]
    %v6014 = vld [vmem:[#allocation13 + $0x350] sm:$0xff]
    %v6015 = vld [vmem:[#allocation13 + $0x358] sm:$0xff]
    %v6016 = vld [vmem:[#allocation13 + $0x360] sm:$0xff]
    %v6017 = vld [vmem:[#allocation13 + $0x368] sm:$0xff]
    %v6018 = vld [vmem:[#allocation13 + $0x370] sm:$0xff]
    %v6019 = vld [vmem:[#allocation13 + $0x378] sm:$0xff]
    %v6020 = vld [vmem:[#allocation13 + $0x380] sm:$0xff]
    %v6021 = vld [vmem:[#allocation13 + $0x388] sm:$0xff]
    %v6022 = vld [vmem:[#allocation13 + $0x390] sm:$0xff]
    %v6023 = vld [vmem:[#allocation13 + $0x398] sm:$0xff]
    %v6024 = vld [vmem:[#allocation13 + $0x3a0] sm:$0xff]
    %v6025 = vld [vmem:[#allocation13 + $0x3a8] sm:$0xff]
    %v6026 = vld [vmem:[#allocation13 + $0x3b0] sm:$0xff]
    %v6027 = vld [vmem:[#allocation13 + $0x3b8] sm:$0xff]
    %v6028 = vld [vmem:[#allocation13 + $0x3c0] sm:$0xff]
    %v6029 = vld [vmem:[#allocation13 + $0x3c8] sm:$0xff]
    %v6030 = vld [vmem:[#allocation13 + $0x3d0] sm:$0xff]
    %v6031 = vld [vmem:[#allocation13 + $0x3d8] sm:$0xff]
    %v6032 = vld [vmem:[#allocation13 + $0x3e0] sm:$0xff]
    %v6033 = vld [vmem:[#allocation13 + $0x3e8] sm:$0xff]
    %v6034 = vld [vmem:[#allocation13 + $0x3f0] sm:$0xff]
    %v6035 = vld [vmem:[#allocation13 + $0x3f8] sm:$0xff]
    %v6036 = vld [vmem:[%s12] sm:$0xff]
    %v6038 = vlaneseq
    %v6039 = vshrl.u32 %v6038, 7
    %v6040 = vsub.s32 0, %v6039
    %v6041 = vrot.slane %v6036, %v6040
    %v6042 = vlaneseq
    %v6043 = vshrl.u32 %v6042, 7
    %v6044 = vsub.s32 1, %v6043
    %v6045 = vrot.slane %v6036, %v6044
    %v6046 = vlaneseq
    %v6047 = vshrl.u32 %v6046, 7
    %v6048 = vsub.s32 2, %v6047
    %v6049 = vrot.slane %v6036, %v6048
    %v6050 = vlaneseq
    %v6051 = vshrl.u32 %v6050, 7
    %v6052 = vsub.s32 3, %v6051
    %v6053 = vrot.slane %v6036, %v6052
    %v6054 = vlaneseq
    %v6055 = vshrl.u32 %v6054, 7
    %v6056 = vsub.s32 4, %v6055
    %v6057 = vrot.slane %v6036, %v6056
    %v6058 = vlaneseq
    %v6059 = vshrl.u32 %v6058, 7
    %v6060 = vsub.s32 5, %v6059
    %v6061 = vrot.slane %v6036, %v6060
    %v6062 = vlaneseq
    %v6063 = vshrl.u32 %v6062, 7
    %v6064 = vsub.s32 6, %v6063
    %v6065 = vrot.slane %v6036, %v6064
    %v6066 = vlaneseq
    %v6067 = vshrl.u32 %v6066, 7
    %v6068 = vsub.s32 7, %v6067
    %v6069 = vrot.slane %v6036, %v6068
    %v6206 = vunpack.c.l.b16 %v5908
    %v6207 = vunpack.c.h.b16 %v5908
    %v6208 = vunpack.c.l.b16 %v5909
    %v6209 = vunpack.c.h.b16 %v5909
    %v6210 = vunpack.c.l.b16 %v5910
    %v6211 = vunpack.c.h.b16 %v5910
    %v6212 = vunpack.c.l.b16 %v5911
    %v6213 = vunpack.c.h.b16 %v5911
    %v6214 = vunpack.c.l.b16 %v5912
    %v6215 = vunpack.c.h.b16 %v5912
    %v6216 = vunpack.c.l.b16 %v5913
    %v6217 = vunpack.c.h.b16 %v5913
    %v6218 = vunpack.c.l.b16 %v5914
    %v6219 = vunpack.c.h.b16 %v5914
    %v6220 = vunpack.c.l.b16 %v5915
    %v6221 = vunpack.c.h.b16 %v5915
    %v6222 = vunpack.c.l.b16 %v5916
    %v6223 = vunpack.c.h.b16 %v5916
    %v6224 = vunpack.c.l.b16 %v5917
    %v6225 = vunpack.c.h.b16 %v5917
    %v6226 = vunpack.c.l.b16 %v5918
    %v6227 = vunpack.c.h.b16 %v5918
    %v6228 = vunpack.c.l.b16 %v5919
    %v6229 = vunpack.c.h.b16 %v5919
    %v6230 = vunpack.c.l.b16 %v5920
    %v6231 = vunpack.c.h.b16 %v5920
    %v6232 = vunpack.c.l.b16 %v5921
    %v6233 = vunpack.c.h.b16 %v5921
    %v6234 = vunpack.c.l.b16 %v5922
    %v6235 = vunpack.c.h.b16 %v5922
    %v6236 = vunpack.c.l.b16 %v5923
    %v6237 = vunpack.c.h.b16 %v5923
    %v6238 = vunpack.c.l.b16 %v5924
    %v6239 = vunpack.c.h.b16 %v5924
    %v6240 = vunpack.c.l.b16 %v5925
    %v6241 = vunpack.c.h.b16 %v5925
    %v6242 = vunpack.c.l.b16 %v5926
    %v6243 = vunpack.c.h.b16 %v5926
    %v6244 = vunpack.c.l.b16 %v5927
    %v6245 = vunpack.c.h.b16 %v5927
    %v6246 = vunpack.c.l.b16 %v5928
    %v6247 = vunpack.c.h.b16 %v5928
    %v6248 = vunpack.c.l.b16 %v5929
    %v6249 = vunpack.c.h.b16 %v5929
    %v6250 = vunpack.c.l.b16 %v5930
    %v6251 = vunpack.c.h.b16 %v5930
    %v6252 = vunpack.c.l.b16 %v5931
    %v6253 = vunpack.c.h.b16 %v5931
    %v6254 = vunpack.c.l.b16 %v5932
    %v6255 = vunpack.c.h.b16 %v5932
    %v6256 = vunpack.c.l.b16 %v5933
    %v6257 = vunpack.c.h.b16 %v5933
    %v6258 = vunpack.c.l.b16 %v5934
    %v6259 = vunpack.c.h.b16 %v5934
    %v6260 = vunpack.c.l.b16 %v5935
    %v6261 = vunpack.c.h.b16 %v5935
    %v6262 = vunpack.c.l.b16 %v5936
    %v6263 = vunpack.c.h.b16 %v5936
    %v6264 = vunpack.c.l.b16 %v5937
    %v6265 = vunpack.c.h.b16 %v5937
    %v6266 = vunpack.c.l.b16 %v5938
    %v6267 = vunpack.c.h.b16 %v5938
    %v6268 = vunpack.c.l.b16 %v5939
    %v6269 = vunpack.c.h.b16 %v5939
    %v6270 = vunpack.c.l.b16 %v5940
    %v6271 = vunpack.c.h.b16 %v5940
    %v6272 = vunpack.c.l.b16 %v5941
    %v6273 = vunpack.c.h.b16 %v5941
    %v6274 = vunpack.c.l.b16 %v5942
    %v6275 = vunpack.c.h.b16 %v5942
    %v6276 = vunpack.c.l.b16 %v5943
    %v6277 = vunpack.c.h.b16 %v5943
    %v6278 = vunpack.c.l.b16 %v5944
    %v6279 = vunpack.c.h.b16 %v5944
    %v6280 = vunpack.c.l.b16 %v5945
    %v6281 = vunpack.c.h.b16 %v5945
    %v6282 = vunpack.c.l.b16 %v5946
    %v6283 = vunpack.c.h.b16 %v5946
    %v6284 = vunpack.c.l.b16 %v5947
    %v6285 = vunpack.c.h.b16 %v5947
    %v6286 = vunpack.c.l.b16 %v5948
    %v6287 = vunpack.c.h.b16 %v5948
    %v6288 = vunpack.c.l.b16 %v5949
    %v6289 = vunpack.c.h.b16 %v5949
    %v6290 = vunpack.c.l.b16 %v5950
    %v6291 = vunpack.c.h.b16 %v5950
    %v6292 = vunpack.c.l.b16 %v5951
    %v6293 = vunpack.c.h.b16 %v5951
    %v6294 = vunpack.c.l.b16 %v5952
    %v6295 = vunpack.c.h.b16 %v5952
    %v6296 = vunpack.c.l.b16 %v5953
    %v6297 = vunpack.c.h.b16 %v5953
    %v6298 = vunpack.c.l.b16 %v5954
    %v6299 = vunpack.c.h.b16 %v5954
    %v6300 = vunpack.c.l.b16 %v5955
    %v6301 = vunpack.c.h.b16 %v5955
    %v6302 = vunpack.c.l.b16 %v5956
    %v6303 = vunpack.c.h.b16 %v5956
    %v6304 = vunpack.c.l.b16 %v5957
    %v6305 = vunpack.c.h.b16 %v5957
    %v6306 = vunpack.c.l.b16 %v5958
    %v6307 = vunpack.c.h.b16 %v5958
    %v6308 = vunpack.c.l.b16 %v5959
    %v6309 = vunpack.c.h.b16 %v5959
    %v6310 = vunpack.c.l.b16 %v5960
    %v6311 = vunpack.c.h.b16 %v5960
    %v6312 = vunpack.c.l.b16 %v5961
    %v6313 = vunpack.c.h.b16 %v5961
    %v6314 = vunpack.c.l.b16 %v5962
    %v6315 = vunpack.c.h.b16 %v5962
    %v6316 = vunpack.c.l.b16 %v5963
    %v6317 = vunpack.c.h.b16 %v5963
    %v6318 = vunpack.c.l.b16 %v5964
    %v6319 = vunpack.c.h.b16 %v5964
    %v6320 = vunpack.c.l.b16 %v5965
    %v6321 = vunpack.c.h.b16 %v5965
    %v6322 = vunpack.c.l.b16 %v5966
    %v6323 = vunpack.c.h.b16 %v5966
    %v6324 = vunpack.c.l.b16 %v5967
    %v6325 = vunpack.c.h.b16 %v5967
    %v6326 = vunpack.c.l.b16 %v5968
    %v6327 = vunpack.c.h.b16 %v5968
    %v6328 = vunpack.c.l.b16 %v5969
    %v6329 = vunpack.c.h.b16 %v5969
    %v6330 = vunpack.c.l.b16 %v5970
    %v6331 = vunpack.c.h.b16 %v5970
    %v6332 = vunpack.c.l.b16 %v5971
    %v6333 = vunpack.c.h.b16 %v5971
    %v6334 = vunpack.c.l.b16 %v5972
    %v6335 = vunpack.c.h.b16 %v5972
    %v6336 = vunpack.c.l.b16 %v5973
    %v6337 = vunpack.c.h.b16 %v5973
    %v6338 = vunpack.c.l.b16 %v5974
    %v6339 = vunpack.c.h.b16 %v5974
    %v6340 = vunpack.c.l.b16 %v5975
    %v6341 = vunpack.c.h.b16 %v5975
    %v6342 = vunpack.c.l.b16 %v5976
    %v6343 = vunpack.c.h.b16 %v5976
    %v6344 = vunpack.c.l.b16 %v5977
    %v6345 = vunpack.c.h.b16 %v5977
    %v6346 = vunpack.c.l.b16 %v5978
    %v6347 = vunpack.c.h.b16 %v5978
    %v6348 = vunpack.c.l.b16 %v5979
    %v6349 = vunpack.c.h.b16 %v5979
    %v6350 = vunpack.c.l.b16 %v5980
    %v6351 = vunpack.c.h.b16 %v5980
    %v6352 = vunpack.c.l.b16 %v5981
    %v6353 = vunpack.c.h.b16 %v5981
    %v6354 = vunpack.c.l.b16 %v5982
    %v6355 = vunpack.c.h.b16 %v5982
    %v6356 = vunpack.c.l.b16 %v5983
    %v6357 = vunpack.c.h.b16 %v5983
    %v6358 = vunpack.c.l.b16 %v5984
    %v6359 = vunpack.c.h.b16 %v5984
    %v6360 = vunpack.c.l.b16 %v5985
    %v6361 = vunpack.c.h.b16 %v5985
    %v6362 = vunpack.c.l.b16 %v5986
    %v6363 = vunpack.c.h.b16 %v5986
    %v6364 = vunpack.c.l.b16 %v5987
    %v6365 = vunpack.c.h.b16 %v5987
    %v6366 = vunpack.c.l.b16 %v5988
    %v6367 = vunpack.c.h.b16 %v5988
    %v6368 = vunpack.c.l.b16 %v5989
    %v6369 = vunpack.c.h.b16 %v5989
    %v6370 = vunpack.c.l.b16 %v5990
    %v6371 = vunpack.c.h.b16 %v5990
    %v6372 = vunpack.c.l.b16 %v5991
    %v6373 = vunpack.c.h.b16 %v5991
    %v6374 = vunpack.c.l.b16 %v5992
    %v6375 = vunpack.c.h.b16 %v5992
    %v6376 = vunpack.c.l.b16 %v5993
    %v6377 = vunpack.c.h.b16 %v5993
    %v6378 = vunpack.c.l.b16 %v5994
    %v6379 = vunpack.c.h.b16 %v5994
    %v6380 = vunpack.c.l.b16 %v5995
    %v6381 = vunpack.c.h.b16 %v5995
    %v6382 = vunpack.c.l.b16 %v5996
    %v6383 = vunpack.c.h.b16 %v5996
    %v6384 = vunpack.c.l.b16 %v5997
    %v6385 = vunpack.c.h.b16 %v5997
    %v6386 = vunpack.c.l.b16 %v5998
    %v6387 = vunpack.c.h.b16 %v5998
    %v6388 = vunpack.c.l.b16 %v5999
    %v6389 = vunpack.c.h.b16 %v5999
    %v6390 = vunpack.c.l.b16 %v6000
    %v6391 = vunpack.c.h.b16 %v6000
    %v6392 = vunpack.c.l.b16 %v6001
    %v6393 = vunpack.c.h.b16 %v6001
    %v6394 = vunpack.c.l.b16 %v6002
    %v6395 = vunpack.c.h.b16 %v6002
    %v6396 = vunpack.c.l.b16 %v6003
    %v6397 = vunpack.c.h.b16 %v6003
    %v6398 = vunpack.c.l.b16 %v6004
    %v6399 = vunpack.c.h.b16 %v6004
    %v6400 = vunpack.c.l.b16 %v6005
    %v6401 = vunpack.c.h.b16 %v6005
    %v6402 = vunpack.c.l.b16 %v6006
    %v6403 = vunpack.c.h.b16 %v6006
    %v6404 = vunpack.c.l.b16 %v6007
    %v6405 = vunpack.c.h.b16 %v6007
    %v6406 = vunpack.c.l.b16 %v6008
    %v6407 = vunpack.c.h.b16 %v6008
    %v6408 = vunpack.c.l.b16 %v6009
    %v6409 = vunpack.c.h.b16 %v6009
    %v6410 = vunpack.c.l.b16 %v6010
    %v6411 = vunpack.c.h.b16 %v6010
    %v6412 = vunpack.c.l.b16 %v6011
    %v6413 = vunpack.c.h.b16 %v6011
    %v6414 = vunpack.c.l.b16 %v6012
    %v6415 = vunpack.c.h.b16 %v6012
    %v6416 = vunpack.c.l.b16 %v6013
    %v6417 = vunpack.c.h.b16 %v6013
    %v6418 = vunpack.c.l.b16 %v6014
    %v6419 = vunpack.c.h.b16 %v6014
    %v6420 = vunpack.c.l.b16 %v6015
    %v6421 = vunpack.c.h.b16 %v6015
    %v6422 = vunpack.c.l.b16 %v6016
    %v6423 = vunpack.c.h.b16 %v6016
    %v6424 = vunpack.c.l.b16 %v6017
    %v6425 = vunpack.c.h.b16 %v6017
    %v6426 = vunpack.c.l.b16 %v6018
    %v6427 = vunpack.c.h.b16 %v6018
    %v6428 = vunpack.c.l.b16 %v6019
    %v6429 = vunpack.c.h.b16 %v6019
    %v6430 = vunpack.c.l.b16 %v6020
    %v6431 = vunpack.c.h.b16 %v6020
    %v6432 = vunpack.c.l.b16 %v6021
    %v6433 = vunpack.c.h.b16 %v6021
    %v6434 = vunpack.c.l.b16 %v6022
    %v6435 = vunpack.c.h.b16 %v6022
    %v6436 = vunpack.c.l.b16 %v6023
    %v6437 = vunpack.c.h.b16 %v6023
    %v6438 = vunpack.c.l.b16 %v6024
    %v6439 = vunpack.c.h.b16 %v6024
    %v6440 = vunpack.c.l.b16 %v6025
    %v6441 = vunpack.c.h.b16 %v6025
    %v6442 = vunpack.c.l.b16 %v6026
    %v6443 = vunpack.c.h.b16 %v6026
    %v6444 = vunpack.c.l.b16 %v6027
    %v6445 = vunpack.c.h.b16 %v6027
    %v6446 = vunpack.c.l.b16 %v6028
    %v6447 = vunpack.c.h.b16 %v6028
    %v6448 = vunpack.c.l.b16 %v6029
    %v6449 = vunpack.c.h.b16 %v6029
    %v6450 = vunpack.c.l.b16 %v6030
    %v6451 = vunpack.c.h.b16 %v6030
    %v6452 = vunpack.c.l.b16 %v6031
    %v6453 = vunpack.c.h.b16 %v6031
    %v6454 = vunpack.c.l.b16 %v6032
    %v6455 = vunpack.c.h.b16 %v6032
    %v6456 = vunpack.c.l.b16 %v6033
    %v6457 = vunpack.c.h.b16 %v6033
    %v6458 = vunpack.c.l.b16 %v6034
    %v6459 = vunpack.c.h.b16 %v6034
    %v6460 = vunpack.c.l.b16 %v6035
    %v6461 = vunpack.c.h.b16 %v6035
    %v6462 = vpack.c.b16 %v6214, %v6206
    %v6463 = vpack.c.b16 %v6215, %v6207
    %v6464 = vpack.c.b16 %v6216, %v6208
    %v6465 = vpack.c.b16 %v6217, %v6209
    %v6466 = vpack.c.b16 %v6218, %v6210
    %v6467 = vpack.c.b16 %v6219, %v6211
    %v6468 = vpack.c.b16 %v6220, %v6212
    %v6469 = vpack.c.b16 %v6221, %v6213
    %v6470 = vpack.c.b16 %v6230, %v6222
    %v6471 = vpack.c.b16 %v6231, %v6223
    %v6472 = vpack.c.b16 %v6232, %v6224
    %v6473 = vpack.c.b16 %v6233, %v6225
    %v6474 = vpack.c.b16 %v6234, %v6226
    %v6475 = vpack.c.b16 %v6235, %v6227
    %v6476 = vpack.c.b16 %v6236, %v6228
    %v6477 = vpack.c.b16 %v6237, %v6229
    %v6478 = vpack.c.b16 %v6246, %v6238
    %v6479 = vpack.c.b16 %v6247, %v6239
    %v6480 = vpack.c.b16 %v6248, %v6240
    %v6481 = vpack.c.b16 %v6249, %v6241
    %v6482 = vpack.c.b16 %v6250, %v6242
    %v6483 = vpack.c.b16 %v6251, %v6243
    %v6484 = vpack.c.b16 %v6252, %v6244
    %v6485 = vpack.c.b16 %v6253, %v6245
    %v6486 = vpack.c.b16 %v6262, %v6254
    %v6487 = vpack.c.b16 %v6263, %v6255
    %v6488 = vpack.c.b16 %v6264, %v6256
    %v6489 = vpack.c.b16 %v6265, %v6257
    %v6490 = vpack.c.b16 %v6266, %v6258
    %v6491 = vpack.c.b16 %v6267, %v6259
    %v6492 = vpack.c.b16 %v6268, %v6260
    %v6493 = vpack.c.b16 %v6269, %v6261
    %v6494 = vpack.c.b16 %v6278, %v6270
    %v6495 = vpack.c.b16 %v6279, %v6271
    %v6496 = vpack.c.b16 %v6280, %v6272
    %v6497 = vpack.c.b16 %v6281, %v6273
    %v6498 = vpack.c.b16 %v6282, %v6274
    %v6499 = vpack.c.b16 %v6283, %v6275
    %v6500 = vpack.c.b16 %v6284, %v6276
    %v6501 = vpack.c.b16 %v6285, %v6277
    %v6502 = vpack.c.b16 %v6294, %v6286
    %v6503 = vpack.c.b16 %v6295, %v6287
    %v6504 = vpack.c.b16 %v6296, %v6288
    %v6505 = vpack.c.b16 %v6297, %v6289
    %v6506 = vpack.c.b16 %v6298, %v6290
    %v6507 = vpack.c.b16 %v6299, %v6291
    %v6508 = vpack.c.b16 %v6300, %v6292
    %v6509 = vpack.c.b16 %v6301, %v6293
    %v6510 = vpack.c.b16 %v6310, %v6302
    %v6511 = vpack.c.b16 %v6311, %v6303
    %v6512 = vpack.c.b16 %v6312, %v6304
    %v6513 = vpack.c.b16 %v6313, %v6305
    %v6514 = vpack.c.b16 %v6314, %v6306
    %v6515 = vpack.c.b16 %v6315, %v6307
    %v6516 = vpack.c.b16 %v6316, %v6308
    %v6517 = vpack.c.b16 %v6317, %v6309
    %v6518 = vpack.c.b16 %v6326, %v6318
    %v6519 = vpack.c.b16 %v6327, %v6319
    %v6520 = vpack.c.b16 %v6328, %v6320
    %v6521 = vpack.c.b16 %v6329, %v6321
    %v6522 = vpack.c.b16 %v6330, %v6322
    %v6523 = vpack.c.b16 %v6331, %v6323
    %v6524 = vpack.c.b16 %v6332, %v6324
    %v6525 = vpack.c.b16 %v6333, %v6325
    %v6526 = vpack.c.b16 %v6342, %v6334
    %v6527 = vpack.c.b16 %v6343, %v6335
    %v6528 = vpack.c.b16 %v6344, %v6336
    %v6529 = vpack.c.b16 %v6345, %v6337
    %v6530 = vpack.c.b16 %v6346, %v6338
    %v6531 = vpack.c.b16 %v6347, %v6339
    %v6532 = vpack.c.b16 %v6348, %v6340
    %v6533 = vpack.c.b16 %v6349, %v6341
    %v6534 = vpack.c.b16 %v6358, %v6350
    %v6535 = vpack.c.b16 %v6359, %v6351
    %v6536 = vpack.c.b16 %v6360, %v6352
    %v6537 = vpack.c.b16 %v6361, %v6353
    %v6538 = vpack.c.b16 %v6362, %v6354
    %v6539 = vpack.c.b16 %v6363, %v6355
    %v6540 = vpack.c.b16 %v6364, %v6356
    %v6541 = vpack.c.b16 %v6365, %v6357
    %v6542 = vpack.c.b16 %v6374, %v6366
    %v6543 = vpack.c.b16 %v6375, %v6367
    %v6544 = vpack.c.b16 %v6376, %v6368
    %v6545 = vpack.c.b16 %v6377, %v6369
    %v6546 = vpack.c.b16 %v6378, %v6370
    %v6547 = vpack.c.b16 %v6379, %v6371
    %v6548 = vpack.c.b16 %v6380, %v6372
    %v6549 = vpack.c.b16 %v6381, %v6373
    %v6550 = vpack.c.b16 %v6390, %v6382
    %v6551 = vpack.c.b16 %v6391, %v6383
    %v6552 = vpack.c.b16 %v6392, %v6384
    %v6553 = vpack.c.b16 %v6393, %v6385
    %v6554 = vpack.c.b16 %v6394, %v6386
    %v6555 = vpack.c.b16 %v6395, %v6387
    %v6556 = vpack.c.b16 %v6396, %v6388
    %v6557 = vpack.c.b16 %v6397, %v6389
    %v6558 = vpack.c.b16 %v6406, %v6398
    %v6559 = vpack.c.b16 %v6407, %v6399
    %v6560 = vpack.c.b16 %v6408, %v6400
    %v6561 = vpack.c.b16 %v6409, %v6401
    %v6562 = vpack.c.b16 %v6410, %v6402
    %v6563 = vpack.c.b16 %v6411, %v6403
    %v6564 = vpack.c.b16 %v6412, %v6404
    %v6565 = vpack.c.b16 %v6413, %v6405
    %v6566 = vpack.c.b16 %v6422, %v6414
    %v6567 = vpack.c.b16 %v6423, %v6415
    %v6568 = vpack.c.b16 %v6424, %v6416
    %v6569 = vpack.c.b16 %v6425, %v6417
    %v6570 = vpack.c.b16 %v6426, %v6418
    %v6571 = vpack.c.b16 %v6427, %v6419
    %v6572 = vpack.c.b16 %v6428, %v6420
    %v6573 = vpack.c.b16 %v6429, %v6421
    %v6574 = vpack.c.b16 %v6438, %v6430
    %v6575 = vpack.c.b16 %v6439, %v6431
    %v6576 = vpack.c.b16 %v6440, %v6432
    %v6577 = vpack.c.b16 %v6441, %v6433
    %v6578 = vpack.c.b16 %v6442, %v6434
    %v6579 = vpack.c.b16 %v6443, %v6435
    %v6580 = vpack.c.b16 %v6444, %v6436
    %v6581 = vpack.c.b16 %v6445, %v6437
    %v6582 = vpack.c.b16 %v6454, %v6446
    %v6583 = vpack.c.b16 %v6455, %v6447
    %v6584 = vpack.c.b16 %v6456, %v6448
    %v6585 = vpack.c.b16 %v6457, %v6449
    %v6586 = vpack.c.b16 %v6458, %v6450
    %v6587 = vpack.c.b16 %v6459, %v6451
    %v6588 = vpack.c.b16 %v6460, %v6452
    %v6589 = vpack.c.b16 %v6461, %v6453
    %6718 = vmatprep.subr.bf16.mxu0 %v6463
    %6719 = vmatpush1.bf16.msra.mxu0 %v6462
    %6720 = vmatprep.subr.bf16.mxu0 %v6471
    %6721 = vmatpush1.bf16.msra.mxu0 %v6470
    %6722 = vmatprep.subr.bf16.mxu0 %v6479
    %6723 = vmatpush1.bf16.msra.mxu0 %v6478
    %6724 = vmatprep.subr.bf16.mxu0 %v6487
    %6725 = vmatpush1.bf16.msra.mxu0 %v6486
    %6726 = vmatprep.subr.bf16.mxu0 %v6495
    %6727 = vmatpush1.bf16.msra.mxu0 %v6494
    %6728 = vmatprep.subr.bf16.mxu0 %v6503
    %6729 = vmatpush1.bf16.msra.mxu0 %v6502
    %6730 = vmatprep.subr.bf16.mxu0 %v6511
    %6731 = vmatpush1.bf16.msra.mxu0 %v6510
    %6732 = vmatprep.subr.bf16.mxu0 %v6519
    %6733 = vmatpush1.bf16.msra.mxu0 %v6518
    %6734 = vmatprep.subr.bf16.mxu0 %v6527
    %6735 = vmatpush1.bf16.msra.mxu0 %v6526
    %6736 = vmatprep.subr.bf16.mxu0 %v6535
    %6737 = vmatpush1.bf16.msra.mxu0 %v6534
    %6738 = vmatprep.subr.bf16.mxu0 %v6543
    %6739 = vmatpush1.bf16.msra.mxu0 %v6542
    %6740 = vmatprep.subr.bf16.mxu0 %v6551
    %6741 = vmatpush1.bf16.msra.mxu0 %v6550
    %6742 = vmatprep.subr.bf16.mxu0 %v6559
    %6743 = vmatpush1.bf16.msra.mxu0 %v6558
    %6744 = vmatprep.subr.bf16.mxu0 %v6567
    %6745 = vmatpush1.bf16.msra.mxu0 %v6566
    %6746 = vmatprep.subr.bf16.mxu0 %v6575
    %6747 = vmatpush1.bf16.msra.mxu0 %v6574
    %6748 = vmatprep.subr.bf16.mxu0 %v6583
    %6749 = vmatpush1.bf16.msra.mxu0 %v6582
    %6750 = vmatprep.mubr.bf16.mxu0 %v5907
    %6751 = vmatmul.mubr.bf16.gmra.mrb[0].mxu0 %v5906
    %v6752 = vpop.f32.mrb[0].mxu0
    %v6753 = vadd.f32 %v6041, %v6752
    %v6754 = vpop.f32.mrb[0].mxu0
    %v6755 = vadd.f32 %v6045, %v6754
    %v6756 = vpop.f32.mrb[0].mxu0
    %v6757 = vpop.f32.mrb[0].mxu0
    %6758 = vdwg.mxu0
    %6759 = vmatprep.subr.bf16.mxu0 %v6465
    %6760 = vmatpush1.bf16.msra.mxu0 %v6464
    %6761 = vmatprep.subr.bf16.mxu0 %v6473
    %6762 = vmatpush1.bf16.msra.mxu0 %v6472
    %6763 = vmatprep.subr.bf16.mxu0 %v6481
    %6764 = vmatpush1.bf16.msra.mxu0 %v6480
    %6765 = vmatprep.subr.bf16.mxu0 %v6489
    %6766 = vmatpush1.bf16.msra.mxu0 %v6488
    %6767 = vmatprep.subr.bf16.mxu0 %v6497
    %6768 = vmatpush1.bf16.msra.mxu0 %v6496
    %6769 = vmatprep.subr.bf16.mxu0 %v6505
    %6770 = vmatpush1.bf16.msra.mxu0 %v6504
    %6771 = vmatprep.subr.bf16.mxu0 %v6513
    %6772 = vmatpush1.bf16.msra.mxu0 %v6512
    %6773 = vmatprep.subr.bf16.mxu0 %v6521
    %6774 = vmatpush1.bf16.msra.mxu0 %v6520
    %6775 = vmatprep.subr.bf16.mxu0 %v6529
    %6776 = vmatpush1.bf16.msra.mxu0 %v6528
    %6777 = vmatprep.subr.bf16.mxu0 %v6537
    %6778 = vmatpush1.bf16.msra.mxu0 %v6536
    %6779 = vmatprep.subr.bf16.mxu0 %v6545
    %6780 = vmatpush1.bf16.msra.mxu0 %v6544
    %6781 = vmatprep.subr.bf16.mxu0 %v6553
    %6782 = vmatpush1.bf16.msra.mxu0 %v6552
    %6783 = vmatprep.subr.bf16.mxu0 %v6561
    %6784 = vmatpush1.bf16.msra.mxu0 %v6560
    %6785 = vmatprep.subr.bf16.mxu0 %v6569
    %6786 = vmatpush1.bf16.msra.mxu0 %v6568
    %6787 = vmatprep.subr.bf16.mxu0 %v6577
    %6788 = vmatpush1.bf16.msra.mxu0 %v6576
    %6789 = vmatprep.subr.bf16.mxu0 %v6585
    %6790 = vmatpush1.bf16.msra.mxu0 %v6584
    %6791 = vmatprep.mubr.bf16.mxu0 %v5907
    %6792 = vmatmul.mubr.bf16.gmra.mrb[0].mxu0 %v5906
    %v6793 = vpop.f32.mrb[0].mxu0
    %v6794 = vadd.f32 %v6049, %v6793
    %v6795 = vpop.f32.mrb[0].mxu0
    %v6796 = vadd.f32 %v6053, %v6795
    %v6797 = vpop.f32.mrb[0].mxu0
    %v6798 = vpop.f32.mrb[0].mxu0
    %6799 = vdwg.mxu0
    %6800 = vmatprep.subr.bf16.mxu0 %v6467
    %6801 = vmatpush1.bf16.msra.mxu0 %v6466
    %6802 = vmatprep.subr.bf16.mxu0 %v6475
    %6803 = vmatpush1.bf16.msra.mxu0 %v6474
    %6804 = vmatprep.subr.bf16.mxu0 %v6483
    %6805 = vmatpush1.bf16.msra.mxu0 %v6482
    %6806 = vmatprep.subr.bf16.mxu0 %v6491
    %6807 = vmatpush1.bf16.msra.mxu0 %v6490
    %6808 = vmatprep.subr.bf16.mxu0 %v6499
    %6809 = vmatpush1.bf16.msra.mxu0 %v6498
    %6810 = vmatprep.subr.bf16.mxu0 %v6507
    %6811 = vmatpush1.bf16.msra.mxu0 %v6506
    %6812 = vmatprep.subr.bf16.mxu0 %v6515
    %6813 = vmatpush1.bf16.msra.mxu0 %v6514
    %6814 = vmatprep.subr.bf16.mxu0 %v6523
    %6815 = vmatpush1.bf16.msra.mxu0 %v6522
    %6816 = vmatprep.subr.bf16.mxu0 %v6531
    %6817 = vmatpush1.bf16.msra.mxu0 %v6530
    %6818 = vmatprep.subr.bf16.mxu0 %v6539
    %6819 = vmatpush1.bf16.msra.mxu0 %v6538
    %6820 = vmatprep.subr.bf16.mxu0 %v6547
    %6821 = vmatpush1.bf16.msra.mxu0 %v6546
    %6822 = vmatprep.subr.bf16.mxu0 %v6555
    %6823 = vmatpush1.bf16.msra.mxu0 %v6554
    %6824 = vmatprep.subr.bf16.mxu0 %v6563
    %6825 = vmatpush1.bf16.msra.mxu0 %v6562
    %6826 = vmatprep.subr.bf16.mxu0 %v6571
    %6827 = vmatpush1.bf16.msra.mxu0 %v6570
    %6828 = vmatprep.subr.bf16.mxu0 %v6579
    %6829 = vmatpush1.bf16.msra.mxu0 %v6578
    %6830 = vmatprep.subr.bf16.mxu0 %v6587
    %6831 = vmatpush1.bf16.msra.mxu0 %v6586
    %6832 = vmatprep.mubr.bf16.mxu0 %v5907
    %6833 = vmatmul.mubr.bf16.gmra.mrb[0].mxu0 %v5906
    %v6834 = vpop.f32.mrb[0].mxu0
    %v6835 = vadd.f32 %v6057, %v6834
    %v6836 = vpop.f32.mrb[0].mxu0
    %v6837 = vadd.f32 %v6061, %v6836
    %v6838 = vpop.f32.mrb[0].mxu0
    %v6839 = vpop.f32.mrb[0].mxu0
    %6840 = vdwg.mxu0
    %6841 = vmatprep.subr.bf16.mxu0 %v6469
    %6842 = vmatpush1.bf16.msra.mxu0 %v6468
    %6843 = vmatprep.subr.bf16.mxu0 %v6477
    %6844 = vmatpush1.bf16.msra.mxu0 %v6476
    %6845 = vmatprep.subr.bf16.mxu0 %v6485
    %6846 = vmatpush1.bf16.msra.mxu0 %v6484
    %6847 = vmatprep.subr.bf16.mxu0 %v6493
    %6848 = vmatpush1.bf16.msra.mxu0 %v6492
    %6849 = vmatprep.subr.bf16.mxu0 %v6501
    %6850 = vmatpush1.bf16.msra.mxu0 %v6500
    %6851 = vmatprep.subr.bf16.mxu0 %v6509
    %6852 = vmatpush1.bf16.msra.mxu0 %v6508
    %6853 = vmatprep.subr.bf16.mxu0 %v6517
    %6854 = vmatpush1.bf16.msra.mxu0 %v6516
    %6855 = vmatprep.subr.bf16.mxu0 %v6525
    %6856 = vmatpush1.bf16.msra.mxu0 %v6524
    %6857 = vmatprep.subr.bf16.mxu0 %v6533
    %6858 = vmatpush1.bf16.msra.mxu0 %v6532
    %6859 = vmatprep.subr.bf16.mxu0 %v6541
    %6860 = vmatpush1.bf16.msra.mxu0 %v6540
    %6861 = vmatprep.subr.bf16.mxu0 %v6549
    %6862 = vmatpush1.bf16.msra.mxu0 %v6548
    %6863 = vmatprep.subr.bf16.mxu0 %v6557
    %6864 = vmatpush1.bf16.msra.mxu0 %v6556
    %6865 = vmatprep.subr.bf16.mxu0 %v6565
    %6866 = vmatpush1.bf16.msra.mxu0 %v6564
    %6867 = vmatprep.subr.bf16.mxu0 %v6573
    %6868 = vmatpush1.bf16.msra.mxu0 %v6572
    %6869 = vmatprep.subr.bf16.mxu0 %v6581
    %6870 = vmatpush1.bf16.msra.mxu0 %v6580
    %6871 = vmatprep.subr.bf16.mxu0 %v6589
    %6872 = vmatpush1.bf16.msra.mxu0 %v6588
    %6873 = vmatprep.mubr.bf16.mxu0 %v5907
    %6874 = vmatmul.mubr.bf16.gmra.mrb[0].mxu0 %v5906
    %v6875 = vpop.f32.mrb[0].mxu0
    %v6876 = vadd.f32 %v6065, %v6875
    %v6877 = vpop.f32.mrb[0].mxu0
    %v6878 = vadd.f32 %v6069, %v6877
    %v6879 = vpop.f32.mrb[0].mxu0
    %v6880 = vpop.f32.mrb[0].mxu0
    %6881 = vdwg.mxu0
    %v6882 = vpack.c.bf16 %v6753, %v6753
    %v6883 = vpack.c.bf16 %v6755, %v6755
    %v6884 = vpack.c.bf16 %v6794, %v6794
    %v6885 = vpack.c.bf16 %v6796, %v6796
    %v6886 = vpack.c.bf16 %v6835, %v6835
    %v6887 = vpack.c.bf16 %v6837, %v6837
    %v6888 = vpack.c.bf16 %v6876, %v6876
    %v6889 = vpack.c.bf16 %v6878, %v6878
    %v6890 = vld [vmem:[#allocation14] sm:$0xff]
    %v6891 = vld [vmem:[#allocation14 + $0x8] sm:$0xff]
    %v6892 = vld [vmem:[#allocation14 + $0x10] sm:$0xff]
    %v6893 = vld [vmem:[#allocation14 + $0x18] sm:$0xff]
    %v6894 = vld [vmem:[#allocation14 + $0x20] sm:$0xff]
    %v6895 = vld [vmem:[#allocation14 + $0x28] sm:$0xff]
    %v6896 = vld [vmem:[#allocation14 + $0x30] sm:$0xff]
    %v6897 = vld [vmem:[#allocation14 + $0x38] sm:$0xff]
    %v6898 = vld [vmem:[#allocation14 + $0x40] sm:$0xff]
    %v6899 = vld [vmem:[#allocation14 + $0x48] sm:$0xff]
    %v6900 = vld [vmem:[#allocation14 + $0x50] sm:$0xff]
    %v6901 = vld [vmem:[#allocation14 + $0x58] sm:$0xff]
    %v6902 = vld [vmem:[#allocation14 + $0x60] sm:$0xff]
    %v6903 = vld [vmem:[#allocation14 + $0x68] sm:$0xff]
    %v6904 = vld [vmem:[#allocation14 + $0x70] sm:$0xff]
    %v6905 = vld [vmem:[#allocation14 + $0x78] sm:$0xff]
    %v6906 = vld [vmem:[#allocation14 + $0x80] sm:$0xff]
    %v6907 = vld [vmem:[#allocation14 + $0x88] sm:$0xff]
    %v6908 = vld [vmem:[#allocation14 + $0x90] sm:$0xff]
    %v6909 = vld [vmem:[#allocation14 + $0x98] sm:$0xff]
    %v6910 = vld [vmem:[#allocation14 + $0xa0] sm:$0xff]
    %v6911 = vld [vmem:[#allocation14 + $0xa8] sm:$0xff]
    %v6912 = vld [vmem:[#allocation14 + $0xb0] sm:$0xff]
    %v6913 = vld [vmem:[#allocation14 + $0xb8] sm:$0xff]
    %v6914 = vld [vmem:[#allocation14 + $0xc0] sm:$0xff]
    %v6915 = vld [vmem:[#allocation14 + $0xc8] sm:$0xff]
    %v6916 = vld [vmem:[#allocation14 + $0xd0] sm:$0xff]
    %v6917 = vld [vmem:[#allocation14 + $0xd8] sm:$0xff]
    %v6918 = vld [vmem:[#allocation14 + $0xe0] sm:$0xff]
    %v6919 = vld [vmem:[#allocation14 + $0xe8] sm:$0xff]
    %v6920 = vld [vmem:[#allocation14 + $0xf0] sm:$0xff]
    %v6921 = vld [vmem:[#allocation14 + $0xf8] sm:$0xff]
    %v6922 = vld [vmem:[#allocation14 + $0x100] sm:$0xff]
    %v6923 = vld [vmem:[#allocation14 + $0x108] sm:$0xff]
    %v6924 = vld [vmem:[#allocation14 + $0x110] sm:$0xff]
    %v6925 = vld [vmem:[#allocation14 + $0x118] sm:$0xff]
    %v6926 = vld [vmem:[#allocation14 + $0x120] sm:$0xff]
    %v6927 = vld [vmem:[#allocation14 + $0x128] sm:$0xff]
    %v6928 = vld [vmem:[#allocation14 + $0x130] sm:$0xff]
    %v6929 = vld [vmem:[#allocation14 + $0x138] sm:$0xff]
    %v6930 = vld [vmem:[#allocation14 + $0x140] sm:$0xff]
    %v6931 = vld [vmem:[#allocation14 + $0x148] sm:$0xff]
    %v6932 = vld [vmem:[#allocation14 + $0x150] sm:$0xff]
    %v6933 = vld [vmem:[#allocation14 + $0x158] sm:$0xff]
    %v6934 = vld [vmem:[#allocation14 + $0x160] sm:$0xff]
    %v6935 = vld [vmem:[#allocation14 + $0x168] sm:$0xff]
    %v6936 = vld [vmem:[#allocation14 + $0x170] sm:$0xff]
    %v6937 = vld [vmem:[#allocation14 + $0x178] sm:$0xff]
    %v6938 = vld [vmem:[#allocation14 + $0x180] sm:$0xff]
    %v6939 = vld [vmem:[#allocation14 + $0x188] sm:$0xff]
    %v6940 = vld [vmem:[#allocation14 + $0x190] sm:$0xff]
    %v6941 = vld [vmem:[#allocation14 + $0x198] sm:$0xff]
    %v6942 = vld [vmem:[#allocation14 + $0x1a0] sm:$0xff]
    %v6943 = vld [vmem:[#allocation14 + $0x1a8] sm:$0xff]
    %v6944 = vld [vmem:[#allocation14 + $0x1b0] sm:$0xff]
    %v6945 = vld [vmem:[#allocation14 + $0x1b8] sm:$0xff]
    %v6946 = vld [vmem:[#allocation14 + $0x1c0] sm:$0xff]
    %v6947 = vld [vmem:[#allocation14 + $0x1c8] sm:$0xff]
    %v6948 = vld [vmem:[#allocation14 + $0x1d0] sm:$0xff]
    %v6949 = vld [vmem:[#allocation14 + $0x1d8] sm:$0xff]
    %v6950 = vld [vmem:[#allocation14 + $0x1e0] sm:$0xff]
    %v6951 = vld [vmem:[#allocation14 + $0x1e8] sm:$0xff]
    %v6952 = vld [vmem:[#allocation14 + $0x1f0] sm:$0xff]
    %v6953 = vld [vmem:[#allocation14 + $0x1f8] sm:$0xff]
    %v6954 = vld [vmem:[#allocation14 + $0x200] sm:$0xff]
    %v6955 = vld [vmem:[#allocation14 + $0x208] sm:$0xff]
    %v6956 = vld [vmem:[#allocation14 + $0x210] sm:$0xff]
    %v6957 = vld [vmem:[#allocation14 + $0x218] sm:$0xff]
    %v6958 = vld [vmem:[#allocation14 + $0x220] sm:$0xff]
    %v6959 = vld [vmem:[#allocation14 + $0x228] sm:$0xff]
    %v6960 = vld [vmem:[#allocation14 + $0x230] sm:$0xff]
    %v6961 = vld [vmem:[#allocation14 + $0x238] sm:$0xff]
    %v6962 = vld [vmem:[#allocation14 + $0x240] sm:$0xff]
    %v6963 = vld [vmem:[#allocation14 + $0x248] sm:$0xff]
    %v6964 = vld [vmem:[#allocation14 + $0x250] sm:$0xff]
    %v6965 = vld [vmem:[#allocation14 + $0x258] sm:$0xff]
    %v6966 = vld [vmem:[#allocation14 + $0x260] sm:$0xff]
    %v6967 = vld [vmem:[#allocation14 + $0x268] sm:$0xff]
    %v6968 = vld [vmem:[#allocation14 + $0x270] sm:$0xff]
    %v6969 = vld [vmem:[#allocation14 + $0x278] sm:$0xff]
    %v6970 = vld [vmem:[#allocation14 + $0x280] sm:$0xff]
    %v6971 = vld [vmem:[#allocation14 + $0x288] sm:$0xff]
    %v6972 = vld [vmem:[#allocation14 + $0x290] sm:$0xff]
    %v6973 = vld [vmem:[#allocation14 + $0x298] sm:$0xff]
    %v6974 = vld [vmem:[#allocation14 + $0x2a0] sm:$0xff]
    %v6975 = vld [vmem:[#allocation14 + $0x2a8] sm:$0xff]
    %v6976 = vld [vmem:[#allocation14 + $0x2b0] sm:$0xff]
    %v6977 = vld [vmem:[#allocation14 + $0x2b8] sm:$0xff]
    %v6978 = vld [vmem:[#allocation14 + $0x2c0] sm:$0xff]
    %v6979 = vld [vmem:[#allocation14 + $0x2c8] sm:$0xff]
    %v6980 = vld [vmem:[#allocation14 + $0x2d0] sm:$0xff]
    %v6981 = vld [vmem:[#allocation14 + $0x2d8] sm:$0xff]
    %v6982 = vld [vmem:[#allocation14 + $0x2e0] sm:$0xff]
    %v6983 = vld [vmem:[#allocation14 + $0x2e8] sm:$0xff]
    %v6984 = vld [vmem:[#allocation14 + $0x2f0] sm:$0xff]
    %v6985 = vld [vmem:[#allocation14 + $0x2f8] sm:$0xff]
    %v6986 = vld [vmem:[#allocation14 + $0x300] sm:$0xff]
    %v6987 = vld [vmem:[#allocation14 + $0x308] sm:$0xff]
    %v6988 = vld [vmem:[#allocation14 + $0x310] sm:$0xff]
    %v6989 = vld [vmem:[#allocation14 + $0x318] sm:$0xff]
    %v6990 = vld [vmem:[#allocation14 + $0x320] sm:$0xff]
    %v6991 = vld [vmem:[#allocation14 + $0x328] sm:$0xff]
    %v6992 = vld [vmem:[#allocation14 + $0x330] sm:$0xff]
    %v6993 = vld [vmem:[#allocation14 + $0x338] sm:$0xff]
    %v6994 = vld [vmem:[#allocation14 + $0x340] sm:$0xff]
    %v6995 = vld [vmem:[#allocation14 + $0x348] sm:$0xff]
    %v6996 = vld [vmem:[#allocation14 + $0x350] sm:$0xff]
    %v6997 = vld [vmem:[#allocation14 + $0x358] sm:$0xff]
    %v6998 = vld [vmem:[#allocation14 + $0x360] sm:$0xff]
    %v6999 = vld [vmem:[#allocation14 + $0x368] sm:$0xff]
    %v7000 = vld [vmem:[#allocation14 + $0x370] sm:$0xff]
    %v7001 = vld [vmem:[#allocation14 + $0x378] sm:$0xff]
    %v7002 = vld [vmem:[#allocation14 + $0x380] sm:$0xff]
    %v7003 = vld [vmem:[#allocation14 + $0x388] sm:$0xff]
    %v7004 = vld [vmem:[#allocation14 + $0x390] sm:$0xff]
    %v7005 = vld [vmem:[#allocation14 + $0x398] sm:$0xff]
    %v7006 = vld [vmem:[#allocation14 + $0x3a0] sm:$0xff]
    %v7007 = vld [vmem:[#allocation14 + $0x3a8] sm:$0xff]
    %v7008 = vld [vmem:[#allocation14 + $0x3b0] sm:$0xff]
    %v7009 = vld [vmem:[#allocation14 + $0x3b8] sm:$0xff]
    %v7010 = vld [vmem:[#allocation14 + $0x3c0] sm:$0xff]
    %v7011 = vld [vmem:[#allocation14 + $0x3c8] sm:$0xff]
    %v7012 = vld [vmem:[#allocation14 + $0x3d0] sm:$0xff]
    %v7013 = vld [vmem:[#allocation14 + $0x3d8] sm:$0xff]
    %v7014 = vld [vmem:[#allocation14 + $0x3e0] sm:$0xff]
    %v7015 = vld [vmem:[#allocation14 + $0x3e8] sm:$0xff]
    %v7016 = vld [vmem:[#allocation14 + $0x3f0] sm:$0xff]
    %v7017 = vld [vmem:[#allocation14 + $0x3f8] sm:$0xff]
    %v7018 = vld [vmem:[%s14] sm:$0x3]
    %v7020 = vlaneseq
    %v7021 = vshrl.u32 %v7020, 7
    %v7022 = vsub.s32 0, %v7021
    %v7023 = vrot.slane %v7018, %v7022
    %v7024 = vlaneseq
    %v7025 = vshrl.u32 %v7024, 7
    %v7026 = vsub.s32 1, %v7025
    %v7027 = vrot.slane %v7018, %v7026
    %v7158 = vunpack.c.l.b16 %v6890
    %v7159 = vunpack.c.h.b16 %v6890
    %v7160 = vunpack.c.l.b16 %v6891
    %v7161 = vunpack.c.h.b16 %v6891
    %v7162 = vunpack.c.l.b16 %v6892
    %v7163 = vunpack.c.h.b16 %v6892
    %v7164 = vunpack.c.l.b16 %v6893
    %v7165 = vunpack.c.h.b16 %v6893
    %v7166 = vunpack.c.l.b16 %v6894
    %v7167 = vunpack.c.h.b16 %v6894
    %v7168 = vunpack.c.l.b16 %v6895
    %v7169 = vunpack.c.h.b16 %v6895
    %v7170 = vunpack.c.l.b16 %v6896
    %v7171 = vunpack.c.h.b16 %v6896
    %v7172 = vunpack.c.l.b16 %v6897
    %v7173 = vunpack.c.h.b16 %v6897
    %v7174 = vunpack.c.l.b16 %v6898
    %v7175 = vunpack.c.h.b16 %v6898
    %v7176 = vunpack.c.l.b16 %v6899
    %v7177 = vunpack.c.h.b16 %v6899
    %v7178 = vunpack.c.l.b16 %v6900
    %v7179 = vunpack.c.h.b16 %v6900
    %v7180 = vunpack.c.l.b16 %v6901
    %v7181 = vunpack.c.h.b16 %v6901
    %v7182 = vunpack.c.l.b16 %v6902
    %v7183 = vunpack.c.h.b16 %v6902
    %v7184 = vunpack.c.l.b16 %v6903
    %v7185 = vunpack.c.h.b16 %v6903
    %v7186 = vunpack.c.l.b16 %v6904
    %v7187 = vunpack.c.h.b16 %v6904
    %v7188 = vunpack.c.l.b16 %v6905
    %v7189 = vunpack.c.h.b16 %v6905
    %v7190 = vunpack.c.l.b16 %v6906
    %v7191 = vunpack.c.h.b16 %v6906
    %v7192 = vunpack.c.l.b16 %v6907
    %v7193 = vunpack.c.h.b16 %v6907
    %v7194 = vunpack.c.l.b16 %v6908
    %v7195 = vunpack.c.h.b16 %v6908
    %v7196 = vunpack.c.l.b16 %v6909
    %v7197 = vunpack.c.h.b16 %v6909
    %v7198 = vunpack.c.l.b16 %v6910
    %v7199 = vunpack.c.h.b16 %v6910
    %v7200 = vunpack.c.l.b16 %v6911
    %v7201 = vunpack.c.h.b16 %v6911
    %v7202 = vunpack.c.l.b16 %v6912
    %v7203 = vunpack.c.h.b16 %v6912
    %v7204 = vunpack.c.l.b16 %v6913
    %v7205 = vunpack.c.h.b16 %v6913
    %v7206 = vunpack.c.l.b16 %v6914
    %v7207 = vunpack.c.h.b16 %v6914
    %v7208 = vunpack.c.l.b16 %v6915
    %v7209 = vunpack.c.h.b16 %v6915
    %v7210 = vunpack.c.l.b16 %v6916
    %v7211 = vunpack.c.h.b16 %v6916
    %v7212 = vunpack.c.l.b16 %v6917
    %v7213 = vunpack.c.h.b16 %v6917
    %v7214 = vunpack.c.l.b16 %v6918
    %v7215 = vunpack.c.h.b16 %v6918
    %v7216 = vunpack.c.l.b16 %v6919
    %v7217 = vunpack.c.h.b16 %v6919
    %v7218 = vunpack.c.l.b16 %v6920
    %v7219 = vunpack.c.h.b16 %v6920
    %v7220 = vunpack.c.l.b16 %v6921
    %v7221 = vunpack.c.h.b16 %v6921
    %v7222 = vunpack.c.l.b16 %v6922
    %v7223 = vunpack.c.h.b16 %v6922
    %v7224 = vunpack.c.l.b16 %v6923
    %v7225 = vunpack.c.h.b16 %v6923
    %v7226 = vunpack.c.l.b16 %v6924
    %v7227 = vunpack.c.h.b16 %v6924
    %v7228 = vunpack.c.l.b16 %v6925
    %v7229 = vunpack.c.h.b16 %v6925
    %v7230 = vunpack.c.l.b16 %v6926
    %v7231 = vunpack.c.h.b16 %v6926
    %v7232 = vunpack.c.l.b16 %v6927
    %v7233 = vunpack.c.h.b16 %v6927
    %v7234 = vunpack.c.l.b16 %v6928
    %v7235 = vunpack.c.h.b16 %v6928
    %v7236 = vunpack.c.l.b16 %v6929
    %v7237 = vunpack.c.h.b16 %v6929
    %v7238 = vunpack.c.l.b16 %v6930
    %v7239 = vunpack.c.h.b16 %v6930
    %v7240 = vunpack.c.l.b16 %v6931
    %v7241 = vunpack.c.h.b16 %v6931
    %v7242 = vunpack.c.l.b16 %v6932
    %v7243 = vunpack.c.h.b16 %v6932
    %v7244 = vunpack.c.l.b16 %v6933
    %v7245 = vunpack.c.h.b16 %v6933
    %v7246 = vunpack.c.l.b16 %v6934
    %v7247 = vunpack.c.h.b16 %v6934
    %v7248 = vunpack.c.l.b16 %v6935
    %v7249 = vunpack.c.h.b16 %v6935
    %v7250 = vunpack.c.l.b16 %v6936
    %v7251 = vunpack.c.h.b16 %v6936
    %v7252 = vunpack.c.l.b16 %v6937
    %v7253 = vunpack.c.h.b16 %v6937
    %v7254 = vunpack.c.l.b16 %v6938
    %v7255 = vunpack.c.h.b16 %v6938
    %v7256 = vunpack.c.l.b16 %v6939
    %v7257 = vunpack.c.h.b16 %v6939
    %v7258 = vunpack.c.l.b16 %v6940
    %v7259 = vunpack.c.h.b16 %v6940
    %v7260 = vunpack.c.l.b16 %v6941
    %v7261 = vunpack.c.h.b16 %v6941
    %v7262 = vunpack.c.l.b16 %v6942
    %v7263 = vunpack.c.h.b16 %v6942
    %v7264 = vunpack.c.l.b16 %v6943
    %v7265 = vunpack.c.h.b16 %v6943
    %v7266 = vunpack.c.l.b16 %v6944
    %v7267 = vunpack.c.h.b16 %v6944
    %v7268 = vunpack.c.l.b16 %v6945
    %v7269 = vunpack.c.h.b16 %v6945
    %v7270 = vunpack.c.l.b16 %v6946
    %v7271 = vunpack.c.h.b16 %v6946
    %v7272 = vunpack.c.l.b16 %v6947
    %v7273 = vunpack.c.h.b16 %v6947
    %v7274 = vunpack.c.l.b16 %v6948
    %v7275 = vunpack.c.h.b16 %v6948
    %v7276 = vunpack.c.l.b16 %v6949
    %v7277 = vunpack.c.h.b16 %v6949
    %v7278 = vunpack.c.l.b16 %v6950
    %v7279 = vunpack.c.h.b16 %v6950
    %v7280 = vunpack.c.l.b16 %v6951
    %v7281 = vunpack.c.h.b16 %v6951
    %v7282 = vunpack.c.l.b16 %v6952
    %v7283 = vunpack.c.h.b16 %v6952
    %v7284 = vunpack.c.l.b16 %v6953
    %v7285 = vunpack.c.h.b16 %v6953
    %v7286 = vunpack.c.l.b16 %v6954
    %v7287 = vunpack.c.h.b16 %v6954
    %v7288 = vunpack.c.l.b16 %v6955
    %v7289 = vunpack.c.h.b16 %v6955
    %v7290 = vunpack.c.l.b16 %v6956
    %v7291 = vunpack.c.h.b16 %v6956
    %v7292 = vunpack.c.l.b16 %v6957
    %v7293 = vunpack.c.h.b16 %v6957
    %v7294 = vunpack.c.l.b16 %v6958
    %v7295 = vunpack.c.h.b16 %v6958
    %v7296 = vunpack.c.l.b16 %v6959
    %v7297 = vunpack.c.h.b16 %v6959
    %v7298 = vunpack.c.l.b16 %v6960
    %v7299 = vunpack.c.h.b16 %v6960
    %v7300 = vunpack.c.l.b16 %v6961
    %v7301 = vunpack.c.h.b16 %v6961
    %v7302 = vunpack.c.l.b16 %v6962
    %v7303 = vunpack.c.h.b16 %v6962
    %v7304 = vunpack.c.l.b16 %v6963
    %v7305 = vunpack.c.h.b16 %v6963
    %v7306 = vunpack.c.l.b16 %v6964
    %v7307 = vunpack.c.h.b16 %v6964
    %v7308 = vunpack.c.l.b16 %v6965
    %v7309 = vunpack.c.h.b16 %v6965
    %v7310 = vunpack.c.l.b16 %v6966
    %v7311 = vunpack.c.h.b16 %v6966
    %v7312 = vunpack.c.l.b16 %v6967
    %v7313 = vunpack.c.h.b16 %v6967
    %v7314 = vunpack.c.l.b16 %v6968
    %v7315 = vunpack.c.h.b16 %v6968
    %v7316 = vunpack.c.l.b16 %v6969
    %v7317 = vunpack.c.h.b16 %v6969
    %v7318 = vunpack.c.l.b16 %v6970
    %v7319 = vunpack.c.h.b16 %v6970
    %v7320 = vunpack.c.l.b16 %v6971
    %v7321 = vunpack.c.h.b16 %v6971
    %v7322 = vunpack.c.l.b16 %v6972
    %v7323 = vunpack.c.h.b16 %v6972
    %v7324 = vunpack.c.l.b16 %v6973
    %v7325 = vunpack.c.h.b16 %v6973
    %v7326 = vunpack.c.l.b16 %v6974
    %v7327 = vunpack.c.h.b16 %v6974
    %v7328 = vunpack.c.l.b16 %v6975
    %v7329 = vunpack.c.h.b16 %v6975
    %v7330 = vunpack.c.l.b16 %v6976
    %v7331 = vunpack.c.h.b16 %v6976
    %v7332 = vunpack.c.l.b16 %v6977
    %v7333 = vunpack.c.h.b16 %v6977
    %v7334 = vunpack.c.l.b16 %v6978
    %v7335 = vunpack.c.h.b16 %v6978
    %v7336 = vunpack.c.l.b16 %v6979
    %v7337 = vunpack.c.h.b16 %v6979
    %v7338 = vunpack.c.l.b16 %v6980
    %v7339 = vunpack.c.h.b16 %v6980
    %v7340 = vunpack.c.l.b16 %v6981
    %v7341 = vunpack.c.h.b16 %v6981
    %v7342 = vunpack.c.l.b16 %v6982
    %v7343 = vunpack.c.h.b16 %v6982
    %v7344 = vunpack.c.l.b16 %v6983
    %v7345 = vunpack.c.h.b16 %v6983
    %v7346 = vunpack.c.l.b16 %v6984
    %v7347 = vunpack.c.h.b16 %v6984
    %v7348 = vunpack.c.l.b16 %v6985
    %v7349 = vunpack.c.h.b16 %v6985
    %v7350 = vunpack.c.l.b16 %v6986
    %v7351 = vunpack.c.h.b16 %v6986
    %v7352 = vunpack.c.l.b16 %v6987
    %v7353 = vunpack.c.h.b16 %v6987
    %v7354 = vunpack.c.l.b16 %v6988
    %v7355 = vunpack.c.h.b16 %v6988
    %v7356 = vunpack.c.l.b16 %v6989
    %v7357 = vunpack.c.h.b16 %v6989
    %v7358 = vunpack.c.l.b16 %v6990
    %v7359 = vunpack.c.h.b16 %v6990
    %v7360 = vunpack.c.l.b16 %v6991
    %v7361 = vunpack.c.h.b16 %v6991
    %v7362 = vunpack.c.l.b16 %v6992
    %v7363 = vunpack.c.h.b16 %v6992
    %v7364 = vunpack.c.l.b16 %v6993
    %v7365 = vunpack.c.h.b16 %v6993
    %v7366 = vunpack.c.l.b16 %v6994
    %v7367 = vunpack.c.h.b16 %v6994
    %v7368 = vunpack.c.l.b16 %v6995
    %v7369 = vunpack.c.h.b16 %v6995
    %v7370 = vunpack.c.l.b16 %v6996
    %v7371 = vunpack.c.h.b16 %v6996
    %v7372 = vunpack.c.l.b16 %v6997
    %v7373 = vunpack.c.h.b16 %v6997
    %v7374 = vunpack.c.l.b16 %v6998
    %v7375 = vunpack.c.h.b16 %v6998
    %v7376 = vunpack.c.l.b16 %v6999
    %v7377 = vunpack.c.h.b16 %v6999
    %v7378 = vunpack.c.l.b16 %v7000
    %v7379 = vunpack.c.h.b16 %v7000
    %v7380 = vunpack.c.l.b16 %v7001
    %v7381 = vunpack.c.h.b16 %v7001
    %v7382 = vunpack.c.l.b16 %v7002
    %v7383 = vunpack.c.h.b16 %v7002
    %v7384 = vunpack.c.l.b16 %v7003
    %v7385 = vunpack.c.h.b16 %v7003
    %v7386 = vunpack.c.l.b16 %v7004
    %v7387 = vunpack.c.h.b16 %v7004
    %v7388 = vunpack.c.l.b16 %v7005
    %v7389 = vunpack.c.h.b16 %v7005
    %v7390 = vunpack.c.l.b16 %v7006
    %v7391 = vunpack.c.h.b16 %v7006
    %v7392 = vunpack.c.l.b16 %v7007
    %v7393 = vunpack.c.h.b16 %v7007
    %v7394 = vunpack.c.l.b16 %v7008
    %v7395 = vunpack.c.h.b16 %v7008
    %v7396 = vunpack.c.l.b16 %v7009
    %v7397 = vunpack.c.h.b16 %v7009
    %v7398 = vunpack.c.l.b16 %v7010
    %v7399 = vunpack.c.h.b16 %v7010
    %v7400 = vunpack.c.l.b16 %v7011
    %v7401 = vunpack.c.h.b16 %v7011
    %v7402 = vunpack.c.l.b16 %v7012
    %v7403 = vunpack.c.h.b16 %v7012
    %v7404 = vunpack.c.l.b16 %v7013
    %v7405 = vunpack.c.h.b16 %v7013
    %v7406 = vunpack.c.l.b16 %v7014
    %v7407 = vunpack.c.h.b16 %v7014
    %v7408 = vunpack.c.l.b16 %v7015
    %v7409 = vunpack.c.h.b16 %v7015
    %v7410 = vunpack.c.l.b16 %v7016
    %v7411 = vunpack.c.h.b16 %v7016
    %v7412 = vunpack.c.l.b16 %v7017
    %v7413 = vunpack.c.h.b16 %v7017
    %v7414 = vpack.c.b16 %v7160, %v7158
    %v7415 = vpack.c.b16 %v7161, %v7159
    %v7416 = vpack.c.b16 %v7164, %v7162
    %v7417 = vpack.c.b16 %v7165, %v7163
    %v7418 = vpack.c.b16 %v7168, %v7166
    %v7419 = vpack.c.b16 %v7169, %v7167
    %v7420 = vpack.c.b16 %v7172, %v7170
    %v7421 = vpack.c.b16 %v7173, %v7171
    %v7422 = vpack.c.b16 %v7176, %v7174
    %v7423 = vpack.c.b16 %v7177, %v7175
    %v7424 = vpack.c.b16 %v7180, %v7178
    %v7425 = vpack.c.b16 %v7181, %v7179
    %v7426 = vpack.c.b16 %v7184, %v7182
    %v7427 = vpack.c.b16 %v7185, %v7183
    %v7428 = vpack.c.b16 %v7188, %v7186
    %v7429 = vpack.c.b16 %v7189, %v7187
    %v7430 = vpack.c.b16 %v7192, %v7190
    %v7431 = vpack.c.b16 %v7193, %v7191
    %v7432 = vpack.c.b16 %v7196, %v7194
    %v7433 = vpack.c.b16 %v7197, %v7195
    %v7434 = vpack.c.b16 %v7200, %v7198
    %v7435 = vpack.c.b16 %v7201, %v7199
    %v7436 = vpack.c.b16 %v7204, %v7202
    %v7437 = vpack.c.b16 %v7205, %v7203
    %v7438 = vpack.c.b16 %v7208, %v7206
    %v7439 = vpack.c.b16 %v7209, %v7207
    %v7440 = vpack.c.b16 %v7212, %v7210
    %v7441 = vpack.c.b16 %v7213, %v7211
    %v7442 = vpack.c.b16 %v7216, %v7214
    %v7443 = vpack.c.b16 %v7217, %v7215
    %v7444 = vpack.c.b16 %v7220, %v7218
    %v7445 = vpack.c.b16 %v7221, %v7219
    %v7446 = vpack.c.b16 %v7224, %v7222
    %v7447 = vpack.c.b16 %v7225, %v7223
    %v7448 = vpack.c.b16 %v7228, %v7226
    %v7449 = vpack.c.b16 %v7229, %v7227
    %v7450 = vpack.c.b16 %v7232, %v7230
    %v7451 = vpack.c.b16 %v7233, %v7231
    %v7452 = vpack.c.b16 %v7236, %v7234
    %v7453 = vpack.c.b16 %v7237, %v7235
    %v7454 = vpack.c.b16 %v7240, %v7238
    %v7455 = vpack.c.b16 %v7241, %v7239
    %v7456 = vpack.c.b16 %v7244, %v7242
    %v7457 = vpack.c.b16 %v7245, %v7243
    %v7458 = vpack.c.b16 %v7248, %v7246
    %v7459 = vpack.c.b16 %v7249, %v7247
    %v7460 = vpack.c.b16 %v7252, %v7250
    %v7461 = vpack.c.b16 %v7253, %v7251
    %v7462 = vpack.c.b16 %v7256, %v7254
    %v7463 = vpack.c.b16 %v7257, %v7255
    %v7464 = vpack.c.b16 %v7260, %v7258
    %v7465 = vpack.c.b16 %v7261, %v7259
    %v7466 = vpack.c.b16 %v7264, %v7262
    %v7467 = vpack.c.b16 %v7265, %v7263
    %v7468 = vpack.c.b16 %v7268, %v7266
    %v7469 = vpack.c.b16 %v7269, %v7267
    %v7470 = vpack.c.b16 %v7272, %v7270
    %v7471 = vpack.c.b16 %v7273, %v7271
    %v7472 = vpack.c.b16 %v7276, %v7274
    %v7473 = vpack.c.b16 %v7277, %v7275
    %v7474 = vpack.c.b16 %v7280, %v7278
    %v7475 = vpack.c.b16 %v7281, %v7279
    %v7476 = vpack.c.b16 %v7284, %v7282
    %v7477 = vpack.c.b16 %v7285, %v7283
    %v7478 = vpack.c.b16 %v7288, %v7286
    %v7479 = vpack.c.b16 %v7289, %v7287
    %v7480 = vpack.c.b16 %v7292, %v7290
    %v7481 = vpack.c.b16 %v7293, %v7291
    %v7482 = vpack.c.b16 %v7296, %v7294
    %v7483 = vpack.c.b16 %v7297, %v7295
    %v7484 = vpack.c.b16 %v7300, %v7298
    %v7485 = vpack.c.b16 %v7301, %v7299
    %v7486 = vpack.c.b16 %v7304, %v7302
    %v7487 = vpack.c.b16 %v7305, %v7303
    %v7488 = vpack.c.b16 %v7308, %v7306
    %v7489 = vpack.c.b16 %v7309, %v7307
    %v7490 = vpack.c.b16 %v7312, %v7310
    %v7491 = vpack.c.b16 %v7313, %v7311
    %v7492 = vpack.c.b16 %v7316, %v7314
    %v7493 = vpack.c.b16 %v7317, %v7315
    %v7494 = vpack.c.b16 %v7320, %v7318
    %v7495 = vpack.c.b16 %v7321, %v7319
    %v7496 = vpack.c.b16 %v7324, %v7322
    %v7497 = vpack.c.b16 %v7325, %v7323
    %v7498 = vpack.c.b16 %v7328, %v7326
    %v7499 = vpack.c.b16 %v7329, %v7327
    %v7500 = vpack.c.b16 %v7332, %v7330
    %v7501 = vpack.c.b16 %v7333, %v7331
    %v7502 = vpack.c.b16 %v7336, %v7334
    %v7503 = vpack.c.b16 %v7337, %v7335
    %v7504 = vpack.c.b16 %v7340, %v7338
    %v7505 = vpack.c.b16 %v7341, %v7339
    %v7506 = vpack.c.b16 %v7344, %v7342
    %v7507 = vpack.c.b16 %v7345, %v7343
    %v7508 = vpack.c.b16 %v7348, %v7346
    %v7509 = vpack.c.b16 %v7349, %v7347
    %v7510 = vpack.c.b16 %v7352, %v7350
    %v7511 = vpack.c.b16 %v7353, %v7351
    %v7512 = vpack.c.b16 %v7356, %v7354
    %v7513 = vpack.c.b16 %v7357, %v7355
    %v7514 = vpack.c.b16 %v7360, %v7358
    %v7515 = vpack.c.b16 %v7361, %v7359
    %v7516 = vpack.c.b16 %v7364, %v7362
    %v7517 = vpack.c.b16 %v7365, %v7363
    %v7518 = vpack.c.b16 %v7368, %v7366
    %v7519 = vpack.c.b16 %v7369, %v7367
    %v7520 = vpack.c.b16 %v7372, %v7370
    %v7521 = vpack.c.b16 %v7373, %v7371
    %v7522 = vpack.c.b16 %v7376, %v7374
    %v7523 = vpack.c.b16 %v7377, %v7375
    %v7524 = vpack.c.b16 %v7380, %v7378
    %v7525 = vpack.c.b16 %v7381, %v7379
    %v7526 = vpack.c.b16 %v7384, %v7382
    %v7527 = vpack.c.b16 %v7385, %v7383
    %v7528 = vpack.c.b16 %v7388, %v7386
    %v7529 = vpack.c.b16 %v7389, %v7387
    %v7530 = vpack.c.b16 %v7392, %v7390
    %v7531 = vpack.c.b16 %v7393, %v7391
    %v7532 = vpack.c.b16 %v7396, %v7394
    %v7533 = vpack.c.b16 %v7397, %v7395
    %v7534 = vpack.c.b16 %v7400, %v7398
    %v7535 = vpack.c.b16 %v7401, %v7399
    %v7536 = vpack.c.b16 %v7404, %v7402
    %v7537 = vpack.c.b16 %v7405, %v7403
    %v7538 = vpack.c.b16 %v7408, %v7406
    %v7539 = vpack.c.b16 %v7409, %v7407
    %v7540 = vpack.c.b16 %v7412, %v7410
    %v7541 = vpack.c.b16 %v7413, %v7411
    %7670 = vmatprep.subr.bf16.mxu0 %v7415
    %7671 = vmatpush1.bf16.msra.mxu0 %v7414
    %7672 = vmatprep.subr.bf16.mxu0 %v7417
    %7673 = vmatpush1.bf16.msra.mxu0 %v7416
    %7674 = vmatprep.subr.bf16.mxu0 %v7419
    %7675 = vmatpush1.bf16.msra.mxu0 %v7418
    %7676 = vmatprep.subr.bf16.mxu0 %v7421
    %7677 = vmatpush1.bf16.msra.mxu0 %v7420
    %7678 = vmatprep.subr.bf16.mxu0 %v7423
    %7679 = vmatpush1.bf16.msra.mxu0 %v7422
    %7680 = vmatprep.subr.bf16.mxu0 %v7425
    %7681 = vmatpush1.bf16.msra.mxu0 %v7424
    %7682 = vmatprep.subr.bf16.mxu0 %v7427
    %7683 = vmatpush1.bf16.msra.mxu0 %v7426
    %7684 = vmatprep.subr.bf16.mxu0 %v7429
    %7685 = vmatpush1.bf16.msra.mxu0 %v7428
    %7686 = vmatprep.subr.bf16.mxu0 %v7431
    %7687 = vmatpush1.bf16.msra.mxu0 %v7430
    %7688 = vmatprep.subr.bf16.mxu0 %v7433
    %7689 = vmatpush1.bf16.msra.mxu0 %v7432
    %7690 = vmatprep.subr.bf16.mxu0 %v7435
    %7691 = vmatpush1.bf16.msra.mxu0 %v7434
    %7692 = vmatprep.subr.bf16.mxu0 %v7437
    %7693 = vmatpush1.bf16.msra.mxu0 %v7436
    %7694 = vmatprep.subr.bf16.mxu0 %v7439
    %7695 = vmatpush1.bf16.msra.mxu0 %v7438
    %7696 = vmatprep.subr.bf16.mxu0 %v7441
    %7697 = vmatpush1.bf16.msra.mxu0 %v7440
    %7698 = vmatprep.subr.bf16.mxu0 %v7443
    %7699 = vmatpush1.bf16.msra.mxu0 %v7442
    %7700 = vmatprep.subr.bf16.mxu0 %v7445
    %7701 = vmatpush1.bf16.msra.mxu0 %v7444
    %7702 = vmatprep.mubr.bf16.mxu0 %v6883
    %7703 = vmatmul.mubr.bf16.gmra.mrb[0].mxu0 %v6882
    %v7704 = vpop.f32.mrb[0].mxu0
    %v7705 = vadd.f32 %v7023, %v7704
    %v7706 = vpop.f32.mrb[0].mxu0
    %v7707 = vadd.f32 %v7027, %v7706
    %v7708 = vpop.f32.mrb[0].mxu0
    %v7709 = vpop.f32.mrb[0].mxu0
    %7710 = vdwg.mxu0
    %7711 = vmatprep.subr.bf16.mxu0 %v7447
    %7712 = vmatpush1.bf16.msra.mxu0 %v7446
    %7713 = vmatprep.subr.bf16.mxu0 %v7449
    %7714 = vmatpush1.bf16.msra.mxu0 %v7448
    %7715 = vmatprep.subr.bf16.mxu0 %v7451
    %7716 = vmatpush1.bf16.msra.mxu0 %v7450
    %7717 = vmatprep.subr.bf16.mxu0 %v7453
    %7718 = vmatpush1.bf16.msra.mxu0 %v7452
    %7719 = vmatprep.subr.bf16.mxu0 %v7455
    %7720 = vmatpush1.bf16.msra.mxu0 %v7454
    %7721 = vmatprep.subr.bf16.mxu0 %v7457
    %7722 = vmatpush1.bf16.msra.mxu0 %v7456
    %7723 = vmatprep.subr.bf16.mxu0 %v7459
    %7724 = vmatpush1.bf16.msra.mxu0 %v7458
    %7725 = vmatprep.subr.bf16.mxu0 %v7461
    %7726 = vmatpush1.bf16.msra.mxu0 %v7460
    %7727 = vmatprep.subr.bf16.mxu0 %v7463
    %7728 = vmatpush1.bf16.msra.mxu0 %v7462
    %7729 = vmatprep.subr.bf16.mxu0 %v7465
    %7730 = vmatpush1.bf16.msra.mxu0 %v7464
    %7731 = vmatprep.subr.bf16.mxu0 %v7467
    %7732 = vmatpush1.bf16.msra.mxu0 %v7466
    %7733 = vmatprep.subr.bf16.mxu0 %v7469
    %7734 = vmatpush1.bf16.msra.mxu0 %v7468
    %7735 = vmatprep.subr.bf16.mxu0 %v7471
    %7736 = vmatpush1.bf16.msra.mxu0 %v7470
    %7737 = vmatprep.subr.bf16.mxu0 %v7473
    %7738 = vmatpush1.bf16.msra.mxu0 %v7472
    %7739 = vmatprep.subr.bf16.mxu0 %v7475
    %7740 = vmatpush1.bf16.msra.mxu0 %v7474
    %7741 = vmatprep.subr.bf16.mxu0 %v7477
    %7742 = vmatpush1.bf16.msra.mxu0 %v7476
    %7743 = vmatprep.mubr.bf16.mxu0 %v6885
    %7744 = vmatmul.mubr.bf16.gmra.mrb[0].mxu0 %v6884
    %v7745 = vpop.f32.mrb[0].mxu0
    %v7746 = vadd.f32 %v7705, %v7745
    %v7747 = vpop.f32.mrb[0].mxu0
    %v7748 = vadd.f32 %v7707, %v7747
    %v7749 = vpop.f32.mrb[0].mxu0
    %v7750 = vpop.f32.mrb[0].mxu0
    %7751 = vdwg.mxu0
    %7752 = vmatprep.subr.bf16.mxu0 %v7479
    %7753 = vmatpush1.bf16.msra.mxu0 %v7478
    %7754 = vmatprep.subr.bf16.mxu0 %v7481
    %7755 = vmatpush1.bf16.msra.mxu0 %v7480
    %7756 = vmatprep.subr.bf16.mxu0 %v7483
    %7757 = vmatpush1.bf16.msra.mxu0 %v7482
    %7758 = vmatprep.subr.bf16.mxu0 %v7485
    %7759 = vmatpush1.bf16.msra.mxu0 %v7484
    %7760 = vmatprep.subr.bf16.mxu0 %v7487
    %7761 = vmatpush1.bf16.msra.mxu0 %v7486
    %7762 = vmatprep.subr.bf16.mxu0 %v7489
    %7763 = vmatpush1.bf16.msra.mxu0 %v7488
    %7764 = vmatprep.subr.bf16.mxu0 %v7491
    %7765 = vmatpush1.bf16.msra.mxu0 %v7490
    %7766 = vmatprep.subr.bf16.mxu0 %v7493
    %7767 = vmatpush1.bf16.msra.mxu0 %v7492
    %7768 = vmatprep.subr.bf16.mxu0 %v7495
    %7769 = vmatpush1.bf16.msra.mxu0 %v7494
    %7770 = vmatprep.subr.bf16.mxu0 %v7497
    %7771 = vmatpush1.bf16.msra.mxu0 %v7496
    %7772 = vmatprep.subr.bf16.mxu0 %v7499
    %7773 = vmatpush1.bf16.msra.mxu0 %v7498
    %7774 = vmatprep.subr.bf16.mxu0 %v7501
    %7775 = vmatpush1.bf16.msra.mxu0 %v7500
    %7776 = vmatprep.subr.bf16.mxu0 %v7503
    %7777 = vmatpush1.bf16.msra.mxu0 %v7502
    %7778 = vmatprep.subr.bf16.mxu0 %v7505
    %7779 = vmatpush1.bf16.msra.mxu0 %v7504
    %7780 = vmatprep.subr.bf16.mxu0 %v7507
    %7781 = vmatpush1.bf16.msra.mxu0 %v7506
    %7782 = vmatprep.subr.bf16.mxu0 %v7509
    %7783 = vmatpush1.bf16.msra.mxu0 %v7508
    %7784 = vmatprep.mubr.bf16.mxu0 %v6887
    %7785 = vmatmul.mubr.bf16.gmra.mrb[0].mxu0 %v6886
    %v7786 = vpop.f32.mrb[0].mxu0
    %v7787 = vadd.f32 %v7746, %v7786
    %v7788 = vpop.f32.mrb[0].mxu0
    %v7789 = vadd.f32 %v7748, %v7788
    %v7790 = vpop.f32.mrb[0].mxu0
    %v7791 = vpop.f32.mrb[0].mxu0
    %7792 = vdwg.mxu0
    %7793 = vmatprep.subr.bf16.mxu0 %v7511
    %7794 = vmatpush1.bf16.msra.mxu0 %v7510
    %7795 = vmatprep.subr.bf16.mxu0 %v7513
    %7796 = vmatpush1.bf16.msra.mxu0 %v7512
    %7797 = vmatprep.subr.bf16.mxu0 %v7515
    %7798 = vmatpush1.bf16.msra.mxu0 %v7514
    %7799 = vmatprep.subr.bf16.mxu0 %v7517
    %7800 = vmatpush1.bf16.msra.mxu0 %v7516
    %7801 = vmatprep.subr.bf16.mxu0 %v7519
    %7802 = vmatpush1.bf16.msra.mxu0 %v7518
    %7803 = vmatprep.subr.bf16.mxu0 %v7521
    %7804 = vmatpush1.bf16.msra.mxu0 %v7520
    %7805 = vmatprep.subr.bf16.mxu0 %v7523
    %7806 = vmatpush1.bf16.msra.mxu0 %v7522
    %7807 = vmatprep.subr.bf16.mxu0 %v7525
    %7808 = vmatpush1.bf16.msra.mxu0 %v7524
    %7809 = vmatprep.subr.bf16.mxu0 %v7527
    %7810 = vmatpush1.bf16.msra.mxu0 %v7526
    %7811 = vmatprep.subr.bf16.mxu0 %v7529
    %7812 = vmatpush1.bf16.msra.mxu0 %v7528
    %7813 = vmatprep.subr.bf16.mxu0 %v7531
    %7814 = vmatpush1.bf16.msra.mxu0 %v7530
    %7815 = vmatprep.subr.bf16.mxu0 %v7533
    %7816 = vmatpush1.bf16.msra.mxu0 %v7532
    %7817 = vmatprep.subr.bf16.mxu0 %v7535
    %7818 = vmatpush1.bf16.msra.mxu0 %v7534
    %7819 = vmatprep.subr.bf16.mxu0 %v7537
    %7820 = vmatpush1.bf16.msra.mxu0 %v7536
    %7821 = vmatprep.subr.bf16.mxu0 %v7539
    %7822 = vmatpush1.bf16.msra.mxu0 %v7538
    %7823 = vmatprep.subr.bf16.mxu0 %v7541
    %7824 = vmatpush1.bf16.msra.mxu0 %v7540
    %7825 = vmatprep.mubr.bf16.mxu0 %v6889
    %7826 = vmatmul.mubr.bf16.gmra.mrb[0].mxu0 %v6888
    %v7827 = vpop.f32.mrb[0].mxu0
    %v7828 = vadd.f32 %v7787, %v7827
    %v7829 = vpop.f32.mrb[0].mxu0
    %v7830 = vadd.f32 %v7789, %v7829
    %v7831 = vpop.f32.mrb[0].mxu0
    %v7832 = vpop.f32.mrb[0].mxu0
    %7833 = vdwg.mxu0
    %v7834 = vpack.c.bf16 %v7828, %v7828
    %v7835 = vpack.c.bf16 %v7830, %v7830
    %v7836 = vld [vmem:[%s15] sm:$0xf]
    %v7837 = vld [vmem:[%s15 + $0x4] sm:$0xf]
    %v7838 = vld [vmem:[%s15 + $0x8] sm:$0xf]
    %v7839 = vld [vmem:[%s15 + $0xc] sm:$0xf]
    %v7840 = vld [vmem:[%s15 + $0x10] sm:$0xf]
    %v7841 = vld [vmem:[%s15 + $0x14] sm:$0xf]
    %v7842 = vld [vmem:[%s15 + $0x18] sm:$0xf]
    %v7843 = vld [vmem:[%s15 + $0x1c] sm:$0xf]
    %v7844 = vld [vmem:[%s15 + $0x20] sm:$0xf]
    %v7845 = vld [vmem:[%s15 + $0x24] sm:$0xf]
    %v7846 = vld [vmem:[%s15 + $0x28] sm:$0xf]
    %v7847 = vld [vmem:[%s15 + $0x2c] sm:$0xf]
    %v7848 = vld [vmem:[%s15 + $0x30] sm:$0xf]
    %v7849 = vld [vmem:[%s15 + $0x34] sm:$0xf]
    %v7850 = vld [vmem:[%s15 + $0x38] sm:$0xf]
    %v7851 = vld [vmem:[%s15 + $0x3c] sm:$0xf]
    %v7852 = vld [vmem:[%s15 + $0x40] sm:$0xf]
    %v7853 = vld [vmem:[%s15 + $0x44] sm:$0xf]
    %v7854 = vld [vmem:[%s15 + $0x48] sm:$0xf]
    %v7855 = vld [vmem:[%s15 + $0x4c] sm:$0xf]
    %v7856 = vld [vmem:[%s15 + $0x50] sm:$0xf]
    %v7857 = vld [vmem:[%s15 + $0x54] sm:$0xf]
    %v7858 = vld [vmem:[%s15 + $0x58] sm:$0xf]
    %v7859 = vld [vmem:[%s15 + $0x5c] sm:$0xf]
    %v7860 = vld [vmem:[%s15 + $0x60] sm:$0xf]
    %v7861 = vld [vmem:[%s15 + $0x64] sm:$0xf]
    %v7862 = vld [vmem:[%s15 + $0x68] sm:$0xf]
    %v7863 = vld [vmem:[%s15 + $0x6c] sm:$0xf]
    %v7864 = vld [vmem:[%s15 + $0x70] sm:$0xf]
    %v7865 = vld [vmem:[%s15 + $0x74] sm:$0xf]
    %v7866 = vld [vmem:[%s15 + $0x78] sm:$0xf]
    %v7867 = vld [vmem:[%s15 + $0x7c] sm:$0xf]
    %v7868 = vld [vmem:[%s16] sm:$0x1]
    %v7870 = vlaneseq
    %v7871 = vshrl.u32 %v7870, 7
    %v7872 = vsub.s32 0, %v7871
    %v7873 = vrot.slane %v7868, %v7872
    %v7907 = vunpack.c.l.b16 %v7836
    %v7908 = vunpack.c.l.b16 %v7837
    %v7909 = vunpack.c.l.b16 %v7838
    %v7910 = vunpack.c.l.b16 %v7839
    %v7911 = vunpack.c.l.b16 %v7840
    %v7912 = vunpack.c.l.b16 %v7841
    %v7913 = vunpack.c.l.b16 %v7842
    %v7914 = vunpack.c.l.b16 %v7843
    %v7915 = vunpack.c.l.b16 %v7844
    %v7916 = vunpack.c.l.b16 %v7845
    %v7917 = vunpack.c.l.b16 %v7846
    %v7918 = vunpack.c.l.b16 %v7847
    %v7919 = vunpack.c.l.b16 %v7848
    %v7920 = vunpack.c.l.b16 %v7849
    %v7921 = vunpack.c.l.b16 %v7850
    %v7922 = vunpack.c.l.b16 %v7851
    %v7923 = vunpack.c.l.b16 %v7852
    %v7924 = vunpack.c.l.b16 %v7853
    %v7925 = vunpack.c.l.b16 %v7854
    %v7926 = vunpack.c.l.b16 %v7855
    %v7927 = vunpack.c.l.b16 %v7856
    %v7928 = vunpack.c.l.b16 %v7857
    %v7929 = vunpack.c.l.b16 %v7858
    %v7930 = vunpack.c.l.b16 %v7859
    %v7931 = vunpack.c.l.b16 %v7860
    %v7932 = vunpack.c.l.b16 %v7861
    %v7933 = vunpack.c.l.b16 %v7862
    %v7934 = vunpack.c.l.b16 %v7863
    %v7935 = vunpack.c.l.b16 %v7864
    %v7936 = vunpack.c.l.b16 %v7865
    %v7937 = vunpack.c.l.b16 %v7866
    %v7938 = vunpack.c.l.b16 %v7867
    %v7939 = vpack.c.b16 %v7908, %v7907
    %v7940 = vpack.c.b16 %v7910, %v7909
    %v7941 = vpack.c.b16 %v7912, %v7911
    %v7942 = vpack.c.b16 %v7914, %v7913
    %v7943 = vpack.c.b16 %v7916, %v7915
    %v7944 = vpack.c.b16 %v7918, %v7917
    %v7945 = vpack.c.b16 %v7920, %v7919
    %v7946 = vpack.c.b16 %v7922, %v7921
    %v7947 = vpack.c.b16 %v7924, %v7923
    %v7948 = vpack.c.b16 %v7926, %v7925
    %v7949 = vpack.c.b16 %v7928, %v7927
    %v7950 = vpack.c.b16 %v7930, %v7929
    %v7951 = vpack.c.b16 %v7932, %v7931
    %v7952 = vpack.c.b16 %v7934, %v7933
    %v7953 = vpack.c.b16 %v7936, %v7935
    %v7954 = vpack.c.b16 %v7938, %v7937
    %7971 = vmatprep.subr.bf16.mxu0 0
    %7972 = vmatpush1.bf16.msra.mxu0 %v7939
    %7973 = vmatprep.subr.bf16.mxu0 0
    %7974 = vmatpush1.bf16.msra.mxu0 %v7940
    %7975 = vmatprep.subr.bf16.mxu0 0
    %7976 = vmatpush1.bf16.msra.mxu0 %v7941
    %7977 = vmatprep.subr.bf16.mxu0 0
    %7978 = vmatpush1.bf16.msra.mxu0 %v7942
    %7979 = vmatprep.subr.bf16.mxu0 0
    %7980 = vmatpush1.bf16.msra.mxu0 %v7943
    %7981 = vmatprep.subr.bf16.mxu0 0
    %7982 = vmatpush1.bf16.msra.mxu0 %v7944
    %7983 = vmatprep.subr.bf16.mxu0 0
    %7984 = vmatpush1.bf16.msra.mxu0 %v7945
    %7985 = vmatprep.subr.bf16.mxu0 0
    %7986 = vmatpush1.bf16.msra.mxu0 %v7946
    %7987 = vmatprep.subr.bf16.mxu0 0
    %7988 = vmatpush1.bf16.msra.mxu0 %v7947
    %7989 = vmatprep.subr.bf16.mxu0 0
    %7990 = vmatpush1.bf16.msra.mxu0 %v7948
    %7991 = vmatprep.subr.bf16.mxu0 0
    %7992 = vmatpush1.bf16.msra.mxu0 %v7949
    %7993 = vmatprep.subr.bf16.mxu0 0
    %7994 = vmatpush1.bf16.msra.mxu0 %v7950
    %7995 = vmatprep.subr.bf16.mxu0 0
    %7996 = vmatpush1.bf16.msra.mxu0 %v7951
    %7997 = vmatprep.subr.bf16.mxu0 0
    %7998 = vmatpush1.bf16.msra.mxu0 %v7952
    %7999 = vmatprep.subr.bf16.mxu0 0
    %8000 = vmatpush1.bf16.msra.mxu0 %v7953
    %8001 = vmatprep.subr.bf16.mxu0 0
    %8002 = vmatpush1.bf16.msra.mxu0 %v7954
    %8003 = vmatprep.mubr.bf16.mxu0 %v7835
    %8004 = vmatmul.mubr.bf16.gmra.mrb[0].mxu0 %v7834
    %v8005 = vpop.f32.mrb[0].mxu0
    %v8006 = vadd.f32 %v7873, %v8005
    %v8007 = vpop.f32.mrb[0].mxu0
    %v8008 = vpop.f32.mrb[0].mxu0
    %v8009 = vpop.f32.mrb[0].mxu0
    %8010 = vdwg.mxu0
    %8011 = vst [vmem:[%s17] sm:$0xff] %v8006
    // Predicated region
    $region94: #{fwd.1} parent=1 // pred_check
      _
    $region95: #{fwd.1} parent=1 // pred_check_branch
      %8013 = sbr.rel (0) target = $region97
    $region96: #{fwd.1} parent=1 // pred_region
      _
    $region97: #{fwd.1} parent=1 // pred_fallthru
      _
    // Predicated region
    $region98: #{fwd.1} parent=1 // pred_check
      _
    $region99: #{fwd.1} parent=1 // pred_check_branch
      %8015 = sbr.rel (0) target = $region101
    $region100: #{fwd.1} parent=1 // pred_region
      _
    $region101: #{fwd.1} parent=1 // pred_fallthru
      _
    %8016 = vsyncpa [#allocation7], 1
    %8017 = vsyncpa [#allocation9], 1
    %8018 = vsyncpa [#allocation12], 1
    %8019 = vsyncpa [#allocation15], 1

</llo_original>
